<compile_context>
chip_gen: v7x
topology: tpu7x:2x2x1
jax: 0.10.0
libtpu: 0.0.40
codegen_flags: <defaults>
</compile_context>

<pallas_src>
import math
import numpy as np
import jax
import jax.numpy as jnp
from jax import lax
from jax.experimental import pallas as pl
from jax.experimental.pallas import tpu as pltpu

LEAKY_RELU = 0.1
F32 = jnp.float32
BF16 = jnp.bfloat16


def _lrelu(x):
    return jnp.where(x > 0, x, LEAKY_RELU * x)


# ----------------------------------------------------------------------------
# Fused discriminator kernel (grid over batch, one sequence per step)
# ----------------------------------------------------------------------------
def disc_kernel(
    # batched inputs
    mels_ref, pitch_ref, keepc_ref, keepr_ref, invlen_ref, ps_ref, ws_ref, oh_ref,
    # pitch-discriminator weights
    pw1, pb1, pw2, pb2, pw3a, pw3s, pb3, pw4, pb4, pw5, pb5, pw6r, pb6,
    # style-discriminator weights
    sw1, sb1, sw2, sb2, cw1, cb1, cw2, cb2,
    wqkv, bqkv, wo, bo, wfc, bfc, wV, bV, wsc, bsc, protos,
    # outputs
    pout_ref, sout_ref, ceout_ref,
    # scratch: zero-padded time buffer for the 5-tap conv shifts
    xpad_ref,
):
    T = mels_ref.shape[1]
    D = sw1.shape[1]                 # hidden dim (=128)
    DK = D // 2                      # per-head dim (n_head = 2)
    keep = keepc_ref[0]              # (T,1)  1.0 = valid frame
    inv_len = invlen_ref[0]          # (1,1)  1 / mel_len

    # zero the halo rows of the conv scratch (rows [0,8) and [8+T, 16+T));
    # aligned (8,128) stores, re-done each step so per-core scratch stays valid.
    xpad_ref[pl.ds(0, 8), :] = jnp.zeros((8, D), F32)
    xpad_ref[pl.ds(8 + T, 8), :] = jnp.zeros((8, D), F32)

    mels_m = mels_ref[0] * keep      # masked_fill(mask, 0) on mels, (T, 80)
    mels_b = mels_m.astype(BF16)

    # ---------------- pitch discriminator ----------------
    h = _lrelu(jnp.dot(mels_b, pw1[...], preferred_element_type=F32) + pb1[...])
    h = _lrelu(jnp.dot(h.astype(BF16), pw2[...], preferred_element_type=F32) + pb2[...])
    # cat([h, pitch_bcast]) @ W3 == h @ W3[:H] + pitch * colsum(W3[H:])   (rank-1, exact)
    xs = _lrelu(jnp.dot(h.astype(BF16), pw3a[...], preferred_element_type=F32)
                + pitch_ref[0] * pw3s[...] + pb3[...])
    xs = _lrelu(jnp.dot(xs.astype(BF16), pw4[...], preferred_element_type=F32) + pb4[...])
    xs = _lrelu(jnp.dot(xs.astype(BF16), pw5[...], preferred_element_type=F32) + pb5[...])
    t = jnp.sum(xs * pw6r[...], axis=-1, keepdims=True) + pb6[...]     # Linear(256->1), (T,1)
    t = t * keep                                                       # masked_fill(mask, 0)
    p_val = jnp.sum(t, axis=0, keepdims=True) * inv_len                # (1,1)
    pout_ref[0] = jnp.broadcast_to(p_val, (1, pout_ref.shape[2]))

    # ---------------- per-example speaker CE (exact f32, VPU only) ----------------
    logits = jnp.sum(ws_ref[0] * protos[...], axis=-1, keepdims=True)  # (n_spk, 1)
    mx = jnp.max(logits, axis=0, keepdims=True)
    lse = mx + jnp.log(jnp.sum(jnp.exp(logits - mx), axis=0, keepdims=True))
    tgt = jnp.sum(logits * oh_ref[0], axis=0, keepdims=True)
    ceout_ref[0] = jnp.broadcast_to(lse - tgt, (1, ceout_ref.shape[2]))

    # ---------------- style discriminator ----------------
    x = _lrelu(jnp.dot(mels_b, sw1[...], preferred_element_type=F32) + sb1[...])
    x = _lrelu(jnp.dot(x.astype(BF16), sw2[...], preferred_element_type=F32) + sb2[...])

    # temporal conv blocks: residual + LReLU(Conv1d(k=5, pad=2))
    # realized as one (T, 5D) @ (5D, D) matmul per block via shifted views from scratch
    for cw, cb in ((cw1, cb1), (cw2, cb2)):
        xpad_ref[pl.ds(8, T), :] = x                                   # aligned store
        xs5 = jnp.concatenate(
            [xpad_ref[pl.ds(6, T), :],     # x[t-2]  (zero-padded at the edges)
             xpad_ref[pl.ds(7, T), :],     # x[t-1]
             x,                            # x[t]   (no VMEM reload for the center tap)
             xpad_ref[pl.ds(9, T), :],     # x[t+1]
             xpad_ref[pl.ds(10, T), :]],   # x[t+2]
            axis=-1)                                                   # (T, 5D)
        x = x + _lrelu(jnp.dot(xs5.astype(BF16), cw[...],
                               preferred_element_type=F32) + cb[...])

    # 2-head self-attention (temperature = sqrt(d_model)), fused QKV projection
    residual = x
    qkv = jnp.dot(x.astype(BF16), wqkv[...], preferred_element_type=F32) + bqkv[...]
    q, k_, v = qkv[:, 0:D], qkv[:, D:2 * D], qkv[:, 2 * D:3 * D]
    neg = (keepr_ref[0] - 1.0) * 1e30                                  # (1,T) additive key mask
    scale = 1.0 / math.sqrt(float(D))
    att = jnp.zeros((T, D), F32)
    for hh in range(2):
        lo, hi = hh * DK, (hh + 1) * DK
        qh = q[:, lo:hi].astype(BF16)
        kh = k_[:, lo:hi].astype(BF16)
        vh = v[:, lo:hi].astype(BF16)
        a = lax.dot_general(qh, kh, (((1,), (1,)), ((), ())),
                            preferred_element_type=F32) * scale + neg  # (T,T)
        m = jnp.max(a, axis=-1, keepdims=True)
        e = jnp.exp(a - m)
        p = e * pl.reciprocal(jnp.sum(e, axis=-1, keepdims=True), approx=True)
        oh = jnp.dot(p.astype(BF16), vh, preferred_element_type=F32)   # (T, DK)
        att = att + jnp.dot(oh.astype(BF16), wo[lo:hi, :], preferred_element_type=F32)
    x = att + bo[...] + residual

    # final linear
    x = jnp.dot(x.astype(BF16), wfc[...], preferred_element_type=F32) + bfc[...]

    # masked temporal average pool (number of valid frames == mel_len)
    hpool = jnp.sum(x * keep, axis=0, keepdims=True) * inv_len         # (1, D)
    vps = jnp.dot(ps_ref[0].astype(BF16), wV[...], preferred_element_type=F32) + bV[...]
    s_val = wsc[...] * jnp.sum(vps * hpool, axis=-1, keepdims=True) + bsc[...]
    sout_ref[0] = jnp.broadcast_to(s_val, (1, sout_ref.shape[2]))


# ----------------------------------------------------------------------------
# Wrapper (glue: masks, gathers, weight packing, BlockSpecs)
# ----------------------------------------------------------------------------
def discriminator_forward(params, mels, ws, pitch, sids, mel_len):
    B, T, _ = mels.shape
    D = params["s_w1"].shape[1]
    H = params["p_w1"].shape[1]
    n_spk = params["protos"].shape[0]

    ids = jnp.arange(T, dtype=mel_len.dtype)
    mask = mel_len[:, None] <= ids[None, :]                     # True = padded
    keep = jnp.where(mask, 0.0, 1.0).astype(F32)                # (B, T)
    keep_col = keep[:, :, None]
    keep_row = keep[:, None, :]
    pitch3 = pitch[:, :, None].astype(F32)
    inv_len = (1.0 / mel_len.astype(F32))[:, None, None]

    protos = params["protos"].astype(F32)
    ps3 = protos[sids][:, None, :]
    ws3 = ws.astype(F32)[:, None, :]
    onehot = jax.nn.one_hot(sids, n_spk, dtype=F32)[:, :, None]  # (B, n_spk, 1)

    wb = lambda a: a.astype(BF16)
    w3 = params["p_w3"]
    pw3a = wb(w3[:H, :])                                         # (H, 2H)
    pw3s = jnp.sum(w3[H:2 * H, :], axis=0, keepdims=True)        # (1, 2H) f32 (exact)
    wqkv = wb(jnp.concatenate([params["wq"], params["wk"], params["wv"]], axis=1))
    bqkv = jnp.concatenate([params["bq"], params["bk"], params["bv"]], axis=1)
    cw1r = wb(params["cw1"].reshape(5 * D, D))
    cw2r = wb(params["cw2"].reshape(5 * D, D))

    batched = [mels.astype(F32), pitch3, keep_col, keep_row, inv_len, ps3, ws3, onehot]
    weights = [
        wb(params["p_w1"]), params["p_b1"], wb(params["p_w2"]), params["p_b2"],
        pw3a, pw3s, params["p_b3"], wb(params["p_w4"]), params["p_b4"],
        wb(params["p_w5"]), params["p_b5"], params["p_w6row"], params["p_b6"],
        wb(params["s_w1"]), params["s_b1"], wb(params["s_w2"]), params["s_b2"],
        cw1r, params["cb1"], cw2r, params["cb2"],
        wqkv, bqkv, wb(params["wo"]), params["bo"],
        wb(params["wfc"]), params["bfc"], wb(params["wV"]), params["bV"],
        params["wscal"], params["bscal"], protos,
    ]

    def bat(a):       # batched: one batch element per grid step
        nd = a.ndim
        return pl.BlockSpec((1,) + a.shape[1:],
                            lambda b, _nd=nd: (b,) + (0,) * (_nd - 1))

    def rep(a):       # replicated (weights): same block every grid step -> DMA'd once
        nd = a.ndim
        return pl.BlockSpec(a.shape, lambda b, _nd=nd: (0,) * _nd)

    in_specs = [bat(a) for a in batched] + [rep(a) for a in weights]
    out_spec = pl.BlockSpec((1, 1, D), lambda b: (b, 0, 0))
    out_shape = jax.ShapeDtypeStruct((B, 1, D), F32)

    p_out, s_out, ce_out = pl.pallas_call(
        disc_kernel,
        grid=(B,),
        in_specs=in_specs,
        out_specs=(out_spec, out_spec, out_spec),
        out_shape=(out_shape, out_shape, out_shape),
        scratch_shapes=[pltpu.VMEM((T + 16, D), F32)],
        compiler_params=pltpu.CompilerParams(dimension_semantics=("parallel",)),
    )(*batched, *weights)

    p_val = p_out[:, 0, 0]
    s_val = s_out[:, 0, 0]
    cls_loss = jnp.mean(ce_out[:, 0, 0])   # mean over B of per-example CE
    return p_val, s_val, cls_loss


# ----------------------------------------------------------------------------
# Deterministic parameter init (mirrors torch layer shapes; stored (in, out))
# ----------------------------------------------------------------------------
def _uinit(key, shape, fan_in):
    bound = 1.0 / math.sqrt(fan_in)
    return jax.random.uniform(key, shape, F32, -bound, bound)


def init_params(key, n_speakers=4, style_dim=128, mel_dim=80, p_hidden=128):
    ks = iter(jax.random.split(key, 64))
    p = {}
    # PitchDiscriminator(80, 128)
    p["p_w1"] = _uinit(next(ks), (mel_dim, p_hidden), mel_dim)
    p["p_b1"] = _uinit(next(ks), (1, p_hidden), mel_dim)
    p["p_w2"] = _uinit(next(ks), (p_hidden, p_hidden), p_hidden)
    p["p_b2"] = _uinit(next(ks), (1, p_hidden), p_hidden)
    for i in (3, 4, 5):
        p[f"p_w{i}"] = _uinit(next(ks), (2 * p_hidden, 2 * p_hidden), 2 * p_hidden)
        p[f"p_b{i}"] = _uinit(next(ks), (1, 2 * p_hidden), 2 * p_hidden)
    p["p_w6row"] = _uinit(next(ks), (1, 2 * p_hidden), 2 * p_hidden)   # Linear(256->1), transposed
    p["p_b6"] = _uinit(next(ks), (1, 1), 2 * p_hidden)
    # StyleDiscriminator(n_speakers, 80, style_dim, style_dim, 5, 2)
    hd = style_dim
    p["protos"] = jax.random.normal(next(ks), (n_speakers, style_dim), F32)
    p["s_w1"] = _uinit(next(ks), (mel_dim, hd), mel_dim)
    p["s_b1"] = _uinit(next(ks), (1, hd), mel_dim)
    p["s_w2"] = _uinit(next(ks), (hd, hd), hd)
    p["s_b2"] = _uinit(next(ks), (1, hd), hd)
    for i in (1, 2):
        p[f"cw{i}"] = _uinit(next(ks), (5, hd, hd), hd * 5)            # (k, in, out)
        p[f"cb{i}"] = _uinit(next(ks), (1, hd), hd * 5)
    for name in ("wq", "wk", "wv", "wo", "wfc", "wV"):
        p[name] = _uinit(next(ks), (hd, hd), hd)
        p["b" + name[1:]] = _uinit(next(ks), (1, hd), hd)
    p["wscal"] = jnp.ones((1, 1), F32)
    p["bscal"] = jnp.zeros((1, 1), F32)
    return p


# ----------------------------------------------------------------------------
# Pure-JAX reference (same math; matmul operands cast to bf16 like the kernel)
# ----------------------------------------------------------------------------
def _mm(a, b):
    return jnp.matmul(a.astype(BF16), b.astype(BF16), preferred_element_type=F32)


def ref_discriminator(p, mels, ws, pitch, sids, mel_len):
    B, T, _ = mels.shape
    mask = mel_len[:, None] <= jnp.arange(T)[None, :]
    keep = (~mask).astype(F32)
    mels_m = mels * keep[:, :, None]

    # pitch discriminator
    h = _lrelu(_mm(mels_m, p["p_w1"]) + p["p_b1"])
    h = _lrelu(_mm(h, p["p_w2"]) + p["p_b2"])
    xs = jnp.concatenate([h, jnp.broadcast_to(pitch[:, :, None], h.shape)], axis=-1)
    xs = _lrelu(_mm(xs, p["p_w3"]) + p["p_b3"])
    xs = _lrelu(_mm(xs, p["p_w4"]) + p["p_b4"])
    xs = _lrelu(_mm(xs, p["p_w5"]) + p["p_b5"])
    t = jnp.sum(xs * p["p_w6row"], axis=-1) + p["p_b6"][0, 0]
    t = t * keep
    p_val = jnp.sum(t, axis=1) / mel_len.astype(F32)

    # cls loss (dot_product_logit + cross entropy), exact f32
    logits = jnp.sum(ws[:, None, :] * p["protos"][None, :, :], axis=-1)
    lse = jax.scipy.special.logsumexp(logits, axis=-1)
    tgt = jnp.take_along_axis(logits, sids[:, None], axis=1)[:, 0]
    cls_loss = jnp.mean(lse - tgt)

    # style discriminator
    x = _lrelu(_mm(mels_m, p["s_w1"]) + p["s_b1"])
    x = _lrelu(_mm(x, p["s_w2"]) + p["s_b2"])
    for cw, cb in ((p["cw1"], p["cb1"]), (p["cw2"], p["cb2"])):
        res = x
        xp = jnp.pad(x, ((0, 0), (2, 2), (0, 0)))
        acc = jnp.zeros_like(x)
        for k in range(5):
            acc = acc + _mm(xp[:, k:k + T, :], cw[k])
        x = res + _lrelu(acc + cb)
    residual = x
    q = _mm(x, p["wq"]) + p["bq"]
    k_ = _mm(x, p["wk"]) + p["bk"]
    v = _mm(x, p["wv"]) + p["bv"]
    D = q.shape[-1]
    scale = 1.0 / math.sqrt(float(D))
    outs = []
    for hd in range(2):
        sl = slice(hd * (D // 2), (hd + 1) * (D // 2))
        a = jnp.einsum("btd,bsd->bts", q[..., sl].astype(BF16), k_[..., sl].astype(BF16),
                       preferred_element_type=F32) * scale
        a = jnp.where(mask[:, None, :], -1e30, a)
        a = jax.nn.softmax(a, axis=-1)
        outs.append(jnp.einsum("bts,bsd->btd", a.astype(BF16), v[..., sl].astype(BF16),
                               preferred_element_type=F32))
    o = _mm(jnp.concatenate(outs, axis=-1), p["wo"]) + p["bo"]
    x = o + residual
    x = _mm(x, p["wfc"]) + p["bfc"]
    hpool = jnp.sum(x * keep[:, :, None], axis=1) / jnp.sum(keep, axis=1, keepdims=True)
    ps = p["protos"][sids]
    s_val = p["wscal"][0, 0] * jnp.sum((_mm(ps, p["wV"]) + p["bV"]) * hpool, axis=1) + p["bscal"][0, 0]
    return p_val, s_val, cls_loss


if __name__ == "__main__":
    B, T, MEL = 2, 192, 80          # T=192 is fixed by get_mask_from_lengths(mel_len, 192)
    N_SPK, STYLE_DIM = 4, 128       # hp.n_speakers, hp.style_dim

    root = jax.random.PRNGKey(0)
    kp, km, kw, kpit = jax.random.split(root, 4)
    params = init_params(kp, n_speakers=N_SPK, style_dim=STYLE_DIM, mel_dim=MEL, p_hidden=128)

    mels = jax.random.normal(km, (B, T, MEL), F32)
    style_embedding = jax.random.normal(kw, (B, STYLE_DIM), F32)
    pitch = jax.random.normal(kpit, (B, T), F32)
    sids = jnp.array([1, 3], dtype=jnp.int32)
    mel_len = jnp.array([120, 192], dtype=jnp.int32)

    fwd = jax.jit(discriminator_forward)
    p_val, s_val, cls_loss = fwd(params, mels, style_embedding, pitch, sids, mel_len)
    jax.block_until_ready((p_val, s_val, cls_loss))

    rp, rs, rc = ref_discriminator(params, mels, style_embedding, pitch, sids, mel_len)
    np.testing.assert_allclose(np.asarray(p_val), np.asarray(rp), rtol=2e-2, atol=2e-2)
    np.testing.assert_allclose(np.asarray(s_val), np.asarray(rs), rtol=2e-2, atol=2e-2)
    np.testing.assert_allclose(np.asarray(cls_loss), np.asarray(rc), rtol=2e-2, atol=2e-2)

    print("KERNEL_OK")
</pallas_src>

<mosaic_0001>
module attributes {stable_mosaic.version = 11 : i64} {
  func.func @disc_kernel(%arg0: i32, %arg1: memref<1x192x80xf32, #tpu.memory_space<vmem>>, %arg2: memref<1x192x1xf32, #tpu.memory_space<vmem>>, %arg3: memref<1x192x1xf32, #tpu.memory_space<vmem>>, %arg4: memref<1x1x192xf32, #tpu.memory_space<vmem>>, %arg5: memref<1x1x1xf32, #tpu.memory_space<vmem>>, %arg6: memref<1x1x128xf32, #tpu.memory_space<vmem>>, %arg7: memref<1x1x128xf32, #tpu.memory_space<vmem>>, %arg8: memref<1x4x1xf32, #tpu.memory_space<vmem>>, %arg9: memref<80x128xbf16, #tpu.memory_space<vmem>>, %arg10: memref<1x128xf32, #tpu.memory_space<vmem>>, %arg11: memref<128x128xbf16, #tpu.memory_space<vmem>>, %arg12: memref<1x128xf32, #tpu.memory_space<vmem>>, %arg13: memref<128x256xbf16, #tpu.memory_space<vmem>>, %arg14: memref<1x256xf32, #tpu.memory_space<vmem>>, %arg15: memref<1x256xf32, #tpu.memory_space<vmem>>, %arg16: memref<256x256xbf16, #tpu.memory_space<vmem>>, %arg17: memref<1x256xf32, #tpu.memory_space<vmem>>, %arg18: memref<256x256xbf16, #tpu.memory_space<vmem>>, %arg19: memref<1x256xf32, #tpu.memory_space<vmem>>, %arg20: memref<1x256xf32, #tpu.memory_space<vmem>>, %arg21: memref<1x1xf32, #tpu.memory_space<vmem>>, %arg22: memref<80x128xbf16, #tpu.memory_space<vmem>>, %arg23: memref<1x128xf32, #tpu.memory_space<vmem>>, %arg24: memref<128x128xbf16, #tpu.memory_space<vmem>>, %arg25: memref<1x128xf32, #tpu.memory_space<vmem>>, %arg26: memref<640x128xbf16, #tpu.memory_space<vmem>>, %arg27: memref<1x128xf32, #tpu.memory_space<vmem>>, %arg28: memref<640x128xbf16, #tpu.memory_space<vmem>>, %arg29: memref<1x128xf32, #tpu.memory_space<vmem>>, %arg30: memref<128x384xbf16, #tpu.memory_space<vmem>>, %arg31: memref<1x384xf32, #tpu.memory_space<vmem>>, %arg32: memref<128x128xbf16, #tpu.memory_space<vmem>>, %arg33: memref<1x128xf32, #tpu.memory_space<vmem>>, %arg34: memref<128x128xbf16, #tpu.memory_space<vmem>>, %arg35: memref<1x128xf32, #tpu.memory_space<vmem>>, %arg36: memref<128x128xbf16, #tpu.memory_space<vmem>>, %arg37: memref<1x128xf32, #tpu.memory_space<vmem>>, %arg38: memref<1x1xf32, #tpu.memory_space<vmem>>, %arg39: memref<1x1xf32, #tpu.memory_space<vmem>>, %arg40: memref<4x128xf32, #tpu.memory_space<vmem>>, %arg41: memref<1x1x128xf32, #tpu.memory_space<vmem>>, %arg42: memref<1x1x128xf32, #tpu.memory_space<vmem>>, %arg43: memref<1x1x128xf32, #tpu.memory_space<vmem>>, %arg44: memref<208x128xf32, #tpu.memory_space<vmem>>) attributes {dimension_semantics = [#tpu.dimension_semantics<parallel>], iteration_bounds = array<i64: 2>, scalar_prefetch = 0 : i64, scratch_operands = 1 : i64, tpu.core_type = #tpu.core_type<tc>, window_params = [{transform_indices = @transform_0, window_bounds = array<i64: 1, 192, 80>}, {transform_indices = @transform_1, window_bounds = array<i64: 1, 192, 1>}, {transform_indices = @transform_2, window_bounds = array<i64: 1, 192, 1>}, {transform_indices = @transform_3, window_bounds = array<i64: 1, 1, 192>}, {transform_indices = @transform_4, window_bounds = array<i64: 1, 1, 1>}, {transform_indices = @transform_5, window_bounds = array<i64: 1, 1, 128>}, {transform_indices = @transform_6, window_bounds = array<i64: 1, 1, 128>}, {transform_indices = @transform_7, window_bounds = array<i64: 1, 4, 1>}, {pipeline_mode = #tpu.pipeline_mode<synchronous>, transform_indices = @transform_8, window_bounds = array<i64: 80, 128>}, {pipeline_mode = #tpu.pipeline_mode<synchronous>, transform_indices = @transform_9, window_bounds = array<i64: 1, 128>}, {pipeline_mode = #tpu.pipeline_mode<synchronous>, transform_indices = @transform_10, window_bounds = array<i64: 128, 128>}, {pipeline_mode = #tpu.pipeline_mode<synchronous>, transform_indices = @transform_11, window_bounds = array<i64: 1, 128>}, {pipeline_mode = #tpu.pipeline_mode<synchronous>, transform_indices = @transform_12, window_bounds = array<i64: 128, 256>}, {pipeline_mode = #tpu.pipeline_mode<synchronous>, transform_indices = @transform_13, window_bounds = array<i64: 1, 256>}, {pipeline_mode = #tpu.pipeline_mode<synchronous>, transform_indices = @transform_14, window_bounds = array<i64: 1, 256>}, {pipeline_mode = #tpu.pipeline_mode<synchronous>, transform_indices = @transform_15, window_bounds = array<i64: 256, 256>}, {pipeline_mode = #tpu.pipeline_mode<synchronous>, transform_indices = @transform_16, window_bounds = array<i64: 1, 256>}, {pipeline_mode = #tpu.pipeline_mode<synchronous>, transform_indices = @transform_17, window_bounds = array<i64: 256, 256>}, {pipeline_mode = #tpu.pipeline_mode<synchronous>, transform_indices = @transform_18, window_bounds = array<i64: 1, 256>}, {pipeline_mode = #tpu.pipeline_mode<synchronous>, transform_indices = @transform_19, window_bounds = array<i64: 1, 256>}, {pipeline_mode = #tpu.pipeline_mode<synchronous>, transform_indices = @transform_20, window_bounds = array<i64: 1, 1>}, {pipeline_mode = #tpu.pipeline_mode<synchronous>, transform_indices = @transform_21, window_bounds = array<i64: 80, 128>}, {pipeline_mode = #tpu.pipeline_mode<synchronous>, transform_indices = @transform_22, window_bounds = array<i64: 1, 128>}, {pipeline_mode = #tpu.pipeline_mode<synchronous>, transform_indices = @transform_23, window_bounds = array<i64: 128, 128>}, {pipeline_mode = #tpu.pipeline_mode<synchronous>, transform_indices = @transform_24, window_bounds = array<i64: 1, 128>}, {pipeline_mode = #tpu.pipeline_mode<synchronous>, transform_indices = @transform_25, window_bounds = array<i64: 640, 128>}, {pipeline_mode = #tpu.pipeline_mode<synchronous>, transform_indices = @transform_26, window_bounds = array<i64: 1, 128>}, {pipeline_mode = #tpu.pipeline_mode<synchronous>, transform_indices = @transform_27, window_bounds = array<i64: 640, 128>}, {pipeline_mode = #tpu.pipeline_mode<synchronous>, transform_indices = @transform_28, window_bounds = array<i64: 1, 128>}, {pipeline_mode = #tpu.pipeline_mode<synchronous>, transform_indices = @transform_29, window_bounds = array<i64: 128, 384>}, {pipeline_mode = #tpu.pipeline_mode<synchronous>, transform_indices = @transform_30, window_bounds = array<i64: 1, 384>}, {pipeline_mode = #tpu.pipeline_mode<synchronous>, transform_indices = @transform_31, window_bounds = array<i64: 128, 128>}, {pipeline_mode = #tpu.pipeline_mode<synchronous>, transform_indices = @transform_32, window_bounds = array<i64: 1, 128>}, {pipeline_mode = #tpu.pipeline_mode<synchronous>, transform_indices = @transform_33, window_bounds = array<i64: 128, 128>}, {pipeline_mode = #tpu.pipeline_mode<synchronous>, transform_indices = @transform_34, window_bounds = array<i64: 1, 128>}, {pipeline_mode = #tpu.pipeline_mode<synchronous>, transform_indices = @transform_35, window_bounds = array<i64: 128, 128>}, {pipeline_mode = #tpu.pipeline_mode<synchronous>, transform_indices = @transform_36, window_bounds = array<i64: 1, 128>}, {pipeline_mode = #tpu.pipeline_mode<synchronous>, transform_indices = @transform_37, window_bounds = array<i64: 1, 1>}, {pipeline_mode = #tpu.pipeline_mode<synchronous>, transform_indices = @transform_38, window_bounds = array<i64: 1, 1>}, {pipeline_mode = #tpu.pipeline_mode<synchronous>, transform_indices = @transform_39, window_bounds = array<i64: 4, 128>}, {transform_indices = @transform_40, window_bounds = array<i64: 1, 1, 128>}, {transform_indices = @transform_41, window_bounds = array<i64: 1, 1, 128>}, {transform_indices = @transform_42, window_bounds = array<i64: 1, 1, 128>}]} {
    %c0 = arith.constant 0 : index
    %c0_0 = arith.constant 0 : index
    %c0_1 = arith.constant 0 : index
    %0 = vector.load %arg3[%c0, %c0_0, %c0_1] : memref<1x192x1xf32, #tpu.memory_space<vmem>>, vector<1x192x1xf32>
    %1 = vector.shape_cast %0 : vector<1x192x1xf32> to vector<192x1xf32>
    %c0_2 = arith.constant 0 : index
    %c0_3 = arith.constant 0 : index
    %c0_4 = arith.constant 0 : index
    %2 = vector.load %arg5[%c0_2, %c0_3, %c0_4] : memref<1x1x1xf32, #tpu.memory_space<vmem>>, vector<1x1x1xf32>
    %3 = vector.shape_cast %2 : vector<1x1x1xf32> to vector<1x1xf32>
    %cst = arith.constant 0.000000e+00 : f32
    %4 = vector.broadcast %cst : f32 to vector<8x128xf32>
    %c0_5 = arith.constant 0 : index
    %c0_6 = arith.constant 0 : index
    %5 = vector.load %arg44[%c0_5, %c0_6] : memref<208x128xf32, #tpu.memory_space<vmem>>, vector<8x128xf32>
    tpu.vector_store %arg44[%c0_5, %c0_6], %4 {strides = array<i32>} : memref<208x128xf32, #tpu.memory_space<vmem>>, vector<8x128xf32>,
    %cst_7 = arith.constant 0.000000e+00 : f32
    %6 = vector.broadcast %cst_7 : f32 to vector<8x128xf32>
    %c200 = arith.constant 200 : index
    %c0_8 = arith.constant 0 : index
    %7 = vector.load %arg44[%c200, %c0_8] : memref<208x128xf32, #tpu.memory_space<vmem>>, vector<8x128xf32>
    tpu.vector_store %arg44[%c200, %c0_8], %6 {strides = array<i32>} : memref<208x128xf32, #tpu.memory_space<vmem>>, vector<8x128xf32>,
    %c0_9 = arith.constant 0 : index
    %c0_10 = arith.constant 0 : index
    %c0_11 = arith.constant 0 : index
    %8 = vector.load %arg1[%c0_9, %c0_10, %c0_11] : memref<1x192x80xf32, #tpu.memory_space<vmem>>, vector<1x192x80xf32>
    %9 = vector.shape_cast %8 : vector<1x192x80xf32> to vector<192x80xf32>
    %10 = vector.broadcast %1 : vector<192x1xf32> to vector<192x80xf32>
    %11 = arith.mulf %9, %10 : vector<192x80xf32>
    %12 = arith.truncf %11 : vector<192x80xf32> to vector<192x80xbf16>
    %c0_12 = arith.constant 0 : index
    %c0_13 = arith.constant 0 : index
    %13 = vector.load %arg9[%c0_12, %c0_13] : memref<80x128xbf16, #tpu.memory_space<vmem>>, vector<80x128xbf16>
    %cst_14 = arith.constant dense<0.000000e+00> : vector<192x128xf32>
    %14 = tpu.matmul %12, %13, %cst_14 {dimension_numbers = #tpu.dot_dimension_numbers<[1], [0], [0], [1], [0, 0, 1, 1], [], []>} : vector<192x80xbf16>, vector<80x128xbf16>, vector<192x128xf32> -> vector<192x128xf32>
    %c0_15 = arith.constant 0 : index
    %c0_16 = arith.constant 0 : index
    %15 = vector.load %arg10[%c0_15, %c0_16] : memref<1x128xf32, #tpu.memory_space<vmem>>, vector<1x128xf32>
    %16 = vector.broadcast %15 : vector<1x128xf32> to vector<192x128xf32>
    %17 = arith.addf %14, %16 : vector<192x128xf32>
    %cst_17 = arith.constant 0.000000e+00 : f32
    %18 = vector.broadcast %cst_17 : f32 to vector<192x128xf32>
    %19 = arith.cmpf ogt, %17, %18 : vector<192x128xf32>
    %cst_18 = arith.constant 1.000000e-01 : f32
    %20 = vector.broadcast %cst_18 : f32 to vector<192x128xf32>
    %21 = arith.mulf %20, %17 : vector<192x128xf32>
    %22 = arith.select %19, %17, %21 : vector<192x128xi1>, vector<192x128xf32>
    %23 = arith.truncf %22 : vector<192x128xf32> to vector<192x128xbf16>
    %c0_19 = arith.constant 0 : index
    %c0_20 = arith.constant 0 : index
    %24 = vector.load %arg11[%c0_19, %c0_20] : memref<128x128xbf16, #tpu.memory_space<vmem>>, vector<128x128xbf16>
    %cst_21 = arith.constant dense<0.000000e+00> : vector<192x128xf32>
    %25 = tpu.matmul %23, %24, %cst_21 {dimension_numbers = #tpu.dot_dimension_numbers<[1], [0], [0], [1], [0, 0, 1, 1], [], []>} : vector<192x128xbf16>, vector<128x128xbf16>, vector<192x128xf32> -> vector<192x128xf32>
    %c0_22 = arith.constant 0 : index
    %c0_23 = arith.constant 0 : index
    %26 = vector.load %arg12[%c0_22, %c0_23] : memref<1x128xf32, #tpu.memory_space<vmem>>, vector<1x128xf32>
    %27 = vector.broadcast %26 : vector<1x128xf32> to vector<192x128xf32>
    %28 = arith.addf %25, %27 : vector<192x128xf32>
    %cst_24 = arith.constant 0.000000e+00 : f32
    %29 = vector.broadcast %cst_24 : f32 to vector<192x128xf32>
    %30 = arith.cmpf ogt, %28, %29 : vector<192x128xf32>
    %cst_25 = arith.constant 1.000000e-01 : f32
    %31 = vector.broadcast %cst_25 : f32 to vector<192x128xf32>
    %32 = arith.mulf %31, %28 : vector<192x128xf32>
    %33 = arith.select %30, %28, %32 : vector<192x128xi1>, vector<192x128xf32>
    %34 = arith.truncf %33 : vector<192x128xf32> to vector<192x128xbf16>
    %c0_26 = arith.constant 0 : index
    %c0_27 = arith.constant 0 : index
    %35 = vector.load %arg13[%c0_26, %c0_27] : memref<128x256xbf16, #tpu.memory_space<vmem>>, vector<128x256xbf16>
    %cst_28 = arith.constant dense<0.000000e+00> : vector<192x256xf32>
    %36 = tpu.matmul %34, %35, %cst_28 {dimension_numbers = #tpu.dot_dimension_numbers<[1], [0], [0], [1], [0, 0, 1, 1], [], []>} : vector<192x128xbf16>, vector<128x256xbf16>, vector<192x256xf32> -> vector<192x256xf32>
    %c0_29 = arith.constant 0 : index
    %c0_30 = arith.constant 0 : index
    %c0_31 = arith.constant 0 : index
    %37 = vector.load %arg2[%c0_29, %c0_30, %c0_31] : memref<1x192x1xf32, #tpu.memory_space<vmem>>, vector<1x192x1xf32>
    %38 = vector.shape_cast %37 : vector<1x192x1xf32> to vector<192x1xf32>
    %c0_32 = arith.constant 0 : index
    %c0_33 = arith.constant 0 : index
    %39 = vector.load %arg14[%c0_32, %c0_33] : memref<1x256xf32, #tpu.memory_space<vmem>>, vector<1x256xf32>
    %40 = vector.broadcast %38 : vector<192x1xf32> to vector<192x256xf32>
    %41 = vector.broadcast %39 : vector<1x256xf32> to vector<192x256xf32>
    %42 = arith.mulf %40, %41 : vector<192x256xf32>
    %43 = arith.addf %36, %42 : vector<192x256xf32>
    %c0_34 = arith.constant 0 : index
    %c0_35 = arith.constant 0 : index
    %44 = vector.load %arg15[%c0_34, %c0_35] : memref<1x256xf32, #tpu.memory_space<vmem>>, vector<1x256xf32>
    %45 = vector.broadcast %44 : vector<1x256xf32> to vector<192x256xf32>
    %46 = arith.addf %43, %45 : vector<192x256xf32>
    %cst_36 = arith.constant 0.000000e+00 : f32
    %47 = vector.broadcast %cst_36 : f32 to vector<192x256xf32>
    %48 = arith.cmpf ogt, %46, %47 : vector<192x256xf32>
    %cst_37 = arith.constant 1.000000e-01 : f32
    %49 = vector.broadcast %cst_37 : f32 to vector<192x256xf32>
    %50 = arith.mulf %49, %46 : vector<192x256xf32>
    %51 = arith.select %48, %46, %50 : vector<192x256xi1>, vector<192x256xf32>
    %52 = arith.truncf %51 : vector<192x256xf32> to vector<192x256xbf16>
    %c0_38 = arith.constant 0 : index
    %c0_39 = arith.constant 0 : index
    %53 = vector.load %arg16[%c0_38, %c0_39] : memref<256x256xbf16, #tpu.memory_space<vmem>>, vector<256x256xbf16>
    %cst_40 = arith.constant dense<0.000000e+00> : vector<192x256xf32>
    %54 = tpu.matmul %52, %53, %cst_40 {dimension_numbers = #tpu.dot_dimension_numbers<[1], [0], [0], [1], [0, 0, 1, 1], [], []>} : vector<192x256xbf16>, vector<256x256xbf16>, vector<192x256xf32> -> vector<192x256xf32>
    %c0_41 = arith.constant 0 : index
    %c0_42 = arith.constant 0 : index
    %55 = vector.load %arg17[%c0_41, %c0_42] : memref<1x256xf32, #tpu.memory_space<vmem>>, vector<1x256xf32>
    %56 = vector.broadcast %55 : vector<1x256xf32> to vector<192x256xf32>
    %57 = arith.addf %54, %56 : vector<192x256xf32>
    %cst_43 = arith.constant 0.000000e+00 : f32
    %58 = vector.broadcast %cst_43 : f32 to vector<192x256xf32>
    %59 = arith.cmpf ogt, %57, %58 : vector<192x256xf32>
    %cst_44 = arith.constant 1.000000e-01 : f32
    %60 = vector.broadcast %cst_44 : f32 to vector<192x256xf32>
    %61 = arith.mulf %60, %57 : vector<192x256xf32>
    %62 = arith.select %59, %57, %61 : vector<192x256xi1>, vector<192x256xf32>
    %63 = arith.truncf %62 : vector<192x256xf32> to vector<192x256xbf16>
    %c0_45 = arith.constant 0 : index
    %c0_46 = arith.constant 0 : index
    %64 = vector.load %arg18[%c0_45, %c0_46] : memref<256x256xbf16, #tpu.memory_space<vmem>>, vector<256x256xbf16>
    %cst_47 = arith.constant dense<0.000000e+00> : vector<192x256xf32>
    %65 = tpu.matmul %63, %64, %cst_47 {dimension_numbers = #tpu.dot_dimension_numbers<[1], [0], [0], [1], [0, 0, 1, 1], [], []>} : vector<192x256xbf16>, vector<256x256xbf16>, vector<192x256xf32> -> vector<192x256xf32>
    %c0_48 = arith.constant 0 : index
    %c0_49 = arith.constant 0 : index
    %66 = vector.load %arg19[%c0_48, %c0_49] : memref<1x256xf32, #tpu.memory_space<vmem>>, vector<1x256xf32>
    %67 = vector.broadcast %66 : vector<1x256xf32> to vector<192x256xf32>
    %68 = arith.addf %65, %67 : vector<192x256xf32>
    %cst_50 = arith.constant 0.000000e+00 : f32
    %69 = vector.broadcast %cst_50 : f32 to vector<192x256xf32>
    %70 = arith.cmpf ogt, %68, %69 : vector<192x256xf32>
    %cst_51 = arith.constant 1.000000e-01 : f32
    %71 = vector.broadcast %cst_51 : f32 to vector<192x256xf32>
    %72 = arith.mulf %71, %68 : vector<192x256xf32>
    %73 = arith.select %70, %68, %72 : vector<192x256xi1>, vector<192x256xf32>
    %c0_52 = arith.constant 0 : index
    %c0_53 = arith.constant 0 : index
    %74 = vector.load %arg20[%c0_52, %c0_53] : memref<1x256xf32, #tpu.memory_space<vmem>>, vector<1x256xf32>
    %75 = vector.broadcast %74 : vector<1x256xf32> to vector<192x256xf32>
    %76 = arith.mulf %73, %75 : vector<192x256xf32>
    %cst_54 = arith.constant dense<0.000000e+00> : vector<192xf32>
    %77 = vector.multi_reduction <add>, %76, %cst_54 [1] : vector<192x256xf32> to vector<192xf32>
    %78 = vector.shape_cast %77 : vector<192xf32> to vector<192x1xf32>
    %c0_55 = arith.constant 0 : index
    %c0_56 = arith.constant 0 : index
    %79 = vector.load %arg21[%c0_55, %c0_56] : memref<1x1xf32, #tpu.memory_space<vmem>>, vector<1x1xf32>
    %80 = vector.broadcast %79 : vector<1x1xf32> to vector<192x1xf32>
    %81 = arith.addf %78, %80 : vector<192x1xf32>
    %82 = arith.mulf %81, %1 : vector<192x1xf32>
    %cst_57 = arith.constant dense<0.000000e+00> : vector<1xf32>
    %83 = vector.multi_reduction <add>, %82, %cst_57 [0] : vector<192x1xf32> to vector<1xf32>
    %84 = vector.shape_cast %83 : vector<1xf32> to vector<1x1xf32>
    %85 = arith.mulf %84, %3 : vector<1x1xf32>
    %86 = vector.shape_cast %85 : vector<1x1xf32> to vector<1x1xf32>
    %87 = vector.broadcast %86 : vector<1x1xf32> to vector<1x128xf32>
    %c0_58 = arith.constant 0 : index
    %c0_59 = arith.constant 0 : index
    %c0_60 = arith.constant 0 : index
    %88 = vector.load %arg41[%c0_58, %c0_59, %c0_60] : memref<1x1x128xf32, #tpu.memory_space<vmem>>, vector<1x1x128xf32>
    %89 = vector.shape_cast %88 : vector<1x1x128xf32> to vector<1x128xf32>
    %90 = vector.shape_cast %87 : vector<1x128xf32> to vector<1x1x128xf32>
    tpu.vector_store %arg41[%c0_58, %c0_59, %c0_60], %90 {strides = array<i32>} : memref<1x1x128xf32, #tpu.memory_space<vmem>>, vector<1x1x128xf32>,
    %c0_61 = arith.constant 0 : index
    %c0_62 = arith.constant 0 : index
    %c0_63 = arith.constant 0 : index
    %91 = vector.load %arg7[%c0_61, %c0_62, %c0_63] : memref<1x1x128xf32, #tpu.memory_space<vmem>>, vector<1x1x128xf32>
    %92 = vector.shape_cast %91 : vector<1x1x128xf32> to vector<1x128xf32>
    %c0_64 = arith.constant 0 : index
    %c0_65 = arith.constant 0 : index
    %93 = vector.load %arg40[%c0_64, %c0_65] : memref<4x128xf32, #tpu.memory_space<vmem>>, vector<4x128xf32>
    %94 = vector.broadcast %92 : vector<1x128xf32> to vector<4x128xf32>
    %95 = arith.mulf %94, %93 : vector<4x128xf32>
    %cst_66 = arith.constant dense<0.000000e+00> : vector<4xf32>
    %96 = vector.multi_reduction <add>, %95, %cst_66 [1] : vector<4x128xf32> to vector<4xf32>
    %97 = vector.shape_cast %96 : vector<4xf32> to vector<4x1xf32>
    %cst_67 = arith.constant dense<0xFF800000> : vector<1xf32>
    %98 = vector.multi_reduction <maximumf>, %97, %cst_67 [0] : vector<4x1xf32> to vector<1xf32>
    %99 = vector.shape_cast %98 : vector<1xf32> to vector<1x1xf32>
    %100 = vector.broadcast %99 : vector<1x1xf32> to vector<4x1xf32>
    %101 = arith.subf %97, %100 : vector<4x1xf32>
    %102 = math.exp %101 : vector<4x1xf32>
    %cst_68 = arith.constant dense<0.000000e+00> : vector<1xf32>
    %103 = vector.multi_reduction <add>, %102, %cst_68 [0] : vector<4x1xf32> to vector<1xf32>
    %104 = vector.shape_cast %103 : vector<1xf32> to vector<1x1xf32>
    %105 = math.log %104 : vector<1x1xf32>
    %106 = arith.addf %99, %105 : vector<1x1xf32>
    %c0_69 = arith.constant 0 : index
    %c0_70 = arith.constant 0 : index
    %c0_71 = arith.constant 0 : index
    %107 = vector.load %arg8[%c0_69, %c0_70, %c0_71] : memref<1x4x1xf32, #tpu.memory_space<vmem>>, vector<1x4x1xf32>
    %108 = vector.shape_cast %107 : vector<1x4x1xf32> to vector<4x1xf32>
    %109 = arith.mulf %97, %108 : vector<4x1xf32>
    %cst_72 = arith.constant dense<0.000000e+00> : vector<1xf32>
    %110 = vector.multi_reduction <add>, %109, %cst_72 [0] : vector<4x1xf32> to vector<1xf32>
    %111 = vector.shape_cast %110 : vector<1xf32> to vector<1x1xf32>
    %112 = arith.subf %106, %111 : vector<1x1xf32>
    %113 = vector.shape_cast %112 : vector<1x1xf32> to vector<1x1xf32>
    %114 = vector.broadcast %113 : vector<1x1xf32> to vector<1x128xf32>
    %c0_73 = arith.constant 0 : index
    %c0_74 = arith.constant 0 : index
    %c0_75 = arith.constant 0 : index
    %115 = vector.load %arg43[%c0_73, %c0_74, %c0_75] : memref<1x1x128xf32, #tpu.memory_space<vmem>>, vector<1x1x128xf32>
    %116 = vector.shape_cast %115 : vector<1x1x128xf32> to vector<1x128xf32>
    %117 = vector.shape_cast %114 : vector<1x128xf32> to vector<1x1x128xf32>
    tpu.vector_store %arg43[%c0_73, %c0_74, %c0_75], %117 {strides = array<i32>} : memref<1x1x128xf32, #tpu.memory_space<vmem>>, vector<1x1x128xf32>,
    %c0_76 = arith.constant 0 : index
    %c0_77 = arith.constant 0 : index
    %118 = vector.load %arg22[%c0_76, %c0_77] : memref<80x128xbf16, #tpu.memory_space<vmem>>, vector<80x128xbf16>
    %cst_78 = arith.constant dense<0.000000e+00> : vector<192x128xf32>
    %119 = tpu.matmul %12, %118, %cst_78 {dimension_numbers = #tpu.dot_dimension_numbers<[1], [0], [0], [1], [0, 0, 1, 1], [], []>} : vector<192x80xbf16>, vector<80x128xbf16>, vector<192x128xf32> -> vector<192x128xf32>
    %c0_79 = arith.constant 0 : index
    %c0_80 = arith.constant 0 : index
    %120 = vector.load %arg23[%c0_79, %c0_80] : memref<1x128xf32, #tpu.memory_space<vmem>>, vector<1x128xf32>
    %121 = vector.broadcast %120 : vector<1x128xf32> to vector<192x128xf32>
    %122 = arith.addf %119, %121 : vector<192x128xf32>
    %cst_81 = arith.constant 0.000000e+00 : f32
    %123 = vector.broadcast %cst_81 : f32 to vector<192x128xf32>
    %124 = arith.cmpf ogt, %122, %123 : vector<192x128xf32>
    %cst_82 = arith.constant 1.000000e-01 : f32
    %125 = vector.broadcast %cst_82 : f32 to vector<192x128xf32>
    %126 = arith.mulf %125, %122 : vector<192x128xf32>
    %127 = arith.select %124, %122, %126 : vector<192x128xi1>, vector<192x128xf32>
    %128 = arith.truncf %127 : vector<192x128xf32> to vector<192x128xbf16>
    %c0_83 = arith.constant 0 : index
    %c0_84 = arith.constant 0 : index
    %129 = vector.load %arg24[%c0_83, %c0_84] : memref<128x128xbf16, #tpu.memory_space<vmem>>, vector<128x128xbf16>
    %cst_85 = arith.constant dense<0.000000e+00> : vector<192x128xf32>
    %130 = tpu.matmul %128, %129, %cst_85 {dimension_numbers = #tpu.dot_dimension_numbers<[1], [0], [0], [1], [0, 0, 1, 1], [], []>} : vector<192x128xbf16>, vector<128x128xbf16>, vector<192x128xf32> -> vector<192x128xf32>
    %c0_86 = arith.constant 0 : index
    %c0_87 = arith.constant 0 : index
    %131 = vector.load %arg25[%c0_86, %c0_87] : memref<1x128xf32, #tpu.memory_space<vmem>>, vector<1x128xf32>
    %132 = vector.broadcast %131 : vector<1x128xf32> to vector<192x128xf32>
    %133 = arith.addf %130, %132 : vector<192x128xf32>
    %cst_88 = arith.constant 0.000000e+00 : f32
    %134 = vector.broadcast %cst_88 : f32 to vector<192x128xf32>
    %135 = arith.cmpf ogt, %133, %134 : vector<192x128xf32>
    %cst_89 = arith.constant 1.000000e-01 : f32
    %136 = vector.broadcast %cst_89 : f32 to vector<192x128xf32>
    %137 = arith.mulf %136, %133 : vector<192x128xf32>
    %138 = arith.select %135, %133, %137 : vector<192x128xi1>, vector<192x128xf32>
    %c8 = arith.constant 8 : index
    %c0_90 = arith.constant 0 : index
    %139 = vector.load %arg44[%c8, %c0_90] : memref<208x128xf32, #tpu.memory_space<vmem>>, vector<192x128xf32>
    tpu.vector_store %arg44[%c8, %c0_90], %138 {strides = array<i32>} : memref<208x128xf32, #tpu.memory_space<vmem>>, vector<192x128xf32>,
    %c6 = arith.constant 6 : index
    %c0_91 = arith.constant 0 : index
    %140 = vector.load %arg44[%c6, %c0_91] : memref<208x128xf32, #tpu.memory_space<vmem>>, vector<192x128xf32>
    %c7 = arith.constant 7 : index
    %c0_92 = arith.constant 0 : index
    %141 = vector.load %arg44[%c7, %c0_92] : memref<208x128xf32, #tpu.memory_space<vmem>>, vector<192x128xf32>
    %c9 = arith.constant 9 : index
    %c0_93 = arith.constant 0 : index
    %142 = vector.load %arg44[%c9, %c0_93] : memref<208x128xf32, #tpu.memory_space<vmem>>, vector<192x128xf32>
    %c10 = arith.constant 10 : index
    %c0_94 = arith.constant 0 : index
    %143 = vector.load %arg44[%c10, %c0_94] : memref<208x128xf32, #tpu.memory_space<vmem>>, vector<192x128xf32>
    %144 = tpu.concatenate %140, %141, %138, %142, %143 in 1 : vector<192x128xf32>, vector<192x128xf32>, vector<192x128xf32>, vector<192x128xf32>, vector<192x128xf32> -> vector<192x640xf32>
    %145 = arith.truncf %144 : vector<192x640xf32> to vector<192x640xbf16>
    %c0_95 = arith.constant 0 : index
    %c0_96 = arith.constant 0 : index
    %146 = vector.load %arg26[%c0_95, %c0_96] : memref<640x128xbf16, #tpu.memory_space<vmem>>, vector<640x128xbf16>
    %cst_97 = arith.constant dense<0.000000e+00> : vector<192x128xf32>
    %147 = tpu.matmul %145, %146, %cst_97 {dimension_numbers = #tpu.dot_dimension_numbers<[1], [0], [0], [1], [0, 0, 1, 1], [], []>} : vector<192x640xbf16>, vector<640x128xbf16>, vector<192x128xf32> -> vector<192x128xf32>
    %c0_98 = arith.constant 0 : index
    %c0_99 = arith.constant 0 : index
    %148 = vector.load %arg27[%c0_98, %c0_99] : memref<1x128xf32, #tpu.memory_space<vmem>>, vector<1x128xf32>
    %149 = vector.broadcast %148 : vector<1x128xf32> to vector<192x128xf32>
    %150 = arith.addf %147, %149 : vector<192x128xf32>
    %cst_100 = arith.constant 0.000000e+00 : f32
    %151 = vector.broadcast %cst_100 : f32 to vector<192x128xf32>
    %152 = arith.cmpf ogt, %150, %151 : vector<192x128xf32>
    %cst_101 = arith.constant 1.000000e-01 : f32
    %153 = vector.broadcast %cst_101 : f32 to vector<192x128xf32>
    %154 = arith.mulf %153, %150 : vector<192x128xf32>
    %155 = arith.select %152, %150, %154 : vector<192x128xi1>, vector<192x128xf32>
    %156 = arith.addf %138, %155 : vector<192x128xf32>
    %c8_102 = arith.constant 8 : index
    %c0_103 = arith.constant 0 : index
    %157 = vector.load %arg44[%c8_102, %c0_103] : memref<208x128xf32, #tpu.memory_space<vmem>>, vector<192x128xf32>
    tpu.vector_store %arg44[%c8_102, %c0_103], %156 {strides = array<i32>} : memref<208x128xf32, #tpu.memory_space<vmem>>, vector<192x128xf32>,
    %c6_104 = arith.constant 6 : index
    %c0_105 = arith.constant 0 : index
    %158 = vector.load %arg44[%c6_104, %c0_105] : memref<208x128xf32, #tpu.memory_space<vmem>>, vector<192x128xf32>
    %c7_106 = arith.constant 7 : index
    %c0_107 = arith.constant 0 : index
    %159 = vector.load %arg44[%c7_106, %c0_107] : memref<208x128xf32, #tpu.memory_space<vmem>>, vector<192x128xf32>
    %c9_108 = arith.constant 9 : index
    %c0_109 = arith.constant 0 : index
    %160 = vector.load %arg44[%c9_108, %c0_109] : memref<208x128xf32, #tpu.memory_space<vmem>>, vector<192x128xf32>
    %c10_110 = arith.constant 10 : index
    %c0_111 = arith.constant 0 : index
    %161 = vector.load %arg44[%c10_110, %c0_111] : memref<208x128xf32, #tpu.memory_space<vmem>>, vector<192x128xf32>
    %162 = tpu.concatenate %158, %159, %156, %160, %161 in 1 : vector<192x128xf32>, vector<192x128xf32>, vector<192x128xf32>, vector<192x128xf32>, vector<192x128xf32> -> vector<192x640xf32>
    %163 = arith.truncf %162 : vector<192x640xf32> to vector<192x640xbf16>
    %c0_112 = arith.constant 0 : index
    %c0_113 = arith.constant 0 : index
    %164 = vector.load %arg28[%c0_112, %c0_113] : memref<640x128xbf16, #tpu.memory_space<vmem>>, vector<640x128xbf16>
    %cst_114 = arith.constant dense<0.000000e+00> : vector<192x128xf32>
    %165 = tpu.matmul %163, %164, %cst_114 {dimension_numbers = #tpu.dot_dimension_numbers<[1], [0], [0], [1], [0, 0, 1, 1], [], []>} : vector<192x640xbf16>, vector<640x128xbf16>, vector<192x128xf32> -> vector<192x128xf32>
    %c0_115 = arith.constant 0 : index
    %c0_116 = arith.constant 0 : index
    %166 = vector.load %arg29[%c0_115, %c0_116] : memref<1x128xf32, #tpu.memory_space<vmem>>, vector<1x128xf32>
    %167 = vector.broadcast %166 : vector<1x128xf32> to vector<192x128xf32>
    %168 = arith.addf %165, %167 : vector<192x128xf32>
    %cst_117 = arith.constant 0.000000e+00 : f32
    %169 = vector.broadcast %cst_117 : f32 to vector<192x128xf32>
    %170 = arith.cmpf ogt, %168, %169 : vector<192x128xf32>
    %cst_118 = arith.constant 1.000000e-01 : f32
    %171 = vector.broadcast %cst_118 : f32 to vector<192x128xf32>
    %172 = arith.mulf %171, %168 : vector<192x128xf32>
    %173 = arith.select %170, %168, %172 : vector<192x128xi1>, vector<192x128xf32>
    %174 = arith.addf %156, %173 : vector<192x128xf32>
    %175 = arith.truncf %174 : vector<192x128xf32> to vector<192x128xbf16>
    %c0_119 = arith.constant 0 : index
    %c0_120 = arith.constant 0 : index
    %176 = vector.load %arg30[%c0_119, %c0_120] : memref<128x384xbf16, #tpu.memory_space<vmem>>, vector<128x384xbf16>
    %cst_121 = arith.constant dense<0.000000e+00> : vector<192x384xf32>
    %177 = tpu.matmul %175, %176, %cst_121 {dimension_numbers = #tpu.dot_dimension_numbers<[1], [0], [0], [1], [0, 0, 1, 1], [], []>} : vector<192x128xbf16>, vector<128x384xbf16>, vector<192x384xf32> -> vector<192x384xf32>
    %c0_122 = arith.constant 0 : index
    %c0_123 = arith.constant 0 : index
    %178 = vector.load %arg31[%c0_122, %c0_123] : memref<1x384xf32, #tpu.memory_space<vmem>>, vector<1x384xf32>
    %179 = vector.broadcast %178 : vector<1x384xf32> to vector<192x384xf32>
    %180 = arith.addf %177, %179 : vector<192x384xf32>
    %181 = vector.extract_strided_slice %180 {offsets = [0, 0], sizes = [192, 128], strides = [1, 1]} : vector<192x384xf32> to vector<192x128xf32>
    %182 = vector.extract_strided_slice %180 {offsets = [0, 128], sizes = [192, 128], strides = [1, 1]} : vector<192x384xf32> to vector<192x128xf32>
    %183 = vector.extract_strided_slice %180 {offsets = [0, 256], sizes = [192, 128], strides = [1, 1]} : vector<192x384xf32> to vector<192x128xf32>
    %c0_124 = arith.constant 0 : index
    %c0_125 = arith.constant 0 : index
    %c0_126 = arith.constant 0 : index
    %184 = vector.load %arg4[%c0_124, %c0_125, %c0_126] : memref<1x1x192xf32, #tpu.memory_space<vmem>>, vector<1x1x192xf32>
    %185 = vector.shape_cast %184 : vector<1x1x192xf32> to vector<1x192xf32>
    %cst_127 = arith.constant 1.000000e+00 : f32
    %186 = vector.broadcast %cst_127 : f32 to vector<1x192xf32>
    %187 = arith.subf %185, %186 : vector<1x192xf32>
    %cst_128 = arith.constant 1.000000e+30 : f32
    %188 = vector.broadcast %cst_128 : f32 to vector<1x192xf32>
    %189 = arith.mulf %187, %188 : vector<1x192xf32>
    %cst_129 = arith.constant 0.000000e+00 : f32
    %190 = vector.broadcast %cst_129 : f32 to vector<192x128xf32>
    %191 = vector.extract_strided_slice %181 {offsets = [0, 0], sizes = [192, 64], strides = [1, 1]} : vector<192x128xf32> to vector<192x64xf32>
    %192 = arith.truncf %191 : vector<192x64xf32> to vector<192x64xbf16>
    %193 = vector.extract_strided_slice %182 {offsets = [0, 0], sizes = [192, 64], strides = [1, 1]} : vector<192x128xf32> to vector<192x64xf32>
    %194 = arith.truncf %193 : vector<192x64xf32> to vector<192x64xbf16>
    %195 = vector.extract_strided_slice %183 {offsets = [0, 0], sizes = [192, 64], strides = [1, 1]} : vector<192x128xf32> to vector<192x64xf32>
    %196 = arith.truncf %195 : vector<192x64xf32> to vector<192x64xbf16>
    %cst_130 = arith.constant dense<0.000000e+00> : vector<192x192xf32>
    %197 = tpu.matmul %192, %194, %cst_130 {dimension_numbers = #tpu.dot_dimension_numbers<[1], [1], [0], [0], [0, 0, 1, 0], [], []>} : vector<192x64xbf16>, vector<192x64xbf16>, vector<192x192xf32> -> vector<192x192xf32>
    %cst_131 = arith.constant 0.0883883461 : f32
    %198 = vector.broadcast %cst_131 : f32 to vector<192x192xf32>
    %199 = arith.mulf %197, %198 : vector<192x192xf32>
    %200 = vector.broadcast %189 : vector<1x192xf32> to vector<192x192xf32>
    %201 = arith.addf %199, %200 : vector<192x192xf32>
    %cst_132 = arith.constant dense<0xFF800000> : vector<192xf32>
    %202 = vector.multi_reduction <maximumf>, %201, %cst_132 [1] : vector<192x192xf32> to vector<192xf32>
    %203 = vector.shape_cast %202 : vector<192xf32> to vector<192x1xf32>
    %204 = vector.broadcast %203 : vector<192x1xf32> to vector<192x192xf32>
    %205 = arith.subf %201, %204 : vector<192x192xf32>
    %206 = math.exp %205 : vector<192x192xf32>
    %cst_133 = arith.constant dense<0.000000e+00> : vector<192xf32>
    %207 = vector.multi_reduction <add>, %206, %cst_133 [1] : vector<192x192xf32> to vector<192xf32>
    %208 = vector.shape_cast %207 : vector<192xf32> to vector<192x1xf32>
    %209 = tpu.reciprocal %208 {approx = true} : vector<192x1xf32> -> vector<192x1xf32>
    %210 = vector.broadcast %209 : vector<192x1xf32> to vector<192x192xf32>
    %211 = arith.mulf %206, %210 : vector<192x192xf32>
    %212 = arith.truncf %211 : vector<192x192xf32> to vector<192x192xbf16>
    %cst_134 = arith.constant dense<0.000000e+00> : vector<192x64xf32>
    %213 = tpu.matmul %212, %196, %cst_134 {dimension_numbers = #tpu.dot_dimension_numbers<[1], [0], [0], [1], [0, 0, 1, 1], [], []>} : vector<192x192xbf16>, vector<192x64xbf16>, vector<192x64xf32> -> vector<192x64xf32>
    %214 = arith.truncf %213 : vector<192x64xf32> to vector<192x64xbf16>
    %c0_135 = arith.constant 0 : index
    %c0_136 = arith.constant 0 : index
    %215 = vector.load %arg32[%c0_135, %c0_136] : memref<128x128xbf16, #tpu.memory_space<vmem>>, vector<64x128xbf16>
    %cst_137 = arith.constant dense<0.000000e+00> : vector<192x128xf32>
    %216 = tpu.matmul %214, %215, %cst_137 {dimension_numbers = #tpu.dot_dimension_numbers<[1], [0], [0], [1], [0, 0, 1, 1], [], []>} : vector<192x64xbf16>, vector<64x128xbf16>, vector<192x128xf32> -> vector<192x128xf32>
    %217 = arith.addf %190, %216 : vector<192x128xf32>
    %218 = vector.extract_strided_slice %181 {offsets = [0, 64], sizes = [192, 64], strides = [1, 1]} : vector<192x128xf32> to vector<192x64xf32>
    %219 = arith.truncf %218 : vector<192x64xf32> to vector<192x64xbf16>
    %220 = vector.extract_strided_slice %182 {offsets = [0, 64], sizes = [192, 64], strides = [1, 1]} : vector<192x128xf32> to vector<192x64xf32>
    %221 = arith.truncf %220 : vector<192x64xf32> to vector<192x64xbf16>
    %222 = vector.extract_strided_slice %183 {offsets = [0, 64], sizes = [192, 64], strides = [1, 1]} : vector<192x128xf32> to vector<192x64xf32>
    %223 = arith.truncf %222 : vector<192x64xf32> to vector<192x64xbf16>
    %cst_138 = arith.constant dense<0.000000e+00> : vector<192x192xf32>
    %224 = tpu.matmul %219, %221, %cst_138 {dimension_numbers = #tpu.dot_dimension_numbers<[1], [1], [0], [0], [0, 0, 1, 0], [], []>} : vector<192x64xbf16>, vector<192x64xbf16>, vector<192x192xf32> -> vector<192x192xf32>
    %cst_139 = arith.constant 0.0883883461 : f32
    %225 = vector.broadcast %cst_139 : f32 to vector<192x192xf32>
    %226 = arith.mulf %224, %225 : vector<192x192xf32>
    %227 = vector.broadcast %189 : vector<1x192xf32> to vector<192x192xf32>
    %228 = arith.addf %226, %227 : vector<192x192xf32>
    %cst_140 = arith.constant dense<0xFF800000> : vector<192xf32>
    %229 = vector.multi_reduction <maximumf>, %228, %cst_140 [1] : vector<192x192xf32> to vector<192xf32>
    %230 = vector.shape_cast %229 : vector<192xf32> to vector<192x1xf32>
    %231 = vector.broadcast %230 : vector<192x1xf32> to vector<192x192xf32>
    %232 = arith.subf %228, %231 : vector<192x192xf32>
    %233 = math.exp %232 : vector<192x192xf32>
    %cst_141 = arith.constant dense<0.000000e+00> : vector<192xf32>
    %234 = vector.multi_reduction <add>, %233, %cst_141 [1] : vector<192x192xf32> to vector<192xf32>
    %235 = vector.shape_cast %234 : vector<192xf32> to vector<192x1xf32>
    %236 = tpu.reciprocal %235 {approx = true} : vector<192x1xf32> -> vector<192x1xf32>
    %237 = vector.broadcast %236 : vector<192x1xf32> to vector<192x192xf32>
    %238 = arith.mulf %233, %237 : vector<192x192xf32>
    %239 = arith.truncf %238 : vector<192x192xf32> to vector<192x192xbf16>
    %cst_142 = arith.constant dense<0.000000e+00> : vector<192x64xf32>
    %240 = tpu.matmul %239, %223, %cst_142 {dimension_numbers = #tpu.dot_dimension_numbers<[1], [0], [0], [1], [0, 0, 1, 1], [], []>} : vector<192x192xbf16>, vector<192x64xbf16>, vector<192x64xf32> -> vector<192x64xf32>
    %241 = arith.truncf %240 : vector<192x64xf32> to vector<192x64xbf16>
    %c64 = arith.constant 64 : index
    %c0_143 = arith.constant 0 : index
    %242 = vector.load %arg32[%c64, %c0_143] : memref<128x128xbf16, #tpu.memory_space<vmem>>, vector<64x128xbf16>
    %cst_144 = arith.constant dense<0.000000e+00> : vector<192x128xf32>
    %243 = tpu.matmul %241, %242, %cst_144 {dimension_numbers = #tpu.dot_dimension_numbers<[1], [0], [0], [1], [0, 0, 1, 1], [], []>} : vector<192x64xbf16>, vector<64x128xbf16>, vector<192x128xf32> -> vector<192x128xf32>
    %244 = arith.addf %217, %243 : vector<192x128xf32>
    %c0_145 = arith.constant 0 : index
    %c0_146 = arith.constant 0 : index
    %245 = vector.load %arg33[%c0_145, %c0_146] : memref<1x128xf32, #tpu.memory_space<vmem>>, vector<1x128xf32>
    %246 = vector.broadcast %245 : vector<1x128xf32> to vector<192x128xf32>
    %247 = arith.addf %244, %246 : vector<192x128xf32>
    %248 = arith.addf %247, %174 : vector<192x128xf32>
    %249 = arith.truncf %248 : vector<192x128xf32> to vector<192x128xbf16>
    %c0_147 = arith.constant 0 : index
    %c0_148 = arith.constant 0 : index
    %250 = vector.load %arg34[%c0_147, %c0_148] : memref<128x128xbf16, #tpu.memory_space<vmem>>, vector<128x128xbf16>
    %cst_149 = arith.constant dense<0.000000e+00> : vector<192x128xf32>
    %251 = tpu.matmul %249, %250, %cst_149 {dimension_numbers = #tpu.dot_dimension_numbers<[1], [0], [0], [1], [0, 0, 1, 1], [], []>} : vector<192x128xbf16>, vector<128x128xbf16>, vector<192x128xf32> -> vector<192x128xf32>
    %c0_150 = arith.constant 0 : index
    %c0_151 = arith.constant 0 : index
    %252 = vector.load %arg35[%c0_150, %c0_151] : memref<1x128xf32, #tpu.memory_space<vmem>>, vector<1x128xf32>
    %253 = vector.broadcast %252 : vector<1x128xf32> to vector<192x128xf32>
    %254 = arith.addf %251, %253 : vector<192x128xf32>
    %255 = vector.broadcast %1 : vector<192x1xf32> to vector<192x128xf32>
    %256 = arith.mulf %254, %255 : vector<192x128xf32>
    %cst_152 = arith.constant dense<0.000000e+00> : vector<128xf32>
    %257 = vector.multi_reduction <add>, %256, %cst_152 [0] : vector<192x128xf32> to vector<128xf32>
    %258 = vector.shape_cast %257 : vector<128xf32> to vector<1x128xf32>
    %259 = vector.broadcast %3 : vector<1x1xf32> to vector<1x128xf32>
    %260 = arith.mulf %258, %259 : vector<1x128xf32>
    %c0_153 = arith.constant 0 : index
    %c0_154 = arith.constant 0 : index
    %c0_155 = arith.constant 0 : index
    %261 = vector.load %arg6[%c0_153, %c0_154, %c0_155] : memref<1x1x128xf32, #tpu.memory_space<vmem>>, vector<1x1x128xf32>
    %262 = vector.shape_cast %261 : vector<1x1x128xf32> to vector<1x128xf32>
    %263 = arith.truncf %262 : vector<1x128xf32> to vector<1x128xbf16>
    %c0_156 = arith.constant 0 : index
    %c0_157 = arith.constant 0 : index
    %264 = vector.load %arg36[%c0_156, %c0_157] : memref<128x128xbf16, #tpu.memory_space<vmem>>, vector<128x128xbf16>
    %cst_158 = arith.constant dense<0.000000e+00> : vector<1x128xf32>
    %265 = tpu.matmul %263, %264, %cst_158 {dimension_numbers = #tpu.dot_dimension_numbers<[1], [0], [0], [1], [0, 0, 1, 1], [], []>} : vector<1x128xbf16>, vector<128x128xbf16>, vector<1x128xf32> -> vector<1x128xf32>
    %c0_159 = arith.constant 0 : index
    %c0_160 = arith.constant 0 : index
    %266 = vector.load %arg37[%c0_159, %c0_160] : memref<1x128xf32, #tpu.memory_space<vmem>>, vector<1x128xf32>
    %267 = arith.addf %265, %266 : vector<1x128xf32>
    %c0_161 = arith.constant 0 : index
    %c0_162 = arith.constant 0 : index
    %268 = vector.load %arg38[%c0_161, %c0_162] : memref<1x1xf32, #tpu.memory_space<vmem>>, vector<1x1xf32>
    %269 = arith.mulf %267, %260 : vector<1x128xf32>
    %cst_163 = arith.constant dense<0.000000e+00> : vector<1xf32>
    %270 = vector.multi_reduction <add>, %269, %cst_163 [1] : vector<1x128xf32> to vector<1xf32>
    %271 = vector.shape_cast %270 : vector<1xf32> to vector<1x1xf32>
    %272 = arith.mulf %268, %271 : vector<1x1xf32>
    %c0_164 = arith.constant 0 : index
    %c0_165 = arith.constant 0 : index
    %273 = vector.load %arg39[%c0_164, %c0_165] : memref<1x1xf32, #tpu.memory_space<vmem>>, vector<1x1xf32>
    %274 = arith.addf %272, %273 : vector<1x1xf32>
    %275 = vector.shape_cast %274 : vector<1x1xf32> to vector<1x1xf32>
    %276 = vector.broadcast %275 : vector<1x1xf32> to vector<1x128xf32>
    %c0_166 = arith.constant 0 : index
    %c0_167 = arith.constant 0 : index
    %c0_168 = arith.constant 0 : index
    %277 = vector.load %arg42[%c0_166, %c0_167, %c0_168] : memref<1x1x128xf32, #tpu.memory_space<vmem>>, vector<1x1x128xf32>
    %278 = vector.shape_cast %277 : vector<1x1x128xf32> to vector<1x128xf32>
    %279 = vector.shape_cast %276 : vector<1x128xf32> to vector<1x1x128xf32>
    tpu.vector_store %arg42[%c0_166, %c0_167, %c0_168], %279 {strides = array<i32>} : memref<1x1x128xf32, #tpu.memory_space<vmem>>, vector<1x1x128xf32>,
    return
  }
  func.func @transform_0(%arg0: i32) -> (i32, i32, i32) {
    %c0_i32 = arith.constant 0 : i32
    %c0_i32_0 = arith.constant 0 : i32
    %c0_i32_1 = arith.constant 0 : i32
    return %arg0, %c0_i32, %c0_i32_0 : i32, i32, i32
  }
  func.func @transform_1(%arg0: i32) -> (i32, i32, i32) {
    %c0_i32 = arith.constant 0 : i32
    %c0_i32_0 = arith.constant 0 : i32
    %c0_i32_1 = arith.constant 0 : i32
    return %arg0, %c0_i32, %c0_i32_0 : i32, i32, i32
  }
  func.func @transform_2(%arg0: i32) -> (i32, i32, i32) {
    %c0_i32 = arith.constant 0 : i32
    %c0_i32_0 = arith.constant 0 : i32
    %c0_i32_1 = arith.constant 0 : i32
    return %arg0, %c0_i32, %c0_i32_0 : i32, i32, i32
  }
  func.func @transform_3(%arg0: i32) -> (i32, i32, i32) {
    %c0_i32 = arith.constant 0 : i32
    %c0_i32_0 = arith.constant 0 : i32
    %c0_i32_1 = arith.constant 0 : i32
    return %arg0, %c0_i32, %c0_i32_0 : i32, i32, i32
  }
  func.func @transform_4(%arg0: i32) -> (i32, i32, i32) {
    %c0_i32 = arith.constant 0 : i32
    %c0_i32_0 = arith.constant 0 : i32
    %c0_i32_1 = arith.constant 0 : i32
    return %arg0, %c0_i32, %c0_i32_0 : i32, i32, i32
  }
  func.func @transform_5(%arg0: i32) -> (i32, i32, i32) {
    %c0_i32 = arith.constant 0 : i32
    %c0_i32_0 = arith.constant 0 : i32
    %c0_i32_1 = arith.constant 0 : i32
    return %arg0, %c0_i32, %c0_i32_0 : i32, i32, i32
  }
  func.func @transform_6(%arg0: i32) -> (i32, i32, i32) {
    %c0_i32 = arith.constant 0 : i32
    %c0_i32_0 = arith.constant 0 : i32
    %c0_i32_1 = arith.constant 0 : i32
    return %arg0, %c0_i32, %c0_i32_0 : i32, i32, i32
  }
  func.func @transform_7(%arg0: i32) -> (i32, i32, i32) {
    %c0_i32 = arith.constant 0 : i32
    %c0_i32_0 = arith.constant 0 : i32
    %c0_i32_1 = arith.constant 0 : i32
    return %arg0, %c0_i32, %c0_i32_0 : i32, i32, i32
  }
  func.func @transform_8(%arg0: i32) -> (i32, i32) {
    %c0_i32 = arith.constant 0 : i32
    %c0_i32_0 = arith.constant 0 : i32
    %c0_i32_1 = arith.constant 0 : i32
    return %c0_i32, %c0_i32_0 : i32, i32
  }
  func.func @transform_9(%arg0: i32) -> (i32, i32) {
    %c0_i32 = arith.constant 0 : i32
    %c0_i32_0 = arith.constant 0 : i32
    %c0_i32_1 = arith.constant 0 : i32
    return %c0_i32, %c0_i32_0 : i32, i32
  }
  func.func @transform_10(%arg0: i32) -> (i32, i32) {
    %c0_i32 = arith.constant 0 : i32
    %c0_i32_0 = arith.constant 0 : i32
    %c0_i32_1 = arith.constant 0 : i32
    return %c0_i32, %c0_i32_0 : i32, i32
  }
  func.func @transform_11(%arg0: i32) -> (i32, i32) {
    %c0_i32 = arith.constant 0 : i32
    %c0_i32_0 = arith.constant 0 : i32
    %c0_i32_1 = arith.constant 0 : i32
    return %c0_i32, %c0_i32_0 : i32, i32
  }
  func.func @transform_12(%arg0: i32) -> (i32, i32) {
    %c0_i32 = arith.constant 0 : i32
    %c0_i32_0 = arith.constant 0 : i32
    %c0_i32_1 = arith.constant 0 : i32
    return %c0_i32, %c0_i32_0 : i32, i32
  }
  func.func @transform_13(%arg0: i32) -> (i32, i32) {
    %c0_i32 = arith.constant 0 : i32
    %c0_i32_0 = arith.constant 0 : i32
    %c0_i32_1 = arith.constant 0 : i32
    return %c0_i32, %c0_i32_0 : i32, i32
  }
  func.func @transform_14(%arg0: i32) -> (i32, i32) {
    %c0_i32 = arith.constant 0 : i32
    %c0_i32_0 = arith.constant 0 : i32
    %c0_i32_1 = arith.constant 0 : i32
    return %c0_i32, %c0_i32_0 : i32, i32
  }
  func.func @transform_15(%arg0: i32) -> (i32, i32) {
    %c0_i32 = arith.constant 0 : i32
    %c0_i32_0 = arith.constant 0 : i32
    %c0_i32_1 = arith.constant 0 : i32
    return %c0_i32, %c0_i32_0 : i32, i32
  }
  func.func @transform_16(%arg0: i32) -> (i32, i32) {
    %c0_i32 = arith.constant 0 : i32
    %c0_i32_0 = arith.constant 0 : i32
    %c0_i32_1 = arith.constant 0 : i32
    return %c0_i32, %c0_i32_0 : i32, i32
  }
  func.func @transform_17(%arg0: i32) -> (i32, i32) {
    %c0_i32 = arith.constant 0 : i32
    %c0_i32_0 = arith.constant 0 : i32
    %c0_i32_1 = arith.constant 0 : i32
    return %c0_i32, %c0_i32_0 : i32, i32
  }
  func.func @transform_18(%arg0: i32) -> (i32, i32) {
    %c0_i32 = arith.constant 0 : i32
    %c0_i32_0 = arith.constant 0 : i32
    %c0_i32_1 = arith.constant 0 : i32
    return %c0_i32, %c0_i32_0 : i32, i32
  }
  func.func @transform_19(%arg0: i32) -> (i32, i32) {
    %c0_i32 = arith.constant 0 : i32
    %c0_i32_0 = arith.constant 0 : i32
    %c0_i32_1 = arith.constant 0 : i32
    return %c0_i32, %c0_i32_0 : i32, i32
  }
  func.func @transform_20(%arg0: i32) -> (i32, i32) {
    %c0_i32 = arith.constant 0 : i32
    %c0_i32_0 = arith.constant 0 : i32
    %c0_i32_1 = arith.constant 0 : i32
    return %c0_i32, %c0_i32_0 : i32, i32
  }
  func.func @transform_21(%arg0: i32) -> (i32, i32) {
    %c0_i32 = arith.constant 0 : i32
    %c0_i32_0 = arith.constant 0 : i32
    %c0_i32_1 = arith.constant 0 : i32
    return %c0_i32, %c0_i32_0 : i32, i32
  }
  func.func @transform_22(%arg0: i32) -> (i32, i32) {
    %c0_i32 = arith.constant 0 : i32
    %c0_i32_0 = arith.constant 0 : i32
    %c0_i32_1 = arith.constant 0 : i32
    return %c0_i32, %c0_i32_0 : i32, i32
  }
  func.func @transform_23(%arg0: i32) -> (i32, i32) {
    %c0_i32 = arith.constant 0 : i32
    %c0_i32_0 = arith.constant 0 : i32
    %c0_i32_1 = arith.constant 0 : i32
    return %c0_i32, %c0_i32_0 : i32, i32
  }
  func.func @transform_24(%arg0: i32) -> (i32, i32) {
    %c0_i32 = arith.constant 0 : i32
    %c0_i32_0 = arith.constant 0 : i32
    %c0_i32_1 = arith.constant 0 : i32
    return %c0_i32, %c0_i32_0 : i32, i32
  }
  func.func @transform_25(%arg0: i32) -> (i32, i32) {
    %c0_i32 = arith.constant 0 : i32
    %c0_i32_0 = arith.constant 0 : i32
    %c0_i32_1 = arith.constant 0 : i32
    return %c0_i32, %c0_i32_0 : i32, i32
  }
  func.func @transform_26(%arg0: i32) -> (i32, i32) {
    %c0_i32 = arith.constant 0 : i32
    %c0_i32_0 = arith.constant 0 : i32
    %c0_i32_1 = arith.constant 0 : i32
    return %c0_i32, %c0_i32_0 : i32, i32
  }
  func.func @transform_27(%arg0: i32) -> (i32, i32) {
    %c0_i32 = arith.constant 0 : i32
    %c0_i32_0 = arith.constant 0 : i32
    %c0_i32_1 = arith.constant 0 : i32
    return %c0_i32, %c0_i32_0 : i32, i32
  }
  func.func @transform_28(%arg0: i32) -> (i32, i32) {
    %c0_i32 = arith.constant 0 : i32
    %c0_i32_0 = arith.constant 0 : i32
    %c0_i32_1 = arith.constant 0 : i32
    return %c0_i32, %c0_i32_0 : i32, i32
  }
  func.func @transform_29(%arg0: i32) -> (i32, i32) {
    %c0_i32 = arith.constant 0 : i32
    %c0_i32_0 = arith.constant 0 : i32
    %c0_i32_1 = arith.constant 0 : i32
    return %c0_i32, %c0_i32_0 : i32, i32
  }
  func.func @transform_30(%arg0: i32) -> (i32, i32) {
    %c0_i32 = arith.constant 0 : i32
    %c0_i32_0 = arith.constant 0 : i32
    %c0_i32_1 = arith.constant 0 : i32
    return %c0_i32, %c0_i32_0 : i32, i32
  }
  func.func @transform_31(%arg0: i32) -> (i32, i32) {
    %c0_i32 = arith.constant 0 : i32
    %c0_i32_0 = arith.constant 0 : i32
    %c0_i32_1 = arith.constant 0 : i32
    return %c0_i32, %c0_i32_0 : i32, i32
  }
  func.func @transform_32(%arg0: i32) -> (i32, i32) {
    %c0_i32 = arith.constant 0 : i32
    %c0_i32_0 = arith.constant 0 : i32
    %c0_i32_1 = arith.constant 0 : i32
    return %c0_i32, %c0_i32_0 : i32, i32
  }
  func.func @transform_33(%arg0: i32) -> (i32, i32) {
    %c0_i32 = arith.constant 0 : i32
    %c0_i32_0 = arith.constant 0 : i32
    %c0_i32_1 = arith.constant 0 : i32
    return %c0_i32, %c0_i32_0 : i32, i32
  }
  func.func @transform_34(%arg0: i32) -> (i32, i32) {
    %c0_i32 = arith.constant 0 : i32
    %c0_i32_0 = arith.constant 0 : i32
    %c0_i32_1 = arith.constant 0 : i32
    return %c0_i32, %c0_i32_0 : i32, i32
  }
  func.func @transform_35(%arg0: i32) -> (i32, i32) {
    %c0_i32 = arith.constant 0 : i32
    %c0_i32_0 = arith.constant 0 : i32
    %c0_i32_1 = arith.constant 0 : i32
    return %c0_i32, %c0_i32_0 : i32, i32
  }
  func.func @transform_36(%arg0: i32) -> (i32, i32) {
    %c0_i32 = arith.constant 0 : i32
    %c0_i32_0 = arith.constant 0 : i32
    %c0_i32_1 = arith.constant 0 : i32
    return %c0_i32, %c0_i32_0 : i32, i32
  }
  func.func @transform_37(%arg0: i32) -> (i32, i32) {
    %c0_i32 = arith.constant 0 : i32
    %c0_i32_0 = arith.constant 0 : i32
    %c0_i32_1 = arith.constant 0 : i32
    return %c0_i32, %c0_i32_0 : i32, i32
  }
  func.func @transform_38(%arg0: i32) -> (i32, i32) {
    %c0_i32 = arith.constant 0 : i32
    %c0_i32_0 = arith.constant 0 : i32
    %c0_i32_1 = arith.constant 0 : i32
    return %c0_i32, %c0_i32_0 : i32, i32
  }
  func.func @transform_39(%arg0: i32) -> (i32, i32) {
    %c0_i32 = arith.constant 0 : i32
    %c0_i32_0 = arith.constant 0 : i32
    %c0_i32_1 = arith.constant 0 : i32
    return %c0_i32, %c0_i32_0 : i32, i32
  }
  func.func @transform_40(%arg0: i32) -> (i32, i32, i32) {
    %c0_i32 = arith.constant 0 : i32
    %c0_i32_0 = arith.constant 0 : i32
    %c0_i32_1 = arith.constant 0 : i32
    return %arg0, %c0_i32, %c0_i32_0 : i32, i32, i32
  }
  func.func @transform_41(%arg0: i32) -> (i32, i32, i32) {
    %c0_i32 = arith.constant 0 : i32
    %c0_i32_0 = arith.constant 0 : i32
    %c0_i32_1 = arith.constant 0 : i32
    return %arg0, %c0_i32, %c0_i32_0 : i32, i32, i32
  }
  func.func @transform_42(%arg0: i32) -> (i32, i32, i32) {
    %c0_i32 = arith.constant 0 : i32
    %c0_i32_0 = arith.constant 0 : i32
    %c0_i32_1 = arith.constant 0 : i32
    return %arg0, %c0_i32, %c0_i32_0 : i32, i32, i32
  }
}

</mosaic_0001>

<llo_original>
// kernel: discriminator_forward.1
$region0: #{discriminator_forward.1}
  #allocation0 [shape = 'u32[]', space=smem, size = 0x4, offset = 0x4, fixed_abs, tag = 'smem constant byte address 0x4 - core index']
  #allocation1 [shape = 'u32[144,128]{1,0:T(1,128)}', space=vmem, size = 0x12000, scoped, tag = 'internal scratch']
  #allocation2 [shape = 'f32[208,128]{1,0:T(8,128)}', space=vmem, size = 0x1a000, scoped, tag = 'scratch operand']
  #allocation3 [shape = 'f32[1,1]{1,0:T(1,128)S(1)}', space=vmem, size = 0x200, scoped, tag = 'scoped memory for discriminator_forward.1']
  #allocation4 [shape = 'f32[1,1]{1,0:T(1,128)S(1)}', space=vmem, size = 0x200, scoped, tag = 'scoped memory for discriminator_forward.1']
  #allocation5 [shape = 'f32[1,1]{1,0:T(1,128)S(1)}', space=vmem, size = 0x200, scoped, tag = 'scoped memory for discriminator_forward.1']
  %s0 = inlined_call_operand.smem [shape: u32[43], index: -1, kind: input, shape index: {}]
  %s1 = sld [smem:[%s0]]
  %s2 = scalar_lea.smem %s0, 1
  %s3 = sld [smem:[%s2]]
  %s4 = scalar_lea.smem %s0, 2
  %s5 = sld [smem:[%s4]]
  %s6 = scalar_lea.smem %s0, 3
  %s7 = sld [smem:[%s6]]
  %s8 = scalar_lea.smem %s0, 4
  %s9 = sld [smem:[%s8]]
  %s10 = scalar_lea.smem %s0, 5
  %s11 = sld [smem:[%s10]]
  %s12 = scalar_lea.smem %s0, 6
  %s13 = sld [smem:[%s12]]
  %s14 = scalar_lea.smem %s0, 7
  %s15 = sld [smem:[%s14]]
  %s16 = scalar_lea.smem %s0, 8
  %s17 = sld [smem:[%s16]]
  %s18 = scalar_lea.smem %s0, 9
  %s19 = sld [smem:[%s18]]
  %s20 = scalar_lea.smem %s0, 10
  %s21 = sld [smem:[%s20]]
  %s22 = scalar_lea.smem %s0, 11
  %s23 = sld [smem:[%s22]]
  %s24 = scalar_lea.smem %s0, 12
  %s25 = sld [smem:[%s24]]
  %s26 = scalar_lea.smem %s0, 13
  %s27 = sld [smem:[%s26]]
  %s28 = scalar_lea.smem %s0, 14
  %s29 = sld [smem:[%s28]]
  %s30 = scalar_lea.smem %s0, 15
  %s31 = sld [smem:[%s30]]
  %s32 = scalar_lea.smem %s0, 16
  %s33 = sld [smem:[%s32]]
  %s34 = scalar_lea.smem %s0, 17
  %s35 = sld [smem:[%s34]]
  %s36 = scalar_lea.smem %s0, 18
  %s37 = sld [smem:[%s36]]
  %s38 = scalar_lea.smem %s0, 19
  %s39 = sld [smem:[%s38]]
  %s40 = scalar_lea.smem %s0, 20
  %s41 = sld [smem:[%s40]]
  %s42 = scalar_lea.smem %s0, 21
  %s43 = sld [smem:[%s42]]
  %s44 = scalar_lea.smem %s0, 22
  %s45 = sld [smem:[%s44]]
  %s46 = scalar_lea.smem %s0, 23
  %s47 = sld [smem:[%s46]]
  %s48 = scalar_lea.smem %s0, 24
  %s49 = sld [smem:[%s48]]
  %s50 = scalar_lea.smem %s0, 25
  %s51 = sld [smem:[%s50]]
  %s52 = scalar_lea.smem %s0, 26
  %s53 = sld [smem:[%s52]]
  %s54 = scalar_lea.smem %s0, 27
  %s55 = sld [smem:[%s54]]
  %s56 = scalar_lea.smem %s0, 28
  %s57 = sld [smem:[%s56]]
  %s58 = scalar_lea.smem %s0, 29
  %s59 = sld [smem:[%s58]]
  %s60 = scalar_lea.smem %s0, 30
  %s61 = sld [smem:[%s60]]
  %s62 = scalar_lea.smem %s0, 31
  %s63 = sld [smem:[%s62]]
  %s64 = scalar_lea.smem %s0, 32
  %s65 = sld [smem:[%s64]]
  %s66 = scalar_lea.smem %s0, 33
  %s67 = sld [smem:[%s66]]
  %s68 = scalar_lea.smem %s0, 34
  %s69 = sld [smem:[%s68]]
  %s70 = scalar_lea.smem %s0, 35
  %s71 = sld [smem:[%s70]]
  %s72 = scalar_lea.smem %s0, 36
  %s73 = sld [smem:[%s72]]
  %s74 = scalar_lea.smem %s0, 37
  %s75 = sld [smem:[%s74]]
  %s76 = scalar_lea.smem %s0, 38
  %s77 = sld [smem:[%s76]]
  %s78 = scalar_lea.smem %s0, 39
  %s79 = sld [smem:[%s78]]
  %s80 = scalar_lea.smem %s0, 40
  %s81 = sld [smem:[%s80]]
  %s82 = scalar_lea.smem %s0, 41
  %s83 = sld [smem:[%s82]]
  %s84 = scalar_lea.smem %s0, 42
  %s85 = sld [smem:[%s84]]
  %86 = xla_tuple %s81, %s83, %s85
  %s87 = sld [smem:[#allocation0]]
  $region209: #{discriminator_forward.1} parent=0
    _
  %s89 = ssub.s32 1, %s87
  %s90 = scalar_select 0, %s89, %s87
  %v91 = vstv %s41
  %92 = vst [vmem:[#allocation3] sm:$0x1] %v91
  %v93 = vstv %s75
  %94 = vst [vmem:[#allocation4] sm:$0x1] %v93
  %v95 = vstv %s77
  %96 = vst [vmem:[#allocation5] sm:$0x1] %v95
  loop: start=0, step=1, limit=4
  $region2: #{discriminator_forward.1} parent=0 // loop_pre_header
    _
  $region3: #{discriminator_forward.1} parent=0 // loop_header
    %s98 = sphi 0, %s102
    %p99 = scmp.ge.s32.totalorder %s98, 4
    %s108 = sphi 0, %s110
    %s111 = sphi 0, %s108
    %s112 = sphi 0, %s111
    %s128 = sphi 0, %s112
    %s134 = sphi 0, %s136
    %s137 = sphi 0, %s134
    %s138 = sphi 0, %s137
    %s154 = sphi 0, %s138
    %s160 = sphi 0, %s162
    %s163 = sphi 0, %s160
    %s164 = sphi 0, %s163
    %s180 = sphi 0, %s164
    %s186 = sphi 0, %s188
    %s189 = sphi 0, %s186
    %s190 = sphi 0, %s189
    %s206 = sphi 0, %s190
    %s212 = sphi 0, %s214
    %s215 = sphi 0, %s212
    %s216 = sphi 0, %s215
    %s232 = sphi 0, %s216
    %s238 = sphi 0, %s240
    %s241 = sphi 0, %s238
    %s242 = sphi 0, %s241
    %s258 = sphi 0, %s242
    %s264 = sphi 0, %s266
    %s267 = sphi 0, %s264
    %s268 = sphi 0, %s267
    %s284 = sphi 0, %s268
    %s290 = sphi 0, %s292
    %s293 = sphi 0, %s290
    %s294 = sphi 0, %s293
    %s310 = sphi 0, %s294
    %s314 = sphi 0, %s314
    %s316 = sphi 0, %s314
    %s317 = sphi 0, %s316
    %s331 = sphi 0, %s317
    %s335 = sphi 0, %s335
    %s337 = sphi 0, %s335
    %s338 = sphi 0, %s337
    %s352 = sphi 0, %s338
    %s356 = sphi 0, %s356
    %s358 = sphi 0, %s356
    %s359 = sphi 0, %s358
    %s373 = sphi 0, %s359
    %s377 = sphi 0, %s377
    %s379 = sphi 0, %s377
    %s380 = sphi 0, %s379
    %s394 = sphi 0, %s380
    %s398 = sphi 0, %s398
    %s400 = sphi 0, %s398
    %s401 = sphi 0, %s400
    %s415 = sphi 0, %s401
    %s419 = sphi 0, %s419
    %s421 = sphi 0, %s419
    %s422 = sphi 0, %s421
    %s436 = sphi 0, %s422
    %s440 = sphi 0, %s440
    %s442 = sphi 0, %s440
    %s443 = sphi 0, %s442
    %s457 = sphi 0, %s443
    %s461 = sphi 0, %s461
    %s463 = sphi 0, %s461
    %s464 = sphi 0, %s463
    %s478 = sphi 0, %s464
    %s482 = sphi 0, %s482
    %s484 = sphi 0, %s482
    %s485 = sphi 0, %s484
    %s499 = sphi 0, %s485
    %s503 = sphi 0, %s503
    %s505 = sphi 0, %s503
    %s506 = sphi 0, %s505
    %s520 = sphi 0, %s506
    %s524 = sphi 0, %s524
    %s526 = sphi 0, %s524
    %s527 = sphi 0, %s526
    %s541 = sphi 0, %s527
    %s545 = sphi 0, %s545
    %s547 = sphi 0, %s545
    %s548 = sphi 0, %s547
    %s562 = sphi 0, %s548
    %s566 = sphi 0, %s566
    %s568 = sphi 0, %s566
    %s569 = sphi 0, %s568
    %s583 = sphi 0, %s569
    %s587 = sphi 0, %s587
    %s589 = sphi 0, %s587
    %s590 = sphi 0, %s589
    %s604 = sphi 0, %s590
    %s608 = sphi 0, %s608
    %s610 = sphi 0, %s608
    %s611 = sphi 0, %s610
    %s625 = sphi 0, %s611
    %s629 = sphi 0, %s629
    %s631 = sphi 0, %s629
    %s632 = sphi 0, %s631
    %s646 = sphi 0, %s632
    %s650 = sphi 0, %s650
    %s652 = sphi 0, %s650
    %s653 = sphi 0, %s652
    %s667 = sphi 0, %s653
    %s671 = sphi 0, %s671
    %s673 = sphi 0, %s671
    %s674 = sphi 0, %s673
    %s688 = sphi 0, %s674
    %s692 = sphi 0, %s692
    %s694 = sphi 0, %s692
    %s695 = sphi 0, %s694
    %s709 = sphi 0, %s695
    %s713 = sphi 0, %s713
    %s715 = sphi 0, %s713
    %s716 = sphi 0, %s715
    %s730 = sphi 0, %s716
    %s734 = sphi 0, %s734
    %s736 = sphi 0, %s734
    %s737 = sphi 0, %s736
    %s751 = sphi 0, %s737
    %s755 = sphi 0, %s755
    %s757 = sphi 0, %s755
    %s758 = sphi 0, %s757
    %s772 = sphi 0, %s758
    %s776 = sphi 0, %s776
    %s778 = sphi 0, %s776
    %s779 = sphi 0, %s778
    %s793 = sphi 0, %s779
    %s797 = sphi 0, %s797
    %s799 = sphi 0, %s797
    %s800 = sphi 0, %s799
    %s814 = sphi 0, %s800
    %s818 = sphi 0, %s818
    %s820 = sphi 0, %s818
    %s821 = sphi 0, %s820
    %s835 = sphi 0, %s821
    %s839 = sphi 0, %s839
    %s841 = sphi 0, %s839
    %s842 = sphi 0, %s841
    %s856 = sphi 0, %s842
    %s860 = sphi 0, %s860
    %s862 = sphi 0, %s860
    %s863 = sphi 0, %s862
    %s877 = sphi 0, %s863
    %s881 = sphi 0, %s881
    %s883 = sphi 0, %s881
    %s884 = sphi 0, %s883
    %s898 = sphi 0, %s884
    %s902 = sphi 0, %s902
    %s904 = sphi 0, %s902
    %s905 = sphi 0, %s904
    %s919 = sphi 0, %s905
    %s923 = sphi 0, %s923
    %s925 = sphi 0, %s923
    %s926 = sphi 0, %s925
    %s940 = sphi 0, %s926
    %s944 = sphi 0, %s944
    %s946 = sphi 0, %s944
    %s947 = sphi 0, %s946
    %s961 = sphi 0, %s947
    %s965 = sphi 0, %s965
    %s967 = sphi 0, %s965
    %s968 = sphi 0, %s967
    %s982 = sphi 0, %s968
    %s988 = sphi 0, %s990
    %s991 = sphi 0, %s988
    %s992 = sphi 0, %s991
    %s1008 = sphi 0, %s992
    %s1014 = sphi 0, %s1016
    %s1017 = sphi 0, %s1014
    %s1018 = sphi 0, %s1017
    %s1034 = sphi 0, %s1018
    %s1040 = sphi 0, %s1042
    %s1043 = sphi 0, %s1040
    %s1044 = sphi 0, %s1043
    %s1060 = sphi 0, %s1044
  $region4: #{discriminator_forward.1} parent=0 // loop_header_branch
    %101 = sbr.rel (%p99) target = $region8
  $region5: #{discriminator_forward.1} parent=0 // loop_body
    %s103 = ssub.s32 %s98, 1
    %s104 = ssub.s32 %s98, 2
    %s105 = sadd.s32 %s98, 1
    %s106 = ssub.s32 %s98, %s105
    %p107 = scmp.eq.s32.totalorder %s106, 0
    %s109 = sadd.s32 %s108, 1
    %s110 = scalar_select %p107, %s108, %s109
    %p113 = pneg %p107
    %p114 = scmp.eq.s32.totalorder %s98, 1
    %p115 = por %p113, %p114
    %p116 = scmp.ne.s32.totalorder %s108, %s111
    %p117 = scmp.eq.s32.totalorder %s98, 0
    %p118 = por %p116, %p117
    %p119 = scmp.ne.s32.totalorder %s108, %s111
    %p120 = scmp.eq.s32.totalorder %s103, 1
    %p121 = por %p119, %p120
    %p122 = scmp.ne.s32.totalorder %s111, %s112
    %p123 = scmp.eq.s32.totalorder %s103, 0
    %p124 = por %p122, %p123
    %p125 = scmp.ne.s32.totalorder %s111, %s112
    %p126 = scmp.eq.s32.totalorder %s104, 1
    %p127 = por %p125, %p126
    %p129 = scmp.ne.s32.totalorder %s112, %s128
    %p130 = scmp.eq.s32.totalorder %s104, 0
    %p131 = por %p129, %p130
    %s132 = ssub.s32 %s98, %s105
    %p133 = scmp.eq.s32.totalorder %s132, 0
    %s135 = sadd.s32 %s134, 1
    %s136 = scalar_select %p133, %s134, %s135
    %p139 = pneg %p133
    %p140 = scmp.eq.s32.totalorder %s98, 1
    %p141 = por %p139, %p140
    %p142 = scmp.ne.s32.totalorder %s134, %s137
    %p143 = scmp.eq.s32.totalorder %s98, 0
    %p144 = por %p142, %p143
    %p145 = scmp.ne.s32.totalorder %s134, %s137
    %p146 = scmp.eq.s32.totalorder %s103, 1
    %p147 = por %p145, %p146
    %p148 = scmp.ne.s32.totalorder %s137, %s138
    %p149 = scmp.eq.s32.totalorder %s103, 0
    %p150 = por %p148, %p149
    %p151 = scmp.ne.s32.totalorder %s137, %s138
    %p152 = scmp.eq.s32.totalorder %s104, 1
    %p153 = por %p151, %p152
    %p155 = scmp.ne.s32.totalorder %s138, %s154
    %p156 = scmp.eq.s32.totalorder %s104, 0
    %p157 = por %p155, %p156
    %s158 = ssub.s32 %s98, %s105
    %p159 = scmp.eq.s32.totalorder %s158, 0
    %s161 = sadd.s32 %s160, 1
    %s162 = scalar_select %p159, %s160, %s161
    %p165 = pneg %p159
    %p166 = scmp.eq.s32.totalorder %s98, 1
    %p167 = por %p165, %p166
    %p168 = scmp.ne.s32.totalorder %s160, %s163
    %p169 = scmp.eq.s32.totalorder %s98, 0
    %p170 = por %p168, %p169
    %p171 = scmp.ne.s32.totalorder %s160, %s163
    %p172 = scmp.eq.s32.totalorder %s103, 1
    %p173 = por %p171, %p172
    %p174 = scmp.ne.s32.totalorder %s163, %s164
    %p175 = scmp.eq.s32.totalorder %s103, 0
    %p176 = por %p174, %p175
    %p177 = scmp.ne.s32.totalorder %s163, %s164
    %p178 = scmp.eq.s32.totalorder %s104, 1
    %p179 = por %p177, %p178
    %p181 = scmp.ne.s32.totalorder %s164, %s180
    %p182 = scmp.eq.s32.totalorder %s104, 0
    %p183 = por %p181, %p182
    %s184 = ssub.s32 %s98, %s105
    %p185 = scmp.eq.s32.totalorder %s184, 0
    %s187 = sadd.s32 %s186, 1
    %s188 = scalar_select %p185, %s186, %s187
    %p191 = pneg %p185
    %p192 = scmp.eq.s32.totalorder %s98, 1
    %p193 = por %p191, %p192
    %p194 = scmp.ne.s32.totalorder %s186, %s189
    %p195 = scmp.eq.s32.totalorder %s98, 0
    %p196 = por %p194, %p195
    %p197 = scmp.ne.s32.totalorder %s186, %s189
    %p198 = scmp.eq.s32.totalorder %s103, 1
    %p199 = por %p197, %p198
    %p200 = scmp.ne.s32.totalorder %s189, %s190
    %p201 = scmp.eq.s32.totalorder %s103, 0
    %p202 = por %p200, %p201
    %p203 = scmp.ne.s32.totalorder %s189, %s190
    %p204 = scmp.eq.s32.totalorder %s104, 1
    %p205 = por %p203, %p204
    %p207 = scmp.ne.s32.totalorder %s190, %s206
    %p208 = scmp.eq.s32.totalorder %s104, 0
    %p209 = por %p207, %p208
    %s210 = ssub.s32 %s98, %s105
    %p211 = scmp.eq.s32.totalorder %s210, 0
    %s213 = sadd.s32 %s212, 1
    %s214 = scalar_select %p211, %s212, %s213
    %p217 = pneg %p211
    %p218 = scmp.eq.s32.totalorder %s98, 1
    %p219 = por %p217, %p218
    %p220 = scmp.ne.s32.totalorder %s212, %s215
    %p221 = scmp.eq.s32.totalorder %s98, 0
    %p222 = por %p220, %p221
    %p223 = scmp.ne.s32.totalorder %s212, %s215
    %p224 = scmp.eq.s32.totalorder %s103, 1
    %p225 = por %p223, %p224
    %p226 = scmp.ne.s32.totalorder %s215, %s216
    %p227 = scmp.eq.s32.totalorder %s103, 0
    %p228 = por %p226, %p227
    %p229 = scmp.ne.s32.totalorder %s215, %s216
    %p230 = scmp.eq.s32.totalorder %s104, 1
    %p231 = por %p229, %p230
    %p233 = scmp.ne.s32.totalorder %s216, %s232
    %p234 = scmp.eq.s32.totalorder %s104, 0
    %p235 = por %p233, %p234
    %s236 = ssub.s32 %s98, %s105
    %p237 = scmp.eq.s32.totalorder %s236, 0
    %s239 = sadd.s32 %s238, 1
    %s240 = scalar_select %p237, %s238, %s239
    %p243 = pneg %p237
    %p244 = scmp.eq.s32.totalorder %s98, 1
    %p245 = por %p243, %p244
    %p246 = scmp.ne.s32.totalorder %s238, %s241
    %p247 = scmp.eq.s32.totalorder %s98, 0
    %p248 = por %p246, %p247
    %p249 = scmp.ne.s32.totalorder %s238, %s241
    %p250 = scmp.eq.s32.totalorder %s103, 1
    %p251 = por %p249, %p250
    %p252 = scmp.ne.s32.totalorder %s241, %s242
    %p253 = scmp.eq.s32.totalorder %s103, 0
    %p254 = por %p252, %p253
    %p255 = scmp.ne.s32.totalorder %s241, %s242
    %p256 = scmp.eq.s32.totalorder %s104, 1
    %p257 = por %p255, %p256
    %p259 = scmp.ne.s32.totalorder %s242, %s258
    %p260 = scmp.eq.s32.totalorder %s104, 0
    %p261 = por %p259, %p260
    %s262 = ssub.s32 %s98, %s105
    %p263 = scmp.eq.s32.totalorder %s262, 0
    %s265 = sadd.s32 %s264, 1
    %s266 = scalar_select %p263, %s264, %s265
    %p269 = pneg %p263
    %p270 = scmp.eq.s32.totalorder %s98, 1
    %p271 = por %p269, %p270
    %p272 = scmp.ne.s32.totalorder %s264, %s267
    %p273 = scmp.eq.s32.totalorder %s98, 0
    %p274 = por %p272, %p273
    %p275 = scmp.ne.s32.totalorder %s264, %s267
    %p276 = scmp.eq.s32.totalorder %s103, 1
    %p277 = por %p275, %p276
    %p278 = scmp.ne.s32.totalorder %s267, %s268
    %p279 = scmp.eq.s32.totalorder %s103, 0
    %p280 = por %p278, %p279
    %p281 = scmp.ne.s32.totalorder %s267, %s268
    %p282 = scmp.eq.s32.totalorder %s104, 1
    %p283 = por %p281, %p282
    %p285 = scmp.ne.s32.totalorder %s268, %s284
    %p286 = scmp.eq.s32.totalorder %s104, 0
    %p287 = por %p285, %p286
    %s288 = ssub.s32 %s98, %s105
    %p289 = scmp.eq.s32.totalorder %s288, 0
    %s291 = sadd.s32 %s290, 1
    %s292 = scalar_select %p289, %s290, %s291
    %p295 = pneg %p289
    %p296 = scmp.eq.s32.totalorder %s98, 1
    %p297 = por %p295, %p296
    %p298 = scmp.ne.s32.totalorder %s290, %s293
    %p299 = scmp.eq.s32.totalorder %s98, 0
    %p300 = por %p298, %p299
    %p301 = scmp.ne.s32.totalorder %s290, %s293
    %p302 = scmp.eq.s32.totalorder %s103, 1
    %p303 = por %p301, %p302
    %p304 = scmp.ne.s32.totalorder %s293, %s294
    %p305 = scmp.eq.s32.totalorder %s103, 0
    %p306 = por %p304, %p305
    %p307 = scmp.ne.s32.totalorder %s293, %s294
    %p308 = scmp.eq.s32.totalorder %s104, 1
    %p309 = por %p307, %p308
    %p311 = scmp.ne.s32.totalorder %s294, %s310
    %p312 = scmp.eq.s32.totalorder %s104, 0
    %p313 = por %p311, %p312
    %s315 = sadd.s32 %s314, 1
    %p318 = scmp.eq.s32.totalorder %s98, 1
    %p319 = scmp.ne.s32.totalorder %s314, %s316
    %p320 = scmp.eq.s32.totalorder %s98, 0
    %p321 = por %p319, %p320
    %p322 = scmp.ne.s32.totalorder %s314, %s316
    %p323 = scmp.eq.s32.totalorder %s103, 1
    %p324 = por %p322, %p323
    %p325 = scmp.ne.s32.totalorder %s316, %s317
    %p326 = scmp.eq.s32.totalorder %s103, 0
    %p327 = por %p325, %p326
    %p328 = scmp.ne.s32.totalorder %s316, %s317
    %p329 = scmp.eq.s32.totalorder %s104, 1
    %p330 = por %p328, %p329
    %p332 = scmp.ne.s32.totalorder %s317, %s331
    %p333 = scmp.eq.s32.totalorder %s104, 0
    %p334 = por %p332, %p333
    %s336 = sadd.s32 %s335, 1
    %p339 = scmp.eq.s32.totalorder %s98, 1
    %p340 = scmp.ne.s32.totalorder %s335, %s337
    %p341 = scmp.eq.s32.totalorder %s98, 0
    %p342 = por %p340, %p341
    %p343 = scmp.ne.s32.totalorder %s335, %s337
    %p344 = scmp.eq.s32.totalorder %s103, 1
    %p345 = por %p343, %p344
    %p346 = scmp.ne.s32.totalorder %s337, %s338
    %p347 = scmp.eq.s32.totalorder %s103, 0
    %p348 = por %p346, %p347
    %p349 = scmp.ne.s32.totalorder %s337, %s338
    %p350 = scmp.eq.s32.totalorder %s104, 1
    %p351 = por %p349, %p350
    %p353 = scmp.ne.s32.totalorder %s338, %s352
    %p354 = scmp.eq.s32.totalorder %s104, 0
    %p355 = por %p353, %p354
    %s357 = sadd.s32 %s356, 1
    %p360 = scmp.eq.s32.totalorder %s98, 1
    %p361 = scmp.ne.s32.totalorder %s356, %s358
    %p362 = scmp.eq.s32.totalorder %s98, 0
    %p363 = por %p361, %p362
    %p364 = scmp.ne.s32.totalorder %s356, %s358
    %p365 = scmp.eq.s32.totalorder %s103, 1
    %p366 = por %p364, %p365
    %p367 = scmp.ne.s32.totalorder %s358, %s359
    %p368 = scmp.eq.s32.totalorder %s103, 0
    %p369 = por %p367, %p368
    %p370 = scmp.ne.s32.totalorder %s358, %s359
    %p371 = scmp.eq.s32.totalorder %s104, 1
    %p372 = por %p370, %p371
    %p374 = scmp.ne.s32.totalorder %s359, %s373
    %p375 = scmp.eq.s32.totalorder %s104, 0
    %p376 = por %p374, %p375
    %s378 = sadd.s32 %s377, 1
    %p381 = scmp.eq.s32.totalorder %s98, 1
    %p382 = scmp.ne.s32.totalorder %s377, %s379
    %p383 = scmp.eq.s32.totalorder %s98, 0
    %p384 = por %p382, %p383
    %p385 = scmp.ne.s32.totalorder %s377, %s379
    %p386 = scmp.eq.s32.totalorder %s103, 1
    %p387 = por %p385, %p386
    %p388 = scmp.ne.s32.totalorder %s379, %s380
    %p389 = scmp.eq.s32.totalorder %s103, 0
    %p390 = por %p388, %p389
    %p391 = scmp.ne.s32.totalorder %s379, %s380
    %p392 = scmp.eq.s32.totalorder %s104, 1
    %p393 = por %p391, %p392
    %p395 = scmp.ne.s32.totalorder %s380, %s394
    %p396 = scmp.eq.s32.totalorder %s104, 0
    %p397 = por %p395, %p396
    %s399 = sadd.s32 %s398, 1
    %p402 = scmp.eq.s32.totalorder %s98, 1
    %p403 = scmp.ne.s32.totalorder %s398, %s400
    %p404 = scmp.eq.s32.totalorder %s98, 0
    %p405 = por %p403, %p404
    %p406 = scmp.ne.s32.totalorder %s398, %s400
    %p407 = scmp.eq.s32.totalorder %s103, 1
    %p408 = por %p406, %p407
    %p409 = scmp.ne.s32.totalorder %s400, %s401
    %p410 = scmp.eq.s32.totalorder %s103, 0
    %p411 = por %p409, %p410
    %p412 = scmp.ne.s32.totalorder %s400, %s401
    %p413 = scmp.eq.s32.totalorder %s104, 1
    %p414 = por %p412, %p413
    %p416 = scmp.ne.s32.totalorder %s401, %s415
    %p417 = scmp.eq.s32.totalorder %s104, 0
    %p418 = por %p416, %p417
    %s420 = sadd.s32 %s419, 1
    %p423 = scmp.eq.s32.totalorder %s98, 1
    %p424 = scmp.ne.s32.totalorder %s419, %s421
    %p425 = scmp.eq.s32.totalorder %s98, 0
    %p426 = por %p424, %p425
    %p427 = scmp.ne.s32.totalorder %s419, %s421
    %p428 = scmp.eq.s32.totalorder %s103, 1
    %p429 = por %p427, %p428
    %p430 = scmp.ne.s32.totalorder %s421, %s422
    %p431 = scmp.eq.s32.totalorder %s103, 0
    %p432 = por %p430, %p431
    %p433 = scmp.ne.s32.totalorder %s421, %s422
    %p434 = scmp.eq.s32.totalorder %s104, 1
    %p435 = por %p433, %p434
    %p437 = scmp.ne.s32.totalorder %s422, %s436
    %p438 = scmp.eq.s32.totalorder %s104, 0
    %p439 = por %p437, %p438
    %s441 = sadd.s32 %s440, 1
    %p444 = scmp.eq.s32.totalorder %s98, 1
    %p445 = scmp.ne.s32.totalorder %s440, %s442
    %p446 = scmp.eq.s32.totalorder %s98, 0
    %p447 = por %p445, %p446
    %p448 = scmp.ne.s32.totalorder %s440, %s442
    %p449 = scmp.eq.s32.totalorder %s103, 1
    %p450 = por %p448, %p449
    %p451 = scmp.ne.s32.totalorder %s442, %s443
    %p452 = scmp.eq.s32.totalorder %s103, 0
    %p453 = por %p451, %p452
    %p454 = scmp.ne.s32.totalorder %s442, %s443
    %p455 = scmp.eq.s32.totalorder %s104, 1
    %p456 = por %p454, %p455
    %p458 = scmp.ne.s32.totalorder %s443, %s457
    %p459 = scmp.eq.s32.totalorder %s104, 0
    %p460 = por %p458, %p459
    %s462 = sadd.s32 %s461, 1
    %p465 = scmp.eq.s32.totalorder %s98, 1
    %p466 = scmp.ne.s32.totalorder %s461, %s463
    %p467 = scmp.eq.s32.totalorder %s98, 0
    %p468 = por %p466, %p467
    %p469 = scmp.ne.s32.totalorder %s461, %s463
    %p470 = scmp.eq.s32.totalorder %s103, 1
    %p471 = por %p469, %p470
    %p472 = scmp.ne.s32.totalorder %s463, %s464
    %p473 = scmp.eq.s32.totalorder %s103, 0
    %p474 = por %p472, %p473
    %p475 = scmp.ne.s32.totalorder %s463, %s464
    %p476 = scmp.eq.s32.totalorder %s104, 1
    %p477 = por %p475, %p476
    %p479 = scmp.ne.s32.totalorder %s464, %s478
    %p480 = scmp.eq.s32.totalorder %s104, 0
    %p481 = por %p479, %p480
    %s483 = sadd.s32 %s482, 1
    %p486 = scmp.eq.s32.totalorder %s98, 1
    %p487 = scmp.ne.s32.totalorder %s482, %s484
    %p488 = scmp.eq.s32.totalorder %s98, 0
    %p489 = por %p487, %p488
    %p490 = scmp.ne.s32.totalorder %s482, %s484
    %p491 = scmp.eq.s32.totalorder %s103, 1
    %p492 = por %p490, %p491
    %p493 = scmp.ne.s32.totalorder %s484, %s485
    %p494 = scmp.eq.s32.totalorder %s103, 0
    %p495 = por %p493, %p494
    %p496 = scmp.ne.s32.totalorder %s484, %s485
    %p497 = scmp.eq.s32.totalorder %s104, 1
    %p498 = por %p496, %p497
    %p500 = scmp.ne.s32.totalorder %s485, %s499
    %p501 = scmp.eq.s32.totalorder %s104, 0
    %p502 = por %p500, %p501
    %s504 = sadd.s32 %s503, 1
    %p507 = scmp.eq.s32.totalorder %s98, 1
    %p508 = scmp.ne.s32.totalorder %s503, %s505
    %p509 = scmp.eq.s32.totalorder %s98, 0
    %p510 = por %p508, %p509
    %p511 = scmp.ne.s32.totalorder %s503, %s505
    %p512 = scmp.eq.s32.totalorder %s103, 1
    %p513 = por %p511, %p512
    %p514 = scmp.ne.s32.totalorder %s505, %s506
    %p515 = scmp.eq.s32.totalorder %s103, 0
    %p516 = por %p514, %p515
    %p517 = scmp.ne.s32.totalorder %s505, %s506
    %p518 = scmp.eq.s32.totalorder %s104, 1
    %p519 = por %p517, %p518
    %p521 = scmp.ne.s32.totalorder %s506, %s520
    %p522 = scmp.eq.s32.totalorder %s104, 0
    %p523 = por %p521, %p522
    %s525 = sadd.s32 %s524, 1
    %p528 = scmp.eq.s32.totalorder %s98, 1
    %p529 = scmp.ne.s32.totalorder %s524, %s526
    %p530 = scmp.eq.s32.totalorder %s98, 0
    %p531 = por %p529, %p530
    %p532 = scmp.ne.s32.totalorder %s524, %s526
    %p533 = scmp.eq.s32.totalorder %s103, 1
    %p534 = por %p532, %p533
    %p535 = scmp.ne.s32.totalorder %s526, %s527
    %p536 = scmp.eq.s32.totalorder %s103, 0
    %p537 = por %p535, %p536
    %p538 = scmp.ne.s32.totalorder %s526, %s527
    %p539 = scmp.eq.s32.totalorder %s104, 1
    %p540 = por %p538, %p539
    %p542 = scmp.ne.s32.totalorder %s527, %s541
    %p543 = scmp.eq.s32.totalorder %s104, 0
    %p544 = por %p542, %p543
    %s546 = sadd.s32 %s545, 1
    %p549 = scmp.eq.s32.totalorder %s98, 1
    %p550 = scmp.ne.s32.totalorder %s545, %s547
    %p551 = scmp.eq.s32.totalorder %s98, 0
    %p552 = por %p550, %p551
    %p553 = scmp.ne.s32.totalorder %s545, %s547
    %p554 = scmp.eq.s32.totalorder %s103, 1
    %p555 = por %p553, %p554
    %p556 = scmp.ne.s32.totalorder %s547, %s548
    %p557 = scmp.eq.s32.totalorder %s103, 0
    %p558 = por %p556, %p557
    %p559 = scmp.ne.s32.totalorder %s547, %s548
    %p560 = scmp.eq.s32.totalorder %s104, 1
    %p561 = por %p559, %p560
    %p563 = scmp.ne.s32.totalorder %s548, %s562
    %p564 = scmp.eq.s32.totalorder %s104, 0
    %p565 = por %p563, %p564
    %s567 = sadd.s32 %s566, 1
    %p570 = scmp.eq.s32.totalorder %s98, 1
    %p571 = scmp.ne.s32.totalorder %s566, %s568
    %p572 = scmp.eq.s32.totalorder %s98, 0
    %p573 = por %p571, %p572
    %p574 = scmp.ne.s32.totalorder %s566, %s568
    %p575 = scmp.eq.s32.totalorder %s103, 1
    %p576 = por %p574, %p575
    %p577 = scmp.ne.s32.totalorder %s568, %s569
    %p578 = scmp.eq.s32.totalorder %s103, 0
    %p579 = por %p577, %p578
    %p580 = scmp.ne.s32.totalorder %s568, %s569
    %p581 = scmp.eq.s32.totalorder %s104, 1
    %p582 = por %p580, %p581
    %p584 = scmp.ne.s32.totalorder %s569, %s583
    %p585 = scmp.eq.s32.totalorder %s104, 0
    %p586 = por %p584, %p585
    %s588 = sadd.s32 %s587, 1
    %p591 = scmp.eq.s32.totalorder %s98, 1
    %p592 = scmp.ne.s32.totalorder %s587, %s589
    %p593 = scmp.eq.s32.totalorder %s98, 0
    %p594 = por %p592, %p593
    %p595 = scmp.ne.s32.totalorder %s587, %s589
    %p596 = scmp.eq.s32.totalorder %s103, 1
    %p597 = por %p595, %p596
    %p598 = scmp.ne.s32.totalorder %s589, %s590
    %p599 = scmp.eq.s32.totalorder %s103, 0
    %p600 = por %p598, %p599
    %p601 = scmp.ne.s32.totalorder %s589, %s590
    %p602 = scmp.eq.s32.totalorder %s104, 1
    %p603 = por %p601, %p602
    %p605 = scmp.ne.s32.totalorder %s590, %s604
    %p606 = scmp.eq.s32.totalorder %s104, 0
    %p607 = por %p605, %p606
    %s609 = sadd.s32 %s608, 1
    %p612 = scmp.eq.s32.totalorder %s98, 1
    %p613 = scmp.ne.s32.totalorder %s608, %s610
    %p614 = scmp.eq.s32.totalorder %s98, 0
    %p615 = por %p613, %p614
    %p616 = scmp.ne.s32.totalorder %s608, %s610
    %p617 = scmp.eq.s32.totalorder %s103, 1
    %p618 = por %p616, %p617
    %p619 = scmp.ne.s32.totalorder %s610, %s611
    %p620 = scmp.eq.s32.totalorder %s103, 0
    %p621 = por %p619, %p620
    %p622 = scmp.ne.s32.totalorder %s610, %s611
    %p623 = scmp.eq.s32.totalorder %s104, 1
    %p624 = por %p622, %p623
    %p626 = scmp.ne.s32.totalorder %s611, %s625
    %p627 = scmp.eq.s32.totalorder %s104, 0
    %p628 = por %p626, %p627
    %s630 = sadd.s32 %s629, 1
    %p633 = scmp.eq.s32.totalorder %s98, 1
    %p634 = scmp.ne.s32.totalorder %s629, %s631
    %p635 = scmp.eq.s32.totalorder %s98, 0
    %p636 = por %p634, %p635
    %p637 = scmp.ne.s32.totalorder %s629, %s631
    %p638 = scmp.eq.s32.totalorder %s103, 1
    %p639 = por %p637, %p638
    %p640 = scmp.ne.s32.totalorder %s631, %s632
    %p641 = scmp.eq.s32.totalorder %s103, 0
    %p642 = por %p640, %p641
    %p643 = scmp.ne.s32.totalorder %s631, %s632
    %p644 = scmp.eq.s32.totalorder %s104, 1
    %p645 = por %p643, %p644
    %p647 = scmp.ne.s32.totalorder %s632, %s646
    %p648 = scmp.eq.s32.totalorder %s104, 0
    %p649 = por %p647, %p648
    %s651 = sadd.s32 %s650, 1
    %p654 = scmp.eq.s32.totalorder %s98, 1
    %p655 = scmp.ne.s32.totalorder %s650, %s652
    %p656 = scmp.eq.s32.totalorder %s98, 0
    %p657 = por %p655, %p656
    %p658 = scmp.ne.s32.totalorder %s650, %s652
    %p659 = scmp.eq.s32.totalorder %s103, 1
    %p660 = por %p658, %p659
    %p661 = scmp.ne.s32.totalorder %s652, %s653
    %p662 = scmp.eq.s32.totalorder %s103, 0
    %p663 = por %p661, %p662
    %p664 = scmp.ne.s32.totalorder %s652, %s653
    %p665 = scmp.eq.s32.totalorder %s104, 1
    %p666 = por %p664, %p665
    %p668 = scmp.ne.s32.totalorder %s653, %s667
    %p669 = scmp.eq.s32.totalorder %s104, 0
    %p670 = por %p668, %p669
    %s672 = sadd.s32 %s671, 1
    %p675 = scmp.eq.s32.totalorder %s98, 1
    %p676 = scmp.ne.s32.totalorder %s671, %s673
    %p677 = scmp.eq.s32.totalorder %s98, 0
    %p678 = por %p676, %p677
    %p679 = scmp.ne.s32.totalorder %s671, %s673
    %p680 = scmp.eq.s32.totalorder %s103, 1
    %p681 = por %p679, %p680
    %p682 = scmp.ne.s32.totalorder %s673, %s674
    %p683 = scmp.eq.s32.totalorder %s103, 0
    %p684 = por %p682, %p683
    %p685 = scmp.ne.s32.totalorder %s673, %s674
    %p686 = scmp.eq.s32.totalorder %s104, 1
    %p687 = por %p685, %p686
    %p689 = scmp.ne.s32.totalorder %s674, %s688
    %p690 = scmp.eq.s32.totalorder %s104, 0
    %p691 = por %p689, %p690
    %s693 = sadd.s32 %s692, 1
    %p696 = scmp.eq.s32.totalorder %s98, 1
    %p697 = scmp.ne.s32.totalorder %s692, %s694
    %p698 = scmp.eq.s32.totalorder %s98, 0
    %p699 = por %p697, %p698
    %p700 = scmp.ne.s32.totalorder %s692, %s694
    %p701 = scmp.eq.s32.totalorder %s103, 1
    %p702 = por %p700, %p701
    %p703 = scmp.ne.s32.totalorder %s694, %s695
    %p704 = scmp.eq.s32.totalorder %s103, 0
    %p705 = por %p703, %p704
    %p706 = scmp.ne.s32.totalorder %s694, %s695
    %p707 = scmp.eq.s32.totalorder %s104, 1
    %p708 = por %p706, %p707
    %p710 = scmp.ne.s32.totalorder %s695, %s709
    %p711 = scmp.eq.s32.totalorder %s104, 0
    %p712 = por %p710, %p711
    %s714 = sadd.s32 %s713, 1
    %p717 = scmp.eq.s32.totalorder %s98, 1
    %p718 = scmp.ne.s32.totalorder %s713, %s715
    %p719 = scmp.eq.s32.totalorder %s98, 0
    %p720 = por %p718, %p719
    %p721 = scmp.ne.s32.totalorder %s713, %s715
    %p722 = scmp.eq.s32.totalorder %s103, 1
    %p723 = por %p721, %p722
    %p724 = scmp.ne.s32.totalorder %s715, %s716
    %p725 = scmp.eq.s32.totalorder %s103, 0
    %p726 = por %p724, %p725
    %p727 = scmp.ne.s32.totalorder %s715, %s716
    %p728 = scmp.eq.s32.totalorder %s104, 1
    %p729 = por %p727, %p728
    %p731 = scmp.ne.s32.totalorder %s716, %s730
    %p732 = scmp.eq.s32.totalorder %s104, 0
    %p733 = por %p731, %p732
    %s735 = sadd.s32 %s734, 1
    %p738 = scmp.eq.s32.totalorder %s98, 1
    %p739 = scmp.ne.s32.totalorder %s734, %s736
    %p740 = scmp.eq.s32.totalorder %s98, 0
    %p741 = por %p739, %p740
    %p742 = scmp.ne.s32.totalorder %s734, %s736
    %p743 = scmp.eq.s32.totalorder %s103, 1
    %p744 = por %p742, %p743
    %p745 = scmp.ne.s32.totalorder %s736, %s737
    %p746 = scmp.eq.s32.totalorder %s103, 0
    %p747 = por %p745, %p746
    %p748 = scmp.ne.s32.totalorder %s736, %s737
    %p749 = scmp.eq.s32.totalorder %s104, 1
    %p750 = por %p748, %p749
    %p752 = scmp.ne.s32.totalorder %s737, %s751
    %p753 = scmp.eq.s32.totalorder %s104, 0
    %p754 = por %p752, %p753
    %s756 = sadd.s32 %s755, 1
    %p759 = scmp.eq.s32.totalorder %s98, 1
    %p760 = scmp.ne.s32.totalorder %s755, %s757
    %p761 = scmp.eq.s32.totalorder %s98, 0
    %p762 = por %p760, %p761
    %p763 = scmp.ne.s32.totalorder %s755, %s757
    %p764 = scmp.eq.s32.totalorder %s103, 1
    %p765 = por %p763, %p764
    %p766 = scmp.ne.s32.totalorder %s757, %s758
    %p767 = scmp.eq.s32.totalorder %s103, 0
    %p768 = por %p766, %p767
    %p769 = scmp.ne.s32.totalorder %s757, %s758
    %p770 = scmp.eq.s32.totalorder %s104, 1
    %p771 = por %p769, %p770
    %p773 = scmp.ne.s32.totalorder %s758, %s772
    %p774 = scmp.eq.s32.totalorder %s104, 0
    %p775 = por %p773, %p774
    %s777 = sadd.s32 %s776, 1
    %p780 = scmp.eq.s32.totalorder %s98, 1
    %p781 = scmp.ne.s32.totalorder %s776, %s778
    %p782 = scmp.eq.s32.totalorder %s98, 0
    %p783 = por %p781, %p782
    %p784 = scmp.ne.s32.totalorder %s776, %s778
    %p785 = scmp.eq.s32.totalorder %s103, 1
    %p786 = por %p784, %p785
    %p787 = scmp.ne.s32.totalorder %s778, %s779
    %p788 = scmp.eq.s32.totalorder %s103, 0
    %p789 = por %p787, %p788
    %p790 = scmp.ne.s32.totalorder %s778, %s779
    %p791 = scmp.eq.s32.totalorder %s104, 1
    %p792 = por %p790, %p791
    %p794 = scmp.ne.s32.totalorder %s779, %s793
    %p795 = scmp.eq.s32.totalorder %s104, 0
    %p796 = por %p794, %p795
    %s798 = sadd.s32 %s797, 1
    %p801 = scmp.eq.s32.totalorder %s98, 1
    %p802 = scmp.ne.s32.totalorder %s797, %s799
    %p803 = scmp.eq.s32.totalorder %s98, 0
    %p804 = por %p802, %p803
    %p805 = scmp.ne.s32.totalorder %s797, %s799
    %p806 = scmp.eq.s32.totalorder %s103, 1
    %p807 = por %p805, %p806
    %p808 = scmp.ne.s32.totalorder %s799, %s800
    %p809 = scmp.eq.s32.totalorder %s103, 0
    %p810 = por %p808, %p809
    %p811 = scmp.ne.s32.totalorder %s799, %s800
    %p812 = scmp.eq.s32.totalorder %s104, 1
    %p813 = por %p811, %p812
    %p815 = scmp.ne.s32.totalorder %s800, %s814
    %p816 = scmp.eq.s32.totalorder %s104, 0
    %p817 = por %p815, %p816
    %s819 = sadd.s32 %s818, 1
    %p822 = scmp.eq.s32.totalorder %s98, 1
    %p823 = scmp.ne.s32.totalorder %s818, %s820
    %p824 = scmp.eq.s32.totalorder %s98, 0
    %p825 = por %p823, %p824
    %p826 = scmp.ne.s32.totalorder %s818, %s820
    %p827 = scmp.eq.s32.totalorder %s103, 1
    %p828 = por %p826, %p827
    %p829 = scmp.ne.s32.totalorder %s820, %s821
    %p830 = scmp.eq.s32.totalorder %s103, 0
    %p831 = por %p829, %p830
    %p832 = scmp.ne.s32.totalorder %s820, %s821
    %p833 = scmp.eq.s32.totalorder %s104, 1
    %p834 = por %p832, %p833
    %p836 = scmp.ne.s32.totalorder %s821, %s835
    %p837 = scmp.eq.s32.totalorder %s104, 0
    %p838 = por %p836, %p837
    %s840 = sadd.s32 %s839, 1
    %p843 = scmp.eq.s32.totalorder %s98, 1
    %p844 = scmp.ne.s32.totalorder %s839, %s841
    %p845 = scmp.eq.s32.totalorder %s98, 0
    %p846 = por %p844, %p845
    %p847 = scmp.ne.s32.totalorder %s839, %s841
    %p848 = scmp.eq.s32.totalorder %s103, 1
    %p849 = por %p847, %p848
    %p850 = scmp.ne.s32.totalorder %s841, %s842
    %p851 = scmp.eq.s32.totalorder %s103, 0
    %p852 = por %p850, %p851
    %p853 = scmp.ne.s32.totalorder %s841, %s842
    %p854 = scmp.eq.s32.totalorder %s104, 1
    %p855 = por %p853, %p854
    %p857 = scmp.ne.s32.totalorder %s842, %s856
    %p858 = scmp.eq.s32.totalorder %s104, 0
    %p859 = por %p857, %p858
    %s861 = sadd.s32 %s860, 1
    %p864 = scmp.eq.s32.totalorder %s98, 1
    %p865 = scmp.ne.s32.totalorder %s860, %s862
    %p866 = scmp.eq.s32.totalorder %s98, 0
    %p867 = por %p865, %p866
    %p868 = scmp.ne.s32.totalorder %s860, %s862
    %p869 = scmp.eq.s32.totalorder %s103, 1
    %p870 = por %p868, %p869
    %p871 = scmp.ne.s32.totalorder %s862, %s863
    %p872 = scmp.eq.s32.totalorder %s103, 0
    %p873 = por %p871, %p872
    %p874 = scmp.ne.s32.totalorder %s862, %s863
    %p875 = scmp.eq.s32.totalorder %s104, 1
    %p876 = por %p874, %p875
    %p878 = scmp.ne.s32.totalorder %s863, %s877
    %p879 = scmp.eq.s32.totalorder %s104, 0
    %p880 = por %p878, %p879
    %s882 = sadd.s32 %s881, 1
    %p885 = scmp.eq.s32.totalorder %s98, 1
    %p886 = scmp.ne.s32.totalorder %s881, %s883
    %p887 = scmp.eq.s32.totalorder %s98, 0
    %p888 = por %p886, %p887
    %p889 = scmp.ne.s32.totalorder %s881, %s883
    %p890 = scmp.eq.s32.totalorder %s103, 1
    %p891 = por %p889, %p890
    %p892 = scmp.ne.s32.totalorder %s883, %s884
    %p893 = scmp.eq.s32.totalorder %s103, 0
    %p894 = por %p892, %p893
    %p895 = scmp.ne.s32.totalorder %s883, %s884
    %p896 = scmp.eq.s32.totalorder %s104, 1
    %p897 = por %p895, %p896
    %p899 = scmp.ne.s32.totalorder %s884, %s898
    %p900 = scmp.eq.s32.totalorder %s104, 0
    %p901 = por %p899, %p900
    %s903 = sadd.s32 %s902, 1
    %p906 = scmp.eq.s32.totalorder %s98, 1
    %p907 = scmp.ne.s32.totalorder %s902, %s904
    %p908 = scmp.eq.s32.totalorder %s98, 0
    %p909 = por %p907, %p908
    %p910 = scmp.ne.s32.totalorder %s902, %s904
    %p911 = scmp.eq.s32.totalorder %s103, 1
    %p912 = por %p910, %p911
    %p913 = scmp.ne.s32.totalorder %s904, %s905
    %p914 = scmp.eq.s32.totalorder %s103, 0
    %p915 = por %p913, %p914
    %p916 = scmp.ne.s32.totalorder %s904, %s905
    %p917 = scmp.eq.s32.totalorder %s104, 1
    %p918 = por %p916, %p917
    %p920 = scmp.ne.s32.totalorder %s905, %s919
    %p921 = scmp.eq.s32.totalorder %s104, 0
    %p922 = por %p920, %p921
    %s924 = sadd.s32 %s923, 1
    %p927 = scmp.eq.s32.totalorder %s98, 1
    %p928 = scmp.ne.s32.totalorder %s923, %s925
    %p929 = scmp.eq.s32.totalorder %s98, 0
    %p930 = por %p928, %p929
    %p931 = scmp.ne.s32.totalorder %s923, %s925
    %p932 = scmp.eq.s32.totalorder %s103, 1
    %p933 = por %p931, %p932
    %p934 = scmp.ne.s32.totalorder %s925, %s926
    %p935 = scmp.eq.s32.totalorder %s103, 0
    %p936 = por %p934, %p935
    %p937 = scmp.ne.s32.totalorder %s925, %s926
    %p938 = scmp.eq.s32.totalorder %s104, 1
    %p939 = por %p937, %p938
    %p941 = scmp.ne.s32.totalorder %s926, %s940
    %p942 = scmp.eq.s32.totalorder %s104, 0
    %p943 = por %p941, %p942
    %s945 = sadd.s32 %s944, 1
    %p948 = scmp.eq.s32.totalorder %s98, 1
    %p949 = scmp.ne.s32.totalorder %s944, %s946
    %p950 = scmp.eq.s32.totalorder %s98, 0
    %p951 = por %p949, %p950
    %p952 = scmp.ne.s32.totalorder %s944, %s946
    %p953 = scmp.eq.s32.totalorder %s103, 1
    %p954 = por %p952, %p953
    %p955 = scmp.ne.s32.totalorder %s946, %s947
    %p956 = scmp.eq.s32.totalorder %s103, 0
    %p957 = por %p955, %p956
    %p958 = scmp.ne.s32.totalorder %s946, %s947
    %p959 = scmp.eq.s32.totalorder %s104, 1
    %p960 = por %p958, %p959
    %p962 = scmp.ne.s32.totalorder %s947, %s961
    %p963 = scmp.eq.s32.totalorder %s104, 0
    %p964 = por %p962, %p963
    %s966 = sadd.s32 %s965, 1
    %p969 = scmp.eq.s32.totalorder %s98, 1
    %p970 = scmp.ne.s32.totalorder %s965, %s967
    %p971 = scmp.eq.s32.totalorder %s98, 0
    %p972 = por %p970, %p971
    %p973 = scmp.ne.s32.totalorder %s965, %s967
    %p974 = scmp.eq.s32.totalorder %s103, 1
    %p975 = por %p973, %p974
    %p976 = scmp.ne.s32.totalorder %s967, %s968
    %p977 = scmp.eq.s32.totalorder %s103, 0
    %p978 = por %p976, %p977
    %p979 = scmp.ne.s32.totalorder %s967, %s968
    %p980 = scmp.eq.s32.totalorder %s104, 1
    %p981 = por %p979, %p980
    %p983 = scmp.ne.s32.totalorder %s968, %s982
    %p984 = scmp.eq.s32.totalorder %s104, 0
    %p985 = por %p983, %p984
    %s986 = ssub.s32 %s98, %s105
    %p987 = scmp.eq.s32.totalorder %s986, 0
    %s989 = sadd.s32 %s988, 1
    %s990 = scalar_select %p987, %s988, %s989
    %p993 = pneg %p987
    %p994 = scmp.eq.s32.totalorder %s98, 1
    %p995 = por %p993, %p994
    %p996 = scmp.ne.s32.totalorder %s988, %s991
    %p997 = scmp.eq.s32.totalorder %s98, 0
    %p998 = por %p996, %p997
    %p999 = scmp.ne.s32.totalorder %s988, %s991
    %p1000 = scmp.eq.s32.totalorder %s103, 1
    %p1001 = por %p999, %p1000
    %p1002 = scmp.ne.s32.totalorder %s991, %s992
    %p1003 = scmp.eq.s32.totalorder %s103, 0
    %p1004 = por %p1002, %p1003
    %p1005 = scmp.ne.s32.totalorder %s991, %s992
    %p1006 = scmp.eq.s32.totalorder %s104, 1
    %p1007 = por %p1005, %p1006
    %p1009 = scmp.ne.s32.totalorder %s992, %s1008
    %p1010 = scmp.eq.s32.totalorder %s104, 0
    %p1011 = por %p1009, %p1010
    %s1012 = ssub.s32 %s98, %s105
    %p1013 = scmp.eq.s32.totalorder %s1012, 0
    %s1015 = sadd.s32 %s1014, 1
    %s1016 = scalar_select %p1013, %s1014, %s1015
    %p1019 = pneg %p1013
    %p1020 = scmp.eq.s32.totalorder %s98, 1
    %p1021 = por %p1019, %p1020
    %p1022 = scmp.ne.s32.totalorder %s1014, %s1017
    %p1023 = scmp.eq.s32.totalorder %s98, 0
    %p1024 = por %p1022, %p1023
    %p1025 = scmp.ne.s32.totalorder %s1014, %s1017
    %p1026 = scmp.eq.s32.totalorder %s103, 1
    %p1027 = por %p1025, %p1026
    %p1028 = scmp.ne.s32.totalorder %s1017, %s1018
    %p1029 = scmp.eq.s32.totalorder %s103, 0
    %p1030 = por %p1028, %p1029
    %p1031 = scmp.ne.s32.totalorder %s1017, %s1018
    %p1032 = scmp.eq.s32.totalorder %s104, 1
    %p1033 = por %p1031, %p1032
    %p1035 = scmp.ne.s32.totalorder %s1018, %s1034
    %p1036 = scmp.eq.s32.totalorder %s104, 0
    %p1037 = por %p1035, %p1036
    %s1038 = ssub.s32 %s98, %s105
    %p1039 = scmp.eq.s32.totalorder %s1038, 0
    %s1041 = sadd.s32 %s1040, 1
    %s1042 = scalar_select %p1039, %s1040, %s1041
    %p1045 = pneg %p1039
    %p1046 = scmp.eq.s32.totalorder %s98, 1
    %p1047 = por %p1045, %p1046
    %p1048 = scmp.ne.s32.totalorder %s1040, %s1043
    %p1049 = scmp.eq.s32.totalorder %s98, 0
    %p1050 = por %p1048, %p1049
    %p1051 = scmp.ne.s32.totalorder %s1040, %s1043
    %p1052 = scmp.eq.s32.totalorder %s103, 1
    %p1053 = por %p1051, %p1052
    %p1054 = scmp.ne.s32.totalorder %s1043, %s1044
    %p1055 = scmp.eq.s32.totalorder %s103, 0
    %p1056 = por %p1054, %p1055
    %p1057 = scmp.ne.s32.totalorder %s1043, %s1044
    %p1058 = scmp.eq.s32.totalorder %s104, 1
    %p1059 = por %p1057, %p1058
    %p1061 = scmp.ne.s32.totalorder %s1044, %s1060
    %p1062 = scmp.eq.s32.totalorder %s104, 0
    %p1063 = por %p1061, %p1062
    %p1064 = scmp.le.s32.totalorder 1, %s98
    %p1065 = scmp.lt.s32.totalorder %s98, 3
    %p1066 = pnand %p1064, %p1065
    %p1067 = pneg %p1066
    // Predicated region
    $region9: #{discriminator_forward.1} parent=5 // pred_check
      _
    $region10: #{discriminator_forward.1} parent=5 // pred_check_branch
      %1069 = sbr.rel (%p1066) target = $region12
    $region11: #{discriminator_forward.1} parent=5 // pred_region
      %s1070 = ssub.s32 %s98, 1
      // Predicated region
      $region13: #{discriminator_forward.1} parent=11 // pred_check
        %p1071 = pneg %p327
      $region14: #{discriminator_forward.1} parent=11 // pred_check_branch
        %1073 = sbr.rel (%p1071) target = $region16
      $region15: #{discriminator_forward.1} parent=11 // pred_region
        _
      $region16: #{discriminator_forward.1} parent=11 // pred_fallthru
        _
      // Predicated region
      $region17: #{discriminator_forward.1} parent=11 // pred_check
        %p1074 = pneg %p348
      $region18: #{discriminator_forward.1} parent=11 // pred_check_branch
        %1076 = sbr.rel (%p1074) target = $region20
      $region19: #{discriminator_forward.1} parent=11 // pred_region
        _
      $region20: #{discriminator_forward.1} parent=11 // pred_fallthru
        _
      // Predicated region
      $region21: #{discriminator_forward.1} parent=11 // pred_check
        %p1077 = pneg %p369
      $region22: #{discriminator_forward.1} parent=11 // pred_check_branch
        %1079 = sbr.rel (%p1077) target = $region24
      $region23: #{discriminator_forward.1} parent=11 // pred_region
        _
      $region24: #{discriminator_forward.1} parent=11 // pred_fallthru
        _
      // Predicated region
      $region25: #{discriminator_forward.1} parent=11 // pred_check
        %p1080 = pneg %p390
      $region26: #{discriminator_forward.1} parent=11 // pred_check_branch
        %1082 = sbr.rel (%p1080) target = $region28
      $region27: #{discriminator_forward.1} parent=11 // pred_region
        _
      $region28: #{discriminator_forward.1} parent=11 // pred_fallthru
        _
      // Predicated region
      $region29: #{discriminator_forward.1} parent=11 // pred_check
        %p1083 = pneg %p411
      $region30: #{discriminator_forward.1} parent=11 // pred_check_branch
        %1085 = sbr.rel (%p1083) target = $region32
      $region31: #{discriminator_forward.1} parent=11 // pred_region
        _
      $region32: #{discriminator_forward.1} parent=11 // pred_fallthru
        _
      // Predicated region
      $region33: #{discriminator_forward.1} parent=11 // pred_check
        %p1086 = pneg %p432
      $region34: #{discriminator_forward.1} parent=11 // pred_check_branch
        %1088 = sbr.rel (%p1086) target = $region36
      $region35: #{discriminator_forward.1} parent=11 // pred_region
        _
      $region36: #{discriminator_forward.1} parent=11 // pred_fallthru
        _
      // Predicated region
      $region37: #{discriminator_forward.1} parent=11 // pred_check
        %p1089 = pneg %p453
      $region38: #{discriminator_forward.1} parent=11 // pred_check_branch
        %1091 = sbr.rel (%p1089) target = $region40
      $region39: #{discriminator_forward.1} parent=11 // pred_region
        _
      $region40: #{discriminator_forward.1} parent=11 // pred_fallthru
        _
      // Predicated region
      $region41: #{discriminator_forward.1} parent=11 // pred_check
        %p1092 = pneg %p474
      $region42: #{discriminator_forward.1} parent=11 // pred_check_branch
        %1094 = sbr.rel (%p1092) target = $region44
      $region43: #{discriminator_forward.1} parent=11 // pred_region
        _
      $region44: #{discriminator_forward.1} parent=11 // pred_fallthru
        _
      // Predicated region
      $region45: #{discriminator_forward.1} parent=11 // pred_check
        %p1095 = pneg %p495
      $region46: #{discriminator_forward.1} parent=11 // pred_check_branch
        %1097 = sbr.rel (%p1095) target = $region48
      $region47: #{discriminator_forward.1} parent=11 // pred_region
        _
      $region48: #{discriminator_forward.1} parent=11 // pred_fallthru
        _
      // Predicated region
      $region49: #{discriminator_forward.1} parent=11 // pred_check
        %p1098 = pneg %p516
      $region50: #{discriminator_forward.1} parent=11 // pred_check_branch
        %1100 = sbr.rel (%p1098) target = $region52
      $region51: #{discriminator_forward.1} parent=11 // pred_region
        _
      $region52: #{discriminator_forward.1} parent=11 // pred_fallthru
        _
      // Predicated region
      $region53: #{discriminator_forward.1} parent=11 // pred_check
        %p1101 = pneg %p537
      $region54: #{discriminator_forward.1} parent=11 // pred_check_branch
        %1103 = sbr.rel (%p1101) target = $region56
      $region55: #{discriminator_forward.1} parent=11 // pred_region
        _
      $region56: #{discriminator_forward.1} parent=11 // pred_fallthru
        _
      // Predicated region
      $region57: #{discriminator_forward.1} parent=11 // pred_check
        %p1104 = pneg %p558
      $region58: #{discriminator_forward.1} parent=11 // pred_check_branch
        %1106 = sbr.rel (%p1104) target = $region60
      $region59: #{discriminator_forward.1} parent=11 // pred_region
        _
      $region60: #{discriminator_forward.1} parent=11 // pred_fallthru
        _
      // Predicated region
      $region61: #{discriminator_forward.1} parent=11 // pred_check
        %p1107 = pneg %p579
      $region62: #{discriminator_forward.1} parent=11 // pred_check_branch
        %1109 = sbr.rel (%p1107) target = $region64
      $region63: #{discriminator_forward.1} parent=11 // pred_region
        _
      $region64: #{discriminator_forward.1} parent=11 // pred_fallthru
        _
      // Predicated region
      $region65: #{discriminator_forward.1} parent=11 // pred_check
        %p1110 = pneg %p600
      $region66: #{discriminator_forward.1} parent=11 // pred_check_branch
        %1112 = sbr.rel (%p1110) target = $region68
      $region67: #{discriminator_forward.1} parent=11 // pred_region
        _
      $region68: #{discriminator_forward.1} parent=11 // pred_fallthru
        _
      // Predicated region
      $region69: #{discriminator_forward.1} parent=11 // pred_check
        %p1113 = pneg %p621
      $region70: #{discriminator_forward.1} parent=11 // pred_check_branch
        %1115 = sbr.rel (%p1113) target = $region72
      $region71: #{discriminator_forward.1} parent=11 // pred_region
        _
      $region72: #{discriminator_forward.1} parent=11 // pred_fallthru
        _
      // Predicated region
      $region73: #{discriminator_forward.1} parent=11 // pred_check
        %p1116 = pneg %p642
      $region74: #{discriminator_forward.1} parent=11 // pred_check_branch
        %1118 = sbr.rel (%p1116) target = $region76
      $region75: #{discriminator_forward.1} parent=11 // pred_region
        _
      $region76: #{discriminator_forward.1} parent=11 // pred_fallthru
        _
      // Predicated region
      $region77: #{discriminator_forward.1} parent=11 // pred_check
        %p1119 = pneg %p663
      $region78: #{discriminator_forward.1} parent=11 // pred_check_branch
        %1121 = sbr.rel (%p1119) target = $region80
      $region79: #{discriminator_forward.1} parent=11 // pred_region
        _
      $region80: #{discriminator_forward.1} parent=11 // pred_fallthru
        _
      // Predicated region
      $region81: #{discriminator_forward.1} parent=11 // pred_check
        %p1122 = pneg %p684
      $region82: #{discriminator_forward.1} parent=11 // pred_check_branch
        %1124 = sbr.rel (%p1122) target = $region84
      $region83: #{discriminator_forward.1} parent=11 // pred_region
        _
      $region84: #{discriminator_forward.1} parent=11 // pred_fallthru
        _
      // Predicated region
      $region85: #{discriminator_forward.1} parent=11 // pred_check
        %p1125 = pneg %p705
      $region86: #{discriminator_forward.1} parent=11 // pred_check_branch
        %1127 = sbr.rel (%p1125) target = $region88
      $region87: #{discriminator_forward.1} parent=11 // pred_region
        _
      $region88: #{discriminator_forward.1} parent=11 // pred_fallthru
        _
      // Predicated region
      $region89: #{discriminator_forward.1} parent=11 // pred_check
        %p1128 = pneg %p726
      $region90: #{discriminator_forward.1} parent=11 // pred_check_branch
        %1130 = sbr.rel (%p1128) target = $region92
      $region91: #{discriminator_forward.1} parent=11 // pred_region
        _
      $region92: #{discriminator_forward.1} parent=11 // pred_fallthru
        _
      // Predicated region
      $region93: #{discriminator_forward.1} parent=11 // pred_check
        %p1131 = pneg %p747
      $region94: #{discriminator_forward.1} parent=11 // pred_check_branch
        %1133 = sbr.rel (%p1131) target = $region96
      $region95: #{discriminator_forward.1} parent=11 // pred_region
        _
      $region96: #{discriminator_forward.1} parent=11 // pred_fallthru
        _
      // Predicated region
      $region97: #{discriminator_forward.1} parent=11 // pred_check
        %p1134 = pneg %p768
      $region98: #{discriminator_forward.1} parent=11 // pred_check_branch
        %1136 = sbr.rel (%p1134) target = $region100
      $region99: #{discriminator_forward.1} parent=11 // pred_region
        _
      $region100: #{discriminator_forward.1} parent=11 // pred_fallthru
        _
      // Predicated region
      $region101: #{discriminator_forward.1} parent=11 // pred_check
        %p1137 = pneg %p789
      $region102: #{discriminator_forward.1} parent=11 // pred_check_branch
        %1139 = sbr.rel (%p1137) target = $region104
      $region103: #{discriminator_forward.1} parent=11 // pred_region
        _
      $region104: #{discriminator_forward.1} parent=11 // pred_fallthru
        _
      // Predicated region
      $region105: #{discriminator_forward.1} parent=11 // pred_check
        %p1140 = pneg %p810
      $region106: #{discriminator_forward.1} parent=11 // pred_check_branch
        %1142 = sbr.rel (%p1140) target = $region108
      $region107: #{discriminator_forward.1} parent=11 // pred_region
        _
      $region108: #{discriminator_forward.1} parent=11 // pred_fallthru
        _
      // Predicated region
      $region109: #{discriminator_forward.1} parent=11 // pred_check
        %p1143 = pneg %p831
      $region110: #{discriminator_forward.1} parent=11 // pred_check_branch
        %1145 = sbr.rel (%p1143) target = $region112
      $region111: #{discriminator_forward.1} parent=11 // pred_region
        _
      $region112: #{discriminator_forward.1} parent=11 // pred_fallthru
        _
      // Predicated region
      $region113: #{discriminator_forward.1} parent=11 // pred_check
        %p1146 = pneg %p852
      $region114: #{discriminator_forward.1} parent=11 // pred_check_branch
        %1148 = sbr.rel (%p1146) target = $region116
      $region115: #{discriminator_forward.1} parent=11 // pred_region
        _
      $region116: #{discriminator_forward.1} parent=11 // pred_fallthru
        _
      // Predicated region
      $region117: #{discriminator_forward.1} parent=11 // pred_check
        %p1149 = pneg %p873
      $region118: #{discriminator_forward.1} parent=11 // pred_check_branch
        %1151 = sbr.rel (%p1149) target = $region120
      $region119: #{discriminator_forward.1} parent=11 // pred_region
        _
      $region120: #{discriminator_forward.1} parent=11 // pred_fallthru
        _
      // Predicated region
      $region121: #{discriminator_forward.1} parent=11 // pred_check
        %p1152 = pneg %p894
      $region122: #{discriminator_forward.1} parent=11 // pred_check_branch
        %1154 = sbr.rel (%p1152) target = $region124
      $region123: #{discriminator_forward.1} parent=11 // pred_region
        _
      $region124: #{discriminator_forward.1} parent=11 // pred_fallthru
        _
      // Predicated region
      $region125: #{discriminator_forward.1} parent=11 // pred_check
        %p1155 = pneg %p915
      $region126: #{discriminator_forward.1} parent=11 // pred_check_branch
        %1157 = sbr.rel (%p1155) target = $region128
      $region127: #{discriminator_forward.1} parent=11 // pred_region
        _
      $region128: #{discriminator_forward.1} parent=11 // pred_fallthru
        _
      // Predicated region
      $region129: #{discriminator_forward.1} parent=11 // pred_check
        %p1158 = pneg %p936
      $region130: #{discriminator_forward.1} parent=11 // pred_check_branch
        %1160 = sbr.rel (%p1158) target = $region132
      $region131: #{discriminator_forward.1} parent=11 // pred_region
        _
      $region132: #{discriminator_forward.1} parent=11 // pred_fallthru
        _
      // Predicated region
      $region133: #{discriminator_forward.1} parent=11 // pred_check
        %p1161 = pneg %p957
      $region134: #{discriminator_forward.1} parent=11 // pred_check_branch
        %1163 = sbr.rel (%p1161) target = $region136
      $region135: #{discriminator_forward.1} parent=11 // pred_region
        _
      $region136: #{discriminator_forward.1} parent=11 // pred_fallthru
        _
      // Predicated region
      $region137: #{discriminator_forward.1} parent=11 // pred_check
        %p1164 = pneg %p978
      $region138: #{discriminator_forward.1} parent=11 // pred_check_branch
        %1166 = sbr.rel (%p1164) target = $region140
      $region139: #{discriminator_forward.1} parent=11 // pred_region
        _
      $region140: #{discriminator_forward.1} parent=11 // pred_fallthru
        _
    $region12: #{discriminator_forward.1} parent=5 // pred_fallthru
      _
    %p1167 = scmp.lt.s32.totalorder %s98, 2
    // Predicated region
    $region141: #{discriminator_forward.1} parent=5 // pred_check
      %p1168 = pneg %p1167
    $region142: #{discriminator_forward.1} parent=5 // pred_check_branch
      %1170 = sbr.rel (%p1168) target = $region144
    $region143: #{discriminator_forward.1} parent=5 // pred_region
      // Predicated region
      $region145: #{discriminator_forward.1} parent=143 // pred_check
        %p1171 = pneg %p118
      $region146: #{discriminator_forward.1} parent=143 // pred_check_branch
        %1173 = sbr.rel (%p1171) target = $region148
      $region147: #{discriminator_forward.1} parent=143 // pred_region
        %p1174 = scmp.lt.s32.totalorder %s98, 1
        %s1175 = scalar_select %p1174, %s98, 1
        %s1176 = smul.addr %s1175, 24
        %s1177 = smul.addr %s1176, 8
        %s1178 = scalar_lea.vmem %s1, %s1177
      $region148: #{discriminator_forward.1} parent=143 // pred_fallthru
        _
      // Predicated region
      $region149: #{discriminator_forward.1} parent=143 // pred_check
        %p1179 = pneg %p144
      $region150: #{discriminator_forward.1} parent=143 // pred_check_branch
        %1181 = sbr.rel (%p1179) target = $region152
      $region151: #{discriminator_forward.1} parent=143 // pred_region
        %p1182 = scmp.lt.s32.totalorder %s98, 1
        %s1183 = scalar_select %p1182, %s98, 1
        %s1184 = smul.addr %s1183, 24
        %s1185 = smul.addr %s1184, 8
        %s1186 = scalar_lea.vmem %s3, %s1185
      $region152: #{discriminator_forward.1} parent=143 // pred_fallthru
        _
      // Predicated region
      $region153: #{discriminator_forward.1} parent=143 // pred_check
        %p1187 = pneg %p170
      $region154: #{discriminator_forward.1} parent=143 // pred_check_branch
        %1189 = sbr.rel (%p1187) target = $region156
      $region155: #{discriminator_forward.1} parent=143 // pred_region
        %p1190 = scmp.lt.s32.totalorder %s98, 1
        %s1191 = scalar_select %p1190, %s98, 1
        %s1192 = smul.addr %s1191, 24
        %s1193 = smul.addr %s1192, 8
        %s1194 = scalar_lea.vmem %s5, %s1193
      $region156: #{discriminator_forward.1} parent=143 // pred_fallthru
        _
      // Predicated region
      $region157: #{discriminator_forward.1} parent=143 // pred_check
        %p1195 = pneg %p196
      $region158: #{discriminator_forward.1} parent=143 // pred_check_branch
        %1197 = sbr.rel (%p1195) target = $region160
      $region159: #{discriminator_forward.1} parent=143 // pred_region
        %p1198 = scmp.lt.s32.totalorder %s98, 1
        %s1199 = scalar_select %p1198, %s98, 1
        %s1200 = smul.addr %s1199, 2
        %s1201 = scalar_lea.vmem %s7, %s1200
      $region160: #{discriminator_forward.1} parent=143 // pred_fallthru
        _
      // Predicated region
      $region161: #{discriminator_forward.1} parent=143 // pred_check
        %p1202 = pneg %p222
      $region162: #{discriminator_forward.1} parent=143 // pred_check_branch
        %1204 = sbr.rel (%p1202) target = $region164
      $region163: #{discriminator_forward.1} parent=143 // pred_region
        %p1205 = scmp.lt.s32.totalorder %s98, 1
        %s1206 = scalar_select %p1205, %s98, 1
        %s1207 = scalar_lea.vmem %s9, %s1206
      $region164: #{discriminator_forward.1} parent=143 // pred_fallthru
        _
      // Predicated region
      $region165: #{discriminator_forward.1} parent=143 // pred_check
        %p1208 = pneg %p248
      $region166: #{discriminator_forward.1} parent=143 // pred_check_branch
        %1210 = sbr.rel (%p1208) target = $region168
      $region167: #{discriminator_forward.1} parent=143 // pred_region
        %p1211 = scmp.lt.s32.totalorder %s98, 1
        %s1212 = scalar_select %p1211, %s98, 1
        %s1213 = scalar_lea.vmem %s11, %s1212
      $region168: #{discriminator_forward.1} parent=143 // pred_fallthru
        _
      // Predicated region
      $region169: #{discriminator_forward.1} parent=143 // pred_check
        %p1214 = pneg %p274
      $region170: #{discriminator_forward.1} parent=143 // pred_check_branch
        %1216 = sbr.rel (%p1214) target = $region172
      $region171: #{discriminator_forward.1} parent=143 // pred_region
        %p1217 = scmp.lt.s32.totalorder %s98, 1
        %s1218 = scalar_select %p1217, %s98, 1
        %s1219 = scalar_lea.vmem %s13, %s1218
      $region172: #{discriminator_forward.1} parent=143 // pred_fallthru
        _
      // Predicated region
      $region173: #{discriminator_forward.1} parent=143 // pred_check
        %p1220 = pneg %p300
      $region174: #{discriminator_forward.1} parent=143 // pred_check_branch
        %1222 = sbr.rel (%p1220) target = $region176
      $region175: #{discriminator_forward.1} parent=143 // pred_region
        %p1223 = scmp.lt.s32.totalorder %s98, 1
        %s1224 = scalar_select %p1223, %s98, 1
        %s1225 = smul.addr %s1224, 4
        %s1226 = scalar_lea.vmem %s15, %s1225
      $region176: #{discriminator_forward.1} parent=143 // pred_fallthru
        _
    $region144: #{discriminator_forward.1} parent=5 // pred_fallthru
      _
    %p1227 = scmp.le.s32.totalorder 1, %s98
    %p1228 = scmp.lt.s32.totalorder %s98, 3
    %p1229 = pnand %p1227, %p1228
    %p1230 = pneg %p1229
    // Predicated region
    $region177: #{discriminator_forward.1} parent=5 // pred_check
      _
    $region178: #{discriminator_forward.1} parent=5 // pred_check_branch
      %1232 = sbr.rel (%p1229) target = $region180
    $region179: #{discriminator_forward.1} parent=5 // pred_region
      %s1233 = ssub.s32 %s98, 1
      %p1234 = scmp.lt.s32.totalorder %s103, 1
      %s1235 = scalar_select %p1234, %s103, 1
      %s1236 = smul.addr %s1235, 24
      %s1237 = smul.addr %s1236, 8
      %s1238 = scalar_lea.vmem %s1, %s1237
      %p1239 = pneg %p124
      %p1240 = pneg %p121
      %p1241 = scmp.lt.s32.totalorder %s103, 1
      %s1242 = scalar_select %p1241, %s103, 1
      %s1243 = smul.addr %s1242, 24
      %s1244 = smul.addr %s1243, 8
      %s1245 = scalar_lea.vmem %s3, %s1244
      %p1246 = pneg %p150
      %p1247 = pneg %p147
      %p1248 = scmp.lt.s32.totalorder %s103, 1
      %s1249 = scalar_select %p1248, %s103, 1
      %s1250 = smul.addr %s1249, 24
      %s1251 = smul.addr %s1250, 8
      %s1252 = scalar_lea.vmem %s5, %s1251
      %p1253 = pneg %p176
      %p1254 = pneg %p173
      %p1255 = scmp.lt.s32.totalorder %s103, 1
      %s1256 = scalar_select %p1255, %s103, 1
      %s1257 = smul.addr %s1256, 2
      %s1258 = scalar_lea.vmem %s7, %s1257
      %p1259 = pneg %p202
      %p1260 = pneg %p199
      %p1261 = scmp.lt.s32.totalorder %s103, 1
      %s1262 = scalar_select %p1261, %s103, 1
      %s1263 = scalar_lea.vmem %s9, %s1262
      %p1264 = pneg %p228
      %p1265 = pneg %p225
      %p1266 = scmp.lt.s32.totalorder %s103, 1
      %s1267 = scalar_select %p1266, %s103, 1
      %s1268 = scalar_lea.vmem %s11, %s1267
      %p1269 = pneg %p254
      %p1270 = pneg %p251
      %p1271 = scmp.lt.s32.totalorder %s103, 1
      %s1272 = scalar_select %p1271, %s103, 1
      %s1273 = scalar_lea.vmem %s13, %s1272
      %p1274 = pneg %p280
      %p1275 = pneg %p277
      %p1276 = scmp.lt.s32.totalorder %s103, 1
      %s1277 = scalar_select %p1276, %s103, 1
      %s1278 = smul.addr %s1277, 4
      %s1279 = scalar_lea.vmem %s15, %s1278
      %p1280 = pneg %p306
      %p1281 = pneg %p303
      %p1282 = pneg %p327
      %p1283 = pneg %p324
      %p1284 = pneg %p348
      %p1285 = pneg %p345
      %p1286 = pneg %p369
      %p1287 = pneg %p366
      %p1288 = pneg %p390
      %p1289 = pneg %p387
      %p1290 = pneg %p411
      %p1291 = pneg %p408
      %p1292 = pneg %p432
      %p1293 = pneg %p429
      %p1294 = pneg %p453
      %p1295 = pneg %p450
      %p1296 = pneg %p474
      %p1297 = pneg %p471
      %p1298 = pneg %p495
      %p1299 = pneg %p492
      %p1300 = pneg %p516
      %p1301 = pneg %p513
      %p1302 = pneg %p537
      %p1303 = pneg %p534
      %p1304 = pneg %p558
      %p1305 = pneg %p555
      %p1306 = pneg %p579
      %p1307 = pneg %p576
      %p1308 = pneg %p600
      %p1309 = pneg %p597
      %p1310 = pneg %p621
      %p1311 = pneg %p618
      %p1312 = pneg %p642
      %p1313 = pneg %p639
      %p1314 = pneg %p663
      %p1315 = pneg %p660
      %p1316 = pneg %p684
      %p1317 = pneg %p681
      %p1318 = pneg %p705
      %p1319 = pneg %p702
      %p1320 = pneg %p726
      %p1321 = pneg %p723
      %p1322 = pneg %p747
      %p1323 = pneg %p744
      %p1324 = pneg %p768
      %p1325 = pneg %p765
      %p1326 = pneg %p789
      %p1327 = pneg %p786
      %p1328 = pneg %p810
      %p1329 = pneg %p807
      %p1330 = pneg %p831
      %p1331 = pneg %p828
      %p1332 = pneg %p852
      %p1333 = pneg %p849
      %p1334 = pneg %p873
      %p1335 = pneg %p870
      %p1336 = pneg %p894
      %p1337 = pneg %p891
      %p1338 = pneg %p915
      %p1339 = pneg %p912
      %p1340 = pneg %p936
      %p1341 = pneg %p933
      %p1342 = pneg %p957
      %p1343 = pneg %p954
      %p1344 = pneg %p978
      %p1345 = pneg %p975
      %p1346 = pneg %p1004
      %p1347 = pneg %p1001
      %p1348 = scmp.lt.s32.totalorder %s103, 1
      %s1349 = scalar_select %p1348, %s103, 1
      %s1350 = scalar_lea.vmem %s81, %s1349
      %p1351 = pneg %p1030
      %p1352 = pneg %p1027
      %p1353 = scmp.lt.s32.totalorder %s103, 1
      %s1354 = scalar_select %p1353, %s103, 1
      %s1355 = scalar_lea.vmem %s83, %s1354
      %p1356 = pneg %p1056
      %p1357 = pneg %p1053
      %p1358 = scmp.lt.s32.totalorder %s103, 1
      %s1359 = scalar_select %p1358, %s103, 1
      %s1360 = scalar_lea.vmem %s85, %s1359
      %p1361 = scmp.lt.s32.totalorder %s103, 1
      %s1362 = scalar_select %p1361, %s103, 1
      %s1363 = smul.addr %s1362, 24
      %s1364 = smul.addr %s1363, 8
      %s1365 = scalar_lea.vmem %s1, %s1364
      %p1366 = scmp.lt.s32.totalorder %s103, 1
      %s1367 = scalar_select %p1366, %s103, 1
      %s1368 = smul.addr %s1367, 24
      %s1369 = smul.addr %s1368, 8
      %s1370 = scalar_lea.vmem %s3, %s1369
      %p1371 = scmp.lt.s32.totalorder %s103, 1
      %s1372 = scalar_select %p1371, %s103, 1
      %s1373 = smul.addr %s1372, 24
      %s1374 = smul.addr %s1373, 8
      %s1375 = scalar_lea.vmem %s5, %s1374
      %p1376 = scmp.lt.s32.totalorder %s103, 1
      %s1377 = scalar_select %p1376, %s103, 1
      %s1378 = smul.addr %s1377, 2
      %s1379 = scalar_lea.vmem %s7, %s1378
      %p1380 = scmp.lt.s32.totalorder %s103, 1
      %s1381 = scalar_select %p1380, %s103, 1
      %s1382 = scalar_lea.vmem %s9, %s1381
      %p1383 = scmp.lt.s32.totalorder %s103, 1
      %s1384 = scalar_select %p1383, %s103, 1
      %s1385 = scalar_lea.vmem %s11, %s1384
      %p1386 = scmp.lt.s32.totalorder %s103, 1
      %s1387 = scalar_select %p1386, %s103, 1
      %s1388 = scalar_lea.vmem %s13, %s1387
      %p1389 = scmp.lt.s32.totalorder %s103, 1
      %s1390 = scalar_select %p1389, %s103, 1
      %s1391 = smul.addr %s1390, 4
      %s1392 = scalar_lea.vmem %s15, %s1391
      %p1393 = scmp.lt.s32.totalorder %s103, 1
      %s1394 = scalar_select %p1393, %s103, 1
      %s1395 = scalar_lea.vmem %s81, %s1394
      %p1396 = scmp.lt.s32.totalorder %s103, 1
      %s1397 = scalar_select %p1396, %s103, 1
      %s1398 = scalar_lea.vmem %s83, %s1397
      %p1399 = scmp.lt.s32.totalorder %s103, 1
      %s1400 = scalar_select %p1399, %s103, 1
      %s1401 = scalar_lea.vmem %s85, %s1400
      %v1403 = vld [vmem:[%s1375] sm:$0xff]
      %v1404 = vld [vmem:[%s1375 + $0x8] sm:$0xff]
      %v1405 = vld [vmem:[%s1375 + $0x10] sm:$0xff]
      %v1406 = vld [vmem:[%s1375 + $0x18] sm:$0xff]
      %v1407 = vld [vmem:[%s1375 + $0x20] sm:$0xff]
      %v1408 = vld [vmem:[%s1375 + $0x28] sm:$0xff]
      %v1409 = vld [vmem:[%s1375 + $0x30] sm:$0xff]
      %v1410 = vld [vmem:[%s1375 + $0x38] sm:$0xff]
      %v1411 = vld [vmem:[%s1375 + $0x40] sm:$0xff]
      %v1412 = vld [vmem:[%s1375 + $0x48] sm:$0xff]
      %v1413 = vld [vmem:[%s1375 + $0x50] sm:$0xff]
      %v1414 = vld [vmem:[%s1375 + $0x58] sm:$0xff]
      %v1415 = vld [vmem:[%s1375 + $0x60] sm:$0xff]
      %v1416 = vld [vmem:[%s1375 + $0x68] sm:$0xff]
      %v1417 = vld [vmem:[%s1375 + $0x70] sm:$0xff]
      %v1418 = vld [vmem:[%s1375 + $0x78] sm:$0xff]
      %v1419 = vld [vmem:[%s1375 + $0x80] sm:$0xff]
      %v1420 = vld [vmem:[%s1375 + $0x88] sm:$0xff]
      %v1421 = vld [vmem:[%s1375 + $0x90] sm:$0xff]
      %v1422 = vld [vmem:[%s1375 + $0x98] sm:$0xff]
      %v1423 = vld [vmem:[%s1375 + $0xa0] sm:$0xff]
      %v1424 = vld [vmem:[%s1375 + $0xa8] sm:$0xff]
      %v1425 = vld [vmem:[%s1375 + $0xb0] sm:$0xff]
      %v1426 = vld [vmem:[%s1375 + $0xb8] sm:$0xff]
      %v1427 = vld [vmem:[%s1382] sm:$0x1]
      %1428 = vst [vmem:[#allocation2] sm:$0xff] 0.0
      %1429 = vst [vmem:[#allocation2 + $0xc8] sm:$0xff] 0.0
      %v1430 = vld [vmem:[%s1365] sm:$0xff]
      %v1431 = vld [vmem:[%s1365 + $0x8] sm:$0xff]
      %v1432 = vld [vmem:[%s1365 + $0x10] sm:$0xff]
      %v1433 = vld [vmem:[%s1365 + $0x18] sm:$0xff]
      %v1434 = vld [vmem:[%s1365 + $0x20] sm:$0xff]
      %v1435 = vld [vmem:[%s1365 + $0x28] sm:$0xff]
      %v1436 = vld [vmem:[%s1365 + $0x30] sm:$0xff]
      %v1437 = vld [vmem:[%s1365 + $0x38] sm:$0xff]
      %v1438 = vld [vmem:[%s1365 + $0x40] sm:$0xff]
      %v1439 = vld [vmem:[%s1365 + $0x48] sm:$0xff]
      %v1440 = vld [vmem:[%s1365 + $0x50] sm:$0xff]
      %v1441 = vld [vmem:[%s1365 + $0x58] sm:$0xff]
      %v1442 = vld [vmem:[%s1365 + $0x60] sm:$0xff]
      %v1443 = vld [vmem:[%s1365 + $0x68] sm:$0xff]
      %v1444 = vld [vmem:[%s1365 + $0x70] sm:$0xff]
      %v1445 = vld [vmem:[%s1365 + $0x78] sm:$0xff]
      %v1446 = vld [vmem:[%s1365 + $0x80] sm:$0xff]
      %v1447 = vld [vmem:[%s1365 + $0x88] sm:$0xff]
      %v1448 = vld [vmem:[%s1365 + $0x90] sm:$0xff]
      %v1449 = vld [vmem:[%s1365 + $0x98] sm:$0xff]
      %v1450 = vld [vmem:[%s1365 + $0xa0] sm:$0xff]
      %v1451 = vld [vmem:[%s1365 + $0xa8] sm:$0xff]
      %v1452 = vld [vmem:[%s1365 + $0xb0] sm:$0xff]
      %v1453 = vld [vmem:[%s1365 + $0xb8] sm:$0xff]
      %1455 = vset.pattern.permute.xlu0 0
      %1456 = vperm.xlu0 %1455, %v1403
      %v1457 = vpop.permute.xlu0 %1456
      %1460 = vset.pattern.permute.xlu0 0
      %1461 = vperm.xlu0 %1460, %v1404
      %v1462 = vpop.permute.xlu0 %1461
      %1465 = vset.pattern.permute.xlu0 0
      %1466 = vperm.xlu0 %1465, %v1405
      %v1467 = vpop.permute.xlu0 %1466
      %1470 = vset.pattern.permute.xlu0 0
      %1471 = vperm.xlu0 %1470, %v1406
      %v1472 = vpop.permute.xlu0 %1471
      %1475 = vset.pattern.permute.xlu0 0
      %1476 = vperm.xlu0 %1475, %v1407
      %v1477 = vpop.permute.xlu0 %1476
      %1480 = vset.pattern.permute.xlu0 0
      %1481 = vperm.xlu0 %1480, %v1408
      %v1482 = vpop.permute.xlu0 %1481
      %1485 = vset.pattern.permute.xlu0 0
      %1486 = vperm.xlu0 %1485, %v1409
      %v1487 = vpop.permute.xlu0 %1486
      %1490 = vset.pattern.permute.xlu0 0
      %1491 = vperm.xlu0 %1490, %v1410
      %v1492 = vpop.permute.xlu0 %1491
      %1495 = vset.pattern.permute.xlu0 0
      %1496 = vperm.xlu0 %1495, %v1411
      %v1497 = vpop.permute.xlu0 %1496
      %1500 = vset.pattern.permute.xlu0 0
      %1501 = vperm.xlu0 %1500, %v1412
      %v1502 = vpop.permute.xlu0 %1501
      %1505 = vset.pattern.permute.xlu0 0
      %1506 = vperm.xlu0 %1505, %v1413
      %v1507 = vpop.permute.xlu0 %1506
      %1510 = vset.pattern.permute.xlu0 0
      %1511 = vperm.xlu0 %1510, %v1414
      %v1512 = vpop.permute.xlu0 %1511
      %1515 = vset.pattern.permute.xlu0 0
      %1516 = vperm.xlu0 %1515, %v1415
      %v1517 = vpop.permute.xlu0 %1516
      %1520 = vset.pattern.permute.xlu0 0
      %1521 = vperm.xlu0 %1520, %v1416
      %v1522 = vpop.permute.xlu0 %1521
      %1525 = vset.pattern.permute.xlu0 0
      %1526 = vperm.xlu0 %1525, %v1417
      %v1527 = vpop.permute.xlu0 %1526
      %1530 = vset.pattern.permute.xlu0 0
      %1531 = vperm.xlu0 %1530, %v1418
      %v1532 = vpop.permute.xlu0 %1531
      %1535 = vset.pattern.permute.xlu0 0
      %1536 = vperm.xlu0 %1535, %v1419
      %v1537 = vpop.permute.xlu0 %1536
      %1540 = vset.pattern.permute.xlu0 0
      %1541 = vperm.xlu0 %1540, %v1420
      %v1542 = vpop.permute.xlu0 %1541
      %1545 = vset.pattern.permute.xlu0 0
      %1546 = vperm.xlu0 %1545, %v1421
      %v1547 = vpop.permute.xlu0 %1546
      %1550 = vset.pattern.permute.xlu0 0
      %1551 = vperm.xlu0 %1550, %v1422
      %v1552 = vpop.permute.xlu0 %1551
      %1555 = vset.pattern.permute.xlu0 0
      %1556 = vperm.xlu0 %1555, %v1423
      %v1557 = vpop.permute.xlu0 %1556
      %1560 = vset.pattern.permute.xlu0 0
      %1561 = vperm.xlu0 %1560, %v1424
      %v1562 = vpop.permute.xlu0 %1561
      %1565 = vset.pattern.permute.xlu0 0
      %1566 = vperm.xlu0 %1565, %v1425
      %v1567 = vpop.permute.xlu0 %1566
      %1570 = vset.pattern.permute.xlu0 0
      %1571 = vperm.xlu0 %1570, %v1426
      %v1572 = vpop.permute.xlu0 %1571
      %v1574 = vmul.f32 %v1430, %v1457
      %v1575 = vmul.f32 %v1431, %v1462
      %v1576 = vmul.f32 %v1432, %v1467
      %v1577 = vmul.f32 %v1433, %v1472
      %v1578 = vmul.f32 %v1434, %v1477
      %v1579 = vmul.f32 %v1435, %v1482
      %v1580 = vmul.f32 %v1436, %v1487
      %v1581 = vmul.f32 %v1437, %v1492
      %v1582 = vmul.f32 %v1438, %v1497
      %v1583 = vmul.f32 %v1439, %v1502
      %v1584 = vmul.f32 %v1440, %v1507
      %v1585 = vmul.f32 %v1441, %v1512
      %v1586 = vmul.f32 %v1442, %v1517
      %v1587 = vmul.f32 %v1443, %v1522
      %v1588 = vmul.f32 %v1444, %v1527
      %v1589 = vmul.f32 %v1445, %v1532
      %v1590 = vmul.f32 %v1446, %v1537
      %v1591 = vmul.f32 %v1447, %v1542
      %v1592 = vmul.f32 %v1448, %v1547
      %v1593 = vmul.f32 %v1449, %v1552
      %v1594 = vmul.f32 %v1450, %v1557
      %v1595 = vmul.f32 %v1451, %v1562
      %v1596 = vmul.f32 %v1452, %v1567
      %v1597 = vmul.f32 %v1453, %v1572
      %v1598 = vpack.c.bf16 %v1575, %v1574
      %v1599 = vpack.c.bf16 %v1577, %v1576
      %v1600 = vpack.c.bf16 %v1579, %v1578
      %v1601 = vpack.c.bf16 %v1581, %v1580
      %v1602 = vpack.c.bf16 %v1583, %v1582
      %v1603 = vpack.c.bf16 %v1585, %v1584
      %v1604 = vpack.c.bf16 %v1587, %v1586
      %v1605 = vpack.c.bf16 %v1589, %v1588
      %v1606 = vpack.c.bf16 %v1591, %v1590
      %v1607 = vpack.c.bf16 %v1593, %v1592
      %v1608 = vpack.c.bf16 %v1595, %v1594
      %v1609 = vpack.c.bf16 %v1597, %v1596
      %v1610 = vld [vmem:[%s17] sm:$0xf]
      %v1611 = vld [vmem:[%s17 + $0x4] sm:$0xf]
      %v1612 = vld [vmem:[%s17 + $0x8] sm:$0xf]
      %v1613 = vld [vmem:[%s17 + $0xc] sm:$0xf]
      %v1614 = vld [vmem:[%s17 + $0x10] sm:$0xf]
      %v1615 = vld [vmem:[%s17 + $0x14] sm:$0xf]
      %v1616 = vld [vmem:[%s17 + $0x18] sm:$0xf]
      %v1617 = vld [vmem:[%s17 + $0x1c] sm:$0xf]
      %v1618 = vld [vmem:[%s17 + $0x20] sm:$0xf]
      %v1619 = vld [vmem:[%s17 + $0x24] sm:$0xf]
      %v1620 = vld [vmem:[%s19] sm:$0x1]
      %v1622 = vlaneseq
      %v1623 = vshrl.u32 %v1622, 7
      %v1624 = vsub.s32 0, %v1623
      %v1625 = vrot.slane %v1620, %v1624
      %v1637 = vunpack.c.l.b16 %v1610
      %v1638 = vunpack.c.l.b16 %v1611
      %v1639 = vunpack.c.l.b16 %v1612
      %v1640 = vunpack.c.l.b16 %v1613
      %v1641 = vunpack.c.l.b16 %v1614
      %v1642 = vunpack.c.l.b16 %v1615
      %v1643 = vunpack.c.l.b16 %v1616
      %v1644 = vunpack.c.l.b16 %v1617
      %v1645 = vunpack.c.l.b16 %v1618
      %v1646 = vunpack.c.l.b16 %v1619
      %v1647 = vpack.c.b16 %v1638, %v1637
      %v1648 = vpack.c.b16 %v1640, %v1639
      %v1649 = vpack.c.b16 %v1642, %v1641
      %v1650 = vpack.c.b16 %v1644, %v1643
      %v1651 = vpack.c.b16 %v1646, %v1645
      %vm1657 = vcmask 654336
      %v1659 = vsel %vm1657, %v1598, 0
      %v1662 = vsel %vm1657, %v1599, 0
      %v1665 = vsel %vm1657, %v1600, 0
      %v1668 = vsel %vm1657, %v1601, 0
      %v1671 = vsel %vm1657, %v1602, 0
      %v1674 = vsel %vm1657, %v1603, 0
      %v1677 = vsel %vm1657, %v1604, 0
      %v1680 = vsel %vm1657, %v1605, 0
      %v1683 = vsel %vm1657, %v1606, 0
      %v1686 = vsel %vm1657, %v1607, 0
      %v1689 = vsel %vm1657, %v1608, 0
      %v1692 = vsel %vm1657, %v1609, 0
      %1694 = vmatprep.subr.bf16.mxu0 0
      %1695 = vmatpush1.bf16.msra.mxu0 %v1647
      %1696 = vmatprep.subr.bf16.mxu0 0
      %1697 = vmatpush1.bf16.msra.mxu0 %v1648
      %1698 = vmatprep.subr.bf16.mxu0 0
      %1699 = vmatpush1.bf16.msra.mxu0 %v1649
      %1700 = vmatprep.subr.bf16.mxu0 0
      %1701 = vmatpush1.bf16.msra.mxu0 %v1650
      %1702 = vmatprep.subr.bf16.mxu0 0
      %1703 = vmatpush1.bf16.msra.mxu0 %v1651
      %1704 = vmatprep.subr.bf16.mxu0 0
      %1705 = vmatpush1.bf16.msra.mxu0 0
      %1706 = vmatprep.subr.bf16.mxu0 0
      %1707 = vmatpush1.bf16.msra.mxu0 0
      %1708 = vmatprep.subr.bf16.mxu0 0
      %1709 = vmatpush1.bf16.msra.mxu0 0
      %1710 = vmatprep.subr.bf16.mxu0 0
      %1711 = vmatpush1.bf16.msra.mxu0 0
      %1712 = vmatprep.subr.bf16.mxu0 0
      %1713 = vmatpush1.bf16.msra.mxu0 0
      %1714 = vmatprep.subr.bf16.mxu0 0
      %1715 = vmatpush1.bf16.msra.mxu0 0
      %1716 = vmatprep.subr.bf16.mxu0 0
      %1717 = vmatpush1.bf16.msra.mxu0 0
      %1718 = vmatprep.subr.bf16.mxu0 0
      %1719 = vmatpush1.bf16.msra.mxu0 0
      %1720 = vmatprep.subr.bf16.mxu0 0
      %1721 = vmatpush1.bf16.msra.mxu0 0
      %1722 = vmatprep.subr.bf16.mxu0 0
      %1723 = vmatpush1.bf16.msra.mxu0 0
      %1724 = vmatprep.subr.bf16.mxu0 0
      %1725 = vmatpush1.bf16.msra.mxu0 0
      %1726 = vmatprep.mubr.bf16.mxu0 0
      %1727 = vmatmul.mubr.bf16.gmra.mrb[0].mxu0 %v1659
      %v1728 = vpop.f32.mrb[0].mxu0
      %v1729 = vadd.f32 %v1625, %v1728
      %v1730 = vpop.f32.mrb[0].mxu0
      %v1731 = vpop.f32.mrb[0].mxu0
      %v1732 = vadd.f32 %v1625, %v1731
      %v1733 = vpop.f32.mrb[0].mxu0
      %1734 = vmatprep.mubr.bf16.mxu0 0
      %1735 = vmatmul.mubr.bf16.gmra.mrb[0].mxu0 %v1662
      %v1736 = vpop.f32.mrb[0].mxu0
      %v1737 = vadd.f32 %v1625, %v1736
      %v1738 = vpop.f32.mrb[0].mxu0
      %v1739 = vpop.f32.mrb[0].mxu0
      %v1740 = vadd.f32 %v1625, %v1739
      %v1741 = vpop.f32.mrb[0].mxu0
      %1742 = vmatprep.mubr.bf16.mxu0 0
      %1743 = vmatmul.mubr.bf16.gmra.mrb[0].mxu0 %v1665
      %v1744 = vpop.f32.mrb[0].mxu0
      %v1745 = vadd.f32 %v1625, %v1744
      %v1746 = vpop.f32.mrb[0].mxu0
      %v1747 = vpop.f32.mrb[0].mxu0
      %v1748 = vadd.f32 %v1625, %v1747
      %v1749 = vpop.f32.mrb[0].mxu0
      %1750 = vmatprep.mubr.bf16.mxu0 0
      %1751 = vmatmul.mubr.bf16.gmra.mrb[0].mxu0 %v1668
      %v1752 = vpop.f32.mrb[0].mxu0
      %v1753 = vadd.f32 %v1625, %v1752
      %v1754 = vpop.f32.mrb[0].mxu0
      %v1755 = vpop.f32.mrb[0].mxu0
      %v1756 = vadd.f32 %v1625, %v1755
      %v1757 = vpop.f32.mrb[0].mxu0
      %1758 = vmatprep.mubr.bf16.mxu0 0
      %1759 = vmatmul.mubr.bf16.gmra.mrb[0].mxu0 %v1671
      %v1760 = vpop.f32.mrb[0].mxu0
      %v1761 = vadd.f32 %v1625, %v1760
      %v1762 = vpop.f32.mrb[0].mxu0
      %v1763 = vpop.f32.mrb[0].mxu0
      %v1764 = vadd.f32 %v1625, %v1763
      %v1765 = vpop.f32.mrb[0].mxu0
      %1766 = vmatprep.mubr.bf16.mxu0 0
      %1767 = vmatmul.mubr.bf16.gmra.mrb[0].mxu0 %v1674
      %v1768 = vpop.f32.mrb[0].mxu0
      %v1769 = vadd.f32 %v1625, %v1768
      %v1770 = vpop.f32.mrb[0].mxu0
      %v1771 = vpop.f32.mrb[0].mxu0
      %v1772 = vadd.f32 %v1625, %v1771
      %v1773 = vpop.f32.mrb[0].mxu0
      %1774 = vmatprep.mubr.bf16.mxu0 0
      %1775 = vmatmul.mubr.bf16.gmra.mrb[0].mxu0 %v1677
      %v1776 = vpop.f32.mrb[0].mxu0
      %v1777 = vadd.f32 %v1625, %v1776
      %v1778 = vpop.f32.mrb[0].mxu0
      %v1779 = vpop.f32.mrb[0].mxu0
      %v1780 = vadd.f32 %v1625, %v1779
      %v1781 = vpop.f32.mrb[0].mxu0
      %1782 = vmatprep.mubr.bf16.mxu0 0
      %1783 = vmatmul.mubr.bf16.gmra.mrb[0].mxu0 %v1680
      %v1784 = vpop.f32.mrb[0].mxu0
      %v1785 = vadd.f32 %v1625, %v1784
      %v1786 = vpop.f32.mrb[0].mxu0
      %v1787 = vpop.f32.mrb[0].mxu0
      %v1788 = vadd.f32 %v1625, %v1787
      %v1789 = vpop.f32.mrb[0].mxu0
      %1790 = vmatprep.mubr.bf16.mxu0 0
      %1791 = vmatmul.mubr.bf16.gmra.mrb[0].mxu0 %v1683
      %v1792 = vpop.f32.mrb[0].mxu0
      %v1793 = vadd.f32 %v1625, %v1792
      %v1794 = vpop.f32.mrb[0].mxu0
      %v1795 = vpop.f32.mrb[0].mxu0
      %v1796 = vadd.f32 %v1625, %v1795
      %v1797 = vpop.f32.mrb[0].mxu0
      %1798 = vmatprep.mubr.bf16.mxu0 0
      %1799 = vmatmul.mubr.bf16.gmra.mrb[0].mxu0 %v1686
      %v1800 = vpop.f32.mrb[0].mxu0
      %v1801 = vadd.f32 %v1625, %v1800
      %v1802 = vpop.f32.mrb[0].mxu0
      %v1803 = vpop.f32.mrb[0].mxu0
      %v1804 = vadd.f32 %v1625, %v1803
      %v1805 = vpop.f32.mrb[0].mxu0
      %1806 = vmatprep.mubr.bf16.mxu0 0
      %1807 = vmatmul.mubr.bf16.gmra.mrb[0].mxu0 %v1689
      %v1808 = vpop.f32.mrb[0].mxu0
      %v1809 = vadd.f32 %v1625, %v1808
      %v1810 = vpop.f32.mrb[0].mxu0
      %v1811 = vpop.f32.mrb[0].mxu0
      %v1812 = vadd.f32 %v1625, %v1811
      %v1813 = vpop.f32.mrb[0].mxu0
      %1814 = vmatprep.mubr.bf16.mxu0 0
      %1815 = vmatmul.mubr.bf16.gmra.mrb[0].mxu0 %v1692
      %v1816 = vpop.f32.mrb[0].mxu0
      %v1817 = vadd.f32 %v1625, %v1816
      %v1818 = vpop.f32.mrb[0].mxu0
      %v1819 = vpop.f32.mrb[0].mxu0
      %v1820 = vadd.f32 %v1625, %v1819
      %v1821 = vpop.f32.mrb[0].mxu0
      %1822 = vdwg.mxu0
      %vm1823 = vcmp.gt.f32.partialorder %v1729, 0.0
      %vm1824 = vcmp.gt.f32.partialorder %v1732, 0.0
      %vm1825 = vcmp.gt.f32.partialorder %v1737, 0.0
      %vm1826 = vcmp.gt.f32.partialorder %v1740, 0.0
      %vm1827 = vcmp.gt.f32.partialorder %v1745, 0.0
      %vm1828 = vcmp.gt.f32.partialorder %v1748, 0.0
      %vm1829 = vcmp.gt.f32.partialorder %v1753, 0.0
      %vm1830 = vcmp.gt.f32.partialorder %v1756, 0.0
      %vm1831 = vcmp.gt.f32.partialorder %v1761, 0.0
      %vm1832 = vcmp.gt.f32.partialorder %v1764, 0.0
      %vm1833 = vcmp.gt.f32.partialorder %v1769, 0.0
      %vm1834 = vcmp.gt.f32.partialorder %v1772, 0.0
      %vm1835 = vcmp.gt.f32.partialorder %v1777, 0.0
      %vm1836 = vcmp.gt.f32.partialorder %v1780, 0.0
      %vm1837 = vcmp.gt.f32.partialorder %v1785, 0.0
      %vm1838 = vcmp.gt.f32.partialorder %v1788, 0.0
      %vm1839 = vcmp.gt.f32.partialorder %v1793, 0.0
      %vm1840 = vcmp.gt.f32.partialorder %v1796, 0.0
      %vm1841 = vcmp.gt.f32.partialorder %v1801, 0.0
      %vm1842 = vcmp.gt.f32.partialorder %v1804, 0.0
      %vm1843 = vcmp.gt.f32.partialorder %v1809, 0.0
      %vm1844 = vcmp.gt.f32.partialorder %v1812, 0.0
      %vm1845 = vcmp.gt.f32.partialorder %v1817, 0.0
      %vm1846 = vcmp.gt.f32.partialorder %v1820, 0.0
      %v1847 = vmul.f32 %v1729, 0.1
      %v1848 = vmul.f32 %v1732, 0.1
      %v1849 = vmul.f32 %v1737, 0.1
      %v1850 = vmul.f32 %v1740, 0.1
      %v1851 = vmul.f32 %v1745, 0.1
      %v1852 = vmul.f32 %v1748, 0.1
      %v1853 = vmul.f32 %v1753, 0.1
      %v1854 = vmul.f32 %v1756, 0.1
      %v1855 = vmul.f32 %v1761, 0.1
      %v1856 = vmul.f32 %v1764, 0.1
      %v1857 = vmul.f32 %v1769, 0.1
      %v1858 = vmul.f32 %v1772, 0.1
      %v1859 = vmul.f32 %v1777, 0.1
      %v1860 = vmul.f32 %v1780, 0.1
      %v1861 = vmul.f32 %v1785, 0.1
      %v1862 = vmul.f32 %v1788, 0.1
      %v1863 = vmul.f32 %v1793, 0.1
      %v1864 = vmul.f32 %v1796, 0.1
      %v1865 = vmul.f32 %v1801, 0.1
      %v1866 = vmul.f32 %v1804, 0.1
      %v1867 = vmul.f32 %v1809, 0.1
      %v1868 = vmul.f32 %v1812, 0.1
      %v1869 = vmul.f32 %v1817, 0.1
      %v1870 = vmul.f32 %v1820, 0.1
      %v1871 = vsel %vm1823, %v1729, %v1847
      %v1872 = vsel %vm1824, %v1732, %v1848
      %v1873 = vsel %vm1825, %v1737, %v1849
      %v1874 = vsel %vm1826, %v1740, %v1850
      %v1875 = vsel %vm1827, %v1745, %v1851
      %v1876 = vsel %vm1828, %v1748, %v1852
      %v1877 = vsel %vm1829, %v1753, %v1853
      %v1878 = vsel %vm1830, %v1756, %v1854
      %v1879 = vsel %vm1831, %v1761, %v1855
      %v1880 = vsel %vm1832, %v1764, %v1856
      %v1881 = vsel %vm1833, %v1769, %v1857
      %v1882 = vsel %vm1834, %v1772, %v1858
      %v1883 = vsel %vm1835, %v1777, %v1859
      %v1884 = vsel %vm1836, %v1780, %v1860
      %v1885 = vsel %vm1837, %v1785, %v1861
      %v1886 = vsel %vm1838, %v1788, %v1862
      %v1887 = vsel %vm1839, %v1793, %v1863
      %v1888 = vsel %vm1840, %v1796, %v1864
      %v1889 = vsel %vm1841, %v1801, %v1865
      %v1890 = vsel %vm1842, %v1804, %v1866
      %v1891 = vsel %vm1843, %v1809, %v1867
      %v1892 = vsel %vm1844, %v1812, %v1868
      %v1893 = vsel %vm1845, %v1817, %v1869
      %v1894 = vsel %vm1846, %v1820, %v1870
      %v1895 = vpack.c.bf16 %v1872, %v1871
      %v1896 = vpack.c.bf16 %v1874, %v1873
      %v1897 = vpack.c.bf16 %v1876, %v1875
      %v1898 = vpack.c.bf16 %v1878, %v1877
      %v1899 = vpack.c.bf16 %v1880, %v1879
      %v1900 = vpack.c.bf16 %v1882, %v1881
      %v1901 = vpack.c.bf16 %v1884, %v1883
      %v1902 = vpack.c.bf16 %v1886, %v1885
      %v1903 = vpack.c.bf16 %v1888, %v1887
      %v1904 = vpack.c.bf16 %v1890, %v1889
      %v1905 = vpack.c.bf16 %v1892, %v1891
      %v1906 = vpack.c.bf16 %v1894, %v1893
      %v1907 = vld [vmem:[%s21] sm:$0xf]
      %v1908 = vld [vmem:[%s21 + $0x4] sm:$0xf]
      %v1909 = vld [vmem:[%s21 + $0x8] sm:$0xf]
      %v1910 = vld [vmem:[%s21 + $0xc] sm:$0xf]
      %v1911 = vld [vmem:[%s21 + $0x10] sm:$0xf]
      %v1912 = vld [vmem:[%s21 + $0x14] sm:$0xf]
      %v1913 = vld [vmem:[%s21 + $0x18] sm:$0xf]
      %v1914 = vld [vmem:[%s21 + $0x1c] sm:$0xf]
      %v1915 = vld [vmem:[%s21 + $0x20] sm:$0xf]
      %v1916 = vld [vmem:[%s21 + $0x24] sm:$0xf]
      %v1917 = vld [vmem:[%s21 + $0x28] sm:$0xf]
      %v1918 = vld [vmem:[%s21 + $0x2c] sm:$0xf]
      %v1919 = vld [vmem:[%s21 + $0x30] sm:$0xf]
      %v1920 = vld [vmem:[%s21 + $0x34] sm:$0xf]
      %v1921 = vld [vmem:[%s21 + $0x38] sm:$0xf]
      %v1922 = vld [vmem:[%s21 + $0x3c] sm:$0xf]
      %v1923 = vld [vmem:[%s23] sm:$0x1]
      %v1925 = vlaneseq
      %v1926 = vshrl.u32 %v1925, 7
      %v1927 = vsub.s32 0, %v1926
      %v1928 = vrot.slane %v1923, %v1927
      %v1946 = vunpack.c.l.b16 %v1907
      %v1947 = vunpack.c.l.b16 %v1908
      %v1948 = vunpack.c.l.b16 %v1909
      %v1949 = vunpack.c.l.b16 %v1910
      %v1950 = vunpack.c.l.b16 %v1911
      %v1951 = vunpack.c.l.b16 %v1912
      %v1952 = vunpack.c.l.b16 %v1913
      %v1953 = vunpack.c.l.b16 %v1914
      %v1954 = vunpack.c.l.b16 %v1915
      %v1955 = vunpack.c.l.b16 %v1916
      %v1956 = vunpack.c.l.b16 %v1917
      %v1957 = vunpack.c.l.b16 %v1918
      %v1958 = vunpack.c.l.b16 %v1919
      %v1959 = vunpack.c.l.b16 %v1920
      %v1960 = vunpack.c.l.b16 %v1921
      %v1961 = vunpack.c.l.b16 %v1922
      %v1962 = vpack.c.b16 %v1947, %v1946
      %v1963 = vpack.c.b16 %v1949, %v1948
      %v1964 = vpack.c.b16 %v1951, %v1950
      %v1965 = vpack.c.b16 %v1953, %v1952
      %v1966 = vpack.c.b16 %v1955, %v1954
      %v1967 = vpack.c.b16 %v1957, %v1956
      %v1968 = vpack.c.b16 %v1959, %v1958
      %v1969 = vpack.c.b16 %v1961, %v1960
      %1978 = vmatprep.subr.bf16.mxu0 0
      %1979 = vmatpush1.bf16.msra.mxu0 %v1962
      %1980 = vmatprep.subr.bf16.mxu0 0
      %1981 = vmatpush1.bf16.msra.mxu0 %v1963
      %1982 = vmatprep.subr.bf16.mxu0 0
      %1983 = vmatpush1.bf16.msra.mxu0 %v1964
      %1984 = vmatprep.subr.bf16.mxu0 0
      %1985 = vmatpush1.bf16.msra.mxu0 %v1965
      %1986 = vmatprep.subr.bf16.mxu0 0
      %1987 = vmatpush1.bf16.msra.mxu0 %v1966
      %1988 = vmatprep.subr.bf16.mxu0 0
      %1989 = vmatpush1.bf16.msra.mxu0 %v1967
      %1990 = vmatprep.subr.bf16.mxu0 0
      %1991 = vmatpush1.bf16.msra.mxu0 %v1968
      %1992 = vmatprep.subr.bf16.mxu0 0
      %1993 = vmatpush1.bf16.msra.mxu0 %v1969
      %1994 = vmatprep.subr.bf16.mxu0 0
      %1995 = vmatpush1.bf16.msra.mxu0 0
      %1996 = vmatprep.subr.bf16.mxu0 0
      %1997 = vmatpush1.bf16.msra.mxu0 0
      %1998 = vmatprep.subr.bf16.mxu0 0
      %1999 = vmatpush1.bf16.msra.mxu0 0
      %2000 = vmatprep.subr.bf16.mxu0 0
      %2001 = vmatpush1.bf16.msra.mxu0 0
      %2002 = vmatprep.subr.bf16.mxu0 0
      %2003 = vmatpush1.bf16.msra.mxu0 0
      %2004 = vmatprep.subr.bf16.mxu0 0
      %2005 = vmatpush1.bf16.msra.mxu0 0
      %2006 = vmatprep.subr.bf16.mxu0 0
      %2007 = vmatpush1.bf16.msra.mxu0 0
      %2008 = vmatprep.subr.bf16.mxu0 0
      %2009 = vmatpush1.bf16.msra.mxu0 0
      %2010 = vmatprep.mubr.bf16.mxu0 0
      %2011 = vmatmul.mubr.bf16.gmra.mrb[0].mxu0 %v1895
      %v2012 = vpop.f32.mrb[0].mxu0
      %v2013 = vadd.f32 %v1928, %v2012
      %v2014 = vpop.f32.mrb[0].mxu0
      %v2015 = vpop.f32.mrb[0].mxu0
      %v2016 = vadd.f32 %v1928, %v2015
      %v2017 = vpop.f32.mrb[0].mxu0
      %2018 = vmatprep.mubr.bf16.mxu0 0
      %2019 = vmatmul.mubr.bf16.gmra.mrb[0].mxu0 %v1896
      %v2020 = vpop.f32.mrb[0].mxu0
      %v2021 = vadd.f32 %v1928, %v2020
      %v2022 = vpop.f32.mrb[0].mxu0
      %v2023 = vpop.f32.mrb[0].mxu0
      %v2024 = vadd.f32 %v1928, %v2023
      %v2025 = vpop.f32.mrb[0].mxu0
      %2026 = vmatprep.mubr.bf16.mxu0 0
      %2027 = vmatmul.mubr.bf16.gmra.mrb[0].mxu0 %v1897
      %v2028 = vpop.f32.mrb[0].mxu0
      %v2029 = vadd.f32 %v1928, %v2028
      %v2030 = vpop.f32.mrb[0].mxu0
      %v2031 = vpop.f32.mrb[0].mxu0
      %v2032 = vadd.f32 %v1928, %v2031
      %v2033 = vpop.f32.mrb[0].mxu0
      %2034 = vmatprep.mubr.bf16.mxu0 0
      %2035 = vmatmul.mubr.bf16.gmra.mrb[0].mxu0 %v1898
      %v2036 = vpop.f32.mrb[0].mxu0
      %v2037 = vadd.f32 %v1928, %v2036
      %v2038 = vpop.f32.mrb[0].mxu0
      %v2039 = vpop.f32.mrb[0].mxu0
      %v2040 = vadd.f32 %v1928, %v2039
      %v2041 = vpop.f32.mrb[0].mxu0
      %2042 = vmatprep.mubr.bf16.mxu0 0
      %2043 = vmatmul.mubr.bf16.gmra.mrb[0].mxu0 %v1899
      %v2044 = vpop.f32.mrb[0].mxu0
      %v2045 = vadd.f32 %v1928, %v2044
      %v2046 = vpop.f32.mrb[0].mxu0
      %v2047 = vpop.f32.mrb[0].mxu0
      %v2048 = vadd.f32 %v1928, %v2047
      %v2049 = vpop.f32.mrb[0].mxu0
      %2050 = vmatprep.mubr.bf16.mxu0 0
      %2051 = vmatmul.mubr.bf16.gmra.mrb[0].mxu0 %v1900
      %v2052 = vpop.f32.mrb[0].mxu0
      %v2053 = vadd.f32 %v1928, %v2052
      %v2054 = vpop.f32.mrb[0].mxu0
      %v2055 = vpop.f32.mrb[0].mxu0
      %v2056 = vadd.f32 %v1928, %v2055
      %v2057 = vpop.f32.mrb[0].mxu0
      %2058 = vmatprep.mubr.bf16.mxu0 0
      %2059 = vmatmul.mubr.bf16.gmra.mrb[0].mxu0 %v1901
      %v2060 = vpop.f32.mrb[0].mxu0
      %v2061 = vadd.f32 %v1928, %v2060
      %v2062 = vpop.f32.mrb[0].mxu0
      %v2063 = vpop.f32.mrb[0].mxu0
      %v2064 = vadd.f32 %v1928, %v2063
      %v2065 = vpop.f32.mrb[0].mxu0
      %2066 = vmatprep.mubr.bf16.mxu0 0
      %2067 = vmatmul.mubr.bf16.gmra.mrb[0].mxu0 %v1902
      %v2068 = vpop.f32.mrb[0].mxu0
      %v2069 = vadd.f32 %v1928, %v2068
      %v2070 = vpop.f32.mrb[0].mxu0
      %v2071 = vpop.f32.mrb[0].mxu0
      %v2072 = vadd.f32 %v1928, %v2071
      %v2073 = vpop.f32.mrb[0].mxu0
      %2074 = vmatprep.mubr.bf16.mxu0 0
      %2075 = vmatmul.mubr.bf16.gmra.mrb[0].mxu0 %v1903
      %v2076 = vpop.f32.mrb[0].mxu0
      %v2077 = vadd.f32 %v1928, %v2076
      %v2078 = vpop.f32.mrb[0].mxu0
      %v2079 = vpop.f32.mrb[0].mxu0
      %v2080 = vadd.f32 %v1928, %v2079
      %v2081 = vpop.f32.mrb[0].mxu0
      %2082 = vmatprep.mubr.bf16.mxu0 0
      %2083 = vmatmul.mubr.bf16.gmra.mrb[0].mxu0 %v1904
      %v2084 = vpop.f32.mrb[0].mxu0
      %v2085 = vadd.f32 %v1928, %v2084
      %v2086 = vpop.f32.mrb[0].mxu0
      %v2087 = vpop.f32.mrb[0].mxu0
      %v2088 = vadd.f32 %v1928, %v2087
      %v2089 = vpop.f32.mrb[0].mxu0
      %2090 = vmatprep.mubr.bf16.mxu0 0
      %2091 = vmatmul.mubr.bf16.gmra.mrb[0].mxu0 %v1905
      %v2092 = vpop.f32.mrb[0].mxu0
      %v2093 = vadd.f32 %v1928, %v2092
      %v2094 = vpop.f32.mrb[0].mxu0
      %v2095 = vpop.f32.mrb[0].mxu0
      %v2096 = vadd.f32 %v1928, %v2095
      %v2097 = vpop.f32.mrb[0].mxu0
      %2098 = vmatprep.mubr.bf16.mxu0 0
      %2099 = vmatmul.mubr.bf16.gmra.mrb[0].mxu0 %v1906
      %v2100 = vpop.f32.mrb[0].mxu0
      %v2101 = vadd.f32 %v1928, %v2100
      %v2102 = vpop.f32.mrb[0].mxu0
      %v2103 = vpop.f32.mrb[0].mxu0
      %v2104 = vadd.f32 %v1928, %v2103
      %v2105 = vpop.f32.mrb[0].mxu0
      %2106 = vdwg.mxu0
      %vm2107 = vcmp.gt.f32.partialorder %v2013, 0.0
      %vm2108 = vcmp.gt.f32.partialorder %v2016, 0.0
      %vm2109 = vcmp.gt.f32.partialorder %v2021, 0.0
      %vm2110 = vcmp.gt.f32.partialorder %v2024, 0.0
      %vm2111 = vcmp.gt.f32.partialorder %v2029, 0.0
      %vm2112 = vcmp.gt.f32.partialorder %v2032, 0.0
      %vm2113 = vcmp.gt.f32.partialorder %v2037, 0.0
      %vm2114 = vcmp.gt.f32.partialorder %v2040, 0.0
      %vm2115 = vcmp.gt.f32.partialorder %v2045, 0.0
      %vm2116 = vcmp.gt.f32.partialorder %v2048, 0.0
      %vm2117 = vcmp.gt.f32.partialorder %v2053, 0.0
      %vm2118 = vcmp.gt.f32.partialorder %v2056, 0.0
      %vm2119 = vcmp.gt.f32.partialorder %v2061, 0.0
      %vm2120 = vcmp.gt.f32.partialorder %v2064, 0.0
      %vm2121 = vcmp.gt.f32.partialorder %v2069, 0.0
      %vm2122 = vcmp.gt.f32.partialorder %v2072, 0.0
      %vm2123 = vcmp.gt.f32.partialorder %v2077, 0.0
      %vm2124 = vcmp.gt.f32.partialorder %v2080, 0.0
      %vm2125 = vcmp.gt.f32.partialorder %v2085, 0.0
      %vm2126 = vcmp.gt.f32.partialorder %v2088, 0.0
      %vm2127 = vcmp.gt.f32.partialorder %v2093, 0.0
      %vm2128 = vcmp.gt.f32.partialorder %v2096, 0.0
      %vm2129 = vcmp.gt.f32.partialorder %v2101, 0.0
      %vm2130 = vcmp.gt.f32.partialorder %v2104, 0.0
      %v2131 = vmul.f32 %v2013, 0.1
      %v2132 = vmul.f32 %v2016, 0.1
      %v2133 = vmul.f32 %v2021, 0.1
      %v2134 = vmul.f32 %v2024, 0.1
      %v2135 = vmul.f32 %v2029, 0.1
      %v2136 = vmul.f32 %v2032, 0.1
      %v2137 = vmul.f32 %v2037, 0.1
      %v2138 = vmul.f32 %v2040, 0.1
      %v2139 = vmul.f32 %v2045, 0.1
      %v2140 = vmul.f32 %v2048, 0.1
      %v2141 = vmul.f32 %v2053, 0.1
      %v2142 = vmul.f32 %v2056, 0.1
      %v2143 = vmul.f32 %v2061, 0.1
      %v2144 = vmul.f32 %v2064, 0.1
      %v2145 = vmul.f32 %v2069, 0.1
      %v2146 = vmul.f32 %v2072, 0.1
      %v2147 = vmul.f32 %v2077, 0.1
      %v2148 = vmul.f32 %v2080, 0.1
      %v2149 = vmul.f32 %v2085, 0.1
      %v2150 = vmul.f32 %v2088, 0.1
      %v2151 = vmul.f32 %v2093, 0.1
      %v2152 = vmul.f32 %v2096, 0.1
      %v2153 = vmul.f32 %v2101, 0.1
      %v2154 = vmul.f32 %v2104, 0.1
      %v2155 = vsel %vm2107, %v2013, %v2131
      %v2156 = vsel %vm2108, %v2016, %v2132
      %v2157 = vsel %vm2109, %v2021, %v2133
      %v2158 = vsel %vm2110, %v2024, %v2134
      %v2159 = vsel %vm2111, %v2029, %v2135
      %v2160 = vsel %vm2112, %v2032, %v2136
      %v2161 = vsel %vm2113, %v2037, %v2137
      %v2162 = vsel %vm2114, %v2040, %v2138
      %v2163 = vsel %vm2115, %v2045, %v2139
      %v2164 = vsel %vm2116, %v2048, %v2140
      %v2165 = vsel %vm2117, %v2053, %v2141
      %v2166 = vsel %vm2118, %v2056, %v2142
      %v2167 = vsel %vm2119, %v2061, %v2143
      %v2168 = vsel %vm2120, %v2064, %v2144
      %v2169 = vsel %vm2121, %v2069, %v2145
      %v2170 = vsel %vm2122, %v2072, %v2146
      %v2171 = vsel %vm2123, %v2077, %v2147
      %v2172 = vsel %vm2124, %v2080, %v2148
      %v2173 = vsel %vm2125, %v2085, %v2149
      %v2174 = vsel %vm2126, %v2088, %v2150
      %v2175 = vsel %vm2127, %v2093, %v2151
      %v2176 = vsel %vm2128, %v2096, %v2152
      %v2177 = vsel %vm2129, %v2101, %v2153
      %v2178 = vsel %vm2130, %v2104, %v2154
      %v2179 = vpack.c.bf16 %v2156, %v2155
      %v2180 = vpack.c.bf16 %v2158, %v2157
      %v2181 = vpack.c.bf16 %v2160, %v2159
      %v2182 = vpack.c.bf16 %v2162, %v2161
      %v2183 = vpack.c.bf16 %v2164, %v2163
      %v2184 = vpack.c.bf16 %v2166, %v2165
      %v2185 = vpack.c.bf16 %v2168, %v2167
      %v2186 = vpack.c.bf16 %v2170, %v2169
      %v2187 = vpack.c.bf16 %v2172, %v2171
      %v2188 = vpack.c.bf16 %v2174, %v2173
      %v2189 = vpack.c.bf16 %v2176, %v2175
      %v2190 = vpack.c.bf16 %v2178, %v2177
      %v2191 = vld [vmem:[%s25] sm:$0xff]
      %v2192 = vld [vmem:[%s25 + $0x8] sm:$0xff]
      %v2193 = vld [vmem:[%s25 + $0x10] sm:$0xff]
      %v2194 = vld [vmem:[%s25 + $0x18] sm:$0xff]
      %v2195 = vld [vmem:[%s25 + $0x20] sm:$0xff]
      %v2196 = vld [vmem:[%s25 + $0x28] sm:$0xff]
      %v2197 = vld [vmem:[%s25 + $0x30] sm:$0xff]
      %v2198 = vld [vmem:[%s25 + $0x38] sm:$0xff]
      %v2199 = vld [vmem:[%s25 + $0x40] sm:$0xff]
      %v2200 = vld [vmem:[%s25 + $0x48] sm:$0xff]
      %v2201 = vld [vmem:[%s25 + $0x50] sm:$0xff]
      %v2202 = vld [vmem:[%s25 + $0x58] sm:$0xff]
      %v2203 = vld [vmem:[%s25 + $0x60] sm:$0xff]
      %v2204 = vld [vmem:[%s25 + $0x68] sm:$0xff]
      %v2205 = vld [vmem:[%s25 + $0x70] sm:$0xff]
      %v2206 = vld [vmem:[%s25 + $0x78] sm:$0xff]
      %v2207 = vld [vmem:[%s1370] sm:$0xff]
      %v2208 = vld [vmem:[%s1370 + $0x8] sm:$0xff]
      %v2209 = vld [vmem:[%s1370 + $0x10] sm:$0xff]
      %v2210 = vld [vmem:[%s1370 + $0x18] sm:$0xff]
      %v2211 = vld [vmem:[%s1370 + $0x20] sm:$0xff]
      %v2212 = vld [vmem:[%s1370 + $0x28] sm:$0xff]
      %v2213 = vld [vmem:[%s1370 + $0x30] sm:$0xff]
      %v2214 = vld [vmem:[%s1370 + $0x38] sm:$0xff]
      %v2215 = vld [vmem:[%s1370 + $0x40] sm:$0xff]
      %v2216 = vld [vmem:[%s1370 + $0x48] sm:$0xff]
      %v2217 = vld [vmem:[%s1370 + $0x50] sm:$0xff]
      %v2218 = vld [vmem:[%s1370 + $0x58] sm:$0xff]
      %v2219 = vld [vmem:[%s1370 + $0x60] sm:$0xff]
      %v2220 = vld [vmem:[%s1370 + $0x68] sm:$0xff]
      %v2221 = vld [vmem:[%s1370 + $0x70] sm:$0xff]
      %v2222 = vld [vmem:[%s1370 + $0x78] sm:$0xff]
      %v2223 = vld [vmem:[%s1370 + $0x80] sm:$0xff]
      %v2224 = vld [vmem:[%s1370 + $0x88] sm:$0xff]
      %v2225 = vld [vmem:[%s1370 + $0x90] sm:$0xff]
      %v2226 = vld [vmem:[%s1370 + $0x98] sm:$0xff]
      %v2227 = vld [vmem:[%s1370 + $0xa0] sm:$0xff]
      %v2228 = vld [vmem:[%s1370 + $0xa8] sm:$0xff]
      %v2229 = vld [vmem:[%s1370 + $0xb0] sm:$0xff]
      %v2230 = vld [vmem:[%s1370 + $0xb8] sm:$0xff]
      %v2231 = vld [vmem:[%s27] sm:$0x3]
      %2233 = vset.pattern.permute.xlu0 0
      %2234 = vperm.xlu0 %2233, %v2207
      %v2235 = vpop.permute.xlu0 %2234
      %2238 = vset.pattern.permute.xlu0 0
      %2239 = vperm.xlu0 %2238, %v2208
      %v2240 = vpop.permute.xlu0 %2239
      %2243 = vset.pattern.permute.xlu0 0
      %2244 = vperm.xlu0 %2243, %v2209
      %v2245 = vpop.permute.xlu0 %2244
      %2248 = vset.pattern.permute.xlu0 0
      %2249 = vperm.xlu0 %2248, %v2210
      %v2250 = vpop.permute.xlu0 %2249
      %2253 = vset.pattern.permute.xlu0 0
      %2254 = vperm.xlu0 %2253, %v2211
      %v2255 = vpop.permute.xlu0 %2254
      %2258 = vset.pattern.permute.xlu0 0
      %2259 = vperm.xlu0 %2258, %v2212
      %v2260 = vpop.permute.xlu0 %2259
      %2263 = vset.pattern.permute.xlu0 0
      %2264 = vperm.xlu0 %2263, %v2213
      %v2265 = vpop.permute.xlu0 %2264
      %2268 = vset.pattern.permute.xlu0 0
      %2269 = vperm.xlu0 %2268, %v2214
      %v2270 = vpop.permute.xlu0 %2269
      %2273 = vset.pattern.permute.xlu0 0
      %2274 = vperm.xlu0 %2273, %v2215
      %v2275 = vpop.permute.xlu0 %2274
      %2278 = vset.pattern.permute.xlu0 0
      %2279 = vperm.xlu0 %2278, %v2216
      %v2280 = vpop.permute.xlu0 %2279
      %2283 = vset.pattern.permute.xlu0 0
      %2284 = vperm.xlu0 %2283, %v2217
      %v2285 = vpop.permute.xlu0 %2284
      %2288 = vset.pattern.permute.xlu0 0
      %2289 = vperm.xlu0 %2288, %v2218
      %v2290 = vpop.permute.xlu0 %2289
      %2293 = vset.pattern.permute.xlu0 0
      %2294 = vperm.xlu0 %2293, %v2219
      %v2295 = vpop.permute.xlu0 %2294
      %2298 = vset.pattern.permute.xlu0 0
      %2299 = vperm.xlu0 %2298, %v2220
      %v2300 = vpop.permute.xlu0 %2299
      %2303 = vset.pattern.permute.xlu0 0
      %2304 = vperm.xlu0 %2303, %v2221
      %v2305 = vpop.permute.xlu0 %2304
      %2308 = vset.pattern.permute.xlu0 0
      %2309 = vperm.xlu0 %2308, %v2222
      %v2310 = vpop.permute.xlu0 %2309
      %2313 = vset.pattern.permute.xlu0 0
      %2314 = vperm.xlu0 %2313, %v2223
      %v2315 = vpop.permute.xlu0 %2314
      %2318 = vset.pattern.permute.xlu0 0
      %2319 = vperm.xlu0 %2318, %v2224
      %v2320 = vpop.permute.xlu0 %2319
      %2323 = vset.pattern.permute.xlu0 0
      %2324 = vperm.xlu0 %2323, %v2225
      %v2325 = vpop.permute.xlu0 %2324
      %2328 = vset.pattern.permute.xlu0 0
      %2329 = vperm.xlu0 %2328, %v2226
      %v2330 = vpop.permute.xlu0 %2329
      %2333 = vset.pattern.permute.xlu0 0
      %2334 = vperm.xlu0 %2333, %v2227
      %v2335 = vpop.permute.xlu0 %2334
      %2338 = vset.pattern.permute.xlu0 0
      %2339 = vperm.xlu0 %2338, %v2228
      %v2340 = vpop.permute.xlu0 %2339
      %2343 = vset.pattern.permute.xlu0 0
      %2344 = vperm.xlu0 %2343, %v2229
      %v2345 = vpop.permute.xlu0 %2344
      %2348 = vset.pattern.permute.xlu0 0
      %2349 = vperm.xlu0 %2348, %v2230
      %v2350 = vpop.permute.xlu0 %2349
      %v2353 = vlaneseq
      %v2354 = vshrl.u32 %v2353, 7
      %v2355 = vsub.s32 0, %v2354
      %v2356 = vrot.slane %v2231, %v2355
      %v2357 = vlaneseq
      %v2358 = vshrl.u32 %v2357, 7
      %v2359 = vsub.s32 1, %v2358
      %v2360 = vrot.slane %v2231, %v2359
      %v2363 = vmul.f32 %v2235, %v2356
      %v2364 = vmul.f32 %v2235, %v2360
      %v2365 = vmul.f32 %v2240, %v2356
      %v2366 = vmul.f32 %v2240, %v2360
      %v2367 = vmul.f32 %v2245, %v2356
      %v2368 = vmul.f32 %v2245, %v2360
      %v2369 = vmul.f32 %v2250, %v2356
      %v2370 = vmul.f32 %v2250, %v2360
      %v2371 = vmul.f32 %v2255, %v2356
      %v2372 = vmul.f32 %v2255, %v2360
      %v2373 = vmul.f32 %v2260, %v2356
      %v2374 = vmul.f32 %v2260, %v2360
      %v2375 = vmul.f32 %v2265, %v2356
      %v2376 = vmul.f32 %v2265, %v2360
      %v2377 = vmul.f32 %v2270, %v2356
      %v2378 = vmul.f32 %v2270, %v2360
      %v2379 = vmul.f32 %v2275, %v2356
      %v2380 = vmul.f32 %v2275, %v2360
      %v2381 = vmul.f32 %v2280, %v2356
      %v2382 = vmul.f32 %v2280, %v2360
      %v2383 = vmul.f32 %v2285, %v2356
      %v2384 = vmul.f32 %v2285, %v2360
      %v2385 = vmul.f32 %v2290, %v2356
      %v2386 = vmul.f32 %v2290, %v2360
      %v2387 = vmul.f32 %v2295, %v2356
      %v2388 = vmul.f32 %v2295, %v2360
      %v2389 = vmul.f32 %v2300, %v2356
      %v2390 = vmul.f32 %v2300, %v2360
      %v2391 = vmul.f32 %v2305, %v2356
      %v2392 = vmul.f32 %v2305, %v2360
      %v2393 = vmul.f32 %v2310, %v2356
      %v2394 = vmul.f32 %v2310, %v2360
      %v2395 = vmul.f32 %v2315, %v2356
      %v2396 = vmul.f32 %v2315, %v2360
      %v2397 = vmul.f32 %v2320, %v2356
      %v2398 = vmul.f32 %v2320, %v2360
      %v2399 = vmul.f32 %v2325, %v2356
      %v2400 = vmul.f32 %v2325, %v2360
      %v2401 = vmul.f32 %v2330, %v2356
      %v2402 = vmul.f32 %v2330, %v2360
      %v2403 = vmul.f32 %v2335, %v2356
      %v2404 = vmul.f32 %v2335, %v2360
      %v2405 = vmul.f32 %v2340, %v2356
      %v2406 = vmul.f32 %v2340, %v2360
      %v2407 = vmul.f32 %v2345, %v2356
      %v2408 = vmul.f32 %v2345, %v2360
      %v2409 = vmul.f32 %v2350, %v2356
      %v2410 = vmul.f32 %v2350, %v2360
      %v2427 = vunpack.c.l.b16 %v2191
      %v2428 = vunpack.c.h.b16 %v2191
      %v2429 = vunpack.c.l.b16 %v2192
      %v2430 = vunpack.c.h.b16 %v2192
      %v2431 = vunpack.c.l.b16 %v2193
      %v2432 = vunpack.c.h.b16 %v2193
      %v2433 = vunpack.c.l.b16 %v2194
      %v2434 = vunpack.c.h.b16 %v2194
      %v2435 = vunpack.c.l.b16 %v2195
      %v2436 = vunpack.c.h.b16 %v2195
      %v2437 = vunpack.c.l.b16 %v2196
      %v2438 = vunpack.c.h.b16 %v2196
      %v2439 = vunpack.c.l.b16 %v2197
      %v2440 = vunpack.c.h.b16 %v2197
      %v2441 = vunpack.c.l.b16 %v2198
      %v2442 = vunpack.c.h.b16 %v2198
      %v2443 = vunpack.c.l.b16 %v2199
      %v2444 = vunpack.c.h.b16 %v2199
      %v2445 = vunpack.c.l.b16 %v2200
      %v2446 = vunpack.c.h.b16 %v2200
      %v2447 = vunpack.c.l.b16 %v2201
      %v2448 = vunpack.c.h.b16 %v2201
      %v2449 = vunpack.c.l.b16 %v2202
      %v2450 = vunpack.c.h.b16 %v2202
      %v2451 = vunpack.c.l.b16 %v2203
      %v2452 = vunpack.c.h.b16 %v2203
      %v2453 = vunpack.c.l.b16 %v2204
      %v2454 = vunpack.c.h.b16 %v2204
      %v2455 = vunpack.c.l.b16 %v2205
      %v2456 = vunpack.c.h.b16 %v2205
      %v2457 = vunpack.c.l.b16 %v2206
      %v2458 = vunpack.c.h.b16 %v2206
      %v2459 = vpack.c.b16 %v2429, %v2427
      %v2460 = vpack.c.b16 %v2430, %v2428
      %v2461 = vpack.c.b16 %v2433, %v2431
      %v2462 = vpack.c.b16 %v2434, %v2432
      %v2463 = vpack.c.b16 %v2437, %v2435
      %v2464 = vpack.c.b16 %v2438, %v2436
      %v2465 = vpack.c.b16 %v2441, %v2439
      %v2466 = vpack.c.b16 %v2442, %v2440
      %v2467 = vpack.c.b16 %v2445, %v2443
      %v2468 = vpack.c.b16 %v2446, %v2444
      %v2469 = vpack.c.b16 %v2449, %v2447
      %v2470 = vpack.c.b16 %v2450, %v2448
      %v2471 = vpack.c.b16 %v2453, %v2451
      %v2472 = vpack.c.b16 %v2454, %v2452
      %v2473 = vpack.c.b16 %v2457, %v2455
      %v2474 = vpack.c.b16 %v2458, %v2456
      %2491 = vmatprep.subr.bf16.mxu0 %v2460
      %2492 = vmatpush1.bf16.msra.mxu0 %v2459
      %2493 = vmatprep.subr.bf16.mxu0 %v2462
      %2494 = vmatpush1.bf16.msra.mxu0 %v2461
      %2495 = vmatprep.subr.bf16.mxu0 %v2464
      %2496 = vmatpush1.bf16.msra.mxu0 %v2463
      %2497 = vmatprep.subr.bf16.mxu0 %v2466
      %2498 = vmatpush1.bf16.msra.mxu0 %v2465
      %2499 = vmatprep.subr.bf16.mxu0 %v2468
      %2500 = vmatpush1.bf16.msra.mxu0 %v2467
      %2501 = vmatprep.subr.bf16.mxu0 %v2470
      %2502 = vmatpush1.bf16.msra.mxu0 %v2469
      %2503 = vmatprep.subr.bf16.mxu0 %v2472
      %2504 = vmatpush1.bf16.msra.mxu0 %v2471
      %2505 = vmatprep.subr.bf16.mxu0 %v2474
      %2506 = vmatpush1.bf16.msra.mxu0 %v2473
      %2507 = vmatprep.subr.bf16.mxu0 0
      %2508 = vmatpush1.bf16.msra.mxu0 0
      %2509 = vmatprep.subr.bf16.mxu0 0
      %2510 = vmatpush1.bf16.msra.mxu0 0
      %2511 = vmatprep.subr.bf16.mxu0 0
      %2512 = vmatpush1.bf16.msra.mxu0 0
      %2513 = vmatprep.subr.bf16.mxu0 0
      %2514 = vmatpush1.bf16.msra.mxu0 0
      %2515 = vmatprep.subr.bf16.mxu0 0
      %2516 = vmatpush1.bf16.msra.mxu0 0
      %2517 = vmatprep.subr.bf16.mxu0 0
      %2518 = vmatpush1.bf16.msra.mxu0 0
      %2519 = vmatprep.subr.bf16.mxu0 0
      %2520 = vmatpush1.bf16.msra.mxu0 0
      %2521 = vmatprep.subr.bf16.mxu0 0
      %2522 = vmatpush1.bf16.msra.mxu0 0
      %2523 = vmatprep.mubr.bf16.mxu0 0
      %2524 = vmatmul.mubr.bf16.gmra.mrb[0].mxu0 %v2179
      %v2525 = vpop.f32.mrb[0].mxu0
      %v2526 = vadd.f32 %v2363, %v2525
      %v2527 = vpop.f32.mrb[0].mxu0
      %v2528 = vadd.f32 %v2364, %v2527
      %v2529 = vpop.f32.mrb[0].mxu0
      %v2530 = vadd.f32 %v2365, %v2529
      %v2531 = vpop.f32.mrb[0].mxu0
      %v2532 = vadd.f32 %v2366, %v2531
      %2533 = vmatprep.mubr.bf16.mxu0 0
      %2534 = vmatmul.mubr.bf16.gmra.mrb[0].mxu0 %v2180
      %v2535 = vpop.f32.mrb[0].mxu0
      %v2536 = vadd.f32 %v2367, %v2535
      %v2537 = vpop.f32.mrb[0].mxu0
      %v2538 = vadd.f32 %v2368, %v2537
      %v2539 = vpop.f32.mrb[0].mxu0
      %v2540 = vadd.f32 %v2369, %v2539
      %v2541 = vpop.f32.mrb[0].mxu0
      %v2542 = vadd.f32 %v2370, %v2541
      %2543 = vmatprep.mubr.bf16.mxu0 0
      %2544 = vmatmul.mubr.bf16.gmra.mrb[0].mxu0 %v2181
      %v2545 = vpop.f32.mrb[0].mxu0
      %v2546 = vadd.f32 %v2371, %v2545
      %v2547 = vpop.f32.mrb[0].mxu0
      %v2548 = vadd.f32 %v2372, %v2547
      %v2549 = vpop.f32.mrb[0].mxu0
      %v2550 = vadd.f32 %v2373, %v2549
      %v2551 = vpop.f32.mrb[0].mxu0
      %v2552 = vadd.f32 %v2374, %v2551
      %2553 = vmatprep.mubr.bf16.mxu0 0
      %2554 = vmatmul.mubr.bf16.gmra.mrb[0].mxu0 %v2182
      %v2555 = vpop.f32.mrb[0].mxu0
      %v2556 = vadd.f32 %v2375, %v2555
      %v2557 = vpop.f32.mrb[0].mxu0
      %v2558 = vadd.f32 %v2376, %v2557
      %v2559 = vpop.f32.mrb[0].mxu0
      %v2560 = vadd.f32 %v2377, %v2559
      %v2561 = vpop.f32.mrb[0].mxu0
      %v2562 = vadd.f32 %v2378, %v2561
      %2563 = vmatprep.mubr.bf16.mxu0 0
      %2564 = vmatmul.mubr.bf16.gmra.mrb[0].mxu0 %v2183
      %v2565 = vpop.f32.mrb[0].mxu0
      %v2566 = vadd.f32 %v2379, %v2565
      %v2567 = vpop.f32.mrb[0].mxu0
      %v2568 = vadd.f32 %v2380, %v2567
      %v2569 = vpop.f32.mrb[0].mxu0
      %v2570 = vadd.f32 %v2381, %v2569
      %v2571 = vpop.f32.mrb[0].mxu0
      %v2572 = vadd.f32 %v2382, %v2571
      %2573 = vmatprep.mubr.bf16.mxu0 0
      %2574 = vmatmul.mubr.bf16.gmra.mrb[0].mxu0 %v2184
      %v2575 = vpop.f32.mrb[0].mxu0
      %v2576 = vadd.f32 %v2383, %v2575
      %v2577 = vpop.f32.mrb[0].mxu0
      %v2578 = vadd.f32 %v2384, %v2577
      %v2579 = vpop.f32.mrb[0].mxu0
      %v2580 = vadd.f32 %v2385, %v2579
      %v2581 = vpop.f32.mrb[0].mxu0
      %v2582 = vadd.f32 %v2386, %v2581
      %2583 = vmatprep.mubr.bf16.mxu0 0
      %2584 = vmatmul.mubr.bf16.gmra.mrb[0].mxu0 %v2185
      %v2585 = vpop.f32.mrb[0].mxu0
      %v2586 = vadd.f32 %v2387, %v2585
      %v2587 = vpop.f32.mrb[0].mxu0
      %v2588 = vadd.f32 %v2388, %v2587
      %v2589 = vpop.f32.mrb[0].mxu0
      %v2590 = vadd.f32 %v2389, %v2589
      %v2591 = vpop.f32.mrb[0].mxu0
      %v2592 = vadd.f32 %v2390, %v2591
      %2593 = vmatprep.mubr.bf16.mxu0 0
      %2594 = vmatmul.mubr.bf16.gmra.mrb[0].mxu0 %v2186
      %v2595 = vpop.f32.mrb[0].mxu0
      %v2596 = vadd.f32 %v2391, %v2595
      %v2597 = vpop.f32.mrb[0].mxu0
      %v2598 = vadd.f32 %v2392, %v2597
      %v2599 = vpop.f32.mrb[0].mxu0
      %v2600 = vadd.f32 %v2393, %v2599
      %v2601 = vpop.f32.mrb[0].mxu0
      %v2602 = vadd.f32 %v2394, %v2601
      %2603 = vmatprep.mubr.bf16.mxu0 0
      %2604 = vmatmul.mubr.bf16.gmra.mrb[0].mxu0 %v2187
      %v2605 = vpop.f32.mrb[0].mxu0
      %v2606 = vadd.f32 %v2395, %v2605
      %v2607 = vpop.f32.mrb[0].mxu0
      %v2608 = vadd.f32 %v2396, %v2607
      %v2609 = vpop.f32.mrb[0].mxu0
      %v2610 = vadd.f32 %v2397, %v2609
      %v2611 = vpop.f32.mrb[0].mxu0
      %v2612 = vadd.f32 %v2398, %v2611
      %2613 = vmatprep.mubr.bf16.mxu0 0
      %2614 = vmatmul.mubr.bf16.gmra.mrb[0].mxu0 %v2188
      %v2615 = vpop.f32.mrb[0].mxu0
      %v2616 = vadd.f32 %v2399, %v2615
      %v2617 = vpop.f32.mrb[0].mxu0
      %v2618 = vadd.f32 %v2400, %v2617
      %v2619 = vpop.f32.mrb[0].mxu0
      %v2620 = vadd.f32 %v2401, %v2619
      %v2621 = vpop.f32.mrb[0].mxu0
      %v2622 = vadd.f32 %v2402, %v2621
      %2623 = vmatprep.mubr.bf16.mxu0 0
      %2624 = vmatmul.mubr.bf16.gmra.mrb[0].mxu0 %v2189
      %v2625 = vpop.f32.mrb[0].mxu0
      %v2626 = vadd.f32 %v2403, %v2625
      %v2627 = vpop.f32.mrb[0].mxu0
      %v2628 = vadd.f32 %v2404, %v2627
      %v2629 = vpop.f32.mrb[0].mxu0
      %v2630 = vadd.f32 %v2405, %v2629
      %v2631 = vpop.f32.mrb[0].mxu0
      %v2632 = vadd.f32 %v2406, %v2631
      %2633 = vmatprep.mubr.bf16.mxu0 0
      %2634 = vmatmul.mubr.bf16.gmra.mrb[0].mxu0 %v2190
      %v2635 = vpop.f32.mrb[0].mxu0
      %v2636 = vadd.f32 %v2407, %v2635
      %v2637 = vpop.f32.mrb[0].mxu0
      %v2638 = vadd.f32 %v2408, %v2637
      %v2639 = vpop.f32.mrb[0].mxu0
      %v2640 = vadd.f32 %v2409, %v2639
      %v2641 = vpop.f32.mrb[0].mxu0
      %v2642 = vadd.f32 %v2410, %v2641
      %2643 = vdwg.mxu0
      %v2644 = vld [vmem:[%s29] sm:$0x3]
      %v2646 = vlaneseq
      %v2647 = vshrl.u32 %v2646, 7
      %v2648 = vsub.s32 0, %v2647
      %v2649 = vrot.slane %v2644, %v2648
      %v2650 = vlaneseq
      %v2651 = vshrl.u32 %v2650, 7
      %v2652 = vsub.s32 1, %v2651
      %v2653 = vrot.slane %v2644, %v2652
      %v2656 = vadd.f32 %v2526, %v2649
      %v2657 = vadd.f32 %v2528, %v2653
      %v2658 = vadd.f32 %v2530, %v2649
      %v2659 = vadd.f32 %v2532, %v2653
      %v2660 = vadd.f32 %v2536, %v2649
      %v2661 = vadd.f32 %v2538, %v2653
      %v2662 = vadd.f32 %v2540, %v2649
      %v2663 = vadd.f32 %v2542, %v2653
      %v2664 = vadd.f32 %v2546, %v2649
      %v2665 = vadd.f32 %v2548, %v2653
      %v2666 = vadd.f32 %v2550, %v2649
      %v2667 = vadd.f32 %v2552, %v2653
      %v2668 = vadd.f32 %v2556, %v2649
      %v2669 = vadd.f32 %v2558, %v2653
      %v2670 = vadd.f32 %v2560, %v2649
      %v2671 = vadd.f32 %v2562, %v2653
      %v2672 = vadd.f32 %v2566, %v2649
      %v2673 = vadd.f32 %v2568, %v2653
      %v2674 = vadd.f32 %v2570, %v2649
      %v2675 = vadd.f32 %v2572, %v2653
      %v2676 = vadd.f32 %v2576, %v2649
      %v2677 = vadd.f32 %v2578, %v2653
      %v2678 = vadd.f32 %v2580, %v2649
      %v2679 = vadd.f32 %v2582, %v2653
      %v2680 = vadd.f32 %v2586, %v2649
      %v2681 = vadd.f32 %v2588, %v2653
      %v2682 = vadd.f32 %v2590, %v2649
      %v2683 = vadd.f32 %v2592, %v2653
      %v2684 = vadd.f32 %v2596, %v2649
      %v2685 = vadd.f32 %v2598, %v2653
      %v2686 = vadd.f32 %v2600, %v2649
      %v2687 = vadd.f32 %v2602, %v2653
      %v2688 = vadd.f32 %v2606, %v2649
      %v2689 = vadd.f32 %v2608, %v2653
      %v2690 = vadd.f32 %v2610, %v2649
      %v2691 = vadd.f32 %v2612, %v2653
      %v2692 = vadd.f32 %v2616, %v2649
      %v2693 = vadd.f32 %v2618, %v2653
      %v2694 = vadd.f32 %v2620, %v2649
      %v2695 = vadd.f32 %v2622, %v2653
      %v2696 = vadd.f32 %v2626, %v2649
      %v2697 = vadd.f32 %v2628, %v2653
      %v2698 = vadd.f32 %v2630, %v2649
      %v2699 = vadd.f32 %v2632, %v2653
      %v2700 = vadd.f32 %v2636, %v2649
      %v2701 = vadd.f32 %v2638, %v2653
      %v2702 = vadd.f32 %v2640, %v2649
      %v2703 = vadd.f32 %v2642, %v2653
      %vm2704 = vcmp.gt.f32.partialorder %v2656, 0.0
      %vm2705 = vcmp.gt.f32.partialorder %v2657, 0.0
      %vm2706 = vcmp.gt.f32.partialorder %v2658, 0.0
      %vm2707 = vcmp.gt.f32.partialorder %v2659, 0.0
      %vm2708 = vcmp.gt.f32.partialorder %v2660, 0.0
      %vm2709 = vcmp.gt.f32.partialorder %v2661, 0.0
      %vm2710 = vcmp.gt.f32.partialorder %v2662, 0.0
      %vm2711 = vcmp.gt.f32.partialorder %v2663, 0.0
      %vm2712 = vcmp.gt.f32.partialorder %v2664, 0.0
      %vm2713 = vcmp.gt.f32.partialorder %v2665, 0.0
      %vm2714 = vcmp.gt.f32.partialorder %v2666, 0.0
      %vm2715 = vcmp.gt.f32.partialorder %v2667, 0.0
      %vm2716 = vcmp.gt.f32.partialorder %v2668, 0.0
      %vm2717 = vcmp.gt.f32.partialorder %v2669, 0.0
      %vm2718 = vcmp.gt.f32.partialorder %v2670, 0.0
      %vm2719 = vcmp.gt.f32.partialorder %v2671, 0.0
      %vm2720 = vcmp.gt.f32.partialorder %v2672, 0.0
      %vm2721 = vcmp.gt.f32.partialorder %v2673, 0.0
      %vm2722 = vcmp.gt.f32.partialorder %v2674, 0.0
      %vm2723 = vcmp.gt.f32.partialorder %v2675, 0.0
      %vm2724 = vcmp.gt.f32.partialorder %v2676, 0.0
      %vm2725 = vcmp.gt.f32.partialorder %v2677, 0.0
      %vm2726 = vcmp.gt.f32.partialorder %v2678, 0.0
      %vm2727 = vcmp.gt.f32.partialorder %v2679, 0.0
      %vm2728 = vcmp.gt.f32.partialorder %v2680, 0.0
      %vm2729 = vcmp.gt.f32.partialorder %v2681, 0.0
      %vm2730 = vcmp.gt.f32.partialorder %v2682, 0.0
      %vm2731 = vcmp.gt.f32.partialorder %v2683, 0.0
      %vm2732 = vcmp.gt.f32.partialorder %v2684, 0.0
      %vm2733 = vcmp.gt.f32.partialorder %v2685, 0.0
      %vm2734 = vcmp.gt.f32.partialorder %v2686, 0.0
      %vm2735 = vcmp.gt.f32.partialorder %v2687, 0.0
      %vm2736 = vcmp.gt.f32.partialorder %v2688, 0.0
      %vm2737 = vcmp.gt.f32.partialorder %v2689, 0.0
      %vm2738 = vcmp.gt.f32.partialorder %v2690, 0.0
      %vm2739 = vcmp.gt.f32.partialorder %v2691, 0.0
      %vm2740 = vcmp.gt.f32.partialorder %v2692, 0.0
      %vm2741 = vcmp.gt.f32.partialorder %v2693, 0.0
      %vm2742 = vcmp.gt.f32.partialorder %v2694, 0.0
      %vm2743 = vcmp.gt.f32.partialorder %v2695, 0.0
      %vm2744 = vcmp.gt.f32.partialorder %v2696, 0.0
      %vm2745 = vcmp.gt.f32.partialorder %v2697, 0.0
      %vm2746 = vcmp.gt.f32.partialorder %v2698, 0.0
      %vm2747 = vcmp.gt.f32.partialorder %v2699, 0.0
      %vm2748 = vcmp.gt.f32.partialorder %v2700, 0.0
      %vm2749 = vcmp.gt.f32.partialorder %v2701, 0.0
      %vm2750 = vcmp.gt.f32.partialorder %v2702, 0.0
      %vm2751 = vcmp.gt.f32.partialorder %v2703, 0.0
      %v2752 = vmul.f32 %v2656, 0.1
      %v2753 = vmul.f32 %v2657, 0.1
      %v2754 = vmul.f32 %v2658, 0.1
      %v2755 = vmul.f32 %v2659, 0.1
      %v2756 = vmul.f32 %v2660, 0.1
      %v2757 = vmul.f32 %v2661, 0.1
      %v2758 = vmul.f32 %v2662, 0.1
      %v2759 = vmul.f32 %v2663, 0.1
      %v2760 = vmul.f32 %v2664, 0.1
      %v2761 = vmul.f32 %v2665, 0.1
      %v2762 = vmul.f32 %v2666, 0.1
      %v2763 = vmul.f32 %v2667, 0.1
      %v2764 = vmul.f32 %v2668, 0.1
      %v2765 = vmul.f32 %v2669, 0.1
      %v2766 = vmul.f32 %v2670, 0.1
      %v2767 = vmul.f32 %v2671, 0.1
      %v2768 = vmul.f32 %v2672, 0.1
      %v2769 = vmul.f32 %v2673, 0.1
      %v2770 = vmul.f32 %v2674, 0.1
      %v2771 = vmul.f32 %v2675, 0.1
      %v2772 = vmul.f32 %v2676, 0.1
      %v2773 = vmul.f32 %v2677, 0.1
      %v2774 = vmul.f32 %v2678, 0.1
      %v2775 = vmul.f32 %v2679, 0.1
      %v2776 = vmul.f32 %v2680, 0.1
      %v2777 = vmul.f32 %v2681, 0.1
      %v2778 = vmul.f32 %v2682, 0.1
      %v2779 = vmul.f32 %v2683, 0.1
      %v2780 = vmul.f32 %v2684, 0.1
      %v2781 = vmul.f32 %v2685, 0.1
      %v2782 = vmul.f32 %v2686, 0.1
      %v2783 = vmul.f32 %v2687, 0.1
      %v2784 = vmul.f32 %v2688, 0.1
      %v2785 = vmul.f32 %v2689, 0.1
      %v2786 = vmul.f32 %v2690, 0.1
      %v2787 = vmul.f32 %v2691, 0.1
      %v2788 = vmul.f32 %v2692, 0.1
      %v2789 = vmul.f32 %v2693, 0.1
      %v2790 = vmul.f32 %v2694, 0.1
      %v2791 = vmul.f32 %v2695, 0.1
      %v2792 = vmul.f32 %v2696, 0.1
      %v2793 = vmul.f32 %v2697, 0.1
      %v2794 = vmul.f32 %v2698, 0.1
      %v2795 = vmul.f32 %v2699, 0.1
      %v2796 = vmul.f32 %v2700, 0.1
      %v2797 = vmul.f32 %v2701, 0.1
      %v2798 = vmul.f32 %v2702, 0.1
      %v2799 = vmul.f32 %v2703, 0.1
      %v2800 = vsel %vm2704, %v2656, %v2752
      %v2801 = vsel %vm2705, %v2657, %v2753
      %v2802 = vsel %vm2706, %v2658, %v2754
      %v2803 = vsel %vm2707, %v2659, %v2755
      %v2804 = vsel %vm2708, %v2660, %v2756
      %v2805 = vsel %vm2709, %v2661, %v2757
      %v2806 = vsel %vm2710, %v2662, %v2758
      %v2807 = vsel %vm2711, %v2663, %v2759
      %v2808 = vsel %vm2712, %v2664, %v2760
      %v2809 = vsel %vm2713, %v2665, %v2761
      %v2810 = vsel %vm2714, %v2666, %v2762
      %v2811 = vsel %vm2715, %v2667, %v2763
      %v2812 = vsel %vm2716, %v2668, %v2764
      %v2813 = vsel %vm2717, %v2669, %v2765
      %v2814 = vsel %vm2718, %v2670, %v2766
      %v2815 = vsel %vm2719, %v2671, %v2767
      %v2816 = vsel %vm2720, %v2672, %v2768
      %v2817 = vsel %vm2721, %v2673, %v2769
      %v2818 = vsel %vm2722, %v2674, %v2770
      %v2819 = vsel %vm2723, %v2675, %v2771
      %v2820 = vsel %vm2724, %v2676, %v2772
      %v2821 = vsel %vm2725, %v2677, %v2773
      %v2822 = vsel %vm2726, %v2678, %v2774
      %v2823 = vsel %vm2727, %v2679, %v2775
      %v2824 = vsel %vm2728, %v2680, %v2776
      %v2825 = vsel %vm2729, %v2681, %v2777
      %v2826 = vsel %vm2730, %v2682, %v2778
      %v2827 = vsel %vm2731, %v2683, %v2779
      %v2828 = vsel %vm2732, %v2684, %v2780
      %v2829 = vsel %vm2733, %v2685, %v2781
      %v2830 = vsel %vm2734, %v2686, %v2782
      %v2831 = vsel %vm2735, %v2687, %v2783
      %v2832 = vsel %vm2736, %v2688, %v2784
      %v2833 = vsel %vm2737, %v2689, %v2785
      %v2834 = vsel %vm2738, %v2690, %v2786
      %v2835 = vsel %vm2739, %v2691, %v2787
      %v2836 = vsel %vm2740, %v2692, %v2788
      %v2837 = vsel %vm2741, %v2693, %v2789
      %v2838 = vsel %vm2742, %v2694, %v2790
      %v2839 = vsel %vm2743, %v2695, %v2791
      %v2840 = vsel %vm2744, %v2696, %v2792
      %v2841 = vsel %vm2745, %v2697, %v2793
      %v2842 = vsel %vm2746, %v2698, %v2794
      %v2843 = vsel %vm2747, %v2699, %v2795
      %v2844 = vsel %vm2748, %v2700, %v2796
      %v2845 = vsel %vm2749, %v2701, %v2797
      %v2846 = vsel %vm2750, %v2702, %v2798
      %v2847 = vsel %vm2751, %v2703, %v2799
      %v2848 = vpack.c.bf16 %v2802, %v2800
      %v2849 = vpack.c.bf16 %v2803, %v2801
      %v2850 = vpack.c.bf16 %v2806, %v2804
      %v2851 = vpack.c.bf16 %v2807, %v2805
      %v2852 = vpack.c.bf16 %v2810, %v2808
      %v2853 = vpack.c.bf16 %v2811, %v2809
      %v2854 = vpack.c.bf16 %v2814, %v2812
      %v2855 = vpack.c.bf16 %v2815, %v2813
      %v2856 = vpack.c.bf16 %v2818, %v2816
      %v2857 = vpack.c.bf16 %v2819, %v2817
      %v2858 = vpack.c.bf16 %v2822, %v2820
      %v2859 = vpack.c.bf16 %v2823, %v2821
      %v2860 = vpack.c.bf16 %v2826, %v2824
      %v2861 = vpack.c.bf16 %v2827, %v2825
      %v2862 = vpack.c.bf16 %v2830, %v2828
      %v2863 = vpack.c.bf16 %v2831, %v2829
      %v2864 = vpack.c.bf16 %v2834, %v2832
      %v2865 = vpack.c.bf16 %v2835, %v2833
      %v2866 = vpack.c.bf16 %v2838, %v2836
      %v2867 = vpack.c.bf16 %v2839, %v2837
      %v2868 = vpack.c.bf16 %v2842, %v2840
      %v2869 = vpack.c.bf16 %v2843, %v2841
      %v2870 = vpack.c.bf16 %v2846, %v2844
      %v2871 = vpack.c.bf16 %v2847, %v2845
      %v2872 = vld [vmem:[%s31] sm:$0xff]
      %v2873 = vld [vmem:[%s31 + $0x8] sm:$0xff]
      %v2874 = vld [vmem:[%s31 + $0x10] sm:$0xff]
      %v2875 = vld [vmem:[%s31 + $0x18] sm:$0xff]
      %v2876 = vld [vmem:[%s31 + $0x20] sm:$0xff]
      %v2877 = vld [vmem:[%s31 + $0x28] sm:$0xff]
      %v2878 = vld [vmem:[%s31 + $0x30] sm:$0xff]
      %v2879 = vld [vmem:[%s31 + $0x38] sm:$0xff]
      %v2880 = vld [vmem:[%s31 + $0x40] sm:$0xff]
      %v2881 = vld [vmem:[%s31 + $0x48] sm:$0xff]
      %v2882 = vld [vmem:[%s31 + $0x50] sm:$0xff]
      %v2883 = vld [vmem:[%s31 + $0x58] sm:$0xff]
      %v2884 = vld [vmem:[%s31 + $0x60] sm:$0xff]
      %v2885 = vld [vmem:[%s31 + $0x68] sm:$0xff]
      %v2886 = vld [vmem:[%s31 + $0x70] sm:$0xff]
      %v2887 = vld [vmem:[%s31 + $0x78] sm:$0xff]
      %v2888 = vld [vmem:[%s31 + $0x80] sm:$0xff]
      %v2889 = vld [vmem:[%s31 + $0x88] sm:$0xff]
      %v2890 = vld [vmem:[%s31 + $0x90] sm:$0xff]
      %v2891 = vld [vmem:[%s31 + $0x98] sm:$0xff]
      %v2892 = vld [vmem:[%s31 + $0xa0] sm:$0xff]
      %v2893 = vld [vmem:[%s31 + $0xa8] sm:$0xff]
      %v2894 = vld [vmem:[%s31 + $0xb0] sm:$0xff]
      %v2895 = vld [vmem:[%s31 + $0xb8] sm:$0xff]
      %v2896 = vld [vmem:[%s31 + $0xc0] sm:$0xff]
      %v2897 = vld [vmem:[%s31 + $0xc8] sm:$0xff]
      %v2898 = vld [vmem:[%s31 + $0xd0] sm:$0xff]
      %v2899 = vld [vmem:[%s31 + $0xd8] sm:$0xff]
      %v2900 = vld [vmem:[%s31 + $0xe0] sm:$0xff]
      %v2901 = vld [vmem:[%s31 + $0xe8] sm:$0xff]
      %v2902 = vld [vmem:[%s31 + $0xf0] sm:$0xff]
      %v2903 = vld [vmem:[%s31 + $0xf8] sm:$0xff]
      %v2904 = vld [vmem:[%s33] sm:$0x3]
      %v2906 = vlaneseq
      %v2907 = vshrl.u32 %v2906, 7
      %v2908 = vsub.s32 0, %v2907
      %v2909 = vrot.slane %v2904, %v2908
      %v2910 = vlaneseq
      %v2911 = vshrl.u32 %v2910, 7
      %v2912 = vsub.s32 1, %v2911
      %v2913 = vrot.slane %v2904, %v2912
      %v2948 = vunpack.c.l.b16 %v2872
      %v2949 = vunpack.c.h.b16 %v2872
      %v2950 = vunpack.c.l.b16 %v2873
      %v2951 = vunpack.c.h.b16 %v2873
      %v2952 = vunpack.c.l.b16 %v2874
      %v2953 = vunpack.c.h.b16 %v2874
      %v2954 = vunpack.c.l.b16 %v2875
      %v2955 = vunpack.c.h.b16 %v2875
      %v2956 = vunpack.c.l.b16 %v2876
      %v2957 = vunpack.c.h.b16 %v2876
      %v2958 = vunpack.c.l.b16 %v2877
      %v2959 = vunpack.c.h.b16 %v2877
      %v2960 = vunpack.c.l.b16 %v2878
      %v2961 = vunpack.c.h.b16 %v2878
      %v2962 = vunpack.c.l.b16 %v2879
      %v2963 = vunpack.c.h.b16 %v2879
      %v2964 = vunpack.c.l.b16 %v2880
      %v2965 = vunpack.c.h.b16 %v2880
      %v2966 = vunpack.c.l.b16 %v2881
      %v2967 = vunpack.c.h.b16 %v2881
      %v2968 = vunpack.c.l.b16 %v2882
      %v2969 = vunpack.c.h.b16 %v2882
      %v2970 = vunpack.c.l.b16 %v2883
      %v2971 = vunpack.c.h.b16 %v2883
      %v2972 = vunpack.c.l.b16 %v2884
      %v2973 = vunpack.c.h.b16 %v2884
      %v2974 = vunpack.c.l.b16 %v2885
      %v2975 = vunpack.c.h.b16 %v2885
      %v2976 = vunpack.c.l.b16 %v2886
      %v2977 = vunpack.c.h.b16 %v2886
      %v2978 = vunpack.c.l.b16 %v2887
      %v2979 = vunpack.c.h.b16 %v2887
      %v2980 = vunpack.c.l.b16 %v2888
      %v2981 = vunpack.c.h.b16 %v2888
      %v2982 = vunpack.c.l.b16 %v2889
      %v2983 = vunpack.c.h.b16 %v2889
      %v2984 = vunpack.c.l.b16 %v2890
      %v2985 = vunpack.c.h.b16 %v2890
      %v2986 = vunpack.c.l.b16 %v2891
      %v2987 = vunpack.c.h.b16 %v2891
      %v2988 = vunpack.c.l.b16 %v2892
      %v2989 = vunpack.c.h.b16 %v2892
      %v2990 = vunpack.c.l.b16 %v2893
      %v2991 = vunpack.c.h.b16 %v2893
      %v2992 = vunpack.c.l.b16 %v2894
      %v2993 = vunpack.c.h.b16 %v2894
      %v2994 = vunpack.c.l.b16 %v2895
      %v2995 = vunpack.c.h.b16 %v2895
      %v2996 = vunpack.c.l.b16 %v2896
      %v2997 = vunpack.c.h.b16 %v2896
      %v2998 = vunpack.c.l.b16 %v2897
      %v2999 = vunpack.c.h.b16 %v2897
      %v3000 = vunpack.c.l.b16 %v2898
      %v3001 = vunpack.c.h.b16 %v2898
      %v3002 = vunpack.c.l.b16 %v2899
      %v3003 = vunpack.c.h.b16 %v2899
      %v3004 = vunpack.c.l.b16 %v2900
      %v3005 = vunpack.c.h.b16 %v2900
      %v3006 = vunpack.c.l.b16 %v2901
      %v3007 = vunpack.c.h.b16 %v2901
      %v3008 = vunpack.c.l.b16 %v2902
      %v3009 = vunpack.c.h.b16 %v2902
      %v3010 = vunpack.c.l.b16 %v2903
      %v3011 = vunpack.c.h.b16 %v2903
      %v3012 = vpack.c.b16 %v2950, %v2948
      %v3013 = vpack.c.b16 %v2951, %v2949
      %v3014 = vpack.c.b16 %v2954, %v2952
      %v3015 = vpack.c.b16 %v2955, %v2953
      %v3016 = vpack.c.b16 %v2958, %v2956
      %v3017 = vpack.c.b16 %v2959, %v2957
      %v3018 = vpack.c.b16 %v2962, %v2960
      %v3019 = vpack.c.b16 %v2963, %v2961
      %v3020 = vpack.c.b16 %v2966, %v2964
      %v3021 = vpack.c.b16 %v2967, %v2965
      %v3022 = vpack.c.b16 %v2970, %v2968
      %v3023 = vpack.c.b16 %v2971, %v2969
      %v3024 = vpack.c.b16 %v2974, %v2972
      %v3025 = vpack.c.b16 %v2975, %v2973
      %v3026 = vpack.c.b16 %v2978, %v2976
      %v3027 = vpack.c.b16 %v2979, %v2977
      %v3028 = vpack.c.b16 %v2982, %v2980
      %v3029 = vpack.c.b16 %v2983, %v2981
      %v3030 = vpack.c.b16 %v2986, %v2984
      %v3031 = vpack.c.b16 %v2987, %v2985
      %v3032 = vpack.c.b16 %v2990, %v2988
      %v3033 = vpack.c.b16 %v2991, %v2989
      %v3034 = vpack.c.b16 %v2994, %v2992
      %v3035 = vpack.c.b16 %v2995, %v2993
      %v3036 = vpack.c.b16 %v2998, %v2996
      %v3037 = vpack.c.b16 %v2999, %v2997
      %v3038 = vpack.c.b16 %v3002, %v3000
      %v3039 = vpack.c.b16 %v3003, %v3001
      %v3040 = vpack.c.b16 %v3006, %v3004
      %v3041 = vpack.c.b16 %v3007, %v3005
      %v3042 = vpack.c.b16 %v3010, %v3008
      %v3043 = vpack.c.b16 %v3011, %v3009
      %3076 = vmatprep.subr.bf16.mxu0 %v3013
      %3077 = vmatpush1.bf16.msra.mxu0 %v3012
      %3078 = vmatprep.subr.bf16.mxu0 %v3015
      %3079 = vmatpush1.bf16.msra.mxu0 %v3014
      %3080 = vmatprep.subr.bf16.mxu0 %v3017
      %3081 = vmatpush1.bf16.msra.mxu0 %v3016
      %3082 = vmatprep.subr.bf16.mxu0 %v3019
      %3083 = vmatpush1.bf16.msra.mxu0 %v3018
      %3084 = vmatprep.subr.bf16.mxu0 %v3021
      %3085 = vmatpush1.bf16.msra.mxu0 %v3020
      %3086 = vmatprep.subr.bf16.mxu0 %v3023
      %3087 = vmatpush1.bf16.msra.mxu0 %v3022
      %3088 = vmatprep.subr.bf16.mxu0 %v3025
      %3089 = vmatpush1.bf16.msra.mxu0 %v3024
      %3090 = vmatprep.subr.bf16.mxu0 %v3027
      %3091 = vmatpush1.bf16.msra.mxu0 %v3026
      %3092 = vmatprep.subr.bf16.mxu0 %v3029
      %3093 = vmatpush1.bf16.msra.mxu0 %v3028
      %3094 = vmatprep.subr.bf16.mxu0 %v3031
      %3095 = vmatpush1.bf16.msra.mxu0 %v3030
      %3096 = vmatprep.subr.bf16.mxu0 %v3033
      %3097 = vmatpush1.bf16.msra.mxu0 %v3032
      %3098 = vmatprep.subr.bf16.mxu0 %v3035
      %3099 = vmatpush1.bf16.msra.mxu0 %v3034
      %3100 = vmatprep.subr.bf16.mxu0 %v3037
      %3101 = vmatpush1.bf16.msra.mxu0 %v3036
      %3102 = vmatprep.subr.bf16.mxu0 %v3039
      %3103 = vmatpush1.bf16.msra.mxu0 %v3038
      %3104 = vmatprep.subr.bf16.mxu0 %v3041
      %3105 = vmatpush1.bf16.msra.mxu0 %v3040
      %3106 = vmatprep.subr.bf16.mxu0 %v3043
      %3107 = vmatpush1.bf16.msra.mxu0 %v3042
      %3108 = vmatprep.mubr.bf16.mxu0 %v2849
      %3109 = vmatmul.mubr.bf16.gmra.mrb[0].mxu0 %v2848
      %v3110 = vpop.f32.mrb[0].mxu0
      %v3111 = vadd.f32 %v2909, %v3110
      %v3112 = vpop.f32.mrb[0].mxu0
      %v3113 = vadd.f32 %v2913, %v3112
      %v3114 = vpop.f32.mrb[0].mxu0
      %v3115 = vadd.f32 %v2909, %v3114
      %v3116 = vpop.f32.mrb[0].mxu0
      %v3117 = vadd.f32 %v2913, %v3116
      %3118 = vmatprep.mubr.bf16.mxu0 %v2851
      %3119 = vmatmul.mubr.bf16.gmra.mrb[0].mxu0 %v2850
      %v3120 = vpop.f32.mrb[0].mxu0
      %v3121 = vadd.f32 %v2909, %v3120
      %v3122 = vpop.f32.mrb[0].mxu0
      %v3123 = vadd.f32 %v2913, %v3122
      %v3124 = vpop.f32.mrb[0].mxu0
      %v3125 = vadd.f32 %v2909, %v3124
      %v3126 = vpop.f32.mrb[0].mxu0
      %v3127 = vadd.f32 %v2913, %v3126
      %3128 = vmatprep.mubr.bf16.mxu0 %v2853
      %3129 = vmatmul.mubr.bf16.gmra.mrb[0].mxu0 %v2852
      %v3130 = vpop.f32.mrb[0].mxu0
      %v3131 = vadd.f32 %v2909, %v3130
      %v3132 = vpop.f32.mrb[0].mxu0
      %v3133 = vadd.f32 %v2913, %v3132
      %v3134 = vpop.f32.mrb[0].mxu0
      %v3135 = vadd.f32 %v2909, %v3134
      %v3136 = vpop.f32.mrb[0].mxu0
      %v3137 = vadd.f32 %v2913, %v3136
      %3138 = vmatprep.mubr.bf16.mxu0 %v2855
      %3139 = vmatmul.mubr.bf16.gmra.mrb[0].mxu0 %v2854
      %v3140 = vpop.f32.mrb[0].mxu0
      %v3141 = vadd.f32 %v2909, %v3140
      %v3142 = vpop.f32.mrb[0].mxu0
      %v3143 = vadd.f32 %v2913, %v3142
      %v3144 = vpop.f32.mrb[0].mxu0
      %v3145 = vadd.f32 %v2909, %v3144
      %v3146 = vpop.f32.mrb[0].mxu0
      %v3147 = vadd.f32 %v2913, %v3146
      %3148 = vmatprep.mubr.bf16.mxu0 %v2857
      %3149 = vmatmul.mubr.bf16.gmra.mrb[0].mxu0 %v2856
      %v3150 = vpop.f32.mrb[0].mxu0
      %v3151 = vadd.f32 %v2909, %v3150
      %v3152 = vpop.f32.mrb[0].mxu0
      %v3153 = vadd.f32 %v2913, %v3152
      %v3154 = vpop.f32.mrb[0].mxu0
      %v3155 = vadd.f32 %v2909, %v3154
      %v3156 = vpop.f32.mrb[0].mxu0
      %v3157 = vadd.f32 %v2913, %v3156
      %3158 = vmatprep.mubr.bf16.mxu0 %v2859
      %3159 = vmatmul.mubr.bf16.gmra.mrb[0].mxu0 %v2858
      %v3160 = vpop.f32.mrb[0].mxu0
      %v3161 = vadd.f32 %v2909, %v3160
      %v3162 = vpop.f32.mrb[0].mxu0
      %v3163 = vadd.f32 %v2913, %v3162
      %v3164 = vpop.f32.mrb[0].mxu0
      %v3165 = vadd.f32 %v2909, %v3164
      %v3166 = vpop.f32.mrb[0].mxu0
      %v3167 = vadd.f32 %v2913, %v3166
      %3168 = vmatprep.mubr.bf16.mxu0 %v2861
      %3169 = vmatmul.mubr.bf16.gmra.mrb[0].mxu0 %v2860
      %v3170 = vpop.f32.mrb[0].mxu0
      %v3171 = vadd.f32 %v2909, %v3170
      %v3172 = vpop.f32.mrb[0].mxu0
      %v3173 = vadd.f32 %v2913, %v3172
      %v3174 = vpop.f32.mrb[0].mxu0
      %v3175 = vadd.f32 %v2909, %v3174
      %v3176 = vpop.f32.mrb[0].mxu0
      %v3177 = vadd.f32 %v2913, %v3176
      %3178 = vmatprep.mubr.bf16.mxu0 %v2863
      %3179 = vmatmul.mubr.bf16.gmra.mrb[0].mxu0 %v2862
      %v3180 = vpop.f32.mrb[0].mxu0
      %v3181 = vadd.f32 %v2909, %v3180
      %v3182 = vpop.f32.mrb[0].mxu0
      %v3183 = vadd.f32 %v2913, %v3182
      %v3184 = vpop.f32.mrb[0].mxu0
      %v3185 = vadd.f32 %v2909, %v3184
      %v3186 = vpop.f32.mrb[0].mxu0
      %v3187 = vadd.f32 %v2913, %v3186
      %3188 = vmatprep.mubr.bf16.mxu0 %v2865
      %3189 = vmatmul.mubr.bf16.gmra.mrb[0].mxu0 %v2864
      %v3190 = vpop.f32.mrb[0].mxu0
      %v3191 = vadd.f32 %v2909, %v3190
      %v3192 = vpop.f32.mrb[0].mxu0
      %v3193 = vadd.f32 %v2913, %v3192
      %v3194 = vpop.f32.mrb[0].mxu0
      %v3195 = vadd.f32 %v2909, %v3194
      %v3196 = vpop.f32.mrb[0].mxu0
      %v3197 = vadd.f32 %v2913, %v3196
      %3198 = vmatprep.mubr.bf16.mxu0 %v2867
      %3199 = vmatmul.mubr.bf16.gmra.mrb[0].mxu0 %v2866
      %v3200 = vpop.f32.mrb[0].mxu0
      %v3201 = vadd.f32 %v2909, %v3200
      %v3202 = vpop.f32.mrb[0].mxu0
      %v3203 = vadd.f32 %v2913, %v3202
      %v3204 = vpop.f32.mrb[0].mxu0
      %v3205 = vadd.f32 %v2909, %v3204
      %v3206 = vpop.f32.mrb[0].mxu0
      %v3207 = vadd.f32 %v2913, %v3206
      %3208 = vmatprep.mubr.bf16.mxu0 %v2869
      %3209 = vmatmul.mubr.bf16.gmra.mrb[0].mxu0 %v2868
      %v3210 = vpop.f32.mrb[0].mxu0
      %v3211 = vadd.f32 %v2909, %v3210
      %v3212 = vpop.f32.mrb[0].mxu0
      %v3213 = vadd.f32 %v2913, %v3212
      %v3214 = vpop.f32.mrb[0].mxu0
      %v3215 = vadd.f32 %v2909, %v3214
      %v3216 = vpop.f32.mrb[0].mxu0
      %v3217 = vadd.f32 %v2913, %v3216
      %3218 = vmatprep.mubr.bf16.mxu0 %v2871
      %3219 = vmatmul.mubr.bf16.gmra.mrb[0].mxu0 %v2870
      %v3220 = vpop.f32.mrb[0].mxu0
      %v3221 = vadd.f32 %v2909, %v3220
      %v3222 = vpop.f32.mrb[0].mxu0
      %v3223 = vadd.f32 %v2913, %v3222
      %v3224 = vpop.f32.mrb[0].mxu0
      %v3225 = vadd.f32 %v2909, %v3224
      %v3226 = vpop.f32.mrb[0].mxu0
      %v3227 = vadd.f32 %v2913, %v3226
      %3228 = vdwg.mxu0
      %vm3229 = vcmp.gt.f32.partialorder %v3111, 0.0
      %vm3230 = vcmp.gt.f32.partialorder %v3113, 0.0
      %vm3231 = vcmp.gt.f32.partialorder %v3115, 0.0
      %vm3232 = vcmp.gt.f32.partialorder %v3117, 0.0
      %vm3233 = vcmp.gt.f32.partialorder %v3121, 0.0
      %vm3234 = vcmp.gt.f32.partialorder %v3123, 0.0
      %vm3235 = vcmp.gt.f32.partialorder %v3125, 0.0
      %vm3236 = vcmp.gt.f32.partialorder %v3127, 0.0
      %vm3237 = vcmp.gt.f32.partialorder %v3131, 0.0
      %vm3238 = vcmp.gt.f32.partialorder %v3133, 0.0
      %vm3239 = vcmp.gt.f32.partialorder %v3135, 0.0
      %vm3240 = vcmp.gt.f32.partialorder %v3137, 0.0
      %vm3241 = vcmp.gt.f32.partialorder %v3141, 0.0
      %vm3242 = vcmp.gt.f32.partialorder %v3143, 0.0
      %vm3243 = vcmp.gt.f32.partialorder %v3145, 0.0
      %vm3244 = vcmp.gt.f32.partialorder %v3147, 0.0
      %vm3245 = vcmp.gt.f32.partialorder %v3151, 0.0
      %vm3246 = vcmp.gt.f32.partialorder %v3153, 0.0
      %vm3247 = vcmp.gt.f32.partialorder %v3155, 0.0
      %vm3248 = vcmp.gt.f32.partialorder %v3157, 0.0
      %vm3249 = vcmp.gt.f32.partialorder %v3161, 0.0
      %vm3250 = vcmp.gt.f32.partialorder %v3163, 0.0
      %vm3251 = vcmp.gt.f32.partialorder %v3165, 0.0
      %vm3252 = vcmp.gt.f32.partialorder %v3167, 0.0
      %vm3253 = vcmp.gt.f32.partialorder %v3171, 0.0
      %vm3254 = vcmp.gt.f32.partialorder %v3173, 0.0
      %vm3255 = vcmp.gt.f32.partialorder %v3175, 0.0
      %vm3256 = vcmp.gt.f32.partialorder %v3177, 0.0
      %vm3257 = vcmp.gt.f32.partialorder %v3181, 0.0
      %vm3258 = vcmp.gt.f32.partialorder %v3183, 0.0
      %vm3259 = vcmp.gt.f32.partialorder %v3185, 0.0
      %vm3260 = vcmp.gt.f32.partialorder %v3187, 0.0
      %vm3261 = vcmp.gt.f32.partialorder %v3191, 0.0
      %vm3262 = vcmp.gt.f32.partialorder %v3193, 0.0
      %vm3263 = vcmp.gt.f32.partialorder %v3195, 0.0
      %vm3264 = vcmp.gt.f32.partialorder %v3197, 0.0
      %vm3265 = vcmp.gt.f32.partialorder %v3201, 0.0
      %vm3266 = vcmp.gt.f32.partialorder %v3203, 0.0
      %vm3267 = vcmp.gt.f32.partialorder %v3205, 0.0
      %vm3268 = vcmp.gt.f32.partialorder %v3207, 0.0
      %vm3269 = vcmp.gt.f32.partialorder %v3211, 0.0
      %vm3270 = vcmp.gt.f32.partialorder %v3213, 0.0
      %vm3271 = vcmp.gt.f32.partialorder %v3215, 0.0
      %vm3272 = vcmp.gt.f32.partialorder %v3217, 0.0
      %vm3273 = vcmp.gt.f32.partialorder %v3221, 0.0
      %vm3274 = vcmp.gt.f32.partialorder %v3223, 0.0
      %vm3275 = vcmp.gt.f32.partialorder %v3225, 0.0
      %vm3276 = vcmp.gt.f32.partialorder %v3227, 0.0
      %v3277 = vmul.f32 %v3111, 0.1
      %v3278 = vmul.f32 %v3113, 0.1
      %v3279 = vmul.f32 %v3115, 0.1
      %v3280 = vmul.f32 %v3117, 0.1
      %v3281 = vmul.f32 %v3121, 0.1
      %v3282 = vmul.f32 %v3123, 0.1
      %v3283 = vmul.f32 %v3125, 0.1
      %v3284 = vmul.f32 %v3127, 0.1
      %v3285 = vmul.f32 %v3131, 0.1
      %v3286 = vmul.f32 %v3133, 0.1
      %v3287 = vmul.f32 %v3135, 0.1
      %v3288 = vmul.f32 %v3137, 0.1
      %v3289 = vmul.f32 %v3141, 0.1
      %v3290 = vmul.f32 %v3143, 0.1
      %v3291 = vmul.f32 %v3145, 0.1
      %v3292 = vmul.f32 %v3147, 0.1
      %v3293 = vmul.f32 %v3151, 0.1
      %v3294 = vmul.f32 %v3153, 0.1
      %v3295 = vmul.f32 %v3155, 0.1
      %v3296 = vmul.f32 %v3157, 0.1
      %v3297 = vmul.f32 %v3161, 0.1
      %v3298 = vmul.f32 %v3163, 0.1
      %v3299 = vmul.f32 %v3165, 0.1
      %v3300 = vmul.f32 %v3167, 0.1
      %v3301 = vmul.f32 %v3171, 0.1
      %v3302 = vmul.f32 %v3173, 0.1
      %v3303 = vmul.f32 %v3175, 0.1
      %v3304 = vmul.f32 %v3177, 0.1
      %v3305 = vmul.f32 %v3181, 0.1
      %v3306 = vmul.f32 %v3183, 0.1
      %v3307 = vmul.f32 %v3185, 0.1
      %v3308 = vmul.f32 %v3187, 0.1
      %v3309 = vmul.f32 %v3191, 0.1
      %v3310 = vmul.f32 %v3193, 0.1
      %v3311 = vmul.f32 %v3195, 0.1
      %v3312 = vmul.f32 %v3197, 0.1
      %v3313 = vmul.f32 %v3201, 0.1
      %v3314 = vmul.f32 %v3203, 0.1
      %v3315 = vmul.f32 %v3205, 0.1
      %v3316 = vmul.f32 %v3207, 0.1
      %v3317 = vmul.f32 %v3211, 0.1
      %v3318 = vmul.f32 %v3213, 0.1
      %v3319 = vmul.f32 %v3215, 0.1
      %v3320 = vmul.f32 %v3217, 0.1
      %v3321 = vmul.f32 %v3221, 0.1
      %v3322 = vmul.f32 %v3223, 0.1
      %v3323 = vmul.f32 %v3225, 0.1
      %v3324 = vmul.f32 %v3227, 0.1
      %v3325 = vsel %vm3229, %v3111, %v3277
      %v3326 = vsel %vm3230, %v3113, %v3278
      %v3327 = vsel %vm3231, %v3115, %v3279
      %v3328 = vsel %vm3232, %v3117, %v3280
      %v3329 = vsel %vm3233, %v3121, %v3281
      %v3330 = vsel %vm3234, %v3123, %v3282
      %v3331 = vsel %vm3235, %v3125, %v3283
      %v3332 = vsel %vm3236, %v3127, %v3284
      %v3333 = vsel %vm3237, %v3131, %v3285
      %v3334 = vsel %vm3238, %v3133, %v3286
      %v3335 = vsel %vm3239, %v3135, %v3287
      %v3336 = vsel %vm3240, %v3137, %v3288
      %v3337 = vsel %vm3241, %v3141, %v3289
      %v3338 = vsel %vm3242, %v3143, %v3290
      %v3339 = vsel %vm3243, %v3145, %v3291
      %v3340 = vsel %vm3244, %v3147, %v3292
      %v3341 = vsel %vm3245, %v3151, %v3293
      %v3342 = vsel %vm3246, %v3153, %v3294
      %v3343 = vsel %vm3247, %v3155, %v3295
      %v3344 = vsel %vm3248, %v3157, %v3296
      %v3345 = vsel %vm3249, %v3161, %v3297
      %v3346 = vsel %vm3250, %v3163, %v3298
      %v3347 = vsel %vm3251, %v3165, %v3299
      %v3348 = vsel %vm3252, %v3167, %v3300
      %v3349 = vsel %vm3253, %v3171, %v3301
      %v3350 = vsel %vm3254, %v3173, %v3302
      %v3351 = vsel %vm3255, %v3175, %v3303
      %v3352 = vsel %vm3256, %v3177, %v3304
      %v3353 = vsel %vm3257, %v3181, %v3305
      %v3354 = vsel %vm3258, %v3183, %v3306
      %v3355 = vsel %vm3259, %v3185, %v3307
      %v3356 = vsel %vm3260, %v3187, %v3308
      %v3357 = vsel %vm3261, %v3191, %v3309
      %v3358 = vsel %vm3262, %v3193, %v3310
      %v3359 = vsel %vm3263, %v3195, %v3311
      %v3360 = vsel %vm3264, %v3197, %v3312
      %v3361 = vsel %vm3265, %v3201, %v3313
      %v3362 = vsel %vm3266, %v3203, %v3314
      %v3363 = vsel %vm3267, %v3205, %v3315
      %v3364 = vsel %vm3268, %v3207, %v3316
      %v3365 = vsel %vm3269, %v3211, %v3317
      %v3366 = vsel %vm3270, %v3213, %v3318
      %v3367 = vsel %vm3271, %v3215, %v3319
      %v3368 = vsel %vm3272, %v3217, %v3320
      %v3369 = vsel %vm3273, %v3221, %v3321
      %v3370 = vsel %vm3274, %v3223, %v3322
      %v3371 = vsel %vm3275, %v3225, %v3323
      %v3372 = vsel %vm3276, %v3227, %v3324
      %v3373 = vpack.c.bf16 %v3327, %v3325
      %v3374 = vpack.c.bf16 %v3328, %v3326
      %v3375 = vpack.c.bf16 %v3331, %v3329
      %v3376 = vpack.c.bf16 %v3332, %v3330
      %v3377 = vpack.c.bf16 %v3335, %v3333
      %v3378 = vpack.c.bf16 %v3336, %v3334
      %v3379 = vpack.c.bf16 %v3339, %v3337
      %v3380 = vpack.c.bf16 %v3340, %v3338
      %v3381 = vpack.c.bf16 %v3343, %v3341
      %v3382 = vpack.c.bf16 %v3344, %v3342
      %v3383 = vpack.c.bf16 %v3347, %v3345
      %v3384 = vpack.c.bf16 %v3348, %v3346
      %v3385 = vpack.c.bf16 %v3351, %v3349
      %v3386 = vpack.c.bf16 %v3352, %v3350
      %v3387 = vpack.c.bf16 %v3355, %v3353
      %v3388 = vpack.c.bf16 %v3356, %v3354
      %v3389 = vpack.c.bf16 %v3359, %v3357
      %v3390 = vpack.c.bf16 %v3360, %v3358
      %v3391 = vpack.c.bf16 %v3363, %v3361
      %v3392 = vpack.c.bf16 %v3364, %v3362
      %v3393 = vpack.c.bf16 %v3367, %v3365
      %v3394 = vpack.c.bf16 %v3368, %v3366
      %v3395 = vpack.c.bf16 %v3371, %v3369
      %v3396 = vpack.c.bf16 %v3372, %v3370
      %v3397 = vld [vmem:[%s35] sm:$0xff]
      %v3398 = vld [vmem:[%s35 + $0x8] sm:$0xff]
      %v3399 = vld [vmem:[%s35 + $0x10] sm:$0xff]
      %v3400 = vld [vmem:[%s35 + $0x18] sm:$0xff]
      %v3401 = vld [vmem:[%s35 + $0x20] sm:$0xff]
      %v3402 = vld [vmem:[%s35 + $0x28] sm:$0xff]
      %v3403 = vld [vmem:[%s35 + $0x30] sm:$0xff]
      %v3404 = vld [vmem:[%s35 + $0x38] sm:$0xff]
      %v3405 = vld [vmem:[%s35 + $0x40] sm:$0xff]
      %v3406 = vld [vmem:[%s35 + $0x48] sm:$0xff]
      %v3407 = vld [vmem:[%s35 + $0x50] sm:$0xff]
      %v3408 = vld [vmem:[%s35 + $0x58] sm:$0xff]
      %v3409 = vld [vmem:[%s35 + $0x60] sm:$0xff]
      %v3410 = vld [vmem:[%s35 + $0x68] sm:$0xff]
      %v3411 = vld [vmem:[%s35 + $0x70] sm:$0xff]
      %v3412 = vld [vmem:[%s35 + $0x78] sm:$0xff]
      %v3413 = vld [vmem:[%s35 + $0x80] sm:$0xff]
      %v3414 = vld [vmem:[%s35 + $0x88] sm:$0xff]
      %v3415 = vld [vmem:[%s35 + $0x90] sm:$0xff]
      %v3416 = vld [vmem:[%s35 + $0x98] sm:$0xff]
      %v3417 = vld [vmem:[%s35 + $0xa0] sm:$0xff]
      %v3418 = vld [vmem:[%s35 + $0xa8] sm:$0xff]
      %v3419 = vld [vmem:[%s35 + $0xb0] sm:$0xff]
      %v3420 = vld [vmem:[%s35 + $0xb8] sm:$0xff]
      %v3421 = vld [vmem:[%s35 + $0xc0] sm:$0xff]
      %v3422 = vld [vmem:[%s35 + $0xc8] sm:$0xff]
      %v3423 = vld [vmem:[%s35 + $0xd0] sm:$0xff]
      %v3424 = vld [vmem:[%s35 + $0xd8] sm:$0xff]
      %v3425 = vld [vmem:[%s35 + $0xe0] sm:$0xff]
      %v3426 = vld [vmem:[%s35 + $0xe8] sm:$0xff]
      %v3427 = vld [vmem:[%s35 + $0xf0] sm:$0xff]
      %v3428 = vld [vmem:[%s35 + $0xf8] sm:$0xff]
      %v3429 = vld [vmem:[%s37] sm:$0x3]
      %v3431 = vlaneseq
      %v3432 = vshrl.u32 %v3431, 7
      %v3433 = vsub.s32 0, %v3432
      %v3434 = vrot.slane %v3429, %v3433
      %v3435 = vlaneseq
      %v3436 = vshrl.u32 %v3435, 7
      %v3437 = vsub.s32 1, %v3436
      %v3438 = vrot.slane %v3429, %v3437
      %v3473 = vunpack.c.l.b16 %v3397
      %v3474 = vunpack.c.h.b16 %v3397
      %v3475 = vunpack.c.l.b16 %v3398
      %v3476 = vunpack.c.h.b16 %v3398
      %v3477 = vunpack.c.l.b16 %v3399
      %v3478 = vunpack.c.h.b16 %v3399
      %v3479 = vunpack.c.l.b16 %v3400
      %v3480 = vunpack.c.h.b16 %v3400
      %v3481 = vunpack.c.l.b16 %v3401
      %v3482 = vunpack.c.h.b16 %v3401
      %v3483 = vunpack.c.l.b16 %v3402
      %v3484 = vunpack.c.h.b16 %v3402
      %v3485 = vunpack.c.l.b16 %v3403
      %v3486 = vunpack.c.h.b16 %v3403
      %v3487 = vunpack.c.l.b16 %v3404
      %v3488 = vunpack.c.h.b16 %v3404
      %v3489 = vunpack.c.l.b16 %v3405
      %v3490 = vunpack.c.h.b16 %v3405
      %v3491 = vunpack.c.l.b16 %v3406
      %v3492 = vunpack.c.h.b16 %v3406
      %v3493 = vunpack.c.l.b16 %v3407
      %v3494 = vunpack.c.h.b16 %v3407
      %v3495 = vunpack.c.l.b16 %v3408
      %v3496 = vunpack.c.h.b16 %v3408
      %v3497 = vunpack.c.l.b16 %v3409
      %v3498 = vunpack.c.h.b16 %v3409
      %v3499 = vunpack.c.l.b16 %v3410
      %v3500 = vunpack.c.h.b16 %v3410
      %v3501 = vunpack.c.l.b16 %v3411
      %v3502 = vunpack.c.h.b16 %v3411
      %v3503 = vunpack.c.l.b16 %v3412
      %v3504 = vunpack.c.h.b16 %v3412
      %v3505 = vunpack.c.l.b16 %v3413
      %v3506 = vunpack.c.h.b16 %v3413
      %v3507 = vunpack.c.l.b16 %v3414
      %v3508 = vunpack.c.h.b16 %v3414
      %v3509 = vunpack.c.l.b16 %v3415
      %v3510 = vunpack.c.h.b16 %v3415
      %v3511 = vunpack.c.l.b16 %v3416
      %v3512 = vunpack.c.h.b16 %v3416
      %v3513 = vunpack.c.l.b16 %v3417
      %v3514 = vunpack.c.h.b16 %v3417
      %v3515 = vunpack.c.l.b16 %v3418
      %v3516 = vunpack.c.h.b16 %v3418
      %v3517 = vunpack.c.l.b16 %v3419
      %v3518 = vunpack.c.h.b16 %v3419
      %v3519 = vunpack.c.l.b16 %v3420
      %v3520 = vunpack.c.h.b16 %v3420
      %v3521 = vunpack.c.l.b16 %v3421
      %v3522 = vunpack.c.h.b16 %v3421
      %v3523 = vunpack.c.l.b16 %v3422
      %v3524 = vunpack.c.h.b16 %v3422
      %v3525 = vunpack.c.l.b16 %v3423
      %v3526 = vunpack.c.h.b16 %v3423
      %v3527 = vunpack.c.l.b16 %v3424
      %v3528 = vunpack.c.h.b16 %v3424
      %v3529 = vunpack.c.l.b16 %v3425
      %v3530 = vunpack.c.h.b16 %v3425
      %v3531 = vunpack.c.l.b16 %v3426
      %v3532 = vunpack.c.h.b16 %v3426
      %v3533 = vunpack.c.l.b16 %v3427
      %v3534 = vunpack.c.h.b16 %v3427
      %v3535 = vunpack.c.l.b16 %v3428
      %v3536 = vunpack.c.h.b16 %v3428
      %v3537 = vpack.c.b16 %v3475, %v3473
      %v3538 = vpack.c.b16 %v3476, %v3474
      %v3539 = vpack.c.b16 %v3479, %v3477
      %v3540 = vpack.c.b16 %v3480, %v3478
      %v3541 = vpack.c.b16 %v3483, %v3481
      %v3542 = vpack.c.b16 %v3484, %v3482
      %v3543 = vpack.c.b16 %v3487, %v3485
      %v3544 = vpack.c.b16 %v3488, %v3486
      %v3545 = vpack.c.b16 %v3491, %v3489
      %v3546 = vpack.c.b16 %v3492, %v3490
      %v3547 = vpack.c.b16 %v3495, %v3493
      %v3548 = vpack.c.b16 %v3496, %v3494
      %v3549 = vpack.c.b16 %v3499, %v3497
      %v3550 = vpack.c.b16 %v3500, %v3498
      %v3551 = vpack.c.b16 %v3503, %v3501
      %v3552 = vpack.c.b16 %v3504, %v3502
      %v3553 = vpack.c.b16 %v3507, %v3505
      %v3554 = vpack.c.b16 %v3508, %v3506
      %v3555 = vpack.c.b16 %v3511, %v3509
      %v3556 = vpack.c.b16 %v3512, %v3510
      %v3557 = vpack.c.b16 %v3515, %v3513
      %v3558 = vpack.c.b16 %v3516, %v3514
      %v3559 = vpack.c.b16 %v3519, %v3517
      %v3560 = vpack.c.b16 %v3520, %v3518
      %v3561 = vpack.c.b16 %v3523, %v3521
      %v3562 = vpack.c.b16 %v3524, %v3522
      %v3563 = vpack.c.b16 %v3527, %v3525
      %v3564 = vpack.c.b16 %v3528, %v3526
      %v3565 = vpack.c.b16 %v3531, %v3529
      %v3566 = vpack.c.b16 %v3532, %v3530
      %v3567 = vpack.c.b16 %v3535, %v3533
      %v3568 = vpack.c.b16 %v3536, %v3534
      %3601 = vmatprep.subr.bf16.mxu0 %v3538
      %3602 = vmatpush1.bf16.msra.mxu0 %v3537
      %3603 = vmatprep.subr.bf16.mxu0 %v3540
      %3604 = vmatpush1.bf16.msra.mxu0 %v3539
      %3605 = vmatprep.subr.bf16.mxu0 %v3542
      %3606 = vmatpush1.bf16.msra.mxu0 %v3541
      %3607 = vmatprep.subr.bf16.mxu0 %v3544
      %3608 = vmatpush1.bf16.msra.mxu0 %v3543
      %3609 = vmatprep.subr.bf16.mxu0 %v3546
      %3610 = vmatpush1.bf16.msra.mxu0 %v3545
      %3611 = vmatprep.subr.bf16.mxu0 %v3548
      %3612 = vmatpush1.bf16.msra.mxu0 %v3547
      %3613 = vmatprep.subr.bf16.mxu0 %v3550
      %3614 = vmatpush1.bf16.msra.mxu0 %v3549
      %3615 = vmatprep.subr.bf16.mxu0 %v3552
      %3616 = vmatpush1.bf16.msra.mxu0 %v3551
      %3617 = vmatprep.subr.bf16.mxu0 %v3554
      %3618 = vmatpush1.bf16.msra.mxu0 %v3553
      %3619 = vmatprep.subr.bf16.mxu0 %v3556
      %3620 = vmatpush1.bf16.msra.mxu0 %v3555
      %3621 = vmatprep.subr.bf16.mxu0 %v3558
      %3622 = vmatpush1.bf16.msra.mxu0 %v3557
      %3623 = vmatprep.subr.bf16.mxu0 %v3560
      %3624 = vmatpush1.bf16.msra.mxu0 %v3559
      %3625 = vmatprep.subr.bf16.mxu0 %v3562
      %3626 = vmatpush1.bf16.msra.mxu0 %v3561
      %3627 = vmatprep.subr.bf16.mxu0 %v3564
      %3628 = vmatpush1.bf16.msra.mxu0 %v3563
      %3629 = vmatprep.subr.bf16.mxu0 %v3566
      %3630 = vmatpush1.bf16.msra.mxu0 %v3565
      %3631 = vmatprep.subr.bf16.mxu0 %v3568
      %3632 = vmatpush1.bf16.msra.mxu0 %v3567
      %3633 = vmatprep.mubr.bf16.mxu0 %v3374
      %3634 = vmatmul.mubr.bf16.gmra.mrb[0].mxu0 %v3373
      %v3635 = vpop.f32.mrb[0].mxu0
      %v3636 = vadd.f32 %v3434, %v3635
      %v3637 = vpop.f32.mrb[0].mxu0
      %v3638 = vadd.f32 %v3438, %v3637
      %v3639 = vpop.f32.mrb[0].mxu0
      %v3640 = vadd.f32 %v3434, %v3639
      %v3641 = vpop.f32.mrb[0].mxu0
      %v3642 = vadd.f32 %v3438, %v3641
      %3643 = vmatprep.mubr.bf16.mxu0 %v3376
      %3644 = vmatmul.mubr.bf16.gmra.mrb[0].mxu0 %v3375
      %v3645 = vpop.f32.mrb[0].mxu0
      %v3646 = vadd.f32 %v3434, %v3645
      %v3647 = vpop.f32.mrb[0].mxu0
      %v3648 = vadd.f32 %v3438, %v3647
      %v3649 = vpop.f32.mrb[0].mxu0
      %v3650 = vadd.f32 %v3434, %v3649
      %v3651 = vpop.f32.mrb[0].mxu0
      %v3652 = vadd.f32 %v3438, %v3651
      %3653 = vmatprep.mubr.bf16.mxu0 %v3378
      %3654 = vmatmul.mubr.bf16.gmra.mrb[0].mxu0 %v3377
      %v3655 = vpop.f32.mrb[0].mxu0
      %v3656 = vadd.f32 %v3434, %v3655
      %v3657 = vpop.f32.mrb[0].mxu0
      %v3658 = vadd.f32 %v3438, %v3657
      %v3659 = vpop.f32.mrb[0].mxu0
      %v3660 = vadd.f32 %v3434, %v3659
      %v3661 = vpop.f32.mrb[0].mxu0
      %v3662 = vadd.f32 %v3438, %v3661
      %3663 = vmatprep.mubr.bf16.mxu0 %v3380
      %3664 = vmatmul.mubr.bf16.gmra.mrb[0].mxu0 %v3379
      %v3665 = vpop.f32.mrb[0].mxu0
      %v3666 = vadd.f32 %v3434, %v3665
      %v3667 = vpop.f32.mrb[0].mxu0
      %v3668 = vadd.f32 %v3438, %v3667
      %v3669 = vpop.f32.mrb[0].mxu0
      %v3670 = vadd.f32 %v3434, %v3669
      %v3671 = vpop.f32.mrb[0].mxu0
      %v3672 = vadd.f32 %v3438, %v3671
      %3673 = vmatprep.mubr.bf16.mxu0 %v3382
      %3674 = vmatmul.mubr.bf16.gmra.mrb[0].mxu0 %v3381
      %v3675 = vpop.f32.mrb[0].mxu0
      %v3676 = vadd.f32 %v3434, %v3675
      %v3677 = vpop.f32.mrb[0].mxu0
      %v3678 = vadd.f32 %v3438, %v3677
      %v3679 = vpop.f32.mrb[0].mxu0
      %v3680 = vadd.f32 %v3434, %v3679
      %v3681 = vpop.f32.mrb[0].mxu0
      %v3682 = vadd.f32 %v3438, %v3681
      %3683 = vmatprep.mubr.bf16.mxu0 %v3384
      %3684 = vmatmul.mubr.bf16.gmra.mrb[0].mxu0 %v3383
      %v3685 = vpop.f32.mrb[0].mxu0
      %v3686 = vadd.f32 %v3434, %v3685
      %v3687 = vpop.f32.mrb[0].mxu0
      %v3688 = vadd.f32 %v3438, %v3687
      %v3689 = vpop.f32.mrb[0].mxu0
      %v3690 = vadd.f32 %v3434, %v3689
      %v3691 = vpop.f32.mrb[0].mxu0
      %v3692 = vadd.f32 %v3438, %v3691
      %3693 = vmatprep.mubr.bf16.mxu0 %v3386
      %3694 = vmatmul.mubr.bf16.gmra.mrb[0].mxu0 %v3385
      %v3695 = vpop.f32.mrb[0].mxu0
      %v3696 = vadd.f32 %v3434, %v3695
      %v3697 = vpop.f32.mrb[0].mxu0
      %v3698 = vadd.f32 %v3438, %v3697
      %v3699 = vpop.f32.mrb[0].mxu0
      %v3700 = vadd.f32 %v3434, %v3699
      %v3701 = vpop.f32.mrb[0].mxu0
      %v3702 = vadd.f32 %v3438, %v3701
      %3703 = vmatprep.mubr.bf16.mxu0 %v3388
      %3704 = vmatmul.mubr.bf16.gmra.mrb[0].mxu0 %v3387
      %v3705 = vpop.f32.mrb[0].mxu0
      %v3706 = vadd.f32 %v3434, %v3705
      %v3707 = vpop.f32.mrb[0].mxu0
      %v3708 = vadd.f32 %v3438, %v3707
      %v3709 = vpop.f32.mrb[0].mxu0
      %v3710 = vadd.f32 %v3434, %v3709
      %v3711 = vpop.f32.mrb[0].mxu0
      %v3712 = vadd.f32 %v3438, %v3711
      %3713 = vmatprep.mubr.bf16.mxu0 %v3390
      %3714 = vmatmul.mubr.bf16.gmra.mrb[0].mxu0 %v3389
      %v3715 = vpop.f32.mrb[0].mxu0
      %v3716 = vadd.f32 %v3434, %v3715
      %v3717 = vpop.f32.mrb[0].mxu0
      %v3718 = vadd.f32 %v3438, %v3717
      %v3719 = vpop.f32.mrb[0].mxu0
      %v3720 = vadd.f32 %v3434, %v3719
      %v3721 = vpop.f32.mrb[0].mxu0
      %v3722 = vadd.f32 %v3438, %v3721
      %3723 = vmatprep.mubr.bf16.mxu0 %v3392
      %3724 = vmatmul.mubr.bf16.gmra.mrb[0].mxu0 %v3391
      %v3725 = vpop.f32.mrb[0].mxu0
      %v3726 = vadd.f32 %v3434, %v3725
      %v3727 = vpop.f32.mrb[0].mxu0
      %v3728 = vadd.f32 %v3438, %v3727
      %v3729 = vpop.f32.mrb[0].mxu0
      %v3730 = vadd.f32 %v3434, %v3729
      %v3731 = vpop.f32.mrb[0].mxu0
      %v3732 = vadd.f32 %v3438, %v3731
      %3733 = vmatprep.mubr.bf16.mxu0 %v3394
      %3734 = vmatmul.mubr.bf16.gmra.mrb[0].mxu0 %v3393
      %v3735 = vpop.f32.mrb[0].mxu0
      %v3736 = vadd.f32 %v3434, %v3735
      %v3737 = vpop.f32.mrb[0].mxu0
      %v3738 = vadd.f32 %v3438, %v3737
      %v3739 = vpop.f32.mrb[0].mxu0
      %v3740 = vadd.f32 %v3434, %v3739
      %v3741 = vpop.f32.mrb[0].mxu0
      %v3742 = vadd.f32 %v3438, %v3741
      %3743 = vmatprep.mubr.bf16.mxu0 %v3396
      %3744 = vmatmul.mubr.bf16.gmra.mrb[0].mxu0 %v3395
      %v3745 = vpop.f32.mrb[0].mxu0
      %v3746 = vadd.f32 %v3434, %v3745
      %v3747 = vpop.f32.mrb[0].mxu0
      %v3748 = vadd.f32 %v3438, %v3747
      %v3749 = vpop.f32.mrb[0].mxu0
      %v3750 = vadd.f32 %v3434, %v3749
      %v3751 = vpop.f32.mrb[0].mxu0
      %v3752 = vadd.f32 %v3438, %v3751
      %3753 = vdwg.mxu0
      %vm3754 = vcmp.gt.f32.partialorder %v3636, 0.0
      %vm3755 = vcmp.gt.f32.partialorder %v3638, 0.0
      %vm3756 = vcmp.gt.f32.partialorder %v3640, 0.0
      %vm3757 = vcmp.gt.f32.partialorder %v3642, 0.0
      %vm3758 = vcmp.gt.f32.partialorder %v3646, 0.0
      %vm3759 = vcmp.gt.f32.partialorder %v3648, 0.0
      %vm3760 = vcmp.gt.f32.partialorder %v3650, 0.0
      %vm3761 = vcmp.gt.f32.partialorder %v3652, 0.0
      %vm3762 = vcmp.gt.f32.partialorder %v3656, 0.0
      %vm3763 = vcmp.gt.f32.partialorder %v3658, 0.0
      %vm3764 = vcmp.gt.f32.partialorder %v3660, 0.0
      %vm3765 = vcmp.gt.f32.partialorder %v3662, 0.0
      %vm3766 = vcmp.gt.f32.partialorder %v3666, 0.0
      %vm3767 = vcmp.gt.f32.partialorder %v3668, 0.0
      %vm3768 = vcmp.gt.f32.partialorder %v3670, 0.0
      %vm3769 = vcmp.gt.f32.partialorder %v3672, 0.0
      %vm3770 = vcmp.gt.f32.partialorder %v3676, 0.0
      %vm3771 = vcmp.gt.f32.partialorder %v3678, 0.0
      %vm3772 = vcmp.gt.f32.partialorder %v3680, 0.0
      %vm3773 = vcmp.gt.f32.partialorder %v3682, 0.0
      %vm3774 = vcmp.gt.f32.partialorder %v3686, 0.0
      %vm3775 = vcmp.gt.f32.partialorder %v3688, 0.0
      %vm3776 = vcmp.gt.f32.partialorder %v3690, 0.0
      %vm3777 = vcmp.gt.f32.partialorder %v3692, 0.0
      %vm3778 = vcmp.gt.f32.partialorder %v3696, 0.0
      %vm3779 = vcmp.gt.f32.partialorder %v3698, 0.0
      %vm3780 = vcmp.gt.f32.partialorder %v3700, 0.0
      %vm3781 = vcmp.gt.f32.partialorder %v3702, 0.0
      %vm3782 = vcmp.gt.f32.partialorder %v3706, 0.0
      %vm3783 = vcmp.gt.f32.partialorder %v3708, 0.0
      %vm3784 = vcmp.gt.f32.partialorder %v3710, 0.0
      %vm3785 = vcmp.gt.f32.partialorder %v3712, 0.0
      %vm3786 = vcmp.gt.f32.partialorder %v3716, 0.0
      %vm3787 = vcmp.gt.f32.partialorder %v3718, 0.0
      %vm3788 = vcmp.gt.f32.partialorder %v3720, 0.0
      %vm3789 = vcmp.gt.f32.partialorder %v3722, 0.0
      %vm3790 = vcmp.gt.f32.partialorder %v3726, 0.0
      %vm3791 = vcmp.gt.f32.partialorder %v3728, 0.0
      %vm3792 = vcmp.gt.f32.partialorder %v3730, 0.0
      %vm3793 = vcmp.gt.f32.partialorder %v3732, 0.0
      %vm3794 = vcmp.gt.f32.partialorder %v3736, 0.0
      %vm3795 = vcmp.gt.f32.partialorder %v3738, 0.0
      %vm3796 = vcmp.gt.f32.partialorder %v3740, 0.0
      %vm3797 = vcmp.gt.f32.partialorder %v3742, 0.0
      %vm3798 = vcmp.gt.f32.partialorder %v3746, 0.0
      %vm3799 = vcmp.gt.f32.partialorder %v3748, 0.0
      %vm3800 = vcmp.gt.f32.partialorder %v3750, 0.0
      %vm3801 = vcmp.gt.f32.partialorder %v3752, 0.0
      %v3802 = vmul.f32 %v3636, 0.1
      %v3803 = vmul.f32 %v3638, 0.1
      %v3804 = vmul.f32 %v3640, 0.1
      %v3805 = vmul.f32 %v3642, 0.1
      %v3806 = vmul.f32 %v3646, 0.1
      %v3807 = vmul.f32 %v3648, 0.1
      %v3808 = vmul.f32 %v3650, 0.1
      %v3809 = vmul.f32 %v3652, 0.1
      %v3810 = vmul.f32 %v3656, 0.1
      %v3811 = vmul.f32 %v3658, 0.1
      %v3812 = vmul.f32 %v3660, 0.1
      %v3813 = vmul.f32 %v3662, 0.1
      %v3814 = vmul.f32 %v3666, 0.1
      %v3815 = vmul.f32 %v3668, 0.1
      %v3816 = vmul.f32 %v3670, 0.1
      %v3817 = vmul.f32 %v3672, 0.1
      %v3818 = vmul.f32 %v3676, 0.1
      %v3819 = vmul.f32 %v3678, 0.1
      %v3820 = vmul.f32 %v3680, 0.1
      %v3821 = vmul.f32 %v3682, 0.1
      %v3822 = vmul.f32 %v3686, 0.1
      %v3823 = vmul.f32 %v3688, 0.1
      %v3824 = vmul.f32 %v3690, 0.1
      %v3825 = vmul.f32 %v3692, 0.1
      %v3826 = vmul.f32 %v3696, 0.1
      %v3827 = vmul.f32 %v3698, 0.1
      %v3828 = vmul.f32 %v3700, 0.1
      %v3829 = vmul.f32 %v3702, 0.1
      %v3830 = vmul.f32 %v3706, 0.1
      %v3831 = vmul.f32 %v3708, 0.1
      %v3832 = vmul.f32 %v3710, 0.1
      %v3833 = vmul.f32 %v3712, 0.1
      %v3834 = vmul.f32 %v3716, 0.1
      %v3835 = vmul.f32 %v3718, 0.1
      %v3836 = vmul.f32 %v3720, 0.1
      %v3837 = vmul.f32 %v3722, 0.1
      %v3838 = vmul.f32 %v3726, 0.1
      %v3839 = vmul.f32 %v3728, 0.1
      %v3840 = vmul.f32 %v3730, 0.1
      %v3841 = vmul.f32 %v3732, 0.1
      %v3842 = vmul.f32 %v3736, 0.1
      %v3843 = vmul.f32 %v3738, 0.1
      %v3844 = vmul.f32 %v3740, 0.1
      %v3845 = vmul.f32 %v3742, 0.1
      %v3846 = vmul.f32 %v3746, 0.1
      %v3847 = vmul.f32 %v3748, 0.1
      %v3848 = vmul.f32 %v3750, 0.1
      %v3849 = vmul.f32 %v3752, 0.1
      %v3850 = vsel %vm3754, %v3636, %v3802
      %v3851 = vsel %vm3755, %v3638, %v3803
      %v3852 = vsel %vm3756, %v3640, %v3804
      %v3853 = vsel %vm3757, %v3642, %v3805
      %v3854 = vsel %vm3758, %v3646, %v3806
      %v3855 = vsel %vm3759, %v3648, %v3807
      %v3856 = vsel %vm3760, %v3650, %v3808
      %v3857 = vsel %vm3761, %v3652, %v3809
      %v3858 = vsel %vm3762, %v3656, %v3810
      %v3859 = vsel %vm3763, %v3658, %v3811
      %v3860 = vsel %vm3764, %v3660, %v3812
      %v3861 = vsel %vm3765, %v3662, %v3813
      %v3862 = vsel %vm3766, %v3666, %v3814
      %v3863 = vsel %vm3767, %v3668, %v3815
      %v3864 = vsel %vm3768, %v3670, %v3816
      %v3865 = vsel %vm3769, %v3672, %v3817
      %v3866 = vsel %vm3770, %v3676, %v3818
      %v3867 = vsel %vm3771, %v3678, %v3819
      %v3868 = vsel %vm3772, %v3680, %v3820
      %v3869 = vsel %vm3773, %v3682, %v3821
      %v3870 = vsel %vm3774, %v3686, %v3822
      %v3871 = vsel %vm3775, %v3688, %v3823
      %v3872 = vsel %vm3776, %v3690, %v3824
      %v3873 = vsel %vm3777, %v3692, %v3825
      %v3874 = vsel %vm3778, %v3696, %v3826
      %v3875 = vsel %vm3779, %v3698, %v3827
      %v3876 = vsel %vm3780, %v3700, %v3828
      %v3877 = vsel %vm3781, %v3702, %v3829
      %v3878 = vsel %vm3782, %v3706, %v3830
      %v3879 = vsel %vm3783, %v3708, %v3831
      %v3880 = vsel %vm3784, %v3710, %v3832
      %v3881 = vsel %vm3785, %v3712, %v3833
      %v3882 = vsel %vm3786, %v3716, %v3834
      %v3883 = vsel %vm3787, %v3718, %v3835
      %v3884 = vsel %vm3788, %v3720, %v3836
      %v3885 = vsel %vm3789, %v3722, %v3837
      %v3886 = vsel %vm3790, %v3726, %v3838
      %v3887 = vsel %vm3791, %v3728, %v3839
      %v3888 = vsel %vm3792, %v3730, %v3840
      %v3889 = vsel %vm3793, %v3732, %v3841
      %v3890 = vsel %vm3794, %v3736, %v3842
      %v3891 = vsel %vm3795, %v3738, %v3843
      %v3892 = vsel %vm3796, %v3740, %v3844
      %v3893 = vsel %vm3797, %v3742, %v3845
      %v3894 = vsel %vm3798, %v3746, %v3846
      %v3895 = vsel %vm3799, %v3748, %v3847
      %v3896 = vsel %vm3800, %v3750, %v3848
      %v3897 = vsel %vm3801, %v3752, %v3849
      %v3898 = vld [vmem:[%s39] sm:$0x3]
      %v3900 = vlaneseq
      %v3901 = vshrl.u32 %v3900, 7
      %v3902 = vsub.s32 0, %v3901
      %v3903 = vrot.slane %v3898, %v3902
      %v3904 = vlaneseq
      %v3905 = vshrl.u32 %v3904, 7
      %v3906 = vsub.s32 1, %v3905
      %v3907 = vrot.slane %v3898, %v3906
      %v3910 = vmul.f32 %v3850, %v3903
      %v3911 = vmul.f32 %v3851, %v3907
      %v3912 = vmul.f32 %v3852, %v3903
      %v3913 = vmul.f32 %v3853, %v3907
      %v3914 = vmul.f32 %v3854, %v3903
      %v3915 = vmul.f32 %v3855, %v3907
      %v3916 = vmul.f32 %v3856, %v3903
      %v3917 = vmul.f32 %v3857, %v3907
      %v3918 = vmul.f32 %v3858, %v3903
      %v3919 = vmul.f32 %v3859, %v3907
      %v3920 = vmul.f32 %v3860, %v3903
      %v3921 = vmul.f32 %v3861, %v3907
      %v3922 = vmul.f32 %v3862, %v3903
      %v3923 = vmul.f32 %v3863, %v3907
      %v3924 = vmul.f32 %v3864, %v3903
      %v3925 = vmul.f32 %v3865, %v3907
      %v3926 = vmul.f32 %v3866, %v3903
      %v3927 = vmul.f32 %v3867, %v3907
      %v3928 = vmul.f32 %v3868, %v3903
      %v3929 = vmul.f32 %v3869, %v3907
      %v3930 = vmul.f32 %v3870, %v3903
      %v3931 = vmul.f32 %v3871, %v3907
      %v3932 = vmul.f32 %v3872, %v3903
      %v3933 = vmul.f32 %v3873, %v3907
      %v3934 = vmul.f32 %v3874, %v3903
      %v3935 = vmul.f32 %v3875, %v3907
      %v3936 = vmul.f32 %v3876, %v3903
      %v3937 = vmul.f32 %v3877, %v3907
      %v3938 = vmul.f32 %v3878, %v3903
      %v3939 = vmul.f32 %v3879, %v3907
      %v3940 = vmul.f32 %v3880, %v3903
      %v3941 = vmul.f32 %v3881, %v3907
      %v3942 = vmul.f32 %v3882, %v3903
      %v3943 = vmul.f32 %v3883, %v3907
      %v3944 = vmul.f32 %v3884, %v3903
      %v3945 = vmul.f32 %v3885, %v3907
      %v3946 = vmul.f32 %v3886, %v3903
      %v3947 = vmul.f32 %v3887, %v3907
      %v3948 = vmul.f32 %v3888, %v3903
      %v3949 = vmul.f32 %v3889, %v3907
      %v3950 = vmul.f32 %v3890, %v3903
      %v3951 = vmul.f32 %v3891, %v3907
      %v3952 = vmul.f32 %v3892, %v3903
      %v3953 = vmul.f32 %v3893, %v3907
      %v3954 = vmul.f32 %v3894, %v3903
      %v3955 = vmul.f32 %v3895, %v3907
      %v3956 = vmul.f32 %v3896, %v3903
      %v3957 = vmul.f32 %v3897, %v3907
      %v3958 = vadd.f32 %v3910, %v3911
      %3959 = vadd.xlane.f32.xlu0 %v3958
      %v3960 = vpop.xlane.xlu0 %3959
      %v3961 = vadd.f32 %v3912, %v3913
      %3962 = vadd.xlane.f32.xlu0 %v3961
      %v3963 = vpop.xlane.xlu0 %3962
      %v3964 = vadd.f32 %v3914, %v3915
      %3965 = vadd.xlane.f32.xlu0 %v3964
      %v3966 = vpop.xlane.xlu0 %3965
      %v3967 = vadd.f32 %v3916, %v3917
      %3968 = vadd.xlane.f32.xlu0 %v3967
      %v3969 = vpop.xlane.xlu0 %3968
      %v3970 = vadd.f32 %v3918, %v3919
      %3971 = vadd.xlane.f32.xlu0 %v3970
      %v3972 = vpop.xlane.xlu0 %3971
      %v3973 = vadd.f32 %v3920, %v3921
      %3974 = vadd.xlane.f32.xlu0 %v3973
      %v3975 = vpop.xlane.xlu0 %3974
      %v3976 = vadd.f32 %v3922, %v3923
      %3977 = vadd.xlane.f32.xlu0 %v3976
      %v3978 = vpop.xlane.xlu0 %3977
      %v3979 = vadd.f32 %v3924, %v3925
      %3980 = vadd.xlane.f32.xlu0 %v3979
      %v3981 = vpop.xlane.xlu0 %3980
      %v3982 = vadd.f32 %v3926, %v3927
      %3983 = vadd.xlane.f32.xlu0 %v3982
      %v3984 = vpop.xlane.xlu0 %3983
      %v3985 = vadd.f32 %v3928, %v3929
      %3986 = vadd.xlane.f32.xlu0 %v3985
      %v3987 = vpop.xlane.xlu0 %3986
      %v3988 = vadd.f32 %v3930, %v3931
      %3989 = vadd.xlane.f32.xlu0 %v3988
      %v3990 = vpop.xlane.xlu0 %3989
      %v3991 = vadd.f32 %v3932, %v3933
      %3992 = vadd.xlane.f32.xlu0 %v3991
      %v3993 = vpop.xlane.xlu0 %3992
      %v3994 = vadd.f32 %v3934, %v3935
      %3995 = vadd.xlane.f32.xlu0 %v3994
      %v3996 = vpop.xlane.xlu0 %3995
      %v3997 = vadd.f32 %v3936, %v3937
      %3998 = vadd.xlane.f32.xlu0 %v3997
      %v3999 = vpop.xlane.xlu0 %3998
      %v4000 = vadd.f32 %v3938, %v3939
      %4001 = vadd.xlane.f32.xlu0 %v4000
      %v4002 = vpop.xlane.xlu0 %4001
      %v4003 = vadd.f32 %v3940, %v3941
      %4004 = vadd.xlane.f32.xlu0 %v4003
      %v4005 = vpop.xlane.xlu0 %4004
      %v4006 = vadd.f32 %v3942, %v3943
      %4007 = vadd.xlane.f32.xlu0 %v4006
      %v4008 = vpop.xlane.xlu0 %4007
      %v4009 = vadd.f32 %v3944, %v3945
      %4010 = vadd.xlane.f32.xlu0 %v4009
      %v4011 = vpop.xlane.xlu0 %4010
      %v4012 = vadd.f32 %v3946, %v3947
      %4013 = vadd.xlane.f32.xlu0 %v4012
      %v4014 = vpop.xlane.xlu0 %4013
      %v4015 = vadd.f32 %v3948, %v3949
      %4016 = vadd.xlane.f32.xlu0 %v4015
      %v4017 = vpop.xlane.xlu0 %4016
      %v4018 = vadd.f32 %v3950, %v3951
      %4019 = vadd.xlane.f32.xlu0 %v4018
      %v4020 = vpop.xlane.xlu0 %4019
      %v4021 = vadd.f32 %v3952, %v3953
      %4022 = vadd.xlane.f32.xlu0 %v4021
      %v4023 = vpop.xlane.xlu0 %4022
      %v4024 = vadd.f32 %v3954, %v3955
      %4025 = vadd.xlane.f32.xlu0 %v4024
      %v4026 = vpop.xlane.xlu0 %4025
      %v4027 = vadd.f32 %v3956, %v3957
      %4028 = vadd.xlane.f32.xlu0 %v4027
      %v4029 = vpop.xlane.xlu0 %4028
      %v4030 = vld [vmem:[#allocation3] sm:$0x1]
      %v4032 = vlaneseq
      %v4033 = vshrl.u32 %v4032, 7
      %v4034 = vsub.s32 0, %v4033
      %v4035 = vrot.slane %v4030, %v4034
      %v4037 = vadd.f32 %v3960, %v4035
      %v4038 = vadd.f32 %v3963, %v4035
      %v4039 = vadd.f32 %v3966, %v4035
      %v4040 = vadd.f32 %v3969, %v4035
      %v4041 = vadd.f32 %v3972, %v4035
      %v4042 = vadd.f32 %v3975, %v4035
      %v4043 = vadd.f32 %v3978, %v4035
      %v4044 = vadd.f32 %v3981, %v4035
      %v4045 = vadd.f32 %v3984, %v4035
      %v4046 = vadd.f32 %v3987, %v4035
      %v4047 = vadd.f32 %v3990, %v4035
      %v4048 = vadd.f32 %v3993, %v4035
      %v4049 = vadd.f32 %v3996, %v4035
      %v4050 = vadd.f32 %v3999, %v4035
      %v4051 = vadd.f32 %v4002, %v4035
      %v4052 = vadd.f32 %v4005, %v4035
      %v4053 = vadd.f32 %v4008, %v4035
      %v4054 = vadd.f32 %v4011, %v4035
      %v4055 = vadd.f32 %v4014, %v4035
      %v4056 = vadd.f32 %v4017, %v4035
      %v4057 = vadd.f32 %v4020, %v4035
      %v4058 = vadd.f32 %v4023, %v4035
      %v4059 = vadd.f32 %v4026, %v4035
      %v4060 = vadd.f32 %v4029, %v4035
      %v4061 = vmul.f32 %v4037, %v1403
      %v4062 = vmul.f32 %v4038, %v1404
      %v4063 = vmul.f32 %v4039, %v1405
      %v4064 = vmul.f32 %v4040, %v1406
      %v4065 = vmul.f32 %v4041, %v1407
      %v4066 = vmul.f32 %v4042, %v1408
      %v4067 = vmul.f32 %v4043, %v1409
      %v4068 = vmul.f32 %v4044, %v1410
      %v4069 = vmul.f32 %v4045, %v1411
      %v4070 = vmul.f32 %v4046, %v1412
      %v4071 = vmul.f32 %v4047, %v1413
      %v4072 = vmul.f32 %v4048, %v1414
      %v4073 = vmul.f32 %v4049, %v1415
      %v4074 = vmul.f32 %v4050, %v1416
      %v4075 = vmul.f32 %v4051, %v1417
      %v4076 = vmul.f32 %v4052, %v1418
      %v4077 = vmul.f32 %v4053, %v1419
      %v4078 = vmul.f32 %v4054, %v1420
      %v4079 = vmul.f32 %v4055, %v1421
      %v4080 = vmul.f32 %v4056, %v1422
      %v4081 = vmul.f32 %v4057, %v1423
      %v4082 = vmul.f32 %v4058, %v1424
      %v4083 = vmul.f32 %v4059, %v1425
      %v4084 = vmul.f32 %v4060, %v1426
      %vm4085 = vcmask 7168
      %v4086 = vsel %vm4085, %v4061, 0.0
      %v4087 = vsel %vm4085, %v4062, 0.0
      %v4088 = vadd.f32 %v4086, %v4087
      %v4089 = vsel %vm4085, %v4063, 0.0
      %v4090 = vadd.f32 %v4088, %v4089
      %v4091 = vsel %vm4085, %v4064, 0.0
      %v4092 = vadd.f32 %v4090, %v4091
      %v4093 = vsel %vm4085, %v4065, 0.0
      %v4094 = vadd.f32 %v4092, %v4093
      %v4095 = vsel %vm4085, %v4066, 0.0
      %v4096 = vadd.f32 %v4094, %v4095
      %v4097 = vsel %vm4085, %v4067, 0.0
      %v4098 = vadd.f32 %v4096, %v4097
      %v4099 = vsel %vm4085, %v4068, 0.0
      %v4100 = vadd.f32 %v4098, %v4099
      %v4101 = vsel %vm4085, %v4069, 0.0
      %v4102 = vadd.f32 %v4100, %v4101
      %v4103 = vsel %vm4085, %v4070, 0.0
      %v4104 = vadd.f32 %v4102, %v4103
      %v4105 = vsel %vm4085, %v4071, 0.0
      %v4106 = vadd.f32 %v4104, %v4105
      %v4107 = vsel %vm4085, %v4072, 0.0
      %v4108 = vadd.f32 %v4106, %v4107
      %v4109 = vsel %vm4085, %v4073, 0.0
      %v4110 = vadd.f32 %v4108, %v4109
      %v4111 = vsel %vm4085, %v4074, 0.0
      %v4112 = vadd.f32 %v4110, %v4111
      %v4113 = vsel %vm4085, %v4075, 0.0
      %v4114 = vadd.f32 %v4112, %v4113
      %v4115 = vsel %vm4085, %v4076, 0.0
      %v4116 = vadd.f32 %v4114, %v4115
      %v4117 = vsel %vm4085, %v4077, 0.0
      %v4118 = vadd.f32 %v4116, %v4117
      %v4119 = vsel %vm4085, %v4078, 0.0
      %v4120 = vadd.f32 %v4118, %v4119
      %v4121 = vsel %vm4085, %v4079, 0.0
      %v4122 = vadd.f32 %v4120, %v4121
      %v4123 = vsel %vm4085, %v4080, 0.0
      %v4124 = vadd.f32 %v4122, %v4123
      %v4125 = vsel %vm4085, %v4081, 0.0
      %v4126 = vadd.f32 %v4124, %v4125
      %v4127 = vsel %vm4085, %v4082, 0.0
      %v4128 = vadd.f32 %v4126, %v4127
      %v4129 = vsel %vm4085, %v4083, 0.0
      %v4130 = vadd.f32 %v4128, %v4129
      %v4131 = vsel %vm4085, %v4084, 0.0
      %v4132 = vadd.f32 %v4130, %v4131
      %v4133 = vrot.slane %v4132, 4
      %v4134 = vadd.f32 %v4132, %v4133
      %v4135 = vrot.slane %v4134, 2
      %v4136 = vadd.f32 %v4134, %v4135
      %v4137 = vrot.slane %v4136, 1
      %v4138 = vadd.f32 %v4136, %v4137
      %v4139 = vmul.f32 %v4138, %v1427
      %4141 = vset.pattern.permute.xlu0 0
      %4142 = vperm.xlu0 %4141, %v4139
      %v4143 = vpop.permute.xlu0 %4142
      %4145 = vst [vmem:[%s1395] sm:$0x1] %v4143
      %v4146 = vld [vmem:[%s1388] sm:$0x1]
      %v4147 = vld [vmem:[%s79] sm:$0xf]
      %v4149 = vlaneseq
      %v4150 = vshrl.u32 %v4149, 7
      %v4151 = vsub.s32 0, %v4150
      %v4152 = vrot.slane %v4146, %v4151
      %v4154 = vmul.f32 %v4152, %v4147
      %vm4155 = vcmask 1043456
      %v4156 = vsel %vm4155, %v4154, 0.0
      %4157 = vadd.xlane.f32.xlu0 %v4156
      %v4158 = vpop.xlane.xlu0 %4157
      %v4159 = vsel %vm4155, %v4158, -inf
      %v4160 = vrot.slane %v4159, 4
      %v4161 = vmax.f32 %v4159, %v4160
      %v4162 = vrot.slane %v4161, 2
      %v4163 = vmax.f32 %v4161, %v4162
      %v4164 = vrot.slane %v4163, 1
      %v4165 = vmax.f32 %v4163, %v4164
      %v4166 = vsub.f32 %v4158, %v4165
      %v4167 = vmul.f32 %v4166, 1.442695
      %v4168 = vpow.pop %v4167
      %v4169 = vsel %vm4155, %v4168, 0.0
      %v4170 = vrot.slane %v4169, 4
      %v4171 = vadd.f32 %v4169, %v4170
      %v4172 = vrot.slane %v4171, 2
      %v4173 = vadd.f32 %v4171, %v4172
      %v4174 = vrot.slane %v4173, 1
      %v4175 = vadd.f32 %v4173, %v4174
      %v4176 = vlog2.pop %v4175
      %v4177 = vmul.f32 %v4176, 0.6931472
      %v4178 = vadd.f32 %v4165, %v4177
      %v4179 = vld [vmem:[%s1392] sm:$0xf]
      %v4180 = vmul.f32 %v4158, %v4179
      %vm4181 = vcmask 3072
      %v4182 = vsel %vm4181, %v4180, 0.0
      %v4183 = vrot.slane %v4182, 4
      %v4184 = vadd.f32 %v4182, %v4183
      %v4185 = vrot.slane %v4184, 2
      %v4186 = vadd.f32 %v4184, %v4185
      %v4187 = vrot.slane %v4186, 1
      %v4188 = vadd.f32 %v4186, %v4187
      %v4189 = vsub.f32 %v4178, %v4188
      %4191 = vset.pattern.permute.xlu0 0
      %4192 = vperm.xlu0 %4191, %v4189
      %v4193 = vpop.permute.xlu0 %4192
      %4195 = vst [vmem:[%s1401] sm:$0x1] %v4193
      %v4196 = vld [vmem:[%s43] sm:$0xf]
      %v4197 = vld [vmem:[%s43 + $0x4] sm:$0xf]
      %v4198 = vld [vmem:[%s43 + $0x8] sm:$0xf]
      %v4199 = vld [vmem:[%s43 + $0xc] sm:$0xf]
      %v4200 = vld [vmem:[%s43 + $0x10] sm:$0xf]
      %v4201 = vld [vmem:[%s43 + $0x14] sm:$0xf]
      %v4202 = vld [vmem:[%s43 + $0x18] sm:$0xf]
      %v4203 = vld [vmem:[%s43 + $0x1c] sm:$0xf]
      %v4204 = vld [vmem:[%s43 + $0x20] sm:$0xf]
      %v4205 = vld [vmem:[%s43 + $0x24] sm:$0xf]
      %v4206 = vld [vmem:[%s45] sm:$0x1]
      %v4208 = vlaneseq
      %v4209 = vshrl.u32 %v4208, 7
      %v4210 = vsub.s32 0, %v4209
      %v4211 = vrot.slane %v4206, %v4210
      %v4223 = vunpack.c.l.b16 %v4196
      %v4224 = vunpack.c.l.b16 %v4197
      %v4225 = vunpack.c.l.b16 %v4198
      %v4226 = vunpack.c.l.b16 %v4199
      %v4227 = vunpack.c.l.b16 %v4200
      %v4228 = vunpack.c.l.b16 %v4201
      %v4229 = vunpack.c.l.b16 %v4202
      %v4230 = vunpack.c.l.b16 %v4203
      %v4231 = vunpack.c.l.b16 %v4204
      %v4232 = vunpack.c.l.b16 %v4205
      %v4233 = vpack.c.b16 %v4224, %v4223
      %v4234 = vpack.c.b16 %v4226, %v4225
      %v4235 = vpack.c.b16 %v4228, %v4227
      %v4236 = vpack.c.b16 %v4230, %v4229
      %v4237 = vpack.c.b16 %v4232, %v4231
      %4243 = vmatprep.subr.bf16.mxu0 0
      %4244 = vmatpush1.bf16.msra.mxu0 %v4233
      %4245 = vmatprep.subr.bf16.mxu0 0
      %4246 = vmatpush1.bf16.msra.mxu0 %v4234
      %4247 = vmatprep.subr.bf16.mxu0 0
      %4248 = vmatpush1.bf16.msra.mxu0 %v4235
      %4249 = vmatprep.subr.bf16.mxu0 0
      %4250 = vmatpush1.bf16.msra.mxu0 %v4236
      %4251 = vmatprep.subr.bf16.mxu0 0
      %4252 = vmatpush1.bf16.msra.mxu0 %v4237
      %4253 = vmatprep.subr.bf16.mxu0 0
      %4254 = vmatpush1.bf16.msra.mxu0 0
      %4255 = vmatprep.subr.bf16.mxu0 0
      %4256 = vmatpush1.bf16.msra.mxu0 0
      %4257 = vmatprep.subr.bf16.mxu0 0
      %4258 = vmatpush1.bf16.msra.mxu0 0
      %4259 = vmatprep.subr.bf16.mxu0 0
      %4260 = vmatpush1.bf16.msra.mxu0 0
      %4261 = vmatprep.subr.bf16.mxu0 0
      %4262 = vmatpush1.bf16.msra.mxu0 0
      %4263 = vmatprep.subr.bf16.mxu0 0
      %4264 = vmatpush1.bf16.msra.mxu0 0
      %4265 = vmatprep.subr.bf16.mxu0 0
      %4266 = vmatpush1.bf16.msra.mxu0 0
      %4267 = vmatprep.subr.bf16.mxu0 0
      %4268 = vmatpush1.bf16.msra.mxu0 0
      %4269 = vmatprep.subr.bf16.mxu0 0
      %4270 = vmatpush1.bf16.msra.mxu0 0
      %4271 = vmatprep.subr.bf16.mxu0 0
      %4272 = vmatpush1.bf16.msra.mxu0 0
      %4273 = vmatprep.subr.bf16.mxu0 0
      %4274 = vmatpush1.bf16.msra.mxu0 0
      %4275 = vmatprep.mubr.bf16.mxu0 0
      %4276 = vmatmul.mubr.bf16.gmra.mrb[0].mxu0 %v1659
      %v4277 = vpop.f32.mrb[0].mxu0
      %v4278 = vadd.f32 %v4211, %v4277
      %v4279 = vpop.f32.mrb[0].mxu0
      %v4280 = vpop.f32.mrb[0].mxu0
      %v4281 = vadd.f32 %v4211, %v4280
      %v4282 = vpop.f32.mrb[0].mxu0
      %4283 = vmatprep.mubr.bf16.mxu0 0
      %4284 = vmatmul.mubr.bf16.gmra.mrb[0].mxu0 %v1662
      %v4285 = vpop.f32.mrb[0].mxu0
      %v4286 = vadd.f32 %v4211, %v4285
      %v4287 = vpop.f32.mrb[0].mxu0
      %v4288 = vpop.f32.mrb[0].mxu0
      %v4289 = vadd.f32 %v4211, %v4288
      %v4290 = vpop.f32.mrb[0].mxu0
      %4291 = vmatprep.mubr.bf16.mxu0 0
      %4292 = vmatmul.mubr.bf16.gmra.mrb[0].mxu0 %v1665
      %v4293 = vpop.f32.mrb[0].mxu0
      %v4294 = vadd.f32 %v4211, %v4293
      %v4295 = vpop.f32.mrb[0].mxu0
      %v4296 = vpop.f32.mrb[0].mxu0
      %v4297 = vadd.f32 %v4211, %v4296
      %v4298 = vpop.f32.mrb[0].mxu0
      %4299 = vmatprep.mubr.bf16.mxu0 0
      %4300 = vmatmul.mubr.bf16.gmra.mrb[0].mxu0 %v1668
      %v4301 = vpop.f32.mrb[0].mxu0
      %v4302 = vadd.f32 %v4211, %v4301
      %v4303 = vpop.f32.mrb[0].mxu0
      %v4304 = vpop.f32.mrb[0].mxu0
      %v4305 = vadd.f32 %v4211, %v4304
      %v4306 = vpop.f32.mrb[0].mxu0
      %4307 = vmatprep.mubr.bf16.mxu0 0
      %4308 = vmatmul.mubr.bf16.gmra.mrb[0].mxu0 %v1671
      %v4309 = vpop.f32.mrb[0].mxu0
      %v4310 = vadd.f32 %v4211, %v4309
      %v4311 = vpop.f32.mrb[0].mxu0
      %v4312 = vpop.f32.mrb[0].mxu0
      %v4313 = vadd.f32 %v4211, %v4312
      %v4314 = vpop.f32.mrb[0].mxu0
      %4315 = vmatprep.mubr.bf16.mxu0 0
      %4316 = vmatmul.mubr.bf16.gmra.mrb[0].mxu0 %v1674
      %v4317 = vpop.f32.mrb[0].mxu0
      %v4318 = vadd.f32 %v4211, %v4317
      %v4319 = vpop.f32.mrb[0].mxu0
      %v4320 = vpop.f32.mrb[0].mxu0
      %v4321 = vadd.f32 %v4211, %v4320
      %v4322 = vpop.f32.mrb[0].mxu0
      %4323 = vmatprep.mubr.bf16.mxu0 0
      %4324 = vmatmul.mubr.bf16.gmra.mrb[0].mxu0 %v1677
      %v4325 = vpop.f32.mrb[0].mxu0
      %v4326 = vadd.f32 %v4211, %v4325
      %v4327 = vpop.f32.mrb[0].mxu0
      %v4328 = vpop.f32.mrb[0].mxu0
      %v4329 = vadd.f32 %v4211, %v4328
      %v4330 = vpop.f32.mrb[0].mxu0
      %4331 = vmatprep.mubr.bf16.mxu0 0
      %4332 = vmatmul.mubr.bf16.gmra.mrb[0].mxu0 %v1680
      %v4333 = vpop.f32.mrb[0].mxu0
      %v4334 = vadd.f32 %v4211, %v4333
      %v4335 = vpop.f32.mrb[0].mxu0
      %v4336 = vpop.f32.mrb[0].mxu0
      %v4337 = vadd.f32 %v4211, %v4336
      %v4338 = vpop.f32.mrb[0].mxu0
      %4339 = vmatprep.mubr.bf16.mxu0 0
      %4340 = vmatmul.mubr.bf16.gmra.mrb[0].mxu0 %v1683
      %v4341 = vpop.f32.mrb[0].mxu0
      %v4342 = vadd.f32 %v4211, %v4341
      %v4343 = vpop.f32.mrb[0].mxu0
      %v4344 = vpop.f32.mrb[0].mxu0
      %v4345 = vadd.f32 %v4211, %v4344
      %v4346 = vpop.f32.mrb[0].mxu0
      %4347 = vmatprep.mubr.bf16.mxu0 0
      %4348 = vmatmul.mubr.bf16.gmra.mrb[0].mxu0 %v1686
      %v4349 = vpop.f32.mrb[0].mxu0
      %v4350 = vadd.f32 %v4211, %v4349
      %v4351 = vpop.f32.mrb[0].mxu0
      %v4352 = vpop.f32.mrb[0].mxu0
      %v4353 = vadd.f32 %v4211, %v4352
      %v4354 = vpop.f32.mrb[0].mxu0
      %4355 = vmatprep.mubr.bf16.mxu0 0
      %4356 = vmatmul.mubr.bf16.gmra.mrb[0].mxu0 %v1689
      %v4357 = vpop.f32.mrb[0].mxu0
      %v4358 = vadd.f32 %v4211, %v4357
      %v4359 = vpop.f32.mrb[0].mxu0
      %v4360 = vpop.f32.mrb[0].mxu0
      %v4361 = vadd.f32 %v4211, %v4360
      %v4362 = vpop.f32.mrb[0].mxu0
      %4363 = vmatprep.mubr.bf16.mxu0 0
      %4364 = vmatmul.mubr.bf16.gmra.mrb[0].mxu0 %v1692
      %v4365 = vpop.f32.mrb[0].mxu0
      %v4366 = vadd.f32 %v4211, %v4365
      %v4367 = vpop.f32.mrb[0].mxu0
      %v4368 = vpop.f32.mrb[0].mxu0
      %v4369 = vadd.f32 %v4211, %v4368
      %v4370 = vpop.f32.mrb[0].mxu0
      %4371 = vdwg.mxu0
      %vm4372 = vcmp.gt.f32.partialorder %v4278, 0.0
      %vm4373 = vcmp.gt.f32.partialorder %v4281, 0.0
      %vm4374 = vcmp.gt.f32.partialorder %v4286, 0.0
      %vm4375 = vcmp.gt.f32.partialorder %v4289, 0.0
      %vm4376 = vcmp.gt.f32.partialorder %v4294, 0.0
      %vm4377 = vcmp.gt.f32.partialorder %v4297, 0.0
      %vm4378 = vcmp.gt.f32.partialorder %v4302, 0.0
      %vm4379 = vcmp.gt.f32.partialorder %v4305, 0.0
      %vm4380 = vcmp.gt.f32.partialorder %v4310, 0.0
      %vm4381 = vcmp.gt.f32.partialorder %v4313, 0.0
      %vm4382 = vcmp.gt.f32.partialorder %v4318, 0.0
      %vm4383 = vcmp.gt.f32.partialorder %v4321, 0.0
      %vm4384 = vcmp.gt.f32.partialorder %v4326, 0.0
      %vm4385 = vcmp.gt.f32.partialorder %v4329, 0.0
      %vm4386 = vcmp.gt.f32.partialorder %v4334, 0.0
      %vm4387 = vcmp.gt.f32.partialorder %v4337, 0.0
      %vm4388 = vcmp.gt.f32.partialorder %v4342, 0.0
      %vm4389 = vcmp.gt.f32.partialorder %v4345, 0.0
      %vm4390 = vcmp.gt.f32.partialorder %v4350, 0.0
      %vm4391 = vcmp.gt.f32.partialorder %v4353, 0.0
      %vm4392 = vcmp.gt.f32.partialorder %v4358, 0.0
      %vm4393 = vcmp.gt.f32.partialorder %v4361, 0.0
      %vm4394 = vcmp.gt.f32.partialorder %v4366, 0.0
      %vm4395 = vcmp.gt.f32.partialorder %v4369, 0.0
      %v4396 = vmul.f32 %v4278, 0.1
      %v4397 = vmul.f32 %v4281, 0.1
      %v4398 = vmul.f32 %v4286, 0.1
      %v4399 = vmul.f32 %v4289, 0.1
      %v4400 = vmul.f32 %v4294, 0.1
      %v4401 = vmul.f32 %v4297, 0.1
      %v4402 = vmul.f32 %v4302, 0.1
      %v4403 = vmul.f32 %v4305, 0.1
      %v4404 = vmul.f32 %v4310, 0.1
      %v4405 = vmul.f32 %v4313, 0.1
      %v4406 = vmul.f32 %v4318, 0.1
      %v4407 = vmul.f32 %v4321, 0.1
      %v4408 = vmul.f32 %v4326, 0.1
      %v4409 = vmul.f32 %v4329, 0.1
      %v4410 = vmul.f32 %v4334, 0.1
      %v4411 = vmul.f32 %v4337, 0.1
      %v4412 = vmul.f32 %v4342, 0.1
      %v4413 = vmul.f32 %v4345, 0.1
      %v4414 = vmul.f32 %v4350, 0.1
      %v4415 = vmul.f32 %v4353, 0.1
      %v4416 = vmul.f32 %v4358, 0.1
      %v4417 = vmul.f32 %v4361, 0.1
      %v4418 = vmul.f32 %v4366, 0.1
      %v4419 = vmul.f32 %v4369, 0.1
      %v4420 = vsel %vm4372, %v4278, %v4396
      %v4421 = vsel %vm4373, %v4281, %v4397
      %v4422 = vsel %vm4374, %v4286, %v4398
      %v4423 = vsel %vm4375, %v4289, %v4399
      %v4424 = vsel %vm4376, %v4294, %v4400
      %v4425 = vsel %vm4377, %v4297, %v4401
      %v4426 = vsel %vm4378, %v4302, %v4402
      %v4427 = vsel %vm4379, %v4305, %v4403
      %v4428 = vsel %vm4380, %v4310, %v4404
      %v4429 = vsel %vm4381, %v4313, %v4405
      %v4430 = vsel %vm4382, %v4318, %v4406
      %v4431 = vsel %vm4383, %v4321, %v4407
      %v4432 = vsel %vm4384, %v4326, %v4408
      %v4433 = vsel %vm4385, %v4329, %v4409
      %v4434 = vsel %vm4386, %v4334, %v4410
      %v4435 = vsel %vm4387, %v4337, %v4411
      %v4436 = vsel %vm4388, %v4342, %v4412
      %v4437 = vsel %vm4389, %v4345, %v4413
      %v4438 = vsel %vm4390, %v4350, %v4414
      %v4439 = vsel %vm4391, %v4353, %v4415
      %v4440 = vsel %vm4392, %v4358, %v4416
      %v4441 = vsel %vm4393, %v4361, %v4417
      %v4442 = vsel %vm4394, %v4366, %v4418
      %v4443 = vsel %vm4395, %v4369, %v4419
      %v4444 = vpack.c.bf16 %v4421, %v4420
      %v4445 = vpack.c.bf16 %v4423, %v4422
      %v4446 = vpack.c.bf16 %v4425, %v4424
      %v4447 = vpack.c.bf16 %v4427, %v4426
      %v4448 = vpack.c.bf16 %v4429, %v4428
      %v4449 = vpack.c.bf16 %v4431, %v4430
      %v4450 = vpack.c.bf16 %v4433, %v4432
      %v4451 = vpack.c.bf16 %v4435, %v4434
      %v4452 = vpack.c.bf16 %v4437, %v4436
      %v4453 = vpack.c.bf16 %v4439, %v4438
      %v4454 = vpack.c.bf16 %v4441, %v4440
      %v4455 = vpack.c.bf16 %v4443, %v4442
      %v4456 = vld [vmem:[%s47] sm:$0xf]
      %v4457 = vld [vmem:[%s47 + $0x4] sm:$0xf]
      %v4458 = vld [vmem:[%s47 + $0x8] sm:$0xf]
      %v4459 = vld [vmem:[%s47 + $0xc] sm:$0xf]
      %v4460 = vld [vmem:[%s47 + $0x10] sm:$0xf]
      %v4461 = vld [vmem:[%s47 + $0x14] sm:$0xf]
      %v4462 = vld [vmem:[%s47 + $0x18] sm:$0xf]
      %v4463 = vld [vmem:[%s47 + $0x1c] sm:$0xf]
      %v4464 = vld [vmem:[%s47 + $0x20] sm:$0xf]
      %v4465 = vld [vmem:[%s47 + $0x24] sm:$0xf]
      %v4466 = vld [vmem:[%s47 + $0x28] sm:$0xf]
      %v4467 = vld [vmem:[%s47 + $0x2c] sm:$0xf]
      %v4468 = vld [vmem:[%s47 + $0x30] sm:$0xf]
      %v4469 = vld [vmem:[%s47 + $0x34] sm:$0xf]
      %v4470 = vld [vmem:[%s47 + $0x38] sm:$0xf]
      %v4471 = vld [vmem:[%s47 + $0x3c] sm:$0xf]
      %v4472 = vld [vmem:[%s49] sm:$0x1]
      %v4474 = vlaneseq
      %v4475 = vshrl.u32 %v4474, 7
      %v4476 = vsub.s32 0, %v4475
      %v4477 = vrot.slane %v4472, %v4476
      %v4495 = vunpack.c.l.b16 %v4456
      %v4496 = vunpack.c.l.b16 %v4457
      %v4497 = vunpack.c.l.b16 %v4458
      %v4498 = vunpack.c.l.b16 %v4459
      %v4499 = vunpack.c.l.b16 %v4460
      %v4500 = vunpack.c.l.b16 %v4461
      %v4501 = vunpack.c.l.b16 %v4462
      %v4502 = vunpack.c.l.b16 %v4463
      %v4503 = vunpack.c.l.b16 %v4464
      %v4504 = vunpack.c.l.b16 %v4465
      %v4505 = vunpack.c.l.b16 %v4466
      %v4506 = vunpack.c.l.b16 %v4467
      %v4507 = vunpack.c.l.b16 %v4468
      %v4508 = vunpack.c.l.b16 %v4469
      %v4509 = vunpack.c.l.b16 %v4470
      %v4510 = vunpack.c.l.b16 %v4471
      %v4511 = vpack.c.b16 %v4496, %v4495
      %v4512 = vpack.c.b16 %v4498, %v4497
      %v4513 = vpack.c.b16 %v4500, %v4499
      %v4514 = vpack.c.b16 %v4502, %v4501
      %v4515 = vpack.c.b16 %v4504, %v4503
      %v4516 = vpack.c.b16 %v4506, %v4505
      %v4517 = vpack.c.b16 %v4508, %v4507
      %v4518 = vpack.c.b16 %v4510, %v4509
      %4527 = vmatprep.subr.bf16.mxu0 0
      %4528 = vmatpush1.bf16.msra.mxu0 %v4511
      %4529 = vmatprep.subr.bf16.mxu0 0
      %4530 = vmatpush1.bf16.msra.mxu0 %v4512
      %4531 = vmatprep.subr.bf16.mxu0 0
      %4532 = vmatpush1.bf16.msra.mxu0 %v4513
      %4533 = vmatprep.subr.bf16.mxu0 0
      %4534 = vmatpush1.bf16.msra.mxu0 %v4514
      %4535 = vmatprep.subr.bf16.mxu0 0
      %4536 = vmatpush1.bf16.msra.mxu0 %v4515
      %4537 = vmatprep.subr.bf16.mxu0 0
      %4538 = vmatpush1.bf16.msra.mxu0 %v4516
      %4539 = vmatprep.subr.bf16.mxu0 0
      %4540 = vmatpush1.bf16.msra.mxu0 %v4517
      %4541 = vmatprep.subr.bf16.mxu0 0
      %4542 = vmatpush1.bf16.msra.mxu0 %v4518
      %4543 = vmatprep.subr.bf16.mxu0 0
      %4544 = vmatpush1.bf16.msra.mxu0 0
      %4545 = vmatprep.subr.bf16.mxu0 0
      %4546 = vmatpush1.bf16.msra.mxu0 0
      %4547 = vmatprep.subr.bf16.mxu0 0
      %4548 = vmatpush1.bf16.msra.mxu0 0
      %4549 = vmatprep.subr.bf16.mxu0 0
      %4550 = vmatpush1.bf16.msra.mxu0 0
      %4551 = vmatprep.subr.bf16.mxu0 0
      %4552 = vmatpush1.bf16.msra.mxu0 0
      %4553 = vmatprep.subr.bf16.mxu0 0
      %4554 = vmatpush1.bf16.msra.mxu0 0
      %4555 = vmatprep.subr.bf16.mxu0 0
      %4556 = vmatpush1.bf16.msra.mxu0 0
      %4557 = vmatprep.subr.bf16.mxu0 0
      %4558 = vmatpush1.bf16.msra.mxu0 0
      %4559 = vmatprep.mubr.bf16.mxu0 0
      %4560 = vmatmul.mubr.bf16.gmra.mrb[0].mxu0 %v4444
      %v4561 = vpop.f32.mrb[0].mxu0
      %v4562 = vadd.f32 %v4477, %v4561
      %v4563 = vpop.f32.mrb[0].mxu0
      %v4564 = vpop.f32.mrb[0].mxu0
      %v4565 = vadd.f32 %v4477, %v4564
      %v4566 = vpop.f32.mrb[0].mxu0
      %4567 = vmatprep.mubr.bf16.mxu0 0
      %4568 = vmatmul.mubr.bf16.gmra.mrb[0].mxu0 %v4445
      %v4569 = vpop.f32.mrb[0].mxu0
      %v4570 = vadd.f32 %v4477, %v4569
      %v4571 = vpop.f32.mrb[0].mxu0
      %v4572 = vpop.f32.mrb[0].mxu0
      %v4573 = vadd.f32 %v4477, %v4572
      %v4574 = vpop.f32.mrb[0].mxu0
      %4575 = vmatprep.mubr.bf16.mxu0 0
      %4576 = vmatmul.mubr.bf16.gmra.mrb[0].mxu0 %v4446
      %v4577 = vpop.f32.mrb[0].mxu0
      %v4578 = vadd.f32 %v4477, %v4577
      %v4579 = vpop.f32.mrb[0].mxu0
      %v4580 = vpop.f32.mrb[0].mxu0
      %v4581 = vadd.f32 %v4477, %v4580
      %v4582 = vpop.f32.mrb[0].mxu0
      %4583 = vmatprep.mubr.bf16.mxu0 0
      %4584 = vmatmul.mubr.bf16.gmra.mrb[0].mxu0 %v4447
      %v4585 = vpop.f32.mrb[0].mxu0
      %v4586 = vadd.f32 %v4477, %v4585
      %v4587 = vpop.f32.mrb[0].mxu0
      %v4588 = vpop.f32.mrb[0].mxu0
      %v4589 = vadd.f32 %v4477, %v4588
      %v4590 = vpop.f32.mrb[0].mxu0
      %4591 = vmatprep.mubr.bf16.mxu0 0
      %4592 = vmatmul.mubr.bf16.gmra.mrb[0].mxu0 %v4448
      %v4593 = vpop.f32.mrb[0].mxu0
      %v4594 = vadd.f32 %v4477, %v4593
      %v4595 = vpop.f32.mrb[0].mxu0
      %v4596 = vpop.f32.mrb[0].mxu0
      %v4597 = vadd.f32 %v4477, %v4596
      %v4598 = vpop.f32.mrb[0].mxu0
      %4599 = vmatprep.mubr.bf16.mxu0 0
      %4600 = vmatmul.mubr.bf16.gmra.mrb[0].mxu0 %v4449
      %v4601 = vpop.f32.mrb[0].mxu0
      %v4602 = vadd.f32 %v4477, %v4601
      %v4603 = vpop.f32.mrb[0].mxu0
      %v4604 = vpop.f32.mrb[0].mxu0
      %v4605 = vadd.f32 %v4477, %v4604
      %v4606 = vpop.f32.mrb[0].mxu0
      %4607 = vmatprep.mubr.bf16.mxu0 0
      %4608 = vmatmul.mubr.bf16.gmra.mrb[0].mxu0 %v4450
      %v4609 = vpop.f32.mrb[0].mxu0
      %v4610 = vadd.f32 %v4477, %v4609
      %v4611 = vpop.f32.mrb[0].mxu0
      %v4612 = vpop.f32.mrb[0].mxu0
      %v4613 = vadd.f32 %v4477, %v4612
      %v4614 = vpop.f32.mrb[0].mxu0
      %4615 = vmatprep.mubr.bf16.mxu0 0
      %4616 = vmatmul.mubr.bf16.gmra.mrb[0].mxu0 %v4451
      %v4617 = vpop.f32.mrb[0].mxu0
      %v4618 = vadd.f32 %v4477, %v4617
      %v4619 = vpop.f32.mrb[0].mxu0
      %v4620 = vpop.f32.mrb[0].mxu0
      %v4621 = vadd.f32 %v4477, %v4620
      %v4622 = vpop.f32.mrb[0].mxu0
      %4623 = vmatprep.mubr.bf16.mxu0 0
      %4624 = vmatmul.mubr.bf16.gmra.mrb[0].mxu0 %v4452
      %v4625 = vpop.f32.mrb[0].mxu0
      %v4626 = vadd.f32 %v4477, %v4625
      %v4627 = vpop.f32.mrb[0].mxu0
      %v4628 = vpop.f32.mrb[0].mxu0
      %v4629 = vadd.f32 %v4477, %v4628
      %v4630 = vpop.f32.mrb[0].mxu0
      %4631 = vmatprep.mubr.bf16.mxu0 0
      %4632 = vmatmul.mubr.bf16.gmra.mrb[0].mxu0 %v4453
      %v4633 = vpop.f32.mrb[0].mxu0
      %v4634 = vadd.f32 %v4477, %v4633
      %v4635 = vpop.f32.mrb[0].mxu0
      %v4636 = vpop.f32.mrb[0].mxu0
      %v4637 = vadd.f32 %v4477, %v4636
      %v4638 = vpop.f32.mrb[0].mxu0
      %4639 = vmatprep.mubr.bf16.mxu0 0
      %4640 = vmatmul.mubr.bf16.gmra.mrb[0].mxu0 %v4454
      %v4641 = vpop.f32.mrb[0].mxu0
      %v4642 = vadd.f32 %v4477, %v4641
      %v4643 = vpop.f32.mrb[0].mxu0
      %v4644 = vpop.f32.mrb[0].mxu0
      %v4645 = vadd.f32 %v4477, %v4644
      %v4646 = vpop.f32.mrb[0].mxu0
      %4647 = vmatprep.mubr.bf16.mxu0 0
      %4648 = vmatmul.mubr.bf16.gmra.mrb[0].mxu0 %v4455
      %v4649 = vpop.f32.mrb[0].mxu0
      %v4650 = vadd.f32 %v4477, %v4649
      %v4651 = vpop.f32.mrb[0].mxu0
      %v4652 = vpop.f32.mrb[0].mxu0
      %v4653 = vadd.f32 %v4477, %v4652
      %v4654 = vpop.f32.mrb[0].mxu0
      %4655 = vdwg.mxu0
      %vm4656 = vcmp.gt.f32.partialorder %v4562, 0.0
      %vm4657 = vcmp.gt.f32.partialorder %v4565, 0.0
      %vm4658 = vcmp.gt.f32.partialorder %v4570, 0.0
      %vm4659 = vcmp.gt.f32.partialorder %v4573, 0.0
      %vm4660 = vcmp.gt.f32.partialorder %v4578, 0.0
      %vm4661 = vcmp.gt.f32.partialorder %v4581, 0.0
      %vm4662 = vcmp.gt.f32.partialorder %v4586, 0.0
      %vm4663 = vcmp.gt.f32.partialorder %v4589, 0.0
      %vm4664 = vcmp.gt.f32.partialorder %v4594, 0.0
      %vm4665 = vcmp.gt.f32.partialorder %v4597, 0.0
      %vm4666 = vcmp.gt.f32.partialorder %v4602, 0.0
      %vm4667 = vcmp.gt.f32.partialorder %v4605, 0.0
      %vm4668 = vcmp.gt.f32.partialorder %v4610, 0.0
      %vm4669 = vcmp.gt.f32.partialorder %v4613, 0.0
      %vm4670 = vcmp.gt.f32.partialorder %v4618, 0.0
      %vm4671 = vcmp.gt.f32.partialorder %v4621, 0.0
      %vm4672 = vcmp.gt.f32.partialorder %v4626, 0.0
      %vm4673 = vcmp.gt.f32.partialorder %v4629, 0.0
      %vm4674 = vcmp.gt.f32.partialorder %v4634, 0.0
      %vm4675 = vcmp.gt.f32.partialorder %v4637, 0.0
      %vm4676 = vcmp.gt.f32.partialorder %v4642, 0.0
      %vm4677 = vcmp.gt.f32.partialorder %v4645, 0.0
      %vm4678 = vcmp.gt.f32.partialorder %v4650, 0.0
      %vm4679 = vcmp.gt.f32.partialorder %v4653, 0.0
      %v4680 = vmul.f32 %v4562, 0.1
      %v4681 = vmul.f32 %v4565, 0.1
      %v4682 = vmul.f32 %v4570, 0.1
      %v4683 = vmul.f32 %v4573, 0.1
      %v4684 = vmul.f32 %v4578, 0.1
      %v4685 = vmul.f32 %v4581, 0.1
      %v4686 = vmul.f32 %v4586, 0.1
      %v4687 = vmul.f32 %v4589, 0.1
      %v4688 = vmul.f32 %v4594, 0.1
      %v4689 = vmul.f32 %v4597, 0.1
      %v4690 = vmul.f32 %v4602, 0.1
      %v4691 = vmul.f32 %v4605, 0.1
      %v4692 = vmul.f32 %v4610, 0.1
      %v4693 = vmul.f32 %v4613, 0.1
      %v4694 = vmul.f32 %v4618, 0.1
      %v4695 = vmul.f32 %v4621, 0.1
      %v4696 = vmul.f32 %v4626, 0.1
      %v4697 = vmul.f32 %v4629, 0.1
      %v4698 = vmul.f32 %v4634, 0.1
      %v4699 = vmul.f32 %v4637, 0.1
      %v4700 = vmul.f32 %v4642, 0.1
      %v4701 = vmul.f32 %v4645, 0.1
      %v4702 = vmul.f32 %v4650, 0.1
      %v4703 = vmul.f32 %v4653, 0.1
      %v4704 = vsel %vm4656, %v4562, %v4680
      %v4705 = vsel %vm4657, %v4565, %v4681
      %v4706 = vsel %vm4658, %v4570, %v4682
      %v4707 = vsel %vm4659, %v4573, %v4683
      %v4708 = vsel %vm4660, %v4578, %v4684
      %v4709 = vsel %vm4661, %v4581, %v4685
      %v4710 = vsel %vm4662, %v4586, %v4686
      %v4711 = vsel %vm4663, %v4589, %v4687
      %v4712 = vsel %vm4664, %v4594, %v4688
      %v4713 = vsel %vm4665, %v4597, %v4689
      %v4714 = vsel %vm4666, %v4602, %v4690
      %v4715 = vsel %vm4667, %v4605, %v4691
      %v4716 = vsel %vm4668, %v4610, %v4692
      %v4717 = vsel %vm4669, %v4613, %v4693
      %v4718 = vsel %vm4670, %v4618, %v4694
      %v4719 = vsel %vm4671, %v4621, %v4695
      %v4720 = vsel %vm4672, %v4626, %v4696
      %v4721 = vsel %vm4673, %v4629, %v4697
      %v4722 = vsel %vm4674, %v4634, %v4698
      %v4723 = vsel %vm4675, %v4637, %v4699
      %v4724 = vsel %vm4676, %v4642, %v4700
      %v4725 = vsel %vm4677, %v4645, %v4701
      %v4726 = vsel %vm4678, %v4650, %v4702
      %v4727 = vsel %vm4679, %v4653, %v4703
      %4728 = vst [vmem:[#allocation2 + $0x8] sm:$0xff] %v4704
      %4729 = vst [vmem:[#allocation2 + $0x10] sm:$0xff] %v4705
      %4730 = vst [vmem:[#allocation2 + $0x18] sm:$0xff] %v4706
      %4731 = vst [vmem:[#allocation2 + $0x20] sm:$0xff] %v4707
      %4732 = vst [vmem:[#allocation2 + $0x28] sm:$0xff] %v4708
      %4733 = vst [vmem:[#allocation2 + $0x30] sm:$0xff] %v4709
      %4734 = vst [vmem:[#allocation2 + $0x38] sm:$0xff] %v4710
      %4735 = vst [vmem:[#allocation2 + $0x40] sm:$0xff] %v4711
      %4736 = vst [vmem:[#allocation2 + $0x48] sm:$0xff] %v4712
      %4737 = vst [vmem:[#allocation2 + $0x50] sm:$0xff] %v4713
      %4738 = vst [vmem:[#allocation2 + $0x58] sm:$0xff] %v4714
      %4739 = vst [vmem:[#allocation2 + $0x60] sm:$0xff] %v4715
      %4740 = vst [vmem:[#allocation2 + $0x68] sm:$0xff] %v4716
      %4741 = vst [vmem:[#allocation2 + $0x70] sm:$0xff] %v4717
      %4742 = vst [vmem:[#allocation2 + $0x78] sm:$0xff] %v4718
      %4743 = vst [vmem:[#allocation2 + $0x80] sm:$0xff] %v4719
      %4744 = vst [vmem:[#allocation2 + $0x88] sm:$0xff] %v4720
      %4745 = vst [vmem:[#allocation2 + $0x90] sm:$0xff] %v4721
      %4746 = vst [vmem:[#allocation2 + $0x98] sm:$0xff] %v4722
      %4747 = vst [vmem:[#allocation2 + $0xa0] sm:$0xff] %v4723
      %4748 = vst [vmem:[#allocation2 + $0xa8] sm:$0xff] %v4724
      %4749 = vst [vmem:[#allocation2 + $0xb0] sm:$0xff] %v4725
      %4750 = vst [vmem:[#allocation2 + $0xb8] sm:$0xff] %v4726
      %4751 = vst [vmem:[#allocation2 + $0xc0] sm:$0xff] %v4727
      %v4752 = vld [vmem:[#allocation2 + $0x6] sm:$0xff]
      %v4753 = vld [vmem:[#allocation2 + $0xe] sm:$0xff]
      %v4754 = vld [vmem:[#allocation2 + $0x16] sm:$0xff]
      %v4755 = vld [vmem:[#allocation2 + $0x1e] sm:$0xff]
      %v4756 = vld [vmem:[#allocation2 + $0x26] sm:$0xff]
      %v4757 = vld [vmem:[#allocation2 + $0x2e] sm:$0xff]
      %v4758 = vld [vmem:[#allocation2 + $0x36] sm:$0xff]
      %v4759 = vld [vmem:[#allocation2 + $0x3e] sm:$0xff]
      %v4760 = vld [vmem:[#allocation2 + $0x46] sm:$0xff]
      %v4761 = vld [vmem:[#allocation2 + $0x4e] sm:$0xff]
      %v4762 = vld [vmem:[#allocation2 + $0x56] sm:$0xff]
      %v4763 = vld [vmem:[#allocation2 + $0x5e] sm:$0xff]
      %v4764 = vld [vmem:[#allocation2 + $0x66] sm:$0xff]
      %v4765 = vld [vmem:[#allocation2 + $0x6e] sm:$0xff]
      %v4766 = vld [vmem:[#allocation2 + $0x76] sm:$0xff]
      %v4767 = vld [vmem:[#allocation2 + $0x7e] sm:$0xff]
      %v4768 = vld [vmem:[#allocation2 + $0x86] sm:$0xff]
      %v4769 = vld [vmem:[#allocation2 + $0x8e] sm:$0xff]
      %v4770 = vld [vmem:[#allocation2 + $0x96] sm:$0xff]
      %v4771 = vld [vmem:[#allocation2 + $0x9e] sm:$0xff]
      %v4772 = vld [vmem:[#allocation2 + $0xa6] sm:$0xff]
      %v4773 = vld [vmem:[#allocation2 + $0xae] sm:$0xff]
      %v4774 = vld [vmem:[#allocation2 + $0xb6] sm:$0xff]
      %v4775 = vld [vmem:[#allocation2 + $0xbe] sm:$0xff]
      %v4776 = vld [vmem:[#allocation2 + $0x7] sm:$0xff]
      %v4777 = vld [vmem:[#allocation2 + $0xf] sm:$0xff]
      %v4778 = vld [vmem:[#allocation2 + $0x17] sm:$0xff]
      %v4779 = vld [vmem:[#allocation2 + $0x1f] sm:$0xff]
      %v4780 = vld [vmem:[#allocation2 + $0x27] sm:$0xff]
      %v4781 = vld [vmem:[#allocation2 + $0x2f] sm:$0xff]
      %v4782 = vld [vmem:[#allocation2 + $0x37] sm:$0xff]
      %v4783 = vld [vmem:[#allocation2 + $0x3f] sm:$0xff]
      %v4784 = vld [vmem:[#allocation2 + $0x47] sm:$0xff]
      %v4785 = vld [vmem:[#allocation2 + $0x4f] sm:$0xff]
      %v4786 = vld [vmem:[#allocation2 + $0x57] sm:$0xff]
      %v4787 = vld [vmem:[#allocation2 + $0x5f] sm:$0xff]
      %v4788 = vld [vmem:[#allocation2 + $0x67] sm:$0xff]
      %v4789 = vld [vmem:[#allocation2 + $0x6f] sm:$0xff]
      %v4790 = vld [vmem:[#allocation2 + $0x77] sm:$0xff]
      %v4791 = vld [vmem:[#allocation2 + $0x7f] sm:$0xff]
      %v4792 = vld [vmem:[#allocation2 + $0x87] sm:$0xff]
      %v4793 = vld [vmem:[#allocation2 + $0x8f] sm:$0xff]
      %v4794 = vld [vmem:[#allocation2 + $0x97] sm:$0xff]
      %v4795 = vld [vmem:[#allocation2 + $0x9f] sm:$0xff]
      %v4796 = vld [vmem:[#allocation2 + $0xa7] sm:$0xff]
      %v4797 = vld [vmem:[#allocation2 + $0xaf] sm:$0xff]
      %v4798 = vld [vmem:[#allocation2 + $0xb7] sm:$0xff]
      %v4799 = vld [vmem:[#allocation2 + $0xbf] sm:$0xff]
      %v4800 = vld [vmem:[#allocation2 + $0x9] sm:$0xff]
      %v4801 = vld [vmem:[#allocation2 + $0x11] sm:$0xff]
      %v4802 = vld [vmem:[#allocation2 + $0x19] sm:$0xff]
      %v4803 = vld [vmem:[#allocation2 + $0x21] sm:$0xff]
      %v4804 = vld [vmem:[#allocation2 + $0x29] sm:$0xff]
      %v4805 = vld [vmem:[#allocation2 + $0x31] sm:$0xff]
      %v4806 = vld [vmem:[#allocation2 + $0x39] sm:$0xff]
      %v4807 = vld [vmem:[#allocation2 + $0x41] sm:$0xff]
      %v4808 = vld [vmem:[#allocation2 + $0x49] sm:$0xff]
      %v4809 = vld [vmem:[#allocation2 + $0x51] sm:$0xff]
      %v4810 = vld [vmem:[#allocation2 + $0x59] sm:$0xff]
      %v4811 = vld [vmem:[#allocation2 + $0x61] sm:$0xff]
      %v4812 = vld [vmem:[#allocation2 + $0x69] sm:$0xff]
      %v4813 = vld [vmem:[#allocation2 + $0x71] sm:$0xff]
      %v4814 = vld [vmem:[#allocation2 + $0x79] sm:$0xff]
      %v4815 = vld [vmem:[#allocation2 + $0x81] sm:$0xff]
      %v4816 = vld [vmem:[#allocation2 + $0x89] sm:$0xff]
      %v4817 = vld [vmem:[#allocation2 + $0x91] sm:$0xff]
      %v4818 = vld [vmem:[#allocation2 + $0x99] sm:$0xff]
      %v4819 = vld [vmem:[#allocation2 + $0xa1] sm:$0xff]
      %v4820 = vld [vmem:[#allocation2 + $0xa9] sm:$0xff]
      %v4821 = vld [vmem:[#allocation2 + $0xb1] sm:$0xff]
      %v4822 = vld [vmem:[#allocation2 + $0xb9] sm:$0xff]
      %v4823 = vld [vmem:[#allocation2 + $0xc1] sm:$0xff]
      %v4824 = vld [vmem:[#allocation2 + $0xa] sm:$0xff]
      %v4825 = vld [vmem:[#allocation2 + $0x12] sm:$0xff]
      %v4826 = vld [vmem:[#allocation2 + $0x1a] sm:$0xff]
      %v4827 = vld [vmem:[#allocation2 + $0x22] sm:$0xff]
      %v4828 = vld [vmem:[#allocation2 + $0x2a] sm:$0xff]
      %v4829 = vld [vmem:[#allocation2 + $0x32] sm:$0xff]
      %v4830 = vld [vmem:[#allocation2 + $0x3a] sm:$0xff]
      %v4831 = vld [vmem:[#allocation2 + $0x42] sm:$0xff]
      %v4832 = vld [vmem:[#allocation2 + $0x4a] sm:$0xff]
      %v4833 = vld [vmem:[#allocation2 + $0x52] sm:$0xff]
      %v4834 = vld [vmem:[#allocation2 + $0x5a] sm:$0xff]
      %v4835 = vld [vmem:[#allocation2 + $0x62] sm:$0xff]
      %v4836 = vld [vmem:[#allocation2 + $0x6a] sm:$0xff]
      %v4837 = vld [vmem:[#allocation2 + $0x72] sm:$0xff]
      %v4838 = vld [vmem:[#allocation2 + $0x7a] sm:$0xff]
      %v4839 = vld [vmem:[#allocation2 + $0x82] sm:$0xff]
      %v4840 = vld [vmem:[#allocation2 + $0x8a] sm:$0xff]
      %v4841 = vld [vmem:[#allocation2 + $0x92] sm:$0xff]
      %v4842 = vld [vmem:[#allocation2 + $0x9a] sm:$0xff]
      %v4843 = vld [vmem:[#allocation2 + $0xa2] sm:$0xff]
      %v4844 = vld [vmem:[#allocation2 + $0xaa] sm:$0xff]
      %v4845 = vld [vmem:[#allocation2 + $0xb2] sm:$0xff]
      %v4846 = vld [vmem:[#allocation2 + $0xba] sm:$0xff]
      %v4847 = vld [vmem:[#allocation2 + $0xc2] sm:$0xff]
      %v4848 = vpack.c.bf16 %v4753, %v4752
      %v4849 = vpack.c.bf16 %v4777, %v4776
      %v4850 = vpack.c.bf16 %v4705, %v4704
      %v4851 = vpack.c.bf16 %v4801, %v4800
      %v4852 = vpack.c.bf16 %v4825, %v4824
      %v4853 = vpack.c.bf16 %v4755, %v4754
      %v4854 = vpack.c.bf16 %v4779, %v4778
      %v4855 = vpack.c.bf16 %v4707, %v4706
      %v4856 = vpack.c.bf16 %v4803, %v4802
      %v4857 = vpack.c.bf16 %v4827, %v4826
      %v4858 = vpack.c.bf16 %v4757, %v4756
      %v4859 = vpack.c.bf16 %v4781, %v4780
      %v4860 = vpack.c.bf16 %v4709, %v4708
      %v4861 = vpack.c.bf16 %v4805, %v4804
      %v4862 = vpack.c.bf16 %v4829, %v4828
      %v4863 = vpack.c.bf16 %v4759, %v4758
      %v4864 = vpack.c.bf16 %v4783, %v4782
      %v4865 = vpack.c.bf16 %v4711, %v4710
      %v4866 = vpack.c.bf16 %v4807, %v4806
      %v4867 = vpack.c.bf16 %v4831, %v4830
      %v4868 = vpack.c.bf16 %v4761, %v4760
      %v4869 = vpack.c.bf16 %v4785, %v4784
      %v4870 = vpack.c.bf16 %v4713, %v4712
      %v4871 = vpack.c.bf16 %v4809, %v4808
      %v4872 = vpack.c.bf16 %v4833, %v4832
      %v4873 = vpack.c.bf16 %v4763, %v4762
      %v4874 = vpack.c.bf16 %v4787, %v4786
      %v4875 = vpack.c.bf16 %v4715, %v4714
      %v4876 = vpack.c.bf16 %v4811, %v4810
      %v4877 = vpack.c.bf16 %v4835, %v4834
      %v4878 = vpack.c.bf16 %v4765, %v4764
      %v4879 = vpack.c.bf16 %v4789, %v4788
      %v4880 = vpack.c.bf16 %v4717, %v4716
      %v4881 = vpack.c.bf16 %v4813, %v4812
      %v4882 = vpack.c.bf16 %v4837, %v4836
      %v4883 = vpack.c.bf16 %v4767, %v4766
      %v4884 = vpack.c.bf16 %v4791, %v4790
      %v4885 = vpack.c.bf16 %v4719, %v4718
      %v4886 = vpack.c.bf16 %v4815, %v4814
      %v4887 = vpack.c.bf16 %v4839, %v4838
      %v4888 = vpack.c.bf16 %v4769, %v4768
      %v4889 = vpack.c.bf16 %v4793, %v4792
      %v4890 = vpack.c.bf16 %v4721, %v4720
      %v4891 = vpack.c.bf16 %v4817, %v4816
      %v4892 = vpack.c.bf16 %v4841, %v4840
      %v4893 = vpack.c.bf16 %v4771, %v4770
      %v4894 = vpack.c.bf16 %v4795, %v4794
      %v4895 = vpack.c.bf16 %v4723, %v4722
      %v4896 = vpack.c.bf16 %v4819, %v4818
      %v4897 = vpack.c.bf16 %v4843, %v4842
      %v4898 = vpack.c.bf16 %v4773, %v4772
      %v4899 = vpack.c.bf16 %v4797, %v4796
      %v4900 = vpack.c.bf16 %v4725, %v4724
      %v4901 = vpack.c.bf16 %v4821, %v4820
      %v4902 = vpack.c.bf16 %v4845, %v4844
      %v4903 = vpack.c.bf16 %v4775, %v4774
      %v4904 = vpack.c.bf16 %v4799, %v4798
      %v4905 = vpack.c.bf16 %v4727, %v4726
      %v4906 = vpack.c.bf16 %v4823, %v4822
      %v4907 = vpack.c.bf16 %v4847, %v4846
      %v4908 = vld [vmem:[%s51] sm:$0xf]
      %v4909 = vld [vmem:[%s51 + $0x4] sm:$0xf]
      %v4910 = vld [vmem:[%s51 + $0x8] sm:$0xf]
      %v4911 = vld [vmem:[%s51 + $0xc] sm:$0xf]
      %v4912 = vld [vmem:[%s51 + $0x10] sm:$0xf]
      %v4913 = vld [vmem:[%s51 + $0x14] sm:$0xf]
      %v4914 = vld [vmem:[%s51 + $0x18] sm:$0xf]
      %v4915 = vld [vmem:[%s51 + $0x1c] sm:$0xf]
      %v4916 = vld [vmem:[%s51 + $0x20] sm:$0xf]
      %v4917 = vld [vmem:[%s51 + $0x24] sm:$0xf]
      %v4918 = vld [vmem:[%s51 + $0x28] sm:$0xf]
      %v4919 = vld [vmem:[%s51 + $0x2c] sm:$0xf]
      %v4920 = vld [vmem:[%s51 + $0x30] sm:$0xf]
      %v4921 = vld [vmem:[%s51 + $0x34] sm:$0xf]
      %v4922 = vld [vmem:[%s51 + $0x38] sm:$0xf]
      %v4923 = vld [vmem:[%s51 + $0x3c] sm:$0xf]
      %v4924 = vld [vmem:[%s51 + $0x40] sm:$0xf]
      %v4925 = vld [vmem:[%s51 + $0x44] sm:$0xf]
      %v4926 = vld [vmem:[%s51 + $0x48] sm:$0xf]
      %v4927 = vld [vmem:[%s51 + $0x4c] sm:$0xf]
      %v4928 = vld [vmem:[%s51 + $0x50] sm:$0xf]
      %v4929 = vld [vmem:[%s51 + $0x54] sm:$0xf]
      %v4930 = vld [vmem:[%s51 + $0x58] sm:$0xf]
      %v4931 = vld [vmem:[%s51 + $0x5c] sm:$0xf]
      %v4932 = vld [vmem:[%s51 + $0x60] sm:$0xf]
      %v4933 = vld [vmem:[%s51 + $0x64] sm:$0xf]
      %v4934 = vld [vmem:[%s51 + $0x68] sm:$0xf]
      %v4935 = vld [vmem:[%s51 + $0x6c] sm:$0xf]
      %v4936 = vld [vmem:[%s51 + $0x70] sm:$0xf]
      %v4937 = vld [vmem:[%s51 + $0x74] sm:$0xf]
      %v4938 = vld [vmem:[%s51 + $0x78] sm:$0xf]
      %v4939 = vld [vmem:[%s51 + $0x7c] sm:$0xf]
      %v4940 = vld [vmem:[%s51 + $0x80] sm:$0xf]
      %v4941 = vld [vmem:[%s51 + $0x84] sm:$0xf]
      %v4942 = vld [vmem:[%s51 + $0x88] sm:$0xf]
      %v4943 = vld [vmem:[%s51 + $0x8c] sm:$0xf]
      %v4944 = vld [vmem:[%s51 + $0x90] sm:$0xf]
      %v4945 = vld [vmem:[%s51 + $0x94] sm:$0xf]
      %v4946 = vld [vmem:[%s51 + $0x98] sm:$0xf]
      %v4947 = vld [vmem:[%s51 + $0x9c] sm:$0xf]
      %v4948 = vld [vmem:[%s51 + $0xa0] sm:$0xf]
      %v4949 = vld [vmem:[%s51 + $0xa4] sm:$0xf]
      %v4950 = vld [vmem:[%s51 + $0xa8] sm:$0xf]
      %v4951 = vld [vmem:[%s51 + $0xac] sm:$0xf]
      %v4952 = vld [vmem:[%s51 + $0xb0] sm:$0xf]
      %v4953 = vld [vmem:[%s51 + $0xb4] sm:$0xf]
      %v4954 = vld [vmem:[%s51 + $0xb8] sm:$0xf]
      %v4955 = vld [vmem:[%s51 + $0xbc] sm:$0xf]
      %v4956 = vld [vmem:[%s51 + $0xc0] sm:$0xf]
      %v4957 = vld [vmem:[%s51 + $0xc4] sm:$0xf]
      %v4958 = vld [vmem:[%s51 + $0xc8] sm:$0xf]
      %v4959 = vld [vmem:[%s51 + $0xcc] sm:$0xf]
      %v4960 = vld [vmem:[%s51 + $0xd0] sm:$0xf]
      %v4961 = vld [vmem:[%s51 + $0xd4] sm:$0xf]
      %v4962 = vld [vmem:[%s51 + $0xd8] sm:$0xf]
      %v4963 = vld [vmem:[%s51 + $0xdc] sm:$0xf]
      %v4964 = vld [vmem:[%s51 + $0xe0] sm:$0xf]
      %v4965 = vld [vmem:[%s51 + $0xe4] sm:$0xf]
      %v4966 = vld [vmem:[%s51 + $0xe8] sm:$0xf]
      %v4967 = vld [vmem:[%s51 + $0xec] sm:$0xf]
      %v4968 = vld [vmem:[%s51 + $0xf0] sm:$0xf]
      %v4969 = vld [vmem:[%s51 + $0xf4] sm:$0xf]
      %v4970 = vld [vmem:[%s51 + $0xf8] sm:$0xf]
      %v4971 = vld [vmem:[%s51 + $0xfc] sm:$0xf]
      %v4972 = vld [vmem:[%s51 + $0x100] sm:$0xf]
      %v4973 = vld [vmem:[%s51 + $0x104] sm:$0xf]
      %v4974 = vld [vmem:[%s51 + $0x108] sm:$0xf]
      %v4975 = vld [vmem:[%s51 + $0x10c] sm:$0xf]
      %v4976 = vld [vmem:[%s51 + $0x110] sm:$0xf]
      %v4977 = vld [vmem:[%s51 + $0x114] sm:$0xf]
      %v4978 = vld [vmem:[%s51 + $0x118] sm:$0xf]
      %v4979 = vld [vmem:[%s51 + $0x11c] sm:$0xf]
      %v4980 = vld [vmem:[%s51 + $0x120] sm:$0xf]
      %v4981 = vld [vmem:[%s51 + $0x124] sm:$0xf]
      %v4982 = vld [vmem:[%s51 + $0x128] sm:$0xf]
      %v4983 = vld [vmem:[%s51 + $0x12c] sm:$0xf]
      %v4984 = vld [vmem:[%s51 + $0x130] sm:$0xf]
      %v4985 = vld [vmem:[%s51 + $0x134] sm:$0xf]
      %v4986 = vld [vmem:[%s51 + $0x138] sm:$0xf]
      %v4987 = vld [vmem:[%s51 + $0x13c] sm:$0xf]
      %v4988 = vld [vmem:[%s53] sm:$0x1]
      %v4990 = vlaneseq
      %v4991 = vshrl.u32 %v4990, 7
      %v4992 = vsub.s32 0, %v4991
      %v4993 = vrot.slane %v4988, %v4992
      %v5075 = vunpack.c.l.b16 %v4908
      %v5076 = vunpack.c.l.b16 %v4909
      %v5077 = vunpack.c.l.b16 %v4910
      %v5078 = vunpack.c.l.b16 %v4911
      %v5079 = vunpack.c.l.b16 %v4912
      %v5080 = vunpack.c.l.b16 %v4913
      %v5081 = vunpack.c.l.b16 %v4914
      %v5082 = vunpack.c.l.b16 %v4915
      %v5083 = vunpack.c.l.b16 %v4916
      %v5084 = vunpack.c.l.b16 %v4917
      %v5085 = vunpack.c.l.b16 %v4918
      %v5086 = vunpack.c.l.b16 %v4919
      %v5087 = vunpack.c.l.b16 %v4920
      %v5088 = vunpack.c.l.b16 %v4921
      %v5089 = vunpack.c.l.b16 %v4922
      %v5090 = vunpack.c.l.b16 %v4923
      %v5091 = vunpack.c.l.b16 %v4924
      %v5092 = vunpack.c.l.b16 %v4925
      %v5093 = vunpack.c.l.b16 %v4926
      %v5094 = vunpack.c.l.b16 %v4927
      %v5095 = vunpack.c.l.b16 %v4928
      %v5096 = vunpack.c.l.b16 %v4929
      %v5097 = vunpack.c.l.b16 %v4930
      %v5098 = vunpack.c.l.b16 %v4931
      %v5099 = vunpack.c.l.b16 %v4932
      %v5100 = vunpack.c.l.b16 %v4933
      %v5101 = vunpack.c.l.b16 %v4934
      %v5102 = vunpack.c.l.b16 %v4935
      %v5103 = vunpack.c.l.b16 %v4936
      %v5104 = vunpack.c.l.b16 %v4937
      %v5105 = vunpack.c.l.b16 %v4938
      %v5106 = vunpack.c.l.b16 %v4939
      %v5107 = vunpack.c.l.b16 %v4940
      %v5108 = vunpack.c.l.b16 %v4941
      %v5109 = vunpack.c.l.b16 %v4942
      %v5110 = vunpack.c.l.b16 %v4943
      %v5111 = vunpack.c.l.b16 %v4944
      %v5112 = vunpack.c.l.b16 %v4945
      %v5113 = vunpack.c.l.b16 %v4946
      %v5114 = vunpack.c.l.b16 %v4947
      %v5115 = vunpack.c.l.b16 %v4948
      %v5116 = vunpack.c.l.b16 %v4949
      %v5117 = vunpack.c.l.b16 %v4950
      %v5118 = vunpack.c.l.b16 %v4951
      %v5119 = vunpack.c.l.b16 %v4952
      %v5120 = vunpack.c.l.b16 %v4953
      %v5121 = vunpack.c.l.b16 %v4954
      %v5122 = vunpack.c.l.b16 %v4955
      %v5123 = vunpack.c.l.b16 %v4956
      %v5124 = vunpack.c.l.b16 %v4957
      %v5125 = vunpack.c.l.b16 %v4958
      %v5126 = vunpack.c.l.b16 %v4959
      %v5127 = vunpack.c.l.b16 %v4960
      %v5128 = vunpack.c.l.b16 %v4961
      %v5129 = vunpack.c.l.b16 %v4962
      %v5130 = vunpack.c.l.b16 %v4963
      %v5131 = vunpack.c.l.b16 %v4964
      %v5132 = vunpack.c.l.b16 %v4965
      %v5133 = vunpack.c.l.b16 %v4966
      %v5134 = vunpack.c.l.b16 %v4967
      %v5135 = vunpack.c.l.b16 %v4968
      %v5136 = vunpack.c.l.b16 %v4969
      %v5137 = vunpack.c.l.b16 %v4970
      %v5138 = vunpack.c.l.b16 %v4971
      %v5139 = vunpack.c.l.b16 %v4972
      %v5140 = vunpack.c.l.b16 %v4973
      %v5141 = vunpack.c.l.b16 %v4974
      %v5142 = vunpack.c.l.b16 %v4975
      %v5143 = vunpack.c.l.b16 %v4976
      %v5144 = vunpack.c.l.b16 %v4977
      %v5145 = vunpack.c.l.b16 %v4978
      %v5146 = vunpack.c.l.b16 %v4979
      %v5147 = vunpack.c.l.b16 %v4980
      %v5148 = vunpack.c.l.b16 %v4981
      %v5149 = vunpack.c.l.b16 %v4982
      %v5150 = vunpack.c.l.b16 %v4983
      %v5151 = vunpack.c.l.b16 %v4984
      %v5152 = vunpack.c.l.b16 %v4985
      %v5153 = vunpack.c.l.b16 %v4986
      %v5154 = vunpack.c.l.b16 %v4987
      %v5155 = vpack.c.b16 %v5076, %v5075
      %v5156 = vpack.c.b16 %v5078, %v5077
      %v5157 = vpack.c.b16 %v5080, %v5079
      %v5158 = vpack.c.b16 %v5082, %v5081
      %v5159 = vpack.c.b16 %v5084, %v5083
      %v5160 = vpack.c.b16 %v5086, %v5085
      %v5161 = vpack.c.b16 %v5088, %v5087
      %v5162 = vpack.c.b16 %v5090, %v5089
      %v5163 = vpack.c.b16 %v5092, %v5091
      %v5164 = vpack.c.b16 %v5094, %v5093
      %v5165 = vpack.c.b16 %v5096, %v5095
      %v5166 = vpack.c.b16 %v5098, %v5097
      %v5167 = vpack.c.b16 %v5100, %v5099
      %v5168 = vpack.c.b16 %v5102, %v5101
      %v5169 = vpack.c.b16 %v5104, %v5103
      %v5170 = vpack.c.b16 %v5106, %v5105
      %v5171 = vpack.c.b16 %v5108, %v5107
      %v5172 = vpack.c.b16 %v5110, %v5109
      %v5173 = vpack.c.b16 %v5112, %v5111
      %v5174 = vpack.c.b16 %v5114, %v5113
      %v5175 = vpack.c.b16 %v5116, %v5115
      %v5176 = vpack.c.b16 %v5118, %v5117
      %v5177 = vpack.c.b16 %v5120, %v5119
      %v5178 = vpack.c.b16 %v5122, %v5121
      %v5179 = vpack.c.b16 %v5124, %v5123
      %v5180 = vpack.c.b16 %v5126, %v5125
      %v5181 = vpack.c.b16 %v5128, %v5127
      %v5182 = vpack.c.b16 %v5130, %v5129
      %v5183 = vpack.c.b16 %v5132, %v5131
      %v5184 = vpack.c.b16 %v5134, %v5133
      %v5185 = vpack.c.b16 %v5136, %v5135
      %v5186 = vpack.c.b16 %v5138, %v5137
      %v5187 = vpack.c.b16 %v5140, %v5139
      %v5188 = vpack.c.b16 %v5142, %v5141
      %v5189 = vpack.c.b16 %v5144, %v5143
      %v5190 = vpack.c.b16 %v5146, %v5145
      %v5191 = vpack.c.b16 %v5148, %v5147
      %v5192 = vpack.c.b16 %v5150, %v5149
      %v5193 = vpack.c.b16 %v5152, %v5151
      %v5194 = vpack.c.b16 %v5154, %v5153
      %5235 = vmatprep.subr.bf16.mxu0 0
      %5236 = vmatpush1.bf16.msra.mxu0 %v5155
      %5237 = vmatprep.subr.bf16.mxu0 0
      %5238 = vmatpush1.bf16.msra.mxu0 %v5156
      %5239 = vmatprep.subr.bf16.mxu0 0
      %5240 = vmatpush1.bf16.msra.mxu0 %v5157
      %5241 = vmatprep.subr.bf16.mxu0 0
      %5242 = vmatpush1.bf16.msra.mxu0 %v5158
      %5243 = vmatprep.subr.bf16.mxu0 0
      %5244 = vmatpush1.bf16.msra.mxu0 %v5159
      %5245 = vmatprep.subr.bf16.mxu0 0
      %5246 = vmatpush1.bf16.msra.mxu0 %v5160
      %5247 = vmatprep.subr.bf16.mxu0 0
      %5248 = vmatpush1.bf16.msra.mxu0 %v5161
      %5249 = vmatprep.subr.bf16.mxu0 0
      %5250 = vmatpush1.bf16.msra.mxu0 %v5162
      %5251 = vmatprep.subr.bf16.mxu0 0
      %5252 = vmatpush1.bf16.msra.mxu0 %v5163
      %5253 = vmatprep.subr.bf16.mxu0 0
      %5254 = vmatpush1.bf16.msra.mxu0 %v5164
      %5255 = vmatprep.subr.bf16.mxu0 0
      %5256 = vmatpush1.bf16.msra.mxu0 %v5165
      %5257 = vmatprep.subr.bf16.mxu0 0
      %5258 = vmatpush1.bf16.msra.mxu0 %v5166
      %5259 = vmatprep.subr.bf16.mxu0 0
      %5260 = vmatpush1.bf16.msra.mxu0 %v5167
      %5261 = vmatprep.subr.bf16.mxu0 0
      %5262 = vmatpush1.bf16.msra.mxu0 %v5168
      %5263 = vmatprep.subr.bf16.mxu0 0
      %5264 = vmatpush1.bf16.msra.mxu0 %v5169
      %5265 = vmatprep.subr.bf16.mxu0 0
      %5266 = vmatpush1.bf16.msra.mxu0 %v5170
      %5267 = vmatprep.mubr.bf16.mxu0 %v4849
      %5268 = vmatmul.mubr.bf16.gmra.mrb[0].mxu0 %v4848
      %v5269 = vpop.f32.mrb[0].mxu0
      %v5270 = vadd.f32 %v4993, %v5269
      %v5271 = vpop.f32.mrb[0].mxu0
      %v5272 = vpop.f32.mrb[0].mxu0
      %v5273 = vadd.f32 %v4993, %v5272
      %v5274 = vpop.f32.mrb[0].mxu0
      %5275 = vmatprep.mubr.bf16.mxu0 %v4854
      %5276 = vmatmul.mubr.bf16.gmra.mrb[0].mxu0 %v4853
      %v5277 = vpop.f32.mrb[0].mxu0
      %v5278 = vadd.f32 %v4993, %v5277
      %v5279 = vpop.f32.mrb[0].mxu0
      %v5280 = vpop.f32.mrb[0].mxu0
      %v5281 = vadd.f32 %v4993, %v5280
      %v5282 = vpop.f32.mrb[0].mxu0
      %5283 = vmatprep.mubr.bf16.mxu0 %v4859
      %5284 = vmatmul.mubr.bf16.gmra.mrb[0].mxu0 %v4858
      %v5285 = vpop.f32.mrb[0].mxu0
      %v5286 = vadd.f32 %v4993, %v5285
      %v5287 = vpop.f32.mrb[0].mxu0
      %v5288 = vpop.f32.mrb[0].mxu0
      %v5289 = vadd.f32 %v4993, %v5288
      %v5290 = vpop.f32.mrb[0].mxu0
      %5291 = vmatprep.mubr.bf16.mxu0 %v4864
      %5292 = vmatmul.mubr.bf16.gmra.mrb[0].mxu0 %v4863
      %v5293 = vpop.f32.mrb[0].mxu0
      %v5294 = vadd.f32 %v4993, %v5293
      %v5295 = vpop.f32.mrb[0].mxu0
      %v5296 = vpop.f32.mrb[0].mxu0
      %v5297 = vadd.f32 %v4993, %v5296
      %v5298 = vpop.f32.mrb[0].mxu0
      %5299 = vmatprep.mubr.bf16.mxu0 %v4869
      %5300 = vmatmul.mubr.bf16.gmra.mrb[0].mxu0 %v4868
      %v5301 = vpop.f32.mrb[0].mxu0
      %v5302 = vadd.f32 %v4993, %v5301
      %v5303 = vpop.f32.mrb[0].mxu0
      %v5304 = vpop.f32.mrb[0].mxu0
      %v5305 = vadd.f32 %v4993, %v5304
      %v5306 = vpop.f32.mrb[0].mxu0
      %5307 = vmatprep.mubr.bf16.mxu0 %v4874
      %5308 = vmatmul.mubr.bf16.gmra.mrb[0].mxu0 %v4873
      %v5309 = vpop.f32.mrb[0].mxu0
      %v5310 = vadd.f32 %v4993, %v5309
      %v5311 = vpop.f32.mrb[0].mxu0
      %v5312 = vpop.f32.mrb[0].mxu0
      %v5313 = vadd.f32 %v4993, %v5312
      %v5314 = vpop.f32.mrb[0].mxu0
      %5315 = vmatprep.mubr.bf16.mxu0 %v4879
      %5316 = vmatmul.mubr.bf16.gmra.mrb[0].mxu0 %v4878
      %v5317 = vpop.f32.mrb[0].mxu0
      %v5318 = vadd.f32 %v4993, %v5317
      %v5319 = vpop.f32.mrb[0].mxu0
      %v5320 = vpop.f32.mrb[0].mxu0
      %v5321 = vadd.f32 %v4993, %v5320
      %v5322 = vpop.f32.mrb[0].mxu0
      %5323 = vmatprep.mubr.bf16.mxu0 %v4884
      %5324 = vmatmul.mubr.bf16.gmra.mrb[0].mxu0 %v4883
      %v5325 = vpop.f32.mrb[0].mxu0
      %v5326 = vadd.f32 %v4993, %v5325
      %v5327 = vpop.f32.mrb[0].mxu0
      %v5328 = vpop.f32.mrb[0].mxu0
      %v5329 = vadd.f32 %v4993, %v5328
      %v5330 = vpop.f32.mrb[0].mxu0
      %5331 = vmatprep.mubr.bf16.mxu0 %v4889
      %5332 = vmatmul.mubr.bf16.gmra.mrb[0].mxu0 %v4888
      %v5333 = vpop.f32.mrb[0].mxu0
      %v5334 = vadd.f32 %v4993, %v5333
      %v5335 = vpop.f32.mrb[0].mxu0
      %v5336 = vpop.f32.mrb[0].mxu0
      %v5337 = vadd.f32 %v4993, %v5336
      %v5338 = vpop.f32.mrb[0].mxu0
      %5339 = vmatprep.mubr.bf16.mxu0 %v4894
      %5340 = vmatmul.mubr.bf16.gmra.mrb[0].mxu0 %v4893
      %v5341 = vpop.f32.mrb[0].mxu0
      %v5342 = vadd.f32 %v4993, %v5341
      %v5343 = vpop.f32.mrb[0].mxu0
      %v5344 = vpop.f32.mrb[0].mxu0
      %v5345 = vadd.f32 %v4993, %v5344
      %v5346 = vpop.f32.mrb[0].mxu0
      %5347 = vmatprep.mubr.bf16.mxu0 %v4899
      %5348 = vmatmul.mubr.bf16.gmra.mrb[0].mxu0 %v4898
      %v5349 = vpop.f32.mrb[0].mxu0
      %v5350 = vadd.f32 %v4993, %v5349
      %v5351 = vpop.f32.mrb[0].mxu0
      %v5352 = vpop.f32.mrb[0].mxu0
      %v5353 = vadd.f32 %v4993, %v5352
      %v5354 = vpop.f32.mrb[0].mxu0
      %5355 = vmatprep.mubr.bf16.mxu0 %v4904
      %5356 = vmatmul.mubr.bf16.gmra.mrb[0].mxu0 %v4903
      %v5357 = vpop.f32.mrb[0].mxu0
      %v5358 = vadd.f32 %v4993, %v5357
      %v5359 = vpop.f32.mrb[0].mxu0
      %v5360 = vpop.f32.mrb[0].mxu0
      %v5361 = vadd.f32 %v4993, %v5360
      %v5362 = vpop.f32.mrb[0].mxu0
      %5363 = vdwg.mxu0
      %5364 = vmatprep.subr.bf16.mxu0 0
      %5365 = vmatpush1.bf16.msra.mxu0 %v5171
      %5366 = vmatprep.subr.bf16.mxu0 0
      %5367 = vmatpush1.bf16.msra.mxu0 %v5172
      %5368 = vmatprep.subr.bf16.mxu0 0
      %5369 = vmatpush1.bf16.msra.mxu0 %v5173
      %5370 = vmatprep.subr.bf16.mxu0 0
      %5371 = vmatpush1.bf16.msra.mxu0 %v5174
      %5372 = vmatprep.subr.bf16.mxu0 0
      %5373 = vmatpush1.bf16.msra.mxu0 %v5175
      %5374 = vmatprep.subr.bf16.mxu0 0
      %5375 = vmatpush1.bf16.msra.mxu0 %v5176
      %5376 = vmatprep.subr.bf16.mxu0 0
      %5377 = vmatpush1.bf16.msra.mxu0 %v5177
      %5378 = vmatprep.subr.bf16.mxu0 0
      %5379 = vmatpush1.bf16.msra.mxu0 %v5178
      %5380 = vmatprep.subr.bf16.mxu0 0
      %5381 = vmatpush1.bf16.msra.mxu0 %v5179
      %5382 = vmatprep.subr.bf16.mxu0 0
      %5383 = vmatpush1.bf16.msra.mxu0 %v5180
      %5384 = vmatprep.subr.bf16.mxu0 0
      %5385 = vmatpush1.bf16.msra.mxu0 %v5181
      %5386 = vmatprep.subr.bf16.mxu0 0
      %5387 = vmatpush1.bf16.msra.mxu0 %v5182
      %5388 = vmatprep.subr.bf16.mxu0 0
      %5389 = vmatpush1.bf16.msra.mxu0 %v5183
      %5390 = vmatprep.subr.bf16.mxu0 0
      %5391 = vmatpush1.bf16.msra.mxu0 %v5184
      %5392 = vmatprep.subr.bf16.mxu0 0
      %5393 = vmatpush1.bf16.msra.mxu0 %v5185
      %5394 = vmatprep.subr.bf16.mxu0 0
      %5395 = vmatpush1.bf16.msra.mxu0 %v5186
      %5396 = vmatprep.mubr.bf16.mxu0 %v4851
      %5397 = vmatmul.mubr.bf16.gmra.mrb[0].mxu0 %v4850
      %v5398 = vpop.f32.mrb[0].mxu0
      %v5399 = vadd.f32 %v5270, %v5398
      %v5400 = vpop.f32.mrb[0].mxu0
      %v5401 = vpop.f32.mrb[0].mxu0
      %v5402 = vadd.f32 %v5273, %v5401
      %v5403 = vpop.f32.mrb[0].mxu0
      %5404 = vmatprep.mubr.bf16.mxu0 %v4856
      %5405 = vmatmul.mubr.bf16.gmra.mrb[0].mxu0 %v4855
      %v5406 = vpop.f32.mrb[0].mxu0
      %v5407 = vadd.f32 %v5278, %v5406
      %v5408 = vpop.f32.mrb[0].mxu0
      %v5409 = vpop.f32.mrb[0].mxu0
      %v5410 = vadd.f32 %v5281, %v5409
      %v5411 = vpop.f32.mrb[0].mxu0
      %5412 = vmatprep.mubr.bf16.mxu0 %v4861
      %5413 = vmatmul.mubr.bf16.gmra.mrb[0].mxu0 %v4860
      %v5414 = vpop.f32.mrb[0].mxu0
      %v5415 = vadd.f32 %v5286, %v5414
      %v5416 = vpop.f32.mrb[0].mxu0
      %v5417 = vpop.f32.mrb[0].mxu0
      %v5418 = vadd.f32 %v5289, %v5417
      %v5419 = vpop.f32.mrb[0].mxu0
      %5420 = vmatprep.mubr.bf16.mxu0 %v4866
      %5421 = vmatmul.mubr.bf16.gmra.mrb[0].mxu0 %v4865
      %v5422 = vpop.f32.mrb[0].mxu0
      %v5423 = vadd.f32 %v5294, %v5422
      %v5424 = vpop.f32.mrb[0].mxu0
      %v5425 = vpop.f32.mrb[0].mxu0
      %v5426 = vadd.f32 %v5297, %v5425
      %v5427 = vpop.f32.mrb[0].mxu0
      %5428 = vmatprep.mubr.bf16.mxu0 %v4871
      %5429 = vmatmul.mubr.bf16.gmra.mrb[0].mxu0 %v4870
      %v5430 = vpop.f32.mrb[0].mxu0
      %v5431 = vadd.f32 %v5302, %v5430
      %v5432 = vpop.f32.mrb[0].mxu0
      %v5433 = vpop.f32.mrb[0].mxu0
      %v5434 = vadd.f32 %v5305, %v5433
      %v5435 = vpop.f32.mrb[0].mxu0
      %5436 = vmatprep.mubr.bf16.mxu0 %v4876
      %5437 = vmatmul.mubr.bf16.gmra.mrb[0].mxu0 %v4875
      %v5438 = vpop.f32.mrb[0].mxu0
      %v5439 = vadd.f32 %v5310, %v5438
      %v5440 = vpop.f32.mrb[0].mxu0
      %v5441 = vpop.f32.mrb[0].mxu0
      %v5442 = vadd.f32 %v5313, %v5441
      %v5443 = vpop.f32.mrb[0].mxu0
      %5444 = vmatprep.mubr.bf16.mxu0 %v4881
      %5445 = vmatmul.mubr.bf16.gmra.mrb[0].mxu0 %v4880
      %v5446 = vpop.f32.mrb[0].mxu0
      %v5447 = vadd.f32 %v5318, %v5446
      %v5448 = vpop.f32.mrb[0].mxu0
      %v5449 = vpop.f32.mrb[0].mxu0
      %v5450 = vadd.f32 %v5321, %v5449
      %v5451 = vpop.f32.mrb[0].mxu0
      %5452 = vmatprep.mubr.bf16.mxu0 %v4886
      %5453 = vmatmul.mubr.bf16.gmra.mrb[0].mxu0 %v4885
      %v5454 = vpop.f32.mrb[0].mxu0
      %v5455 = vadd.f32 %v5326, %v5454
      %v5456 = vpop.f32.mrb[0].mxu0
      %v5457 = vpop.f32.mrb[0].mxu0
      %v5458 = vadd.f32 %v5329, %v5457
      %v5459 = vpop.f32.mrb[0].mxu0
      %5460 = vmatprep.mubr.bf16.mxu0 %v4891
      %5461 = vmatmul.mubr.bf16.gmra.mrb[0].mxu0 %v4890
      %v5462 = vpop.f32.mrb[0].mxu0
      %v5463 = vadd.f32 %v5334, %v5462
      %v5464 = vpop.f32.mrb[0].mxu0
      %v5465 = vpop.f32.mrb[0].mxu0
      %v5466 = vadd.f32 %v5337, %v5465
      %v5467 = vpop.f32.mrb[0].mxu0
      %5468 = vmatprep.mubr.bf16.mxu0 %v4896
      %5469 = vmatmul.mubr.bf16.gmra.mrb[0].mxu0 %v4895
      %v5470 = vpop.f32.mrb[0].mxu0
      %v5471 = vadd.f32 %v5342, %v5470
      %v5472 = vpop.f32.mrb[0].mxu0
      %v5473 = vpop.f32.mrb[0].mxu0
      %v5474 = vadd.f32 %v5345, %v5473
      %v5475 = vpop.f32.mrb[0].mxu0
      %5476 = vmatprep.mubr.bf16.mxu0 %v4901
      %5477 = vmatmul.mubr.bf16.gmra.mrb[0].mxu0 %v4900
      %v5478 = vpop.f32.mrb[0].mxu0
      %v5479 = vadd.f32 %v5350, %v5478
      %v5480 = vpop.f32.mrb[0].mxu0
      %v5481 = vpop.f32.mrb[0].mxu0
      %v5482 = vadd.f32 %v5353, %v5481
      %v5483 = vpop.f32.mrb[0].mxu0
      %5484 = vmatprep.mubr.bf16.mxu0 %v4906
      %5485 = vmatmul.mubr.bf16.gmra.mrb[0].mxu0 %v4905
      %v5486 = vpop.f32.mrb[0].mxu0
      %v5487 = vadd.f32 %v5358, %v5486
      %v5488 = vpop.f32.mrb[0].mxu0
      %v5489 = vpop.f32.mrb[0].mxu0
      %v5490 = vadd.f32 %v5361, %v5489
      %v5491 = vpop.f32.mrb[0].mxu0
      %5492 = vdwg.mxu0
      %5493 = vmatprep.subr.bf16.mxu0 0
      %5494 = vmatpush1.bf16.msra.mxu0 %v5187
      %5495 = vmatprep.subr.bf16.mxu0 0
      %5496 = vmatpush1.bf16.msra.mxu0 %v5188
      %5497 = vmatprep.subr.bf16.mxu0 0
      %5498 = vmatpush1.bf16.msra.mxu0 %v5189
      %5499 = vmatprep.subr.bf16.mxu0 0
      %5500 = vmatpush1.bf16.msra.mxu0 %v5190
      %5501 = vmatprep.subr.bf16.mxu0 0
      %5502 = vmatpush1.bf16.msra.mxu0 %v5191
      %5503 = vmatprep.subr.bf16.mxu0 0
      %5504 = vmatpush1.bf16.msra.mxu0 %v5192
      %5505 = vmatprep.subr.bf16.mxu0 0
      %5506 = vmatpush1.bf16.msra.mxu0 %v5193
      %5507 = vmatprep.subr.bf16.mxu0 0
      %5508 = vmatpush1.bf16.msra.mxu0 %v5194
      %5509 = vmatprep.subr.bf16.mxu0 0
      %5510 = vmatpush1.bf16.msra.mxu0 0
      %5511 = vmatprep.subr.bf16.mxu0 0
      %5512 = vmatpush1.bf16.msra.mxu0 0
      %5513 = vmatprep.subr.bf16.mxu0 0
      %5514 = vmatpush1.bf16.msra.mxu0 0
      %5515 = vmatprep.subr.bf16.mxu0 0
      %5516 = vmatpush1.bf16.msra.mxu0 0
      %5517 = vmatprep.subr.bf16.mxu0 0
      %5518 = vmatpush1.bf16.msra.mxu0 0
      %5519 = vmatprep.subr.bf16.mxu0 0
      %5520 = vmatpush1.bf16.msra.mxu0 0
      %5521 = vmatprep.subr.bf16.mxu0 0
      %5522 = vmatpush1.bf16.msra.mxu0 0
      %5523 = vmatprep.subr.bf16.mxu0 0
      %5524 = vmatpush1.bf16.msra.mxu0 0
      %5525 = vmatprep.mubr.bf16.mxu0 0
      %5526 = vmatmul.mubr.bf16.gmra.mrb[0].mxu0 %v4852
      %v5527 = vpop.f32.mrb[0].mxu0
      %v5528 = vadd.f32 %v5399, %v5527
      %v5529 = vpop.f32.mrb[0].mxu0
      %v5530 = vpop.f32.mrb[0].mxu0
      %v5531 = vadd.f32 %v5402, %v5530
      %v5532 = vpop.f32.mrb[0].mxu0
      %5533 = vmatprep.mubr.bf16.mxu0 0
      %5534 = vmatmul.mubr.bf16.gmra.mrb[0].mxu0 %v4857
      %v5535 = vpop.f32.mrb[0].mxu0
      %v5536 = vadd.f32 %v5407, %v5535
      %v5537 = vpop.f32.mrb[0].mxu0
      %v5538 = vpop.f32.mrb[0].mxu0
      %v5539 = vadd.f32 %v5410, %v5538
      %v5540 = vpop.f32.mrb[0].mxu0
      %5541 = vmatprep.mubr.bf16.mxu0 0
      %5542 = vmatmul.mubr.bf16.gmra.mrb[0].mxu0 %v4862
      %v5543 = vpop.f32.mrb[0].mxu0
      %v5544 = vadd.f32 %v5415, %v5543
      %v5545 = vpop.f32.mrb[0].mxu0
      %v5546 = vpop.f32.mrb[0].mxu0
      %v5547 = vadd.f32 %v5418, %v5546
      %v5548 = vpop.f32.mrb[0].mxu0
      %5549 = vmatprep.mubr.bf16.mxu0 0
      %5550 = vmatmul.mubr.bf16.gmra.mrb[0].mxu0 %v4867
      %v5551 = vpop.f32.mrb[0].mxu0
      %v5552 = vadd.f32 %v5423, %v5551
      %v5553 = vpop.f32.mrb[0].mxu0
      %v5554 = vpop.f32.mrb[0].mxu0
      %v5555 = vadd.f32 %v5426, %v5554
      %v5556 = vpop.f32.mrb[0].mxu0
      %5557 = vmatprep.mubr.bf16.mxu0 0
      %5558 = vmatmul.mubr.bf16.gmra.mrb[0].mxu0 %v4872
      %v5559 = vpop.f32.mrb[0].mxu0
      %v5560 = vadd.f32 %v5431, %v5559
      %v5561 = vpop.f32.mrb[0].mxu0
      %v5562 = vpop.f32.mrb[0].mxu0
      %v5563 = vadd.f32 %v5434, %v5562
      %v5564 = vpop.f32.mrb[0].mxu0
      %5565 = vmatprep.mubr.bf16.mxu0 0
      %5566 = vmatmul.mubr.bf16.gmra.mrb[0].mxu0 %v4877
      %v5567 = vpop.f32.mrb[0].mxu0
      %v5568 = vadd.f32 %v5439, %v5567
      %v5569 = vpop.f32.mrb[0].mxu0
      %v5570 = vpop.f32.mrb[0].mxu0
      %v5571 = vadd.f32 %v5442, %v5570
      %v5572 = vpop.f32.mrb[0].mxu0
      %5573 = vmatprep.mubr.bf16.mxu0 0
      %5574 = vmatmul.mubr.bf16.gmra.mrb[0].mxu0 %v4882
      %v5575 = vpop.f32.mrb[0].mxu0
      %v5576 = vadd.f32 %v5447, %v5575
      %v5577 = vpop.f32.mrb[0].mxu0
      %v5578 = vpop.f32.mrb[0].mxu0
      %v5579 = vadd.f32 %v5450, %v5578
      %v5580 = vpop.f32.mrb[0].mxu0
      %5581 = vmatprep.mubr.bf16.mxu0 0
      %5582 = vmatmul.mubr.bf16.gmra.mrb[0].mxu0 %v4887
      %v5583 = vpop.f32.mrb[0].mxu0
      %v5584 = vadd.f32 %v5455, %v5583
      %v5585 = vpop.f32.mrb[0].mxu0
      %v5586 = vpop.f32.mrb[0].mxu0
      %v5587 = vadd.f32 %v5458, %v5586
      %v5588 = vpop.f32.mrb[0].mxu0
      %5589 = vmatprep.mubr.bf16.mxu0 0
      %5590 = vmatmul.mubr.bf16.gmra.mrb[0].mxu0 %v4892
      %v5591 = vpop.f32.mrb[0].mxu0
      %v5592 = vadd.f32 %v5463, %v5591
      %v5593 = vpop.f32.mrb[0].mxu0
      %v5594 = vpop.f32.mrb[0].mxu0
      %v5595 = vadd.f32 %v5466, %v5594
      %v5596 = vpop.f32.mrb[0].mxu0
      %5597 = vmatprep.mubr.bf16.mxu0 0
      %5598 = vmatmul.mubr.bf16.gmra.mrb[0].mxu0 %v4897
      %v5599 = vpop.f32.mrb[0].mxu0
      %v5600 = vadd.f32 %v5471, %v5599
      %v5601 = vpop.f32.mrb[0].mxu0
      %v5602 = vpop.f32.mrb[0].mxu0
      %v5603 = vadd.f32 %v5474, %v5602
      %v5604 = vpop.f32.mrb[0].mxu0
      %5605 = vmatprep.mubr.bf16.mxu0 0
      %5606 = vmatmul.mubr.bf16.gmra.mrb[0].mxu0 %v4902
      %v5607 = vpop.f32.mrb[0].mxu0
      %v5608 = vadd.f32 %v5479, %v5607
      %v5609 = vpop.f32.mrb[0].mxu0
      %v5610 = vpop.f32.mrb[0].mxu0
      %v5611 = vadd.f32 %v5482, %v5610
      %v5612 = vpop.f32.mrb[0].mxu0
      %5613 = vmatprep.mubr.bf16.mxu0 0
      %5614 = vmatmul.mubr.bf16.gmra.mrb[0].mxu0 %v4907
      %v5615 = vpop.f32.mrb[0].mxu0
      %v5616 = vadd.f32 %v5487, %v5615
      %v5617 = vpop.f32.mrb[0].mxu0
      %v5618 = vpop.f32.mrb[0].mxu0
      %v5619 = vadd.f32 %v5490, %v5618
      %v5620 = vpop.f32.mrb[0].mxu0
      %5621 = vdwg.mxu0
      %vm5622 = vcmp.gt.f32.partialorder %v5528, 0.0
      %vm5623 = vcmp.gt.f32.partialorder %v5531, 0.0
      %vm5624 = vcmp.gt.f32.partialorder %v5536, 0.0
      %vm5625 = vcmp.gt.f32.partialorder %v5539, 0.0
      %vm5626 = vcmp.gt.f32.partialorder %v5544, 0.0
      %vm5627 = vcmp.gt.f32.partialorder %v5547, 0.0
      %vm5628 = vcmp.gt.f32.partialorder %v5552, 0.0
      %vm5629 = vcmp.gt.f32.partialorder %v5555, 0.0
      %vm5630 = vcmp.gt.f32.partialorder %v5560, 0.0
      %vm5631 = vcmp.gt.f32.partialorder %v5563, 0.0
      %vm5632 = vcmp.gt.f32.partialorder %v5568, 0.0
      %vm5633 = vcmp.gt.f32.partialorder %v5571, 0.0
      %vm5634 = vcmp.gt.f32.partialorder %v5576, 0.0
      %vm5635 = vcmp.gt.f32.partialorder %v5579, 0.0
      %vm5636 = vcmp.gt.f32.partialorder %v5584, 0.0
      %vm5637 = vcmp.gt.f32.partialorder %v5587, 0.0
      %vm5638 = vcmp.gt.f32.partialorder %v5592, 0.0
      %vm5639 = vcmp.gt.f32.partialorder %v5595, 0.0
      %vm5640 = vcmp.gt.f32.partialorder %v5600, 0.0
      %vm5641 = vcmp.gt.f32.partialorder %v5603, 0.0
      %vm5642 = vcmp.gt.f32.partialorder %v5608, 0.0
      %vm5643 = vcmp.gt.f32.partialorder %v5611, 0.0
      %vm5644 = vcmp.gt.f32.partialorder %v5616, 0.0
      %vm5645 = vcmp.gt.f32.partialorder %v5619, 0.0
      %v5646 = vmul.f32 %v5528, 0.1
      %v5647 = vmul.f32 %v5531, 0.1
      %v5648 = vmul.f32 %v5536, 0.1
      %v5649 = vmul.f32 %v5539, 0.1
      %v5650 = vmul.f32 %v5544, 0.1
      %v5651 = vmul.f32 %v5547, 0.1
      %v5652 = vmul.f32 %v5552, 0.1
      %v5653 = vmul.f32 %v5555, 0.1
      %v5654 = vmul.f32 %v5560, 0.1
      %v5655 = vmul.f32 %v5563, 0.1
      %v5656 = vmul.f32 %v5568, 0.1
      %v5657 = vmul.f32 %v5571, 0.1
      %v5658 = vmul.f32 %v5576, 0.1
      %v5659 = vmul.f32 %v5579, 0.1
      %v5660 = vmul.f32 %v5584, 0.1
      %v5661 = vmul.f32 %v5587, 0.1
      %v5662 = vmul.f32 %v5592, 0.1
      %v5663 = vmul.f32 %v5595, 0.1
      %v5664 = vmul.f32 %v5600, 0.1
      %v5665 = vmul.f32 %v5603, 0.1
      %v5666 = vmul.f32 %v5608, 0.1
      %v5667 = vmul.f32 %v5611, 0.1
      %v5668 = vmul.f32 %v5616, 0.1
      %v5669 = vmul.f32 %v5619, 0.1
      %v5670 = vsel %vm5622, %v5528, %v5646
      %v5671 = vsel %vm5623, %v5531, %v5647
      %v5672 = vsel %vm5624, %v5536, %v5648
      %v5673 = vsel %vm5625, %v5539, %v5649
      %v5674 = vsel %vm5626, %v5544, %v5650
      %v5675 = vsel %vm5627, %v5547, %v5651
      %v5676 = vsel %vm5628, %v5552, %v5652
      %v5677 = vsel %vm5629, %v5555, %v5653
      %v5678 = vsel %vm5630, %v5560, %v5654
      %v5679 = vsel %vm5631, %v5563, %v5655
      %v5680 = vsel %vm5632, %v5568, %v5656
      %v5681 = vsel %vm5633, %v5571, %v5657
      %v5682 = vsel %vm5634, %v5576, %v5658
      %v5683 = vsel %vm5635, %v5579, %v5659
      %v5684 = vsel %vm5636, %v5584, %v5660
      %v5685 = vsel %vm5637, %v5587, %v5661
      %v5686 = vsel %vm5638, %v5592, %v5662
      %v5687 = vsel %vm5639, %v5595, %v5663
      %v5688 = vsel %vm5640, %v5600, %v5664
      %v5689 = vsel %vm5641, %v5603, %v5665
      %v5690 = vsel %vm5642, %v5608, %v5666
      %v5691 = vsel %vm5643, %v5611, %v5667
      %v5692 = vsel %vm5644, %v5616, %v5668
      %v5693 = vsel %vm5645, %v5619, %v5669
      %v5694 = vadd.f32 %v4704, %v5670
      %v5695 = vadd.f32 %v4705, %v5671
      %v5696 = vadd.f32 %v4706, %v5672
      %v5697 = vadd.f32 %v4707, %v5673
      %v5698 = vadd.f32 %v4708, %v5674
      %v5699 = vadd.f32 %v4709, %v5675
      %v5700 = vadd.f32 %v4710, %v5676
      %v5701 = vadd.f32 %v4711, %v5677
      %v5702 = vadd.f32 %v4712, %v5678
      %v5703 = vadd.f32 %v4713, %v5679
      %v5704 = vadd.f32 %v4714, %v5680
      %v5705 = vadd.f32 %v4715, %v5681
      %v5706 = vadd.f32 %v4716, %v5682
      %v5707 = vadd.f32 %v4717, %v5683
      %v5708 = vadd.f32 %v4718, %v5684
      %v5709 = vadd.f32 %v4719, %v5685
      %v5710 = vadd.f32 %v4720, %v5686
      %v5711 = vadd.f32 %v4721, %v5687
      %v5712 = vadd.f32 %v4722, %v5688
      %v5713 = vadd.f32 %v4723, %v5689
      %v5714 = vadd.f32 %v4724, %v5690
      %v5715 = vadd.f32 %v4725, %v5691
      %v5716 = vadd.f32 %v4726, %v5692
      %v5717 = vadd.f32 %v4727, %v5693
      %5718 = vst [vmem:[#allocation2 + $0x8] sm:$0xff] %v5694
      %5719 = vst [vmem:[#allocation2 + $0x10] sm:$0xff] %v5695
      %5720 = vst [vmem:[#allocation2 + $0x18] sm:$0xff] %v5696
      %5721 = vst [vmem:[#allocation2 + $0x20] sm:$0xff] %v5697
      %5722 = vst [vmem:[#allocation2 + $0x28] sm:$0xff] %v5698
      %5723 = vst [vmem:[#allocation2 + $0x30] sm:$0xff] %v5699
      %5724 = vst [vmem:[#allocation2 + $0x38] sm:$0xff] %v5700
      %5725 = vst [vmem:[#allocation2 + $0x40] sm:$0xff] %v5701
      %5726 = vst [vmem:[#allocation2 + $0x48] sm:$0xff] %v5702
      %5727 = vst [vmem:[#allocation2 + $0x50] sm:$0xff] %v5703
      %5728 = vst [vmem:[#allocation2 + $0x58] sm:$0xff] %v5704
      %5729 = vst [vmem:[#allocation2 + $0x60] sm:$0xff] %v5705
      %5730 = vst [vmem:[#allocation2 + $0x68] sm:$0xff] %v5706
      %5731 = vst [vmem:[#allocation2 + $0x70] sm:$0xff] %v5707
      %5732 = vst [vmem:[#allocation2 + $0x78] sm:$0xff] %v5708
      %5733 = vst [vmem:[#allocation2 + $0x80] sm:$0xff] %v5709
      %5734 = vst [vmem:[#allocation2 + $0x88] sm:$0xff] %v5710
      %5735 = vst [vmem:[#allocation2 + $0x90] sm:$0xff] %v5711
      %5736 = vst [vmem:[#allocation2 + $0x98] sm:$0xff] %v5712
      %5737 = vst [vmem:[#allocation2 + $0xa0] sm:$0xff] %v5713
      %5738 = vst [vmem:[#allocation2 + $0xa8] sm:$0xff] %v5714
      %5739 = vst [vmem:[#allocation2 + $0xb0] sm:$0xff] %v5715
      %5740 = vst [vmem:[#allocation2 + $0xb8] sm:$0xff] %v5716
      %5741 = vst [vmem:[#allocation2 + $0xc0] sm:$0xff] %v5717
      %v5742 = vld [vmem:[#allocation2 + $0x6] sm:$0xff]
      %v5743 = vld [vmem:[#allocation2 + $0xe] sm:$0xff]
      %v5744 = vld [vmem:[#allocation2 + $0x16] sm:$0xff]
      %v5745 = vld [vmem:[#allocation2 + $0x1e] sm:$0xff]
      %v5746 = vld [vmem:[#allocation2 + $0x26] sm:$0xff]
      %v5747 = vld [vmem:[#allocation2 + $0x2e] sm:$0xff]
      %v5748 = vld [vmem:[#allocation2 + $0x36] sm:$0xff]
      %v5749 = vld [vmem:[#allocation2 + $0x3e] sm:$0xff]
      %v5750 = vld [vmem:[#allocation2 + $0x46] sm:$0xff]
      %v5751 = vld [vmem:[#allocation2 + $0x4e] sm:$0xff]
      %v5752 = vld [vmem:[#allocation2 + $0x56] sm:$0xff]
      %v5753 = vld [vmem:[#allocation2 + $0x5e] sm:$0xff]
      %v5754 = vld [vmem:[#allocation2 + $0x66] sm:$0xff]
      %v5755 = vld [vmem:[#allocation2 + $0x6e] sm:$0xff]
      %v5756 = vld [vmem:[#allocation2 + $0x76] sm:$0xff]
      %v5757 = vld [vmem:[#allocation2 + $0x7e] sm:$0xff]
      %v5758 = vld [vmem:[#allocation2 + $0x86] sm:$0xff]
      %v5759 = vld [vmem:[#allocation2 + $0x8e] sm:$0xff]
      %v5760 = vld [vmem:[#allocation2 + $0x96] sm:$0xff]
      %v5761 = vld [vmem:[#allocation2 + $0x9e] sm:$0xff]
      %v5762 = vld [vmem:[#allocation2 + $0xa6] sm:$0xff]
      %v5763 = vld [vmem:[#allocation2 + $0xae] sm:$0xff]
      %v5764 = vld [vmem:[#allocation2 + $0xb6] sm:$0xff]
      %v5765 = vld [vmem:[#allocation2 + $0xbe] sm:$0xff]
      %v5766 = vld [vmem:[#allocation2 + $0x7] sm:$0xff]
      %v5767 = vld [vmem:[#allocation2 + $0xf] sm:$0xff]
      %v5768 = vld [vmem:[#allocation2 + $0x17] sm:$0xff]
      %v5769 = vld [vmem:[#allocation2 + $0x1f] sm:$0xff]
      %v5770 = vld [vmem:[#allocation2 + $0x27] sm:$0xff]
      %v5771 = vld [vmem:[#allocation2 + $0x2f] sm:$0xff]
      %v5772 = vld [vmem:[#allocation2 + $0x37] sm:$0xff]
      %v5773 = vld [vmem:[#allocation2 + $0x3f] sm:$0xff]
      %v5774 = vld [vmem:[#allocation2 + $0x47] sm:$0xff]
      %v5775 = vld [vmem:[#allocation2 + $0x4f] sm:$0xff]
      %v5776 = vld [vmem:[#allocation2 + $0x57] sm:$0xff]
      %v5777 = vld [vmem:[#allocation2 + $0x5f] sm:$0xff]
      %v5778 = vld [vmem:[#allocation2 + $0x67] sm:$0xff]
      %v5779 = vld [vmem:[#allocation2 + $0x6f] sm:$0xff]
      %v5780 = vld [vmem:[#allocation2 + $0x77] sm:$0xff]
      %v5781 = vld [vmem:[#allocation2 + $0x7f] sm:$0xff]
      %v5782 = vld [vmem:[#allocation2 + $0x87] sm:$0xff]
      %v5783 = vld [vmem:[#allocation2 + $0x8f] sm:$0xff]
      %v5784 = vld [vmem:[#allocation2 + $0x97] sm:$0xff]
      %v5785 = vld [vmem:[#allocation2 + $0x9f] sm:$0xff]
      %v5786 = vld [vmem:[#allocation2 + $0xa7] sm:$0xff]
      %v5787 = vld [vmem:[#allocation2 + $0xaf] sm:$0xff]
      %v5788 = vld [vmem:[#allocation2 + $0xb7] sm:$0xff]
      %v5789 = vld [vmem:[#allocation2 + $0xbf] sm:$0xff]
      %v5790 = vld [vmem:[#allocation2 + $0x9] sm:$0xff]
      %v5791 = vld [vmem:[#allocation2 + $0x11] sm:$0xff]
      %v5792 = vld [vmem:[#allocation2 + $0x19] sm:$0xff]
      %v5793 = vld [vmem:[#allocation2 + $0x21] sm:$0xff]
      %v5794 = vld [vmem:[#allocation2 + $0x29] sm:$0xff]
      %v5795 = vld [vmem:[#allocation2 + $0x31] sm:$0xff]
      %v5796 = vld [vmem:[#allocation2 + $0x39] sm:$0xff]
      %v5797 = vld [vmem:[#allocation2 + $0x41] sm:$0xff]
      %v5798 = vld [vmem:[#allocation2 + $0x49] sm:$0xff]
      %v5799 = vld [vmem:[#allocation2 + $0x51] sm:$0xff]
      %v5800 = vld [vmem:[#allocation2 + $0x59] sm:$0xff]
      %v5801 = vld [vmem:[#allocation2 + $0x61] sm:$0xff]
      %v5802 = vld [vmem:[#allocation2 + $0x69] sm:$0xff]
      %v5803 = vld [vmem:[#allocation2 + $0x71] sm:$0xff]
      %v5804 = vld [vmem:[#allocation2 + $0x79] sm:$0xff]
      %v5805 = vld [vmem:[#allocation2 + $0x81] sm:$0xff]
      %v5806 = vld [vmem:[#allocation2 + $0x89] sm:$0xff]
      %v5807 = vld [vmem:[#allocation2 + $0x91] sm:$0xff]
      %v5808 = vld [vmem:[#allocation2 + $0x99] sm:$0xff]
      %v5809 = vld [vmem:[#allocation2 + $0xa1] sm:$0xff]
      %v5810 = vld [vmem:[#allocation2 + $0xa9] sm:$0xff]
      %v5811 = vld [vmem:[#allocation2 + $0xb1] sm:$0xff]
      %v5812 = vld [vmem:[#allocation2 + $0xb9] sm:$0xff]
      %v5813 = vld [vmem:[#allocation2 + $0xc1] sm:$0xff]
      %v5814 = vld [vmem:[#allocation2 + $0xa] sm:$0xff]
      %v5815 = vld [vmem:[#allocation2 + $0x12] sm:$0xff]
      %v5816 = vld [vmem:[#allocation2 + $0x1a] sm:$0xff]
      %v5817 = vld [vmem:[#allocation2 + $0x22] sm:$0xff]
      %v5818 = vld [vmem:[#allocation2 + $0x2a] sm:$0xff]
      %v5819 = vld [vmem:[#allocation2 + $0x32] sm:$0xff]
      %v5820 = vld [vmem:[#allocation2 + $0x3a] sm:$0xff]
      %v5821 = vld [vmem:[#allocation2 + $0x42] sm:$0xff]
      %v5822 = vld [vmem:[#allocation2 + $0x4a] sm:$0xff]
      %v5823 = vld [vmem:[#allocation2 + $0x52] sm:$0xff]
      %v5824 = vld [vmem:[#allocation2 + $0x5a] sm:$0xff]
      %v5825 = vld [vmem:[#allocation2 + $0x62] sm:$0xff]
      %v5826 = vld [vmem:[#allocation2 + $0x6a] sm:$0xff]
      %v5827 = vld [vmem:[#allocation2 + $0x72] sm:$0xff]
      %v5828 = vld [vmem:[#allocation2 + $0x7a] sm:$0xff]
      %v5829 = vld [vmem:[#allocation2 + $0x82] sm:$0xff]
      %v5830 = vld [vmem:[#allocation2 + $0x8a] sm:$0xff]
      %v5831 = vld [vmem:[#allocation2 + $0x92] sm:$0xff]
      %v5832 = vld [vmem:[#allocation2 + $0x9a] sm:$0xff]
      %v5833 = vld [vmem:[#allocation2 + $0xa2] sm:$0xff]
      %v5834 = vld [vmem:[#allocation2 + $0xaa] sm:$0xff]
      %v5835 = vld [vmem:[#allocation2 + $0xb2] sm:$0xff]
      %v5836 = vld [vmem:[#allocation2 + $0xba] sm:$0xff]
      %v5837 = vld [vmem:[#allocation2 + $0xc2] sm:$0xff]
      %v5838 = vpack.c.bf16 %v5743, %v5742
      %v5839 = vpack.c.bf16 %v5767, %v5766
      %v5840 = vpack.c.bf16 %v5695, %v5694
      %v5841 = vpack.c.bf16 %v5791, %v5790
      %v5842 = vpack.c.bf16 %v5815, %v5814
      %v5843 = vpack.c.bf16 %v5745, %v5744
      %v5844 = vpack.c.bf16 %v5769, %v5768
      %v5845 = vpack.c.bf16 %v5697, %v5696
      %v5846 = vpack.c.bf16 %v5793, %v5792
      %v5847 = vpack.c.bf16 %v5817, %v5816
      %v5848 = vpack.c.bf16 %v5747, %v5746
      %v5849 = vpack.c.bf16 %v5771, %v5770
      %v5850 = vpack.c.bf16 %v5699, %v5698
      %v5851 = vpack.c.bf16 %v5795, %v5794
      %v5852 = vpack.c.bf16 %v5819, %v5818
      %v5853 = vpack.c.bf16 %v5749, %v5748
      %v5854 = vpack.c.bf16 %v5773, %v5772
      %v5855 = vpack.c.bf16 %v5701, %v5700
      %v5856 = vpack.c.bf16 %v5797, %v5796
      %v5857 = vpack.c.bf16 %v5821, %v5820
      %v5858 = vpack.c.bf16 %v5751, %v5750
      %v5859 = vpack.c.bf16 %v5775, %v5774
      %v5860 = vpack.c.bf16 %v5703, %v5702
      %v5861 = vpack.c.bf16 %v5799, %v5798
      %v5862 = vpack.c.bf16 %v5823, %v5822
      %v5863 = vpack.c.bf16 %v5753, %v5752
      %v5864 = vpack.c.bf16 %v5777, %v5776
      %v5865 = vpack.c.bf16 %v5705, %v5704
      %v5866 = vpack.c.bf16 %v5801, %v5800
      %v5867 = vpack.c.bf16 %v5825, %v5824
      %v5868 = vpack.c.bf16 %v5755, %v5754
      %v5869 = vpack.c.bf16 %v5779, %v5778
      %v5870 = vpack.c.bf16 %v5707, %v5706
      %v5871 = vpack.c.bf16 %v5803, %v5802
      %v5872 = vpack.c.bf16 %v5827, %v5826
      %v5873 = vpack.c.bf16 %v5757, %v5756
      %v5874 = vpack.c.bf16 %v5781, %v5780
      %v5875 = vpack.c.bf16 %v5709, %v5708
      %v5876 = vpack.c.bf16 %v5805, %v5804
      %v5877 = vpack.c.bf16 %v5829, %v5828
      %v5878 = vpack.c.bf16 %v5759, %v5758
      %v5879 = vpack.c.bf16 %v5783, %v5782
      %v5880 = vpack.c.bf16 %v5711, %v5710
      %v5881 = vpack.c.bf16 %v5807, %v5806
      %v5882 = vpack.c.bf16 %v5831, %v5830
      %v5883 = vpack.c.bf16 %v5761, %v5760
      %v5884 = vpack.c.bf16 %v5785, %v5784
      %v5885 = vpack.c.bf16 %v5713, %v5712
      %v5886 = vpack.c.bf16 %v5809, %v5808
      %v5887 = vpack.c.bf16 %v5833, %v5832
      %v5888 = vpack.c.bf16 %v5763, %v5762
      %v5889 = vpack.c.bf16 %v5787, %v5786
      %v5890 = vpack.c.bf16 %v5715, %v5714
      %v5891 = vpack.c.bf16 %v5811, %v5810
      %v5892 = vpack.c.bf16 %v5835, %v5834
      %v5893 = vpack.c.bf16 %v5765, %v5764
      %v5894 = vpack.c.bf16 %v5789, %v5788
      %v5895 = vpack.c.bf16 %v5717, %v5716
      %v5896 = vpack.c.bf16 %v5813, %v5812
      %v5897 = vpack.c.bf16 %v5837, %v5836
      %v5898 = vld [vmem:[%s55] sm:$0xf]
      %v5899 = vld [vmem:[%s55 + $0x4] sm:$0xf]
      %v5900 = vld [vmem:[%s55 + $0x8] sm:$0xf]
      %v5901 = vld [vmem:[%s55 + $0xc] sm:$0xf]
      %v5902 = vld [vmem:[%s55 + $0x10] sm:$0xf]
      %v5903 = vld [vmem:[%s55 + $0x14] sm:$0xf]
      %v5904 = vld [vmem:[%s55 + $0x18] sm:$0xf]
      %v5905 = vld [vmem:[%s55 + $0x1c] sm:$0xf]
      %v5906 = vld [vmem:[%s55 + $0x20] sm:$0xf]
      %v5907 = vld [vmem:[%s55 + $0x24] sm:$0xf]
      %v5908 = vld [vmem:[%s55 + $0x28] sm:$0xf]
      %v5909 = vld [vmem:[%s55 + $0x2c] sm:$0xf]
      %v5910 = vld [vmem:[%s55 + $0x30] sm:$0xf]
      %v5911 = vld [vmem:[%s55 + $0x34] sm:$0xf]
      %v5912 = vld [vmem:[%s55 + $0x38] sm:$0xf]
      %v5913 = vld [vmem:[%s55 + $0x3c] sm:$0xf]
      %v5914 = vld [vmem:[%s55 + $0x40] sm:$0xf]
      %v5915 = vld [vmem:[%s55 + $0x44] sm:$0xf]
      %v5916 = vld [vmem:[%s55 + $0x48] sm:$0xf]
      %v5917 = vld [vmem:[%s55 + $0x4c] sm:$0xf]
      %v5918 = vld [vmem:[%s55 + $0x50] sm:$0xf]
      %v5919 = vld [vmem:[%s55 + $0x54] sm:$0xf]
      %v5920 = vld [vmem:[%s55 + $0x58] sm:$0xf]
      %v5921 = vld [vmem:[%s55 + $0x5c] sm:$0xf]
      %v5922 = vld [vmem:[%s55 + $0x60] sm:$0xf]
      %v5923 = vld [vmem:[%s55 + $0x64] sm:$0xf]
      %v5924 = vld [vmem:[%s55 + $0x68] sm:$0xf]
      %v5925 = vld [vmem:[%s55 + $0x6c] sm:$0xf]
      %v5926 = vld [vmem:[%s55 + $0x70] sm:$0xf]
      %v5927 = vld [vmem:[%s55 + $0x74] sm:$0xf]
      %v5928 = vld [vmem:[%s55 + $0x78] sm:$0xf]
      %v5929 = vld [vmem:[%s55 + $0x7c] sm:$0xf]
      %v5930 = vld [vmem:[%s55 + $0x80] sm:$0xf]
      %v5931 = vld [vmem:[%s55 + $0x84] sm:$0xf]
      %v5932 = vld [vmem:[%s55 + $0x88] sm:$0xf]
      %v5933 = vld [vmem:[%s55 + $0x8c] sm:$0xf]
      %v5934 = vld [vmem:[%s55 + $0x90] sm:$0xf]
      %v5935 = vld [vmem:[%s55 + $0x94] sm:$0xf]
      %v5936 = vld [vmem:[%s55 + $0x98] sm:$0xf]
      %v5937 = vld [vmem:[%s55 + $0x9c] sm:$0xf]
      %v5938 = vld [vmem:[%s55 + $0xa0] sm:$0xf]
      %v5939 = vld [vmem:[%s55 + $0xa4] sm:$0xf]
      %v5940 = vld [vmem:[%s55 + $0xa8] sm:$0xf]
      %v5941 = vld [vmem:[%s55 + $0xac] sm:$0xf]
      %v5942 = vld [vmem:[%s55 + $0xb0] sm:$0xf]
      %v5943 = vld [vmem:[%s55 + $0xb4] sm:$0xf]
      %v5944 = vld [vmem:[%s55 + $0xb8] sm:$0xf]
      %v5945 = vld [vmem:[%s55 + $0xbc] sm:$0xf]
      %v5946 = vld [vmem:[%s55 + $0xc0] sm:$0xf]
      %v5947 = vld [vmem:[%s55 + $0xc4] sm:$0xf]
      %v5948 = vld [vmem:[%s55 + $0xc8] sm:$0xf]
      %v5949 = vld [vmem:[%s55 + $0xcc] sm:$0xf]
      %v5950 = vld [vmem:[%s55 + $0xd0] sm:$0xf]
      %v5951 = vld [vmem:[%s55 + $0xd4] sm:$0xf]
      %v5952 = vld [vmem:[%s55 + $0xd8] sm:$0xf]
      %v5953 = vld [vmem:[%s55 + $0xdc] sm:$0xf]
      %v5954 = vld [vmem:[%s55 + $0xe0] sm:$0xf]
      %v5955 = vld [vmem:[%s55 + $0xe4] sm:$0xf]
      %v5956 = vld [vmem:[%s55 + $0xe8] sm:$0xf]
      %v5957 = vld [vmem:[%s55 + $0xec] sm:$0xf]
      %v5958 = vld [vmem:[%s55 + $0xf0] sm:$0xf]
      %v5959 = vld [vmem:[%s55 + $0xf4] sm:$0xf]
      %v5960 = vld [vmem:[%s55 + $0xf8] sm:$0xf]
      %v5961 = vld [vmem:[%s55 + $0xfc] sm:$0xf]
      %v5962 = vld [vmem:[%s55 + $0x100] sm:$0xf]
      %v5963 = vld [vmem:[%s55 + $0x104] sm:$0xf]
      %v5964 = vld [vmem:[%s55 + $0x108] sm:$0xf]
      %v5965 = vld [vmem:[%s55 + $0x10c] sm:$0xf]
      %v5966 = vld [vmem:[%s55 + $0x110] sm:$0xf]
      %v5967 = vld [vmem:[%s55 + $0x114] sm:$0xf]
      %v5968 = vld [vmem:[%s55 + $0x118] sm:$0xf]
      %v5969 = vld [vmem:[%s55 + $0x11c] sm:$0xf]
      %v5970 = vld [vmem:[%s55 + $0x120] sm:$0xf]
      %v5971 = vld [vmem:[%s55 + $0x124] sm:$0xf]
      %v5972 = vld [vmem:[%s55 + $0x128] sm:$0xf]
      %v5973 = vld [vmem:[%s55 + $0x12c] sm:$0xf]
      %v5974 = vld [vmem:[%s55 + $0x130] sm:$0xf]
      %v5975 = vld [vmem:[%s55 + $0x134] sm:$0xf]
      %v5976 = vld [vmem:[%s55 + $0x138] sm:$0xf]
      %v5977 = vld [vmem:[%s55 + $0x13c] sm:$0xf]
      %v5978 = vld [vmem:[%s57] sm:$0x1]
      %v5980 = vlaneseq
      %v5981 = vshrl.u32 %v5980, 7
      %v5982 = vsub.s32 0, %v5981
      %v5983 = vrot.slane %v5978, %v5982
      %v6065 = vunpack.c.l.b16 %v5898
      %v6066 = vunpack.c.l.b16 %v5899
      %v6067 = vunpack.c.l.b16 %v5900
      %v6068 = vunpack.c.l.b16 %v5901
      %v6069 = vunpack.c.l.b16 %v5902
      %v6070 = vunpack.c.l.b16 %v5903
      %v6071 = vunpack.c.l.b16 %v5904
      %v6072 = vunpack.c.l.b16 %v5905
      %v6073 = vunpack.c.l.b16 %v5906
      %v6074 = vunpack.c.l.b16 %v5907
      %v6075 = vunpack.c.l.b16 %v5908
      %v6076 = vunpack.c.l.b16 %v5909
      %v6077 = vunpack.c.l.b16 %v5910
      %v6078 = vunpack.c.l.b16 %v5911
      %v6079 = vunpack.c.l.b16 %v5912
      %v6080 = vunpack.c.l.b16 %v5913
      %v6081 = vunpack.c.l.b16 %v5914
      %v6082 = vunpack.c.l.b16 %v5915
      %v6083 = vunpack.c.l.b16 %v5916
      %v6084 = vunpack.c.l.b16 %v5917
      %v6085 = vunpack.c.l.b16 %v5918
      %v6086 = vunpack.c.l.b16 %v5919
      %v6087 = vunpack.c.l.b16 %v5920
      %v6088 = vunpack.c.l.b16 %v5921
      %v6089 = vunpack.c.l.b16 %v5922
      %v6090 = vunpack.c.l.b16 %v5923
      %v6091 = vunpack.c.l.b16 %v5924
      %v6092 = vunpack.c.l.b16 %v5925
      %v6093 = vunpack.c.l.b16 %v5926
      %v6094 = vunpack.c.l.b16 %v5927
      %v6095 = vunpack.c.l.b16 %v5928
      %v6096 = vunpack.c.l.b16 %v5929
      %v6097 = vunpack.c.l.b16 %v5930
      %v6098 = vunpack.c.l.b16 %v5931
      %v6099 = vunpack.c.l.b16 %v5932
      %v6100 = vunpack.c.l.b16 %v5933
      %v6101 = vunpack.c.l.b16 %v5934
      %v6102 = vunpack.c.l.b16 %v5935
      %v6103 = vunpack.c.l.b16 %v5936
      %v6104 = vunpack.c.l.b16 %v5937
      %v6105 = vunpack.c.l.b16 %v5938
      %v6106 = vunpack.c.l.b16 %v5939
      %v6107 = vunpack.c.l.b16 %v5940
      %v6108 = vunpack.c.l.b16 %v5941
      %v6109 = vunpack.c.l.b16 %v5942
      %v6110 = vunpack.c.l.b16 %v5943
      %v6111 = vunpack.c.l.b16 %v5944
      %v6112 = vunpack.c.l.b16 %v5945
      %v6113 = vunpack.c.l.b16 %v5946
      %v6114 = vunpack.c.l.b16 %v5947
      %v6115 = vunpack.c.l.b16 %v5948
      %v6116 = vunpack.c.l.b16 %v5949
      %v6117 = vunpack.c.l.b16 %v5950
      %v6118 = vunpack.c.l.b16 %v5951
      %v6119 = vunpack.c.l.b16 %v5952
      %v6120 = vunpack.c.l.b16 %v5953
      %v6121 = vunpack.c.l.b16 %v5954
      %v6122 = vunpack.c.l.b16 %v5955
      %v6123 = vunpack.c.l.b16 %v5956
      %v6124 = vunpack.c.l.b16 %v5957
      %v6125 = vunpack.c.l.b16 %v5958
      %v6126 = vunpack.c.l.b16 %v5959
      %v6127 = vunpack.c.l.b16 %v5960
      %v6128 = vunpack.c.l.b16 %v5961
      %v6129 = vunpack.c.l.b16 %v5962
      %v6130 = vunpack.c.l.b16 %v5963
      %v6131 = vunpack.c.l.b16 %v5964
      %v6132 = vunpack.c.l.b16 %v5965
      %v6133 = vunpack.c.l.b16 %v5966
      %v6134 = vunpack.c.l.b16 %v5967
      %v6135 = vunpack.c.l.b16 %v5968
      %v6136 = vunpack.c.l.b16 %v5969
      %v6137 = vunpack.c.l.b16 %v5970
      %v6138 = vunpack.c.l.b16 %v5971
      %v6139 = vunpack.c.l.b16 %v5972
      %v6140 = vunpack.c.l.b16 %v5973
      %v6141 = vunpack.c.l.b16 %v5974
      %v6142 = vunpack.c.l.b16 %v5975
      %v6143 = vunpack.c.l.b16 %v5976
      %v6144 = vunpack.c.l.b16 %v5977
      %v6145 = vpack.c.b16 %v6066, %v6065
      %v6146 = vpack.c.b16 %v6068, %v6067
      %v6147 = vpack.c.b16 %v6070, %v6069
      %v6148 = vpack.c.b16 %v6072, %v6071
      %v6149 = vpack.c.b16 %v6074, %v6073
      %v6150 = vpack.c.b16 %v6076, %v6075
      %v6151 = vpack.c.b16 %v6078, %v6077
      %v6152 = vpack.c.b16 %v6080, %v6079
      %v6153 = vpack.c.b16 %v6082, %v6081
      %v6154 = vpack.c.b16 %v6084, %v6083
      %v6155 = vpack.c.b16 %v6086, %v6085
      %v6156 = vpack.c.b16 %v6088, %v6087
      %v6157 = vpack.c.b16 %v6090, %v6089
      %v6158 = vpack.c.b16 %v6092, %v6091
      %v6159 = vpack.c.b16 %v6094, %v6093
      %v6160 = vpack.c.b16 %v6096, %v6095
      %v6161 = vpack.c.b16 %v6098, %v6097
      %v6162 = vpack.c.b16 %v6100, %v6099
      %v6163 = vpack.c.b16 %v6102, %v6101
      %v6164 = vpack.c.b16 %v6104, %v6103
      %v6165 = vpack.c.b16 %v6106, %v6105
      %v6166 = vpack.c.b16 %v6108, %v6107
      %v6167 = vpack.c.b16 %v6110, %v6109
      %v6168 = vpack.c.b16 %v6112, %v6111
      %v6169 = vpack.c.b16 %v6114, %v6113
      %v6170 = vpack.c.b16 %v6116, %v6115
      %v6171 = vpack.c.b16 %v6118, %v6117
      %v6172 = vpack.c.b16 %v6120, %v6119
      %v6173 = vpack.c.b16 %v6122, %v6121
      %v6174 = vpack.c.b16 %v6124, %v6123
      %v6175 = vpack.c.b16 %v6126, %v6125
      %v6176 = vpack.c.b16 %v6128, %v6127
      %v6177 = vpack.c.b16 %v6130, %v6129
      %v6178 = vpack.c.b16 %v6132, %v6131
      %v6179 = vpack.c.b16 %v6134, %v6133
      %v6180 = vpack.c.b16 %v6136, %v6135
      %v6181 = vpack.c.b16 %v6138, %v6137
      %v6182 = vpack.c.b16 %v6140, %v6139
      %v6183 = vpack.c.b16 %v6142, %v6141
      %v6184 = vpack.c.b16 %v6144, %v6143
      %6225 = vmatprep.subr.bf16.mxu0 0
      %6226 = vmatpush1.bf16.msra.mxu0 %v6145
      %6227 = vmatprep.subr.bf16.mxu0 0
      %6228 = vmatpush1.bf16.msra.mxu0 %v6146
      %6229 = vmatprep.subr.bf16.mxu0 0
      %6230 = vmatpush1.bf16.msra.mxu0 %v6147
      %6231 = vmatprep.subr.bf16.mxu0 0
      %6232 = vmatpush1.bf16.msra.mxu0 %v6148
      %6233 = vmatprep.subr.bf16.mxu0 0
      %6234 = vmatpush1.bf16.msra.mxu0 %v6149
      %6235 = vmatprep.subr.bf16.mxu0 0
      %6236 = vmatpush1.bf16.msra.mxu0 %v6150
      %6237 = vmatprep.subr.bf16.mxu0 0
      %6238 = vmatpush1.bf16.msra.mxu0 %v6151
      %6239 = vmatprep.subr.bf16.mxu0 0
      %6240 = vmatpush1.bf16.msra.mxu0 %v6152
      %6241 = vmatprep.subr.bf16.mxu0 0
      %6242 = vmatpush1.bf16.msra.mxu0 %v6153
      %6243 = vmatprep.subr.bf16.mxu0 0
      %6244 = vmatpush1.bf16.msra.mxu0 %v6154
      %6245 = vmatprep.subr.bf16.mxu0 0
      %6246 = vmatpush1.bf16.msra.mxu0 %v6155
      %6247 = vmatprep.subr.bf16.mxu0 0
      %6248 = vmatpush1.bf16.msra.mxu0 %v6156
      %6249 = vmatprep.subr.bf16.mxu0 0
      %6250 = vmatpush1.bf16.msra.mxu0 %v6157
      %6251 = vmatprep.subr.bf16.mxu0 0
      %6252 = vmatpush1.bf16.msra.mxu0 %v6158
      %6253 = vmatprep.subr.bf16.mxu0 0
      %6254 = vmatpush1.bf16.msra.mxu0 %v6159
      %6255 = vmatprep.subr.bf16.mxu0 0
      %6256 = vmatpush1.bf16.msra.mxu0 %v6160
      %6257 = vmatprep.mubr.bf16.mxu0 %v5839
      %6258 = vmatmul.mubr.bf16.gmra.mrb[0].mxu0 %v5838
      %v6259 = vpop.f32.mrb[0].mxu0
      %v6260 = vadd.f32 %v5983, %v6259
      %v6261 = vpop.f32.mrb[0].mxu0
      %v6262 = vpop.f32.mrb[0].mxu0
      %v6263 = vadd.f32 %v5983, %v6262
      %v6264 = vpop.f32.mrb[0].mxu0
      %6265 = vmatprep.mubr.bf16.mxu0 %v5844
      %6266 = vmatmul.mubr.bf16.gmra.mrb[0].mxu0 %v5843
      %v6267 = vpop.f32.mrb[0].mxu0
      %v6268 = vadd.f32 %v5983, %v6267
      %v6269 = vpop.f32.mrb[0].mxu0
      %v6270 = vpop.f32.mrb[0].mxu0
      %v6271 = vadd.f32 %v5983, %v6270
      %v6272 = vpop.f32.mrb[0].mxu0
      %6273 = vmatprep.mubr.bf16.mxu0 %v5849
      %6274 = vmatmul.mubr.bf16.gmra.mrb[0].mxu0 %v5848
      %v6275 = vpop.f32.mrb[0].mxu0
      %v6276 = vadd.f32 %v5983, %v6275
      %v6277 = vpop.f32.mrb[0].mxu0
      %v6278 = vpop.f32.mrb[0].mxu0
      %v6279 = vadd.f32 %v5983, %v6278
      %v6280 = vpop.f32.mrb[0].mxu0
      %6281 = vmatprep.mubr.bf16.mxu0 %v5854
      %6282 = vmatmul.mubr.bf16.gmra.mrb[0].mxu0 %v5853
      %v6283 = vpop.f32.mrb[0].mxu0
      %v6284 = vadd.f32 %v5983, %v6283
      %v6285 = vpop.f32.mrb[0].mxu0
      %v6286 = vpop.f32.mrb[0].mxu0
      %v6287 = vadd.f32 %v5983, %v6286
      %v6288 = vpop.f32.mrb[0].mxu0
      %6289 = vmatprep.mubr.bf16.mxu0 %v5859
      %6290 = vmatmul.mubr.bf16.gmra.mrb[0].mxu0 %v5858
      %v6291 = vpop.f32.mrb[0].mxu0
      %v6292 = vadd.f32 %v5983, %v6291
      %v6293 = vpop.f32.mrb[0].mxu0
      %v6294 = vpop.f32.mrb[0].mxu0
      %v6295 = vadd.f32 %v5983, %v6294
      %v6296 = vpop.f32.mrb[0].mxu0
      %6297 = vmatprep.mubr.bf16.mxu0 %v5864
      %6298 = vmatmul.mubr.bf16.gmra.mrb[0].mxu0 %v5863
      %v6299 = vpop.f32.mrb[0].mxu0
      %v6300 = vadd.f32 %v5983, %v6299
      %v6301 = vpop.f32.mrb[0].mxu0
      %v6302 = vpop.f32.mrb[0].mxu0
      %v6303 = vadd.f32 %v5983, %v6302
      %v6304 = vpop.f32.mrb[0].mxu0
      %6305 = vmatprep.mubr.bf16.mxu0 %v5869
      %6306 = vmatmul.mubr.bf16.gmra.mrb[0].mxu0 %v5868
      %v6307 = vpop.f32.mrb[0].mxu0
      %v6308 = vadd.f32 %v5983, %v6307
      %v6309 = vpop.f32.mrb[0].mxu0
      %v6310 = vpop.f32.mrb[0].mxu0
      %v6311 = vadd.f32 %v5983, %v6310
      %v6312 = vpop.f32.mrb[0].mxu0
      %6313 = vmatprep.mubr.bf16.mxu0 %v5874
      %6314 = vmatmul.mubr.bf16.gmra.mrb[0].mxu0 %v5873
      %v6315 = vpop.f32.mrb[0].mxu0
      %v6316 = vadd.f32 %v5983, %v6315
      %v6317 = vpop.f32.mrb[0].mxu0
      %v6318 = vpop.f32.mrb[0].mxu0
      %v6319 = vadd.f32 %v5983, %v6318
      %v6320 = vpop.f32.mrb[0].mxu0
      %6321 = vmatprep.mubr.bf16.mxu0 %v5879
      %6322 = vmatmul.mubr.bf16.gmra.mrb[0].mxu0 %v5878
      %v6323 = vpop.f32.mrb[0].mxu0
      %v6324 = vadd.f32 %v5983, %v6323
      %v6325 = vpop.f32.mrb[0].mxu0
      %v6326 = vpop.f32.mrb[0].mxu0
      %v6327 = vadd.f32 %v5983, %v6326
      %v6328 = vpop.f32.mrb[0].mxu0
      %6329 = vmatprep.mubr.bf16.mxu0 %v5884
      %6330 = vmatmul.mubr.bf16.gmra.mrb[0].mxu0 %v5883
      %v6331 = vpop.f32.mrb[0].mxu0
      %v6332 = vadd.f32 %v5983, %v6331
      %v6333 = vpop.f32.mrb[0].mxu0
      %v6334 = vpop.f32.mrb[0].mxu0
      %v6335 = vadd.f32 %v5983, %v6334
      %v6336 = vpop.f32.mrb[0].mxu0
      %6337 = vmatprep.mubr.bf16.mxu0 %v5889
      %6338 = vmatmul.mubr.bf16.gmra.mrb[0].mxu0 %v5888
      %v6339 = vpop.f32.mrb[0].mxu0
      %v6340 = vadd.f32 %v5983, %v6339
      %v6341 = vpop.f32.mrb[0].mxu0
      %v6342 = vpop.f32.mrb[0].mxu0
      %v6343 = vadd.f32 %v5983, %v6342
      %v6344 = vpop.f32.mrb[0].mxu0
      %6345 = vmatprep.mubr.bf16.mxu0 %v5894
      %6346 = vmatmul.mubr.bf16.gmra.mrb[0].mxu0 %v5893
      %v6347 = vpop.f32.mrb[0].mxu0
      %v6348 = vadd.f32 %v5983, %v6347
      %v6349 = vpop.f32.mrb[0].mxu0
      %v6350 = vpop.f32.mrb[0].mxu0
      %v6351 = vadd.f32 %v5983, %v6350
      %v6352 = vpop.f32.mrb[0].mxu0
      %6353 = vdwg.mxu0
      %6354 = vmatprep.subr.bf16.mxu0 0
      %6355 = vmatpush1.bf16.msra.mxu0 %v6161
      %6356 = vmatprep.subr.bf16.mxu0 0
      %6357 = vmatpush1.bf16.msra.mxu0 %v6162
      %6358 = vmatprep.subr.bf16.mxu0 0
      %6359 = vmatpush1.bf16.msra.mxu0 %v6163
      %6360 = vmatprep.subr.bf16.mxu0 0
      %6361 = vmatpush1.bf16.msra.mxu0 %v6164
      %6362 = vmatprep.subr.bf16.mxu0 0
      %6363 = vmatpush1.bf16.msra.mxu0 %v6165
      %6364 = vmatprep.subr.bf16.mxu0 0
      %6365 = vmatpush1.bf16.msra.mxu0 %v6166
      %6366 = vmatprep.subr.bf16.mxu0 0
      %6367 = vmatpush1.bf16.msra.mxu0 %v6167
      %6368 = vmatprep.subr.bf16.mxu0 0
      %6369 = vmatpush1.bf16.msra.mxu0 %v6168
      %6370 = vmatprep.subr.bf16.mxu0 0
      %6371 = vmatpush1.bf16.msra.mxu0 %v6169
      %6372 = vmatprep.subr.bf16.mxu0 0
      %6373 = vmatpush1.bf16.msra.mxu0 %v6170
      %6374 = vmatprep.subr.bf16.mxu0 0
      %6375 = vmatpush1.bf16.msra.mxu0 %v6171
      %6376 = vmatprep.subr.bf16.mxu0 0
      %6377 = vmatpush1.bf16.msra.mxu0 %v6172
      %6378 = vmatprep.subr.bf16.mxu0 0
      %6379 = vmatpush1.bf16.msra.mxu0 %v6173
      %6380 = vmatprep.subr.bf16.mxu0 0
      %6381 = vmatpush1.bf16.msra.mxu0 %v6174
      %6382 = vmatprep.subr.bf16.mxu0 0
      %6383 = vmatpush1.bf16.msra.mxu0 %v6175
      %6384 = vmatprep.subr.bf16.mxu0 0
      %6385 = vmatpush1.bf16.msra.mxu0 %v6176
      %6386 = vmatprep.mubr.bf16.mxu0 %v5841
      %6387 = vmatmul.mubr.bf16.gmra.mrb[0].mxu0 %v5840
      %v6388 = vpop.f32.mrb[0].mxu0
      %v6389 = vadd.f32 %v6260, %v6388
      %v6390 = vpop.f32.mrb[0].mxu0
      %v6391 = vpop.f32.mrb[0].mxu0
      %v6392 = vadd.f32 %v6263, %v6391
      %v6393 = vpop.f32.mrb[0].mxu0
      %6394 = vmatprep.mubr.bf16.mxu0 %v5846
      %6395 = vmatmul.mubr.bf16.gmra.mrb[0].mxu0 %v5845
      %v6396 = vpop.f32.mrb[0].mxu0
      %v6397 = vadd.f32 %v6268, %v6396
      %v6398 = vpop.f32.mrb[0].mxu0
      %v6399 = vpop.f32.mrb[0].mxu0
      %v6400 = vadd.f32 %v6271, %v6399
      %v6401 = vpop.f32.mrb[0].mxu0
      %6402 = vmatprep.mubr.bf16.mxu0 %v5851
      %6403 = vmatmul.mubr.bf16.gmra.mrb[0].mxu0 %v5850
      %v6404 = vpop.f32.mrb[0].mxu0
      %v6405 = vadd.f32 %v6276, %v6404
      %v6406 = vpop.f32.mrb[0].mxu0
      %v6407 = vpop.f32.mrb[0].mxu0
      %v6408 = vadd.f32 %v6279, %v6407
      %v6409 = vpop.f32.mrb[0].mxu0
      %6410 = vmatprep.mubr.bf16.mxu0 %v5856
      %6411 = vmatmul.mubr.bf16.gmra.mrb[0].mxu0 %v5855
      %v6412 = vpop.f32.mrb[0].mxu0
      %v6413 = vadd.f32 %v6284, %v6412
      %v6414 = vpop.f32.mrb[0].mxu0
      %v6415 = vpop.f32.mrb[0].mxu0
      %v6416 = vadd.f32 %v6287, %v6415
      %v6417 = vpop.f32.mrb[0].mxu0
      %6418 = vmatprep.mubr.bf16.mxu0 %v5861
      %6419 = vmatmul.mubr.bf16.gmra.mrb[0].mxu0 %v5860
      %v6420 = vpop.f32.mrb[0].mxu0
      %v6421 = vadd.f32 %v6292, %v6420
      %v6422 = vpop.f32.mrb[0].mxu0
      %v6423 = vpop.f32.mrb[0].mxu0
      %v6424 = vadd.f32 %v6295, %v6423
      %v6425 = vpop.f32.mrb[0].mxu0
      %6426 = vmatprep.mubr.bf16.mxu0 %v5866
      %6427 = vmatmul.mubr.bf16.gmra.mrb[0].mxu0 %v5865
      %v6428 = vpop.f32.mrb[0].mxu0
      %v6429 = vadd.f32 %v6300, %v6428
      %v6430 = vpop.f32.mrb[0].mxu0
      %v6431 = vpop.f32.mrb[0].mxu0
      %v6432 = vadd.f32 %v6303, %v6431
      %v6433 = vpop.f32.mrb[0].mxu0
      %6434 = vmatprep.mubr.bf16.mxu0 %v5871
      %6435 = vmatmul.mubr.bf16.gmra.mrb[0].mxu0 %v5870
      %v6436 = vpop.f32.mrb[0].mxu0
      %v6437 = vadd.f32 %v6308, %v6436
      %v6438 = vpop.f32.mrb[0].mxu0
      %v6439 = vpop.f32.mrb[0].mxu0
      %v6440 = vadd.f32 %v6311, %v6439
      %v6441 = vpop.f32.mrb[0].mxu0
      %6442 = vmatprep.mubr.bf16.mxu0 %v5876
      %6443 = vmatmul.mubr.bf16.gmra.mrb[0].mxu0 %v5875
      %v6444 = vpop.f32.mrb[0].mxu0
      %v6445 = vadd.f32 %v6316, %v6444
      %v6446 = vpop.f32.mrb[0].mxu0
      %v6447 = vpop.f32.mrb[0].mxu0
      %v6448 = vadd.f32 %v6319, %v6447
      %v6449 = vpop.f32.mrb[0].mxu0
      %6450 = vmatprep.mubr.bf16.mxu0 %v5881
      %6451 = vmatmul.mubr.bf16.gmra.mrb[0].mxu0 %v5880
      %v6452 = vpop.f32.mrb[0].mxu0
      %v6453 = vadd.f32 %v6324, %v6452
      %v6454 = vpop.f32.mrb[0].mxu0
      %v6455 = vpop.f32.mrb[0].mxu0
      %v6456 = vadd.f32 %v6327, %v6455
      %v6457 = vpop.f32.mrb[0].mxu0
      %6458 = vmatprep.mubr.bf16.mxu0 %v5886
      %6459 = vmatmul.mubr.bf16.gmra.mrb[0].mxu0 %v5885
      %v6460 = vpop.f32.mrb[0].mxu0
      %v6461 = vadd.f32 %v6332, %v6460
      %v6462 = vpop.f32.mrb[0].mxu0
      %v6463 = vpop.f32.mrb[0].mxu0
      %v6464 = vadd.f32 %v6335, %v6463
      %v6465 = vpop.f32.mrb[0].mxu0
      %6466 = vmatprep.mubr.bf16.mxu0 %v5891
      %6467 = vmatmul.mubr.bf16.gmra.mrb[0].mxu0 %v5890
      %v6468 = vpop.f32.mrb[0].mxu0
      %v6469 = vadd.f32 %v6340, %v6468
      %v6470 = vpop.f32.mrb[0].mxu0
      %v6471 = vpop.f32.mrb[0].mxu0
      %v6472 = vadd.f32 %v6343, %v6471
      %v6473 = vpop.f32.mrb[0].mxu0
      %6474 = vmatprep.mubr.bf16.mxu0 %v5896
      %6475 = vmatmul.mubr.bf16.gmra.mrb[0].mxu0 %v5895
      %v6476 = vpop.f32.mrb[0].mxu0
      %v6477 = vadd.f32 %v6348, %v6476
      %v6478 = vpop.f32.mrb[0].mxu0
      %v6479 = vpop.f32.mrb[0].mxu0
      %v6480 = vadd.f32 %v6351, %v6479
      %v6481 = vpop.f32.mrb[0].mxu0
      %6482 = vdwg.mxu0
      %6483 = vmatprep.subr.bf16.mxu0 0
      %6484 = vmatpush1.bf16.msra.mxu0 %v6177
      %6485 = vmatprep.subr.bf16.mxu0 0
      %6486 = vmatpush1.bf16.msra.mxu0 %v6178
      %6487 = vmatprep.subr.bf16.mxu0 0
      %6488 = vmatpush1.bf16.msra.mxu0 %v6179
      %6489 = vmatprep.subr.bf16.mxu0 0
      %6490 = vmatpush1.bf16.msra.mxu0 %v6180
      %6491 = vmatprep.subr.bf16.mxu0 0
      %6492 = vmatpush1.bf16.msra.mxu0 %v6181
      %6493 = vmatprep.subr.bf16.mxu0 0
      %6494 = vmatpush1.bf16.msra.mxu0 %v6182
      %6495 = vmatprep.subr.bf16.mxu0 0
      %6496 = vmatpush1.bf16.msra.mxu0 %v6183
      %6497 = vmatprep.subr.bf16.mxu0 0
      %6498 = vmatpush1.bf16.msra.mxu0 %v6184
      %6499 = vmatprep.subr.bf16.mxu0 0
      %6500 = vmatpush1.bf16.msra.mxu0 0
      %6501 = vmatprep.subr.bf16.mxu0 0
      %6502 = vmatpush1.bf16.msra.mxu0 0
      %6503 = vmatprep.subr.bf16.mxu0 0
      %6504 = vmatpush1.bf16.msra.mxu0 0
      %6505 = vmatprep.subr.bf16.mxu0 0
      %6506 = vmatpush1.bf16.msra.mxu0 0
      %6507 = vmatprep.subr.bf16.mxu0 0
      %6508 = vmatpush1.bf16.msra.mxu0 0
      %6509 = vmatprep.subr.bf16.mxu0 0
      %6510 = vmatpush1.bf16.msra.mxu0 0
      %6511 = vmatprep.subr.bf16.mxu0 0
      %6512 = vmatpush1.bf16.msra.mxu0 0
      %6513 = vmatprep.subr.bf16.mxu0 0
      %6514 = vmatpush1.bf16.msra.mxu0 0
      %6515 = vmatprep.mubr.bf16.mxu0 0
      %6516 = vmatmul.mubr.bf16.gmra.mrb[0].mxu0 %v5842
      %v6517 = vpop.f32.mrb[0].mxu0
      %v6518 = vadd.f32 %v6389, %v6517
      %v6519 = vpop.f32.mrb[0].mxu0
      %v6520 = vpop.f32.mrb[0].mxu0
      %v6521 = vadd.f32 %v6392, %v6520
      %v6522 = vpop.f32.mrb[0].mxu0
      %6523 = vmatprep.mubr.bf16.mxu0 0
      %6524 = vmatmul.mubr.bf16.gmra.mrb[0].mxu0 %v5847
      %v6525 = vpop.f32.mrb[0].mxu0
      %v6526 = vadd.f32 %v6397, %v6525
      %v6527 = vpop.f32.mrb[0].mxu0
      %v6528 = vpop.f32.mrb[0].mxu0
      %v6529 = vadd.f32 %v6400, %v6528
      %v6530 = vpop.f32.mrb[0].mxu0
      %6531 = vmatprep.mubr.bf16.mxu0 0
      %6532 = vmatmul.mubr.bf16.gmra.mrb[0].mxu0 %v5852
      %v6533 = vpop.f32.mrb[0].mxu0
      %v6534 = vadd.f32 %v6405, %v6533
      %v6535 = vpop.f32.mrb[0].mxu0
      %v6536 = vpop.f32.mrb[0].mxu0
      %v6537 = vadd.f32 %v6408, %v6536
      %v6538 = vpop.f32.mrb[0].mxu0
      %6539 = vmatprep.mubr.bf16.mxu0 0
      %6540 = vmatmul.mubr.bf16.gmra.mrb[0].mxu0 %v5857
      %v6541 = vpop.f32.mrb[0].mxu0
      %v6542 = vadd.f32 %v6413, %v6541
      %v6543 = vpop.f32.mrb[0].mxu0
      %v6544 = vpop.f32.mrb[0].mxu0
      %v6545 = vadd.f32 %v6416, %v6544
      %v6546 = vpop.f32.mrb[0].mxu0
      %6547 = vmatprep.mubr.bf16.mxu0 0
      %6548 = vmatmul.mubr.bf16.gmra.mrb[0].mxu0 %v5862
      %v6549 = vpop.f32.mrb[0].mxu0
      %v6550 = vadd.f32 %v6421, %v6549
      %v6551 = vpop.f32.mrb[0].mxu0
      %v6552 = vpop.f32.mrb[0].mxu0
      %v6553 = vadd.f32 %v6424, %v6552
      %v6554 = vpop.f32.mrb[0].mxu0
      %6555 = vmatprep.mubr.bf16.mxu0 0
      %6556 = vmatmul.mubr.bf16.gmra.mrb[0].mxu0 %v5867
      %v6557 = vpop.f32.mrb[0].mxu0
      %v6558 = vadd.f32 %v6429, %v6557
      %v6559 = vpop.f32.mrb[0].mxu0
      %v6560 = vpop.f32.mrb[0].mxu0
      %v6561 = vadd.f32 %v6432, %v6560
      %v6562 = vpop.f32.mrb[0].mxu0
      %6563 = vmatprep.mubr.bf16.mxu0 0
      %6564 = vmatmul.mubr.bf16.gmra.mrb[0].mxu0 %v5872
      %v6565 = vpop.f32.mrb[0].mxu0
      %v6566 = vadd.f32 %v6437, %v6565
      %v6567 = vpop.f32.mrb[0].mxu0
      %v6568 = vpop.f32.mrb[0].mxu0
      %v6569 = vadd.f32 %v6440, %v6568
      %v6570 = vpop.f32.mrb[0].mxu0
      %6571 = vmatprep.mubr.bf16.mxu0 0
      %6572 = vmatmul.mubr.bf16.gmra.mrb[0].mxu0 %v5877
      %v6573 = vpop.f32.mrb[0].mxu0
      %v6574 = vadd.f32 %v6445, %v6573
      %v6575 = vpop.f32.mrb[0].mxu0
      %v6576 = vpop.f32.mrb[0].mxu0
      %v6577 = vadd.f32 %v6448, %v6576
      %v6578 = vpop.f32.mrb[0].mxu0
      %6579 = vmatprep.mubr.bf16.mxu0 0
      %6580 = vmatmul.mubr.bf16.gmra.mrb[0].mxu0 %v5882
      %v6581 = vpop.f32.mrb[0].mxu0
      %v6582 = vadd.f32 %v6453, %v6581
      %v6583 = vpop.f32.mrb[0].mxu0
      %v6584 = vpop.f32.mrb[0].mxu0
      %v6585 = vadd.f32 %v6456, %v6584
      %v6586 = vpop.f32.mrb[0].mxu0
      %6587 = vmatprep.mubr.bf16.mxu0 0
      %6588 = vmatmul.mubr.bf16.gmra.mrb[0].mxu0 %v5887
      %v6589 = vpop.f32.mrb[0].mxu0
      %v6590 = vadd.f32 %v6461, %v6589
      %v6591 = vpop.f32.mrb[0].mxu0
      %v6592 = vpop.f32.mrb[0].mxu0
      %v6593 = vadd.f32 %v6464, %v6592
      %v6594 = vpop.f32.mrb[0].mxu0
      %6595 = vmatprep.mubr.bf16.mxu0 0
      %6596 = vmatmul.mubr.bf16.gmra.mrb[0].mxu0 %v5892
      %v6597 = vpop.f32.mrb[0].mxu0
      %v6598 = vadd.f32 %v6469, %v6597
      %v6599 = vpop.f32.mrb[0].mxu0
      %v6600 = vpop.f32.mrb[0].mxu0
      %v6601 = vadd.f32 %v6472, %v6600
      %v6602 = vpop.f32.mrb[0].mxu0
      %6603 = vmatprep.mubr.bf16.mxu0 0
      %6604 = vmatmul.mubr.bf16.gmra.mrb[0].mxu0 %v5897
      %v6605 = vpop.f32.mrb[0].mxu0
      %v6606 = vadd.f32 %v6477, %v6605
      %v6607 = vpop.f32.mrb[0].mxu0
      %v6608 = vpop.f32.mrb[0].mxu0
      %v6609 = vadd.f32 %v6480, %v6608
      %v6610 = vpop.f32.mrb[0].mxu0
      %6611 = vdwg.mxu0
      %vm6612 = vcmp.gt.f32.partialorder %v6518, 0.0
      %vm6613 = vcmp.gt.f32.partialorder %v6521, 0.0
      %vm6614 = vcmp.gt.f32.partialorder %v6526, 0.0
      %vm6615 = vcmp.gt.f32.partialorder %v6529, 0.0
      %vm6616 = vcmp.gt.f32.partialorder %v6534, 0.0
      %vm6617 = vcmp.gt.f32.partialorder %v6537, 0.0
      %vm6618 = vcmp.gt.f32.partialorder %v6542, 0.0
      %vm6619 = vcmp.gt.f32.partialorder %v6545, 0.0
      %vm6620 = vcmp.gt.f32.partialorder %v6550, 0.0
      %vm6621 = vcmp.gt.f32.partialorder %v6553, 0.0
      %vm6622 = vcmp.gt.f32.partialorder %v6558, 0.0
      %vm6623 = vcmp.gt.f32.partialorder %v6561, 0.0
      %vm6624 = vcmp.gt.f32.partialorder %v6566, 0.0
      %vm6625 = vcmp.gt.f32.partialorder %v6569, 0.0
      %vm6626 = vcmp.gt.f32.partialorder %v6574, 0.0
      %vm6627 = vcmp.gt.f32.partialorder %v6577, 0.0
      %vm6628 = vcmp.gt.f32.partialorder %v6582, 0.0
      %vm6629 = vcmp.gt.f32.partialorder %v6585, 0.0
      %vm6630 = vcmp.gt.f32.partialorder %v6590, 0.0
      %vm6631 = vcmp.gt.f32.partialorder %v6593, 0.0
      %vm6632 = vcmp.gt.f32.partialorder %v6598, 0.0
      %vm6633 = vcmp.gt.f32.partialorder %v6601, 0.0
      %vm6634 = vcmp.gt.f32.partialorder %v6606, 0.0
      %vm6635 = vcmp.gt.f32.partialorder %v6609, 0.0
      %v6636 = vmul.f32 %v6518, 0.1
      %v6637 = vmul.f32 %v6521, 0.1
      %v6638 = vmul.f32 %v6526, 0.1
      %v6639 = vmul.f32 %v6529, 0.1
      %v6640 = vmul.f32 %v6534, 0.1
      %v6641 = vmul.f32 %v6537, 0.1
      %v6642 = vmul.f32 %v6542, 0.1
      %v6643 = vmul.f32 %v6545, 0.1
      %v6644 = vmul.f32 %v6550, 0.1
      %v6645 = vmul.f32 %v6553, 0.1
      %v6646 = vmul.f32 %v6558, 0.1
      %v6647 = vmul.f32 %v6561, 0.1
      %v6648 = vmul.f32 %v6566, 0.1
      %v6649 = vmul.f32 %v6569, 0.1
      %v6650 = vmul.f32 %v6574, 0.1
      %v6651 = vmul.f32 %v6577, 0.1
      %v6652 = vmul.f32 %v6582, 0.1
      %v6653 = vmul.f32 %v6585, 0.1
      %v6654 = vmul.f32 %v6590, 0.1
      %v6655 = vmul.f32 %v6593, 0.1
      %v6656 = vmul.f32 %v6598, 0.1
      %v6657 = vmul.f32 %v6601, 0.1
      %v6658 = vmul.f32 %v6606, 0.1
      %v6659 = vmul.f32 %v6609, 0.1
      %v6660 = vsel %vm6612, %v6518, %v6636
      %v6661 = vsel %vm6613, %v6521, %v6637
      %v6662 = vsel %vm6614, %v6526, %v6638
      %v6663 = vsel %vm6615, %v6529, %v6639
      %v6664 = vsel %vm6616, %v6534, %v6640
      %v6665 = vsel %vm6617, %v6537, %v6641
      %v6666 = vsel %vm6618, %v6542, %v6642
      %v6667 = vsel %vm6619, %v6545, %v6643
      %v6668 = vsel %vm6620, %v6550, %v6644
      %v6669 = vsel %vm6621, %v6553, %v6645
      %v6670 = vsel %vm6622, %v6558, %v6646
      %v6671 = vsel %vm6623, %v6561, %v6647
      %v6672 = vsel %vm6624, %v6566, %v6648
      %v6673 = vsel %vm6625, %v6569, %v6649
      %v6674 = vsel %vm6626, %v6574, %v6650
      %v6675 = vsel %vm6627, %v6577, %v6651
      %v6676 = vsel %vm6628, %v6582, %v6652
      %v6677 = vsel %vm6629, %v6585, %v6653
      %v6678 = vsel %vm6630, %v6590, %v6654
      %v6679 = vsel %vm6631, %v6593, %v6655
      %v6680 = vsel %vm6632, %v6598, %v6656
      %v6681 = vsel %vm6633, %v6601, %v6657
      %v6682 = vsel %vm6634, %v6606, %v6658
      %v6683 = vsel %vm6635, %v6609, %v6659
      %v6684 = vadd.f32 %v5694, %v6660
      %v6685 = vadd.f32 %v5695, %v6661
      %v6686 = vadd.f32 %v5696, %v6662
      %v6687 = vadd.f32 %v5697, %v6663
      %v6688 = vadd.f32 %v5698, %v6664
      %v6689 = vadd.f32 %v5699, %v6665
      %v6690 = vadd.f32 %v5700, %v6666
      %v6691 = vadd.f32 %v5701, %v6667
      %v6692 = vadd.f32 %v5702, %v6668
      %v6693 = vadd.f32 %v5703, %v6669
      %v6694 = vadd.f32 %v5704, %v6670
      %v6695 = vadd.f32 %v5705, %v6671
      %v6696 = vadd.f32 %v5706, %v6672
      %v6697 = vadd.f32 %v5707, %v6673
      %v6698 = vadd.f32 %v5708, %v6674
      %v6699 = vadd.f32 %v5709, %v6675
      %v6700 = vadd.f32 %v5710, %v6676
      %v6701 = vadd.f32 %v5711, %v6677
      %v6702 = vadd.f32 %v5712, %v6678
      %v6703 = vadd.f32 %v5713, %v6679
      %v6704 = vadd.f32 %v5714, %v6680
      %v6705 = vadd.f32 %v5715, %v6681
      %v6706 = vadd.f32 %v5716, %v6682
      %v6707 = vadd.f32 %v5717, %v6683
      %v6708 = vpack.c.bf16 %v6685, %v6684
      %v6709 = vpack.c.bf16 %v6687, %v6686
      %v6710 = vpack.c.bf16 %v6689, %v6688
      %v6711 = vpack.c.bf16 %v6691, %v6690
      %v6712 = vpack.c.bf16 %v6693, %v6692
      %v6713 = vpack.c.bf16 %v6695, %v6694
      %v6714 = vpack.c.bf16 %v6697, %v6696
      %v6715 = vpack.c.bf16 %v6699, %v6698
      %v6716 = vpack.c.bf16 %v6701, %v6700
      %v6717 = vpack.c.bf16 %v6703, %v6702
      %v6718 = vpack.c.bf16 %v6705, %v6704
      %v6719 = vpack.c.bf16 %v6707, %v6706
      %v6720 = vld [vmem:[%s59] sm:$0xff]
      %v6721 = vld [vmem:[%s59 + $0x8] sm:$0xf]
      %v6722 = vld [vmem:[%s59 + $0xc] sm:$0xff]
      %v6723 = vld [vmem:[%s59 + $0x14] sm:$0xf]
      %v6724 = vld [vmem:[%s59 + $0x18] sm:$0xff]
      %v6725 = vld [vmem:[%s59 + $0x20] sm:$0xf]
      %v6726 = vld [vmem:[%s59 + $0x24] sm:$0xff]
      %v6727 = vld [vmem:[%s59 + $0x2c] sm:$0xf]
      %v6728 = vld [vmem:[%s59 + $0x30] sm:$0xff]
      %v6729 = vld [vmem:[%s59 + $0x38] sm:$0xf]
      %v6730 = vld [vmem:[%s59 + $0x3c] sm:$0xff]
      %v6731 = vld [vmem:[%s59 + $0x44] sm:$0xf]
      %v6732 = vld [vmem:[%s59 + $0x48] sm:$0xff]
      %v6733 = vld [vmem:[%s59 + $0x50] sm:$0xf]
      %v6734 = vld [vmem:[%s59 + $0x54] sm:$0xff]
      %v6735 = vld [vmem:[%s59 + $0x5c] sm:$0xf]
      %v6736 = vld [vmem:[%s59 + $0x60] sm:$0xff]
      %v6737 = vld [vmem:[%s59 + $0x68] sm:$0xf]
      %v6738 = vld [vmem:[%s59 + $0x6c] sm:$0xff]
      %v6739 = vld [vmem:[%s59 + $0x74] sm:$0xf]
      %v6740 = vld [vmem:[%s59 + $0x78] sm:$0xff]
      %v6741 = vld [vmem:[%s59 + $0x80] sm:$0xf]
      %v6742 = vld [vmem:[%s59 + $0x84] sm:$0xff]
      %v6743 = vld [vmem:[%s59 + $0x8c] sm:$0xf]
      %v6744 = vld [vmem:[%s59 + $0x90] sm:$0xff]
      %v6745 = vld [vmem:[%s59 + $0x98] sm:$0xf]
      %v6746 = vld [vmem:[%s59 + $0x9c] sm:$0xff]
      %v6747 = vld [vmem:[%s59 + $0xa4] sm:$0xf]
      %v6748 = vld [vmem:[%s59 + $0xa8] sm:$0xff]
      %v6749 = vld [vmem:[%s59 + $0xb0] sm:$0xf]
      %v6750 = vld [vmem:[%s59 + $0xb4] sm:$0xff]
      %v6751 = vld [vmem:[%s59 + $0xbc] sm:$0xf]
      %v6752 = vld [vmem:[%s61] sm:$0x7]
      %v6754 = vlaneseq
      %v6755 = vshrl.u32 %v6754, 7
      %v6756 = vsub.s32 0, %v6755
      %v6757 = vrot.slane %v6752, %v6756
      %v6758 = vlaneseq
      %v6759 = vshrl.u32 %v6758, 7
      %v6760 = vsub.s32 1, %v6759
      %v6761 = vrot.slane %v6752, %v6760
      %v6762 = vlaneseq
      %v6763 = vshrl.u32 %v6762, 7
      %v6764 = vsub.s32 2, %v6763
      %v6765 = vrot.slane %v6752, %v6764
      %v6801 = vunpack.c.l.b16 %v6720
      %v6802 = vunpack.c.h.b16 %v6720
      %v6803 = vunpack.c.l.b16 %v6721
      %v6804 = vunpack.c.l.b16 %v6722
      %v6805 = vunpack.c.h.b16 %v6722
      %v6806 = vunpack.c.l.b16 %v6723
      %v6807 = vunpack.c.l.b16 %v6724
      %v6808 = vunpack.c.h.b16 %v6724
      %v6809 = vunpack.c.l.b16 %v6725
      %v6810 = vunpack.c.l.b16 %v6726
      %v6811 = vunpack.c.h.b16 %v6726
      %v6812 = vunpack.c.l.b16 %v6727
      %v6813 = vunpack.c.l.b16 %v6728
      %v6814 = vunpack.c.h.b16 %v6728
      %v6815 = vunpack.c.l.b16 %v6729
      %v6816 = vunpack.c.l.b16 %v6730
      %v6817 = vunpack.c.h.b16 %v6730
      %v6818 = vunpack.c.l.b16 %v6731
      %v6819 = vunpack.c.l.b16 %v6732
      %v6820 = vunpack.c.h.b16 %v6732
      %v6821 = vunpack.c.l.b16 %v6733
      %v6822 = vunpack.c.l.b16 %v6734
      %v6823 = vunpack.c.h.b16 %v6734
      %v6824 = vunpack.c.l.b16 %v6735
      %v6825 = vunpack.c.l.b16 %v6736
      %v6826 = vunpack.c.h.b16 %v6736
      %v6827 = vunpack.c.l.b16 %v6737
      %v6828 = vunpack.c.l.b16 %v6738
      %v6829 = vunpack.c.h.b16 %v6738
      %v6830 = vunpack.c.l.b16 %v6739
      %v6831 = vunpack.c.l.b16 %v6740
      %v6832 = vunpack.c.h.b16 %v6740
      %v6833 = vunpack.c.l.b16 %v6741
      %v6834 = vunpack.c.l.b16 %v6742
      %v6835 = vunpack.c.h.b16 %v6742
      %v6836 = vunpack.c.l.b16 %v6743
      %v6837 = vunpack.c.l.b16 %v6744
      %v6838 = vunpack.c.h.b16 %v6744
      %v6839 = vunpack.c.l.b16 %v6745
      %v6840 = vunpack.c.l.b16 %v6746
      %v6841 = vunpack.c.h.b16 %v6746
      %v6842 = vunpack.c.l.b16 %v6747
      %v6843 = vunpack.c.l.b16 %v6748
      %v6844 = vunpack.c.h.b16 %v6748
      %v6845 = vunpack.c.l.b16 %v6749
      %v6846 = vunpack.c.l.b16 %v6750
      %v6847 = vunpack.c.h.b16 %v6750
      %v6848 = vunpack.c.l.b16 %v6751
      %v6849 = vpack.c.b16 %v6804, %v6801
      %v6850 = vpack.c.b16 %v6805, %v6802
      %v6851 = vpack.c.b16 %v6806, %v6803
      %v6852 = vpack.c.b16 %v6810, %v6807
      %v6853 = vpack.c.b16 %v6811, %v6808
      %v6854 = vpack.c.b16 %v6812, %v6809
      %v6855 = vpack.c.b16 %v6816, %v6813
      %v6856 = vpack.c.b16 %v6817, %v6814
      %v6857 = vpack.c.b16 %v6818, %v6815
      %v6858 = vpack.c.b16 %v6822, %v6819
      %v6859 = vpack.c.b16 %v6823, %v6820
      %v6860 = vpack.c.b16 %v6824, %v6821
      %v6861 = vpack.c.b16 %v6828, %v6825
      %v6862 = vpack.c.b16 %v6829, %v6826
      %v6863 = vpack.c.b16 %v6830, %v6827
      %v6864 = vpack.c.b16 %v6834, %v6831
      %v6865 = vpack.c.b16 %v6835, %v6832
      %v6866 = vpack.c.b16 %v6836, %v6833
      %v6867 = vpack.c.b16 %v6840, %v6837
      %v6868 = vpack.c.b16 %v6841, %v6838
      %v6869 = vpack.c.b16 %v6842, %v6839
      %v6870 = vpack.c.b16 %v6846, %v6843
      %v6871 = vpack.c.b16 %v6847, %v6844
      %v6872 = vpack.c.b16 %v6848, %v6845
      %6897 = vmatprep.subr.bf16.mxu0 %v6850
      %6898 = vmatpush1.bf16.msra.mxu0 %v6849
      %6899 = vmatprep.subr.bf16.mxu0 %v6853
      %6900 = vmatpush1.bf16.msra.mxu0 %v6852
      %6901 = vmatprep.subr.bf16.mxu0 %v6856
      %6902 = vmatpush1.bf16.msra.mxu0 %v6855
      %6903 = vmatprep.subr.bf16.mxu0 %v6859
      %6904 = vmatpush1.bf16.msra.mxu0 %v6858
      %6905 = vmatprep.subr.bf16.mxu0 %v6862
      %6906 = vmatpush1.bf16.msra.mxu0 %v6861
      %6907 = vmatprep.subr.bf16.mxu0 %v6865
      %6908 = vmatpush1.bf16.msra.mxu0 %v6864
      %6909 = vmatprep.subr.bf16.mxu0 %v6868
      %6910 = vmatpush1.bf16.msra.mxu0 %v6867
      %6911 = vmatprep.subr.bf16.mxu0 %v6871
      %6912 = vmatpush1.bf16.msra.mxu0 %v6870
      %6913 = vmatprep.subr.bf16.mxu0 0
      %6914 = vmatpush1.bf16.msra.mxu0 0
      %6915 = vmatprep.subr.bf16.mxu0 0
      %6916 = vmatpush1.bf16.msra.mxu0 0
      %6917 = vmatprep.subr.bf16.mxu0 0
      %6918 = vmatpush1.bf16.msra.mxu0 0
      %6919 = vmatprep.subr.bf16.mxu0 0
      %6920 = vmatpush1.bf16.msra.mxu0 0
      %6921 = vmatprep.subr.bf16.mxu0 0
      %6922 = vmatpush1.bf16.msra.mxu0 0
      %6923 = vmatprep.subr.bf16.mxu0 0
      %6924 = vmatpush1.bf16.msra.mxu0 0
      %6925 = vmatprep.subr.bf16.mxu0 0
      %6926 = vmatpush1.bf16.msra.mxu0 0
      %6927 = vmatprep.subr.bf16.mxu0 0
      %6928 = vmatpush1.bf16.msra.mxu0 0
      %6929 = vmatprep.mubr.bf16.mxu0 0
      %6930 = vmatmul.mubr.bf16.gmra.mrb[0].mxu0 %v6708
      %v6931 = vpop.f32.mrb[0].mxu0
      %v6932 = vadd.f32 %v6757, %v6931
      %v6933 = vpop.f32.mrb[0].mxu0
      %v6934 = vadd.f32 %v6761, %v6933
      %v6935 = vpop.f32.mrb[0].mxu0
      %v6936 = vadd.f32 %v6757, %v6935
      %v6937 = vpop.f32.mrb[0].mxu0
      %v6938 = vadd.f32 %v6761, %v6937
      %6939 = vmatprep.mubr.bf16.mxu0 0
      %6940 = vmatmul.mubr.bf16.gmra.mrb[0].mxu0 %v6709
      %v6941 = vpop.f32.mrb[0].mxu0
      %v6942 = vadd.f32 %v6757, %v6941
      %v6943 = vpop.f32.mrb[0].mxu0
      %v6944 = vadd.f32 %v6761, %v6943
      %v6945 = vpop.f32.mrb[0].mxu0
      %v6946 = vadd.f32 %v6757, %v6945
      %v6947 = vpop.f32.mrb[0].mxu0
      %v6948 = vadd.f32 %v6761, %v6947
      %6949 = vmatprep.mubr.bf16.mxu0 0
      %6950 = vmatmul.mubr.bf16.gmra.mrb[0].mxu0 %v6710
      %v6951 = vpop.f32.mrb[0].mxu0
      %v6952 = vadd.f32 %v6757, %v6951
      %v6953 = vpop.f32.mrb[0].mxu0
      %v6954 = vadd.f32 %v6761, %v6953
      %v6955 = vpop.f32.mrb[0].mxu0
      %v6956 = vadd.f32 %v6757, %v6955
      %v6957 = vpop.f32.mrb[0].mxu0
      %v6958 = vadd.f32 %v6761, %v6957
      %6959 = vmatprep.mubr.bf16.mxu0 0
      %6960 = vmatmul.mubr.bf16.gmra.mrb[0].mxu0 %v6711
      %v6961 = vpop.f32.mrb[0].mxu0
      %v6962 = vadd.f32 %v6757, %v6961
      %v6963 = vpop.f32.mrb[0].mxu0
      %v6964 = vadd.f32 %v6761, %v6963
      %v6965 = vpop.f32.mrb[0].mxu0
      %v6966 = vadd.f32 %v6757, %v6965
      %v6967 = vpop.f32.mrb[0].mxu0
      %v6968 = vadd.f32 %v6761, %v6967
      %6969 = vmatprep.mubr.bf16.mxu0 0
      %6970 = vmatmul.mubr.bf16.gmra.mrb[0].mxu0 %v6712
      %v6971 = vpop.f32.mrb[0].mxu0
      %v6972 = vadd.f32 %v6757, %v6971
      %v6973 = vpop.f32.mrb[0].mxu0
      %v6974 = vadd.f32 %v6761, %v6973
      %v6975 = vpop.f32.mrb[0].mxu0
      %v6976 = vadd.f32 %v6757, %v6975
      %v6977 = vpop.f32.mrb[0].mxu0
      %v6978 = vadd.f32 %v6761, %v6977
      %6979 = vmatprep.mubr.bf16.mxu0 0
      %6980 = vmatmul.mubr.bf16.gmra.mrb[0].mxu0 %v6713
      %v6981 = vpop.f32.mrb[0].mxu0
      %v6982 = vadd.f32 %v6757, %v6981
      %v6983 = vpop.f32.mrb[0].mxu0
      %v6984 = vadd.f32 %v6761, %v6983
      %v6985 = vpop.f32.mrb[0].mxu0
      %v6986 = vadd.f32 %v6757, %v6985
      %v6987 = vpop.f32.mrb[0].mxu0
      %v6988 = vadd.f32 %v6761, %v6987
      %6989 = vmatprep.mubr.bf16.mxu0 0
      %6990 = vmatmul.mubr.bf16.gmra.mrb[0].mxu0 %v6714
      %v6991 = vpop.f32.mrb[0].mxu0
      %v6992 = vadd.f32 %v6757, %v6991
      %v6993 = vpop.f32.mrb[0].mxu0
      %v6994 = vadd.f32 %v6761, %v6993
      %v6995 = vpop.f32.mrb[0].mxu0
      %v6996 = vadd.f32 %v6757, %v6995
      %v6997 = vpop.f32.mrb[0].mxu0
      %v6998 = vadd.f32 %v6761, %v6997
      %6999 = vmatprep.mubr.bf16.mxu0 0
      %7000 = vmatmul.mubr.bf16.gmra.mrb[0].mxu0 %v6715
      %v7001 = vpop.f32.mrb[0].mxu0
      %v7002 = vadd.f32 %v6757, %v7001
      %v7003 = vpop.f32.mrb[0].mxu0
      %v7004 = vadd.f32 %v6761, %v7003
      %v7005 = vpop.f32.mrb[0].mxu0
      %v7006 = vadd.f32 %v6757, %v7005
      %v7007 = vpop.f32.mrb[0].mxu0
      %v7008 = vadd.f32 %v6761, %v7007
      %7009 = vmatprep.mubr.bf16.mxu0 0
      %7010 = vmatmul.mubr.bf16.gmra.mrb[0].mxu0 %v6716
      %v7011 = vpop.f32.mrb[0].mxu0
      %v7012 = vadd.f32 %v6757, %v7011
      %v7013 = vpop.f32.mrb[0].mxu0
      %v7014 = vadd.f32 %v6761, %v7013
      %v7015 = vpop.f32.mrb[0].mxu0
      %v7016 = vadd.f32 %v6757, %v7015
      %v7017 = vpop.f32.mrb[0].mxu0
      %v7018 = vadd.f32 %v6761, %v7017
      %7019 = vmatprep.mubr.bf16.mxu0 0
      %7020 = vmatmul.mubr.bf16.gmra.mrb[0].mxu0 %v6717
      %v7021 = vpop.f32.mrb[0].mxu0
      %v7022 = vadd.f32 %v6757, %v7021
      %v7023 = vpop.f32.mrb[0].mxu0
      %v7024 = vadd.f32 %v6761, %v7023
      %v7025 = vpop.f32.mrb[0].mxu0
      %v7026 = vadd.f32 %v6757, %v7025
      %v7027 = vpop.f32.mrb[0].mxu0
      %v7028 = vadd.f32 %v6761, %v7027
      %7029 = vmatprep.mubr.bf16.mxu0 0
      %7030 = vmatmul.mubr.bf16.gmra.mrb[0].mxu0 %v6718
      %v7031 = vpop.f32.mrb[0].mxu0
      %v7032 = vadd.f32 %v6757, %v7031
      %v7033 = vpop.f32.mrb[0].mxu0
      %v7034 = vadd.f32 %v6761, %v7033
      %v7035 = vpop.f32.mrb[0].mxu0
      %v7036 = vadd.f32 %v6757, %v7035
      %v7037 = vpop.f32.mrb[0].mxu0
      %v7038 = vadd.f32 %v6761, %v7037
      %7039 = vmatprep.mubr.bf16.mxu0 0
      %7040 = vmatmul.mubr.bf16.gmra.mrb[0].mxu0 %v6719
      %v7041 = vpop.f32.mrb[0].mxu0
      %v7042 = vadd.f32 %v6757, %v7041
      %v7043 = vpop.f32.mrb[0].mxu0
      %v7044 = vadd.f32 %v6761, %v7043
      %v7045 = vpop.f32.mrb[0].mxu0
      %v7046 = vadd.f32 %v6757, %v7045
      %v7047 = vpop.f32.mrb[0].mxu0
      %v7048 = vadd.f32 %v6761, %v7047
      %7049 = vdwg.mxu0
      %7050 = vmatprep.subr.bf16.mxu0 0
      %7051 = vmatpush1.bf16.msra.mxu0 %v6851
      %7052 = vmatprep.subr.bf16.mxu0 0
      %7053 = vmatpush1.bf16.msra.mxu0 %v6854
      %7054 = vmatprep.subr.bf16.mxu0 0
      %7055 = vmatpush1.bf16.msra.mxu0 %v6857
      %7056 = vmatprep.subr.bf16.mxu0 0
      %7057 = vmatpush1.bf16.msra.mxu0 %v6860
      %7058 = vmatprep.subr.bf16.mxu0 0
      %7059 = vmatpush1.bf16.msra.mxu0 %v6863
      %7060 = vmatprep.subr.bf16.mxu0 0
      %7061 = vmatpush1.bf16.msra.mxu0 %v6866
      %7062 = vmatprep.subr.bf16.mxu0 0
      %7063 = vmatpush1.bf16.msra.mxu0 %v6869
      %7064 = vmatprep.subr.bf16.mxu0 0
      %7065 = vmatpush1.bf16.msra.mxu0 %v6872
      %7066 = vmatprep.subr.bf16.mxu0 0
      %7067 = vmatpush1.bf16.msra.mxu0 0
      %7068 = vmatprep.subr.bf16.mxu0 0
      %7069 = vmatpush1.bf16.msra.mxu0 0
      %7070 = vmatprep.subr.bf16.mxu0 0
      %7071 = vmatpush1.bf16.msra.mxu0 0
      %7072 = vmatprep.subr.bf16.mxu0 0
      %7073 = vmatpush1.bf16.msra.mxu0 0
      %7074 = vmatprep.subr.bf16.mxu0 0
      %7075 = vmatpush1.bf16.msra.mxu0 0
      %7076 = vmatprep.subr.bf16.mxu0 0
      %7077 = vmatpush1.bf16.msra.mxu0 0
      %7078 = vmatprep.subr.bf16.mxu0 0
      %7079 = vmatpush1.bf16.msra.mxu0 0
      %7080 = vmatprep.subr.bf16.mxu0 0
      %7081 = vmatpush1.bf16.msra.mxu0 0
      %7082 = vmatprep.mubr.bf16.mxu0 0
      %7083 = vmatmul.mubr.bf16.gmra.mrb[0].mxu0 %v6708
      %v7084 = vpop.f32.mrb[0].mxu0
      %v7085 = vadd.f32 %v6765, %v7084
      %v7086 = vpop.f32.mrb[0].mxu0
      %v7087 = vpop.f32.mrb[0].mxu0
      %v7088 = vadd.f32 %v6765, %v7087
      %v7089 = vpop.f32.mrb[0].mxu0
      %7090 = vmatprep.mubr.bf16.mxu0 0
      %7091 = vmatmul.mubr.bf16.gmra.mrb[0].mxu0 %v6709
      %v7092 = vpop.f32.mrb[0].mxu0
      %v7093 = vadd.f32 %v6765, %v7092
      %v7094 = vpop.f32.mrb[0].mxu0
      %v7095 = vpop.f32.mrb[0].mxu0
      %v7096 = vadd.f32 %v6765, %v7095
      %v7097 = vpop.f32.mrb[0].mxu0
      %7098 = vmatprep.mubr.bf16.mxu0 0
      %7099 = vmatmul.mubr.bf16.gmra.mrb[0].mxu0 %v6710
      %v7100 = vpop.f32.mrb[0].mxu0
      %v7101 = vadd.f32 %v6765, %v7100
      %v7102 = vpop.f32.mrb[0].mxu0
      %v7103 = vpop.f32.mrb[0].mxu0
      %v7104 = vadd.f32 %v6765, %v7103
      %v7105 = vpop.f32.mrb[0].mxu0
      %7106 = vmatprep.mubr.bf16.mxu0 0
      %7107 = vmatmul.mubr.bf16.gmra.mrb[0].mxu0 %v6711
      %v7108 = vpop.f32.mrb[0].mxu0
      %v7109 = vadd.f32 %v6765, %v7108
      %v7110 = vpop.f32.mrb[0].mxu0
      %v7111 = vpop.f32.mrb[0].mxu0
      %v7112 = vadd.f32 %v6765, %v7111
      %v7113 = vpop.f32.mrb[0].mxu0
      %7114 = vmatprep.mubr.bf16.mxu0 0
      %7115 = vmatmul.mubr.bf16.gmra.mrb[0].mxu0 %v6712
      %v7116 = vpop.f32.mrb[0].mxu0
      %v7117 = vadd.f32 %v6765, %v7116
      %v7118 = vpop.f32.mrb[0].mxu0
      %v7119 = vpop.f32.mrb[0].mxu0
      %v7120 = vadd.f32 %v6765, %v7119
      %v7121 = vpop.f32.mrb[0].mxu0
      %7122 = vmatprep.mubr.bf16.mxu0 0
      %7123 = vmatmul.mubr.bf16.gmra.mrb[0].mxu0 %v6713
      %v7124 = vpop.f32.mrb[0].mxu0
      %v7125 = vadd.f32 %v6765, %v7124
      %v7126 = vpop.f32.mrb[0].mxu0
      %v7127 = vpop.f32.mrb[0].mxu0
      %v7128 = vadd.f32 %v6765, %v7127
      %v7129 = vpop.f32.mrb[0].mxu0
      %7130 = vmatprep.mubr.bf16.mxu0 0
      %7131 = vmatmul.mubr.bf16.gmra.mrb[0].mxu0 %v6714
      %v7132 = vpop.f32.mrb[0].mxu0
      %v7133 = vadd.f32 %v6765, %v7132
      %v7134 = vpop.f32.mrb[0].mxu0
      %v7135 = vpop.f32.mrb[0].mxu0
      %v7136 = vadd.f32 %v6765, %v7135
      %v7137 = vpop.f32.mrb[0].mxu0
      %7138 = vmatprep.mubr.bf16.mxu0 0
      %7139 = vmatmul.mubr.bf16.gmra.mrb[0].mxu0 %v6715
      %v7140 = vpop.f32.mrb[0].mxu0
      %v7141 = vadd.f32 %v6765, %v7140
      %v7142 = vpop.f32.mrb[0].mxu0
      %v7143 = vpop.f32.mrb[0].mxu0
      %v7144 = vadd.f32 %v6765, %v7143
      %v7145 = vpop.f32.mrb[0].mxu0
      %7146 = vmatprep.mubr.bf16.mxu0 0
      %7147 = vmatmul.mubr.bf16.gmra.mrb[0].mxu0 %v6716
      %v7148 = vpop.f32.mrb[0].mxu0
      %v7149 = vadd.f32 %v6765, %v7148
      %v7150 = vpop.f32.mrb[0].mxu0
      %v7151 = vpop.f32.mrb[0].mxu0
      %v7152 = vadd.f32 %v6765, %v7151
      %v7153 = vpop.f32.mrb[0].mxu0
      %7154 = vmatprep.mubr.bf16.mxu0 0
      %7155 = vmatmul.mubr.bf16.gmra.mrb[0].mxu0 %v6717
      %v7156 = vpop.f32.mrb[0].mxu0
      %v7157 = vadd.f32 %v6765, %v7156
      %v7158 = vpop.f32.mrb[0].mxu0
      %v7159 = vpop.f32.mrb[0].mxu0
      %v7160 = vadd.f32 %v6765, %v7159
      %v7161 = vpop.f32.mrb[0].mxu0
      %7162 = vmatprep.mubr.bf16.mxu0 0
      %7163 = vmatmul.mubr.bf16.gmra.mrb[0].mxu0 %v6718
      %v7164 = vpop.f32.mrb[0].mxu0
      %v7165 = vadd.f32 %v6765, %v7164
      %v7166 = vpop.f32.mrb[0].mxu0
      %v7167 = vpop.f32.mrb[0].mxu0
      %v7168 = vadd.f32 %v6765, %v7167
      %v7169 = vpop.f32.mrb[0].mxu0
      %7170 = vmatprep.mubr.bf16.mxu0 0
      %7171 = vmatmul.mubr.bf16.gmra.mrb[0].mxu0 %v6719
      %v7172 = vpop.f32.mrb[0].mxu0
      %v7173 = vadd.f32 %v6765, %v7172
      %v7174 = vpop.f32.mrb[0].mxu0
      %v7175 = vpop.f32.mrb[0].mxu0
      %v7176 = vadd.f32 %v6765, %v7175
      %v7177 = vpop.f32.mrb[0].mxu0
      %7178 = vdwg.mxu0
      %v7179 = vld [vmem:[%s1379] sm:$0x3]
      %v7180 = vsub.f32 %v7179, 1.0
      %v7181 = vmul.f32 %v7180, 1e+30
      %v7182 = vpack.c.bf16 %v6936, %v6932
      %v7183 = vpack.c.bf16 %v6946, %v6942
      %v7184 = vpack.c.bf16 %v6956, %v6952
      %v7185 = vpack.c.bf16 %v6966, %v6962
      %v7186 = vpack.c.bf16 %v6976, %v6972
      %v7187 = vpack.c.bf16 %v6986, %v6982
      %v7188 = vpack.c.bf16 %v6996, %v6992
      %v7189 = vpack.c.bf16 %v7006, %v7002
      %v7190 = vpack.c.bf16 %v7016, %v7012
      %v7191 = vpack.c.bf16 %v7026, %v7022
      %v7192 = vpack.c.bf16 %v7036, %v7032
      %v7193 = vpack.c.bf16 %v7046, %v7042
      %v7194 = vpack.c.bf16 %v6938, %v6934
      %v7195 = vpack.c.bf16 %v6948, %v6944
      %v7196 = vpack.c.bf16 %v6958, %v6954
      %v7197 = vpack.c.bf16 %v6968, %v6964
      %v7198 = vpack.c.bf16 %v6978, %v6974
      %v7199 = vpack.c.bf16 %v6988, %v6984
      %v7200 = vpack.c.bf16 %v6998, %v6994
      %v7201 = vpack.c.bf16 %v7008, %v7004
      %v7202 = vpack.c.bf16 %v7018, %v7014
      %v7203 = vpack.c.bf16 %v7028, %v7024
      %v7204 = vpack.c.bf16 %v7038, %v7034
      %v7205 = vpack.c.bf16 %v7048, %v7044
      %v7206 = vpack.c.bf16 %v7088, %v7085
      %v7207 = vpack.c.bf16 %v7096, %v7093
      %v7208 = vpack.c.bf16 %v7104, %v7101
      %v7209 = vpack.c.bf16 %v7112, %v7109
      %v7210 = vpack.c.bf16 %v7120, %v7117
      %v7211 = vpack.c.bf16 %v7128, %v7125
      %v7212 = vpack.c.bf16 %v7136, %v7133
      %v7213 = vpack.c.bf16 %v7144, %v7141
      %v7214 = vpack.c.bf16 %v7152, %v7149
      %v7215 = vpack.c.bf16 %v7160, %v7157
      %v7216 = vpack.c.bf16 %v7168, %v7165
      %v7217 = vpack.c.bf16 %v7176, %v7173
      %vm7218 = vcmask 523264
      %v7220 = vsel %vm7218, %v7182, 0
      %v7223 = vsel %vm7218, %v7183, 0
      %v7226 = vsel %vm7218, %v7184, 0
      %v7229 = vsel %vm7218, %v7185, 0
      %v7232 = vsel %vm7218, %v7186, 0
      %v7235 = vsel %vm7218, %v7187, 0
      %v7238 = vsel %vm7218, %v7188, 0
      %v7241 = vsel %vm7218, %v7189, 0
      %v7244 = vsel %vm7218, %v7190, 0
      %v7247 = vsel %vm7218, %v7191, 0
      %v7250 = vsel %vm7218, %v7192, 0
      %v7253 = vsel %vm7218, %v7193, 0
      %v7256 = vsel %vm7218, %v7194, 0
      %v7259 = vsel %vm7218, %v7195, 0
      %v7262 = vsel %vm7218, %v7196, 0
      %v7265 = vsel %vm7218, %v7197, 0
      %v7268 = vsel %vm7218, %v7198, 0
      %v7271 = vsel %vm7218, %v7199, 0
      %v7274 = vsel %vm7218, %v7200, 0
      %v7277 = vsel %vm7218, %v7201, 0
      %v7280 = vsel %vm7218, %v7202, 0
      %v7283 = vsel %vm7218, %v7203, 0
      %v7286 = vsel %vm7218, %v7204, 0
      %v7289 = vsel %vm7218, %v7205, 0
      %7291 = vmatprep.subr.bf16.mxu0 0
      %7292 = vmatpush1.bf16.xpose.msra.mxu0 %v7256
      %7293 = vmatprep.subr.bf16.mxu0 0
      %7294 = vmatpush1.bf16.xpose.msra.mxu0 %v7259
      %7295 = vmatprep.subr.bf16.mxu0 0
      %7296 = vmatpush1.bf16.xpose.msra.mxu0 %v7262
      %7297 = vmatprep.subr.bf16.mxu0 0
      %7298 = vmatpush1.bf16.xpose.msra.mxu0 %v7265
      %7299 = vmatprep.subr.bf16.mxu0 0
      %7300 = vmatpush1.bf16.xpose.msra.mxu0 %v7268
      %7301 = vmatprep.subr.bf16.mxu0 0
      %7302 = vmatpush1.bf16.xpose.msra.mxu0 %v7271
      %7303 = vmatprep.subr.bf16.mxu0 0
      %7304 = vmatpush1.bf16.xpose.msra.mxu0 %v7274
      %7305 = vmatprep.subr.bf16.mxu0 0
      %7306 = vmatpush1.bf16.xpose.msra.mxu0 %v7277
      %7307 = vmatprep.subr.bf16.mxu0 0
      %7308 = vmatpush1.bf16.xpose.msra.mxu0 %v7280
      %7309 = vmatprep.subr.bf16.mxu0 0
      %7310 = vmatpush1.bf16.xpose.msra.mxu0 %v7283
      %7311 = vmatprep.subr.bf16.mxu0 0
      %7312 = vmatpush1.bf16.xpose.msra.mxu0 %v7286
      %7313 = vmatprep.subr.bf16.mxu0 0
      %7314 = vmatpush1.bf16.xpose.msra.mxu0 %v7289
      %7315 = vmatprep.subr.bf16.mxu0 0
      %7316 = vmatpush1.bf16.xpose.msra.mxu0 0
      %7317 = vmatprep.subr.bf16.mxu0 0
      %7318 = vmatpush1.bf16.xpose.msra.mxu0 0
      %7319 = vmatprep.subr.bf16.mxu0 0
      %7320 = vmatpush1.bf16.xpose.msra.mxu0 0
      %7321 = vmatprep.subr.bf16.mxu0 0
      %7322 = vmatpush1.bf16.xpose.msra.mxu0 0
      %7323 = vmatprep.mubr.bf16.mxu0 0
      %7324 = vmatmul.mubr.bf16.gmra.mrb[0].mxu0 %v7220
      %v7325 = vpop.f32.mrb[0].mxu0
      %v7326 = vadd.f32 0.0, %v7325
      %v7327 = vpop.f32.mrb[0].mxu0
      %v7328 = vadd.f32 0.0, %v7327
      %v7329 = vpop.f32.mrb[0].mxu0
      %v7330 = vadd.f32 0.0, %v7329
      %v7331 = vpop.f32.mrb[0].mxu0
      %v7332 = vadd.f32 0.0, %v7331
      %7333 = vmatprep.mubr.bf16.mxu0 0
      %7334 = vmatmul.mubr.bf16.gmra.mrb[0].mxu0 %v7223
      %v7335 = vpop.f32.mrb[0].mxu0
      %v7336 = vadd.f32 0.0, %v7335
      %v7337 = vpop.f32.mrb[0].mxu0
      %v7338 = vadd.f32 0.0, %v7337
      %v7339 = vpop.f32.mrb[0].mxu0
      %v7340 = vadd.f32 0.0, %v7339
      %v7341 = vpop.f32.mrb[0].mxu0
      %v7342 = vadd.f32 0.0, %v7341
      %7343 = vmatprep.mubr.bf16.mxu0 0
      %7344 = vmatmul.mubr.bf16.gmra.mrb[0].mxu0 %v7226
      %v7345 = vpop.f32.mrb[0].mxu0
      %v7346 = vadd.f32 0.0, %v7345
      %v7347 = vpop.f32.mrb[0].mxu0
      %v7348 = vadd.f32 0.0, %v7347
      %v7349 = vpop.f32.mrb[0].mxu0
      %v7350 = vadd.f32 0.0, %v7349
      %v7351 = vpop.f32.mrb[0].mxu0
      %v7352 = vadd.f32 0.0, %v7351
      %7353 = vmatprep.mubr.bf16.mxu0 0
      %7354 = vmatmul.mubr.bf16.gmra.mrb[0].mxu0 %v7229
      %v7355 = vpop.f32.mrb[0].mxu0
      %v7356 = vadd.f32 0.0, %v7355
      %v7357 = vpop.f32.mrb[0].mxu0
      %v7358 = vadd.f32 0.0, %v7357
      %v7359 = vpop.f32.mrb[0].mxu0
      %v7360 = vadd.f32 0.0, %v7359
      %v7361 = vpop.f32.mrb[0].mxu0
      %v7362 = vadd.f32 0.0, %v7361
      %7363 = vmatprep.mubr.bf16.mxu0 0
      %7364 = vmatmul.mubr.bf16.gmra.mrb[0].mxu0 %v7232
      %v7365 = vpop.f32.mrb[0].mxu0
      %v7366 = vadd.f32 0.0, %v7365
      %v7367 = vpop.f32.mrb[0].mxu0
      %v7368 = vadd.f32 0.0, %v7367
      %v7369 = vpop.f32.mrb[0].mxu0
      %v7370 = vadd.f32 0.0, %v7369
      %v7371 = vpop.f32.mrb[0].mxu0
      %v7372 = vadd.f32 0.0, %v7371
      %7373 = vmatprep.mubr.bf16.mxu0 0
      %7374 = vmatmul.mubr.bf16.gmra.mrb[0].mxu0 %v7235
      %v7375 = vpop.f32.mrb[0].mxu0
      %v7376 = vadd.f32 0.0, %v7375
      %v7377 = vpop.f32.mrb[0].mxu0
      %v7378 = vadd.f32 0.0, %v7377
      %v7379 = vpop.f32.mrb[0].mxu0
      %v7380 = vadd.f32 0.0, %v7379
      %v7381 = vpop.f32.mrb[0].mxu0
      %v7382 = vadd.f32 0.0, %v7381
      %7383 = vmatprep.mubr.bf16.mxu0 0
      %7384 = vmatmul.mubr.bf16.gmra.mrb[0].mxu0 %v7238
      %v7385 = vpop.f32.mrb[0].mxu0
      %v7386 = vadd.f32 0.0, %v7385
      %v7387 = vpop.f32.mrb[0].mxu0
      %v7388 = vadd.f32 0.0, %v7387
      %v7389 = vpop.f32.mrb[0].mxu0
      %v7390 = vadd.f32 0.0, %v7389
      %v7391 = vpop.f32.mrb[0].mxu0
      %v7392 = vadd.f32 0.0, %v7391
      %7393 = vmatprep.mubr.bf16.mxu0 0
      %7394 = vmatmul.mubr.bf16.gmra.mrb[0].mxu0 %v7241
      %v7395 = vpop.f32.mrb[0].mxu0
      %v7396 = vadd.f32 0.0, %v7395
      %v7397 = vpop.f32.mrb[0].mxu0
      %v7398 = vadd.f32 0.0, %v7397
      %v7399 = vpop.f32.mrb[0].mxu0
      %v7400 = vadd.f32 0.0, %v7399
      %v7401 = vpop.f32.mrb[0].mxu0
      %v7402 = vadd.f32 0.0, %v7401
      %7403 = vmatprep.mubr.bf16.mxu0 0
      %7404 = vmatmul.mubr.bf16.gmra.mrb[0].mxu0 %v7244
      %v7405 = vpop.f32.mrb[0].mxu0
      %v7406 = vadd.f32 0.0, %v7405
      %v7407 = vpop.f32.mrb[0].mxu0
      %v7408 = vadd.f32 0.0, %v7407
      %v7409 = vpop.f32.mrb[0].mxu0
      %v7410 = vadd.f32 0.0, %v7409
      %v7411 = vpop.f32.mrb[0].mxu0
      %v7412 = vadd.f32 0.0, %v7411
      %7413 = vmatprep.mubr.bf16.mxu0 0
      %7414 = vmatmul.mubr.bf16.gmra.mrb[0].mxu0 %v7247
      %v7415 = vpop.f32.mrb[0].mxu0
      %v7416 = vadd.f32 0.0, %v7415
      %v7417 = vpop.f32.mrb[0].mxu0
      %v7418 = vadd.f32 0.0, %v7417
      %v7419 = vpop.f32.mrb[0].mxu0
      %v7420 = vadd.f32 0.0, %v7419
      %v7421 = vpop.f32.mrb[0].mxu0
      %v7422 = vadd.f32 0.0, %v7421
      %7423 = vmatprep.mubr.bf16.mxu0 0
      %7424 = vmatmul.mubr.bf16.gmra.mrb[0].mxu0 %v7250
      %v7425 = vpop.f32.mrb[0].mxu0
      %v7426 = vadd.f32 0.0, %v7425
      %v7427 = vpop.f32.mrb[0].mxu0
      %v7428 = vadd.f32 0.0, %v7427
      %v7429 = vpop.f32.mrb[0].mxu0
      %v7430 = vadd.f32 0.0, %v7429
      %v7431 = vpop.f32.mrb[0].mxu0
      %v7432 = vadd.f32 0.0, %v7431
      %7433 = vmatprep.mubr.bf16.mxu0 0
      %7434 = vmatmul.mubr.bf16.gmra.mrb[0].mxu0 %v7253
      %v7435 = vpop.f32.mrb[0].mxu0
      %v7436 = vadd.f32 0.0, %v7435
      %v7437 = vpop.f32.mrb[0].mxu0
      %v7438 = vadd.f32 0.0, %v7437
      %v7439 = vpop.f32.mrb[0].mxu0
      %v7440 = vadd.f32 0.0, %v7439
      %v7441 = vpop.f32.mrb[0].mxu0
      %v7442 = vadd.f32 0.0, %v7441
      %7443 = vdwg.mxu0
      %v7444 = vmul.f32 %v7326, 0.088388346
      %v7445 = vmul.f32 %v7328, 0.088388346
      %v7446 = vmul.f32 %v7330, 0.088388346
      %v7447 = vmul.f32 %v7332, 0.088388346
      %v7448 = vmul.f32 %v7336, 0.088388346
      %v7449 = vmul.f32 %v7338, 0.088388346
      %v7450 = vmul.f32 %v7340, 0.088388346
      %v7451 = vmul.f32 %v7342, 0.088388346
      %v7452 = vmul.f32 %v7346, 0.088388346
      %v7453 = vmul.f32 %v7348, 0.088388346
      %v7454 = vmul.f32 %v7350, 0.088388346
      %v7455 = vmul.f32 %v7352, 0.088388346
      %v7456 = vmul.f32 %v7356, 0.088388346
      %v7457 = vmul.f32 %v7358, 0.088388346
      %v7458 = vmul.f32 %v7360, 0.088388346
      %v7459 = vmul.f32 %v7362, 0.088388346
      %v7460 = vmul.f32 %v7366, 0.088388346
      %v7461 = vmul.f32 %v7368, 0.088388346
      %v7462 = vmul.f32 %v7370, 0.088388346
      %v7463 = vmul.f32 %v7372, 0.088388346
      %v7464 = vmul.f32 %v7376, 0.088388346
      %v7465 = vmul.f32 %v7378, 0.088388346
      %v7466 = vmul.f32 %v7380, 0.088388346
      %v7467 = vmul.f32 %v7382, 0.088388346
      %v7468 = vmul.f32 %v7386, 0.088388346
      %v7469 = vmul.f32 %v7388, 0.088388346
      %v7470 = vmul.f32 %v7390, 0.088388346
      %v7471 = vmul.f32 %v7392, 0.088388346
      %v7472 = vmul.f32 %v7396, 0.088388346
      %v7473 = vmul.f32 %v7398, 0.088388346
      %v7474 = vmul.f32 %v7400, 0.088388346
      %v7475 = vmul.f32 %v7402, 0.088388346
      %v7476 = vmul.f32 %v7406, 0.088388346
      %v7477 = vmul.f32 %v7408, 0.088388346
      %v7478 = vmul.f32 %v7410, 0.088388346
      %v7479 = vmul.f32 %v7412, 0.088388346
      %v7480 = vmul.f32 %v7416, 0.088388346
      %v7481 = vmul.f32 %v7418, 0.088388346
      %v7482 = vmul.f32 %v7420, 0.088388346
      %v7483 = vmul.f32 %v7422, 0.088388346
      %v7484 = vmul.f32 %v7426, 0.088388346
      %v7485 = vmul.f32 %v7428, 0.088388346
      %v7486 = vmul.f32 %v7430, 0.088388346
      %v7487 = vmul.f32 %v7432, 0.088388346
      %v7488 = vmul.f32 %v7436, 0.088388346
      %v7489 = vmul.f32 %v7438, 0.088388346
      %v7490 = vmul.f32 %v7440, 0.088388346
      %v7491 = vmul.f32 %v7442, 0.088388346
      %v7493 = vlaneseq
      %v7494 = vshrl.u32 %v7493, 7
      %v7495 = vsub.s32 0, %v7494
      %v7496 = vrot.slane %v7181, %v7495
      %v7497 = vlaneseq
      %v7498 = vshrl.u32 %v7497, 7
      %v7499 = vsub.s32 1, %v7498
      %v7500 = vrot.slane %v7181, %v7499
      %v7503 = vadd.f32 %v7444, %v7496
      %v7504 = vadd.f32 %v7445, %v7500
      %v7505 = vadd.f32 %v7446, %v7496
      %v7506 = vadd.f32 %v7447, %v7500
      %v7507 = vadd.f32 %v7448, %v7496
      %v7508 = vadd.f32 %v7449, %v7500
      %v7509 = vadd.f32 %v7450, %v7496
      %v7510 = vadd.f32 %v7451, %v7500
      %v7511 = vadd.f32 %v7452, %v7496
      %v7512 = vadd.f32 %v7453, %v7500
      %v7513 = vadd.f32 %v7454, %v7496
      %v7514 = vadd.f32 %v7455, %v7500
      %v7515 = vadd.f32 %v7456, %v7496
      %v7516 = vadd.f32 %v7457, %v7500
      %v7517 = vadd.f32 %v7458, %v7496
      %v7518 = vadd.f32 %v7459, %v7500
      %v7519 = vadd.f32 %v7460, %v7496
      %v7520 = vadd.f32 %v7461, %v7500
      %v7521 = vadd.f32 %v7462, %v7496
      %v7522 = vadd.f32 %v7463, %v7500
      %v7523 = vadd.f32 %v7464, %v7496
      %v7524 = vadd.f32 %v7465, %v7500
      %v7525 = vadd.f32 %v7466, %v7496
      %v7526 = vadd.f32 %v7467, %v7500
      %v7527 = vadd.f32 %v7468, %v7496
      %v7528 = vadd.f32 %v7469, %v7500
      %v7529 = vadd.f32 %v7470, %v7496
      %v7530 = vadd.f32 %v7471, %v7500
      %v7531 = vadd.f32 %v7472, %v7496
      %v7532 = vadd.f32 %v7473, %v7500
      %v7533 = vadd.f32 %v7474, %v7496
      %v7534 = vadd.f32 %v7475, %v7500
      %v7535 = vadd.f32 %v7476, %v7496
      %v7536 = vadd.f32 %v7477, %v7500
      %v7537 = vadd.f32 %v7478, %v7496
      %v7538 = vadd.f32 %v7479, %v7500
      %v7539 = vadd.f32 %v7480, %v7496
      %v7540 = vadd.f32 %v7481, %v7500
      %v7541 = vadd.f32 %v7482, %v7496
      %v7542 = vadd.f32 %v7483, %v7500
      %v7543 = vadd.f32 %v7484, %v7496
      %v7544 = vadd.f32 %v7485, %v7500
      %v7545 = vadd.f32 %v7486, %v7496
      %v7546 = vadd.f32 %v7487, %v7500
      %v7547 = vadd.f32 %v7488, %v7496
      %v7548 = vadd.f32 %v7489, %v7500
      %v7549 = vadd.f32 %v7490, %v7496
      %v7550 = vadd.f32 %v7491, %v7500
      %v7551 = vsel %vm7218, %v7504, -inf
      %v7552 = vmax.f32 %v7503, %v7551
      %7553 = vmax.xlane.f32.xlu0 %v7552
      %v7554 = vpop.xlane.xlu0 %7553
      %v7555 = vsel %vm7218, %v7506, -inf
      %v7556 = vmax.f32 %v7505, %v7555
      %7557 = vmax.xlane.f32.xlu0 %v7556
      %v7558 = vpop.xlane.xlu0 %7557
      %v7559 = vsel %vm7218, %v7508, -inf
      %v7560 = vmax.f32 %v7507, %v7559
      %7561 = vmax.xlane.f32.xlu0 %v7560
      %v7562 = vpop.xlane.xlu0 %7561
      %v7563 = vsel %vm7218, %v7510, -inf
      %v7564 = vmax.f32 %v7509, %v7563
      %7565 = vmax.xlane.f32.xlu0 %v7564
      %v7566 = vpop.xlane.xlu0 %7565
      %v7567 = vsel %vm7218, %v7512, -inf
      %v7568 = vmax.f32 %v7511, %v7567
      %7569 = vmax.xlane.f32.xlu0 %v7568
      %v7570 = vpop.xlane.xlu0 %7569
      %v7571 = vsel %vm7218, %v7514, -inf
      %v7572 = vmax.f32 %v7513, %v7571
      %7573 = vmax.xlane.f32.xlu0 %v7572
      %v7574 = vpop.xlane.xlu0 %7573
      %v7575 = vsel %vm7218, %v7516, -inf
      %v7576 = vmax.f32 %v7515, %v7575
      %7577 = vmax.xlane.f32.xlu0 %v7576
      %v7578 = vpop.xlane.xlu0 %7577
      %v7579 = vsel %vm7218, %v7518, -inf
      %v7580 = vmax.f32 %v7517, %v7579
      %7581 = vmax.xlane.f32.xlu0 %v7580
      %v7582 = vpop.xlane.xlu0 %7581
      %v7583 = vsel %vm7218, %v7520, -inf
      %v7584 = vmax.f32 %v7519, %v7583
      %7585 = vmax.xlane.f32.xlu0 %v7584
      %v7586 = vpop.xlane.xlu0 %7585
      %v7587 = vsel %vm7218, %v7522, -inf
      %v7588 = vmax.f32 %v7521, %v7587
      %7589 = vmax.xlane.f32.xlu0 %v7588
      %v7590 = vpop.xlane.xlu0 %7589
      %v7591 = vsel %vm7218, %v7524, -inf
      %v7592 = vmax.f32 %v7523, %v7591
      %7593 = vmax.xlane.f32.xlu0 %v7592
      %v7594 = vpop.xlane.xlu0 %7593
      %v7595 = vsel %vm7218, %v7526, -inf
      %v7596 = vmax.f32 %v7525, %v7595
      %7597 = vmax.xlane.f32.xlu0 %v7596
      %v7598 = vpop.xlane.xlu0 %7597
      %v7599 = vsel %vm7218, %v7528, -inf
      %v7600 = vmax.f32 %v7527, %v7599
      %7601 = vmax.xlane.f32.xlu0 %v7600
      %v7602 = vpop.xlane.xlu0 %7601
      %v7603 = vsel %vm7218, %v7530, -inf
      %v7604 = vmax.f32 %v7529, %v7603
      %7605 = vmax.xlane.f32.xlu0 %v7604
      %v7606 = vpop.xlane.xlu0 %7605
      %v7607 = vsel %vm7218, %v7532, -inf
      %v7608 = vmax.f32 %v7531, %v7607
      %7609 = vmax.xlane.f32.xlu0 %v7608
      %v7610 = vpop.xlane.xlu0 %7609
      %v7611 = vsel %vm7218, %v7534, -inf
      %v7612 = vmax.f32 %v7533, %v7611
      %7613 = vmax.xlane.f32.xlu0 %v7612
      %v7614 = vpop.xlane.xlu0 %7613
      %v7615 = vsel %vm7218, %v7536, -inf
      %v7616 = vmax.f32 %v7535, %v7615
      %7617 = vmax.xlane.f32.xlu0 %v7616
      %v7618 = vpop.xlane.xlu0 %7617
      %v7619 = vsel %vm7218, %v7538, -inf
      %v7620 = vmax.f32 %v7537, %v7619
      %7621 = vmax.xlane.f32.xlu0 %v7620
      %v7622 = vpop.xlane.xlu0 %7621
      %v7623 = vsel %vm7218, %v7540, -inf
      %v7624 = vmax.f32 %v7539, %v7623
      %7625 = vmax.xlane.f32.xlu0 %v7624
      %v7626 = vpop.xlane.xlu0 %7625
      %v7627 = vsel %vm7218, %v7542, -inf
      %v7628 = vmax.f32 %v7541, %v7627
      %7629 = vmax.xlane.f32.xlu0 %v7628
      %v7630 = vpop.xlane.xlu0 %7629
      %v7631 = vsel %vm7218, %v7544, -inf
      %v7632 = vmax.f32 %v7543, %v7631
      %7633 = vmax.xlane.f32.xlu0 %v7632
      %v7634 = vpop.xlane.xlu0 %7633
      %v7635 = vsel %vm7218, %v7546, -inf
      %v7636 = vmax.f32 %v7545, %v7635
      %7637 = vmax.xlane.f32.xlu0 %v7636
      %v7638 = vpop.xlane.xlu0 %7637
      %v7639 = vsel %vm7218, %v7548, -inf
      %v7640 = vmax.f32 %v7547, %v7639
      %7641 = vmax.xlane.f32.xlu0 %v7640
      %v7642 = vpop.xlane.xlu0 %7641
      %v7643 = vsel %vm7218, %v7550, -inf
      %v7644 = vmax.f32 %v7549, %v7643
      %7645 = vmax.xlane.f32.xlu0 %v7644
      %v7646 = vpop.xlane.xlu0 %7645
      %v7647 = vsub.f32 %v7503, %v7554
      %v7648 = vsub.f32 %v7504, %v7554
      %v7649 = vsub.f32 %v7505, %v7558
      %v7650 = vsub.f32 %v7506, %v7558
      %v7651 = vsub.f32 %v7507, %v7562
      %v7652 = vsub.f32 %v7508, %v7562
      %v7653 = vsub.f32 %v7509, %v7566
      %v7654 = vsub.f32 %v7510, %v7566
      %v7655 = vsub.f32 %v7511, %v7570
      %v7656 = vsub.f32 %v7512, %v7570
      %v7657 = vsub.f32 %v7513, %v7574
      %v7658 = vsub.f32 %v7514, %v7574
      %v7659 = vsub.f32 %v7515, %v7578
      %v7660 = vsub.f32 %v7516, %v7578
      %v7661 = vsub.f32 %v7517, %v7582
      %v7662 = vsub.f32 %v7518, %v7582
      %v7663 = vsub.f32 %v7519, %v7586
      %v7664 = vsub.f32 %v7520, %v7586
      %v7665 = vsub.f32 %v7521, %v7590
      %v7666 = vsub.f32 %v7522, %v7590
      %v7667 = vsub.f32 %v7523, %v7594
      %v7668 = vsub.f32 %v7524, %v7594
      %v7669 = vsub.f32 %v7525, %v7598
      %v7670 = vsub.f32 %v7526, %v7598
      %v7671 = vsub.f32 %v7527, %v7602
      %v7672 = vsub.f32 %v7528, %v7602
      %v7673 = vsub.f32 %v7529, %v7606
      %v7674 = vsub.f32 %v7530, %v7606
      %v7675 = vsub.f32 %v7531, %v7610
      %v7676 = vsub.f32 %v7532, %v7610
      %v7677 = vsub.f32 %v7533, %v7614
      %v7678 = vsub.f32 %v7534, %v7614
      %v7679 = vsub.f32 %v7535, %v7618
      %v7680 = vsub.f32 %v7536, %v7618
      %v7681 = vsub.f32 %v7537, %v7622
      %v7682 = vsub.f32 %v7538, %v7622
      %v7683 = vsub.f32 %v7539, %v7626
      %v7684 = vsub.f32 %v7540, %v7626
      %v7685 = vsub.f32 %v7541, %v7630
      %v7686 = vsub.f32 %v7542, %v7630
      %v7687 = vsub.f32 %v7543, %v7634
      %v7688 = vsub.f32 %v7544, %v7634
      %v7689 = vsub.f32 %v7545, %v7638
      %v7690 = vsub.f32 %v7546, %v7638
      %v7691 = vsub.f32 %v7547, %v7642
      %v7692 = vsub.f32 %v7548, %v7642
      %v7693 = vsub.f32 %v7549, %v7646
      %v7694 = vsub.f32 %v7550, %v7646
      %v7695 = vmul.f32 %v7647, 1.442695
      %v7696 = vpow.pop %v7695
      %v7697 = vmul.f32 %v7648, 1.442695
      %v7698 = vpow.pop %v7697
      %v7699 = vmul.f32 %v7649, 1.442695
      %v7700 = vpow.pop %v7699
      %v7701 = vmul.f32 %v7650, 1.442695
      %v7702 = vpow.pop %v7701
      %v7703 = vmul.f32 %v7651, 1.442695
      %v7704 = vpow.pop %v7703
      %v7705 = vmul.f32 %v7652, 1.442695
      %v7706 = vpow.pop %v7705
      %v7707 = vmul.f32 %v7653, 1.442695
      %v7708 = vpow.pop %v7707
      %v7709 = vmul.f32 %v7654, 1.442695
      %v7710 = vpow.pop %v7709
      %v7711 = vmul.f32 %v7655, 1.442695
      %v7712 = vpow.pop %v7711
      %v7713 = vmul.f32 %v7656, 1.442695
      %v7714 = vpow.pop %v7713
      %v7715 = vmul.f32 %v7657, 1.442695
      %v7716 = vpow.pop %v7715
      %v7717 = vmul.f32 %v7658, 1.442695
      %v7718 = vpow.pop %v7717
      %v7719 = vmul.f32 %v7659, 1.442695
      %v7720 = vpow.pop %v7719
      %v7721 = vmul.f32 %v7660, 1.442695
      %v7722 = vpow.pop %v7721
      %v7723 = vmul.f32 %v7661, 1.442695
      %v7724 = vpow.pop %v7723
      %v7725 = vmul.f32 %v7662, 1.442695
      %v7726 = vpow.pop %v7725
      %v7727 = vmul.f32 %v7663, 1.442695
      %v7728 = vpow.pop %v7727
      %v7729 = vmul.f32 %v7664, 1.442695
      %v7730 = vpow.pop %v7729
      %v7731 = vmul.f32 %v7665, 1.442695
      %v7732 = vpow.pop %v7731
      %v7733 = vmul.f32 %v7666, 1.442695
      %v7734 = vpow.pop %v7733
      %v7735 = vmul.f32 %v7667, 1.442695
      %v7736 = vpow.pop %v7735
      %v7737 = vmul.f32 %v7668, 1.442695
      %v7738 = vpow.pop %v7737
      %v7739 = vmul.f32 %v7669, 1.442695
      %v7740 = vpow.pop %v7739
      %v7741 = vmul.f32 %v7670, 1.442695
      %v7742 = vpow.pop %v7741
      %v7743 = vmul.f32 %v7671, 1.442695
      %v7744 = vpow.pop %v7743
      %v7745 = vmul.f32 %v7672, 1.442695
      %v7746 = vpow.pop %v7745
      %v7747 = vmul.f32 %v7673, 1.442695
      %v7748 = vpow.pop %v7747
      %v7749 = vmul.f32 %v7674, 1.442695
      %v7750 = vpow.pop %v7749
      %v7751 = vmul.f32 %v7675, 1.442695
      %v7752 = vpow.pop %v7751
      %v7753 = vmul.f32 %v7676, 1.442695
      %v7754 = vpow.pop %v7753
      %v7755 = vmul.f32 %v7677, 1.442695
      %v7756 = vpow.pop %v7755
      %v7757 = vmul.f32 %v7678, 1.442695
      %v7758 = vpow.pop %v7757
      %v7759 = vmul.f32 %v7679, 1.442695
      %v7760 = vpow.pop %v7759
      %v7761 = vmul.f32 %v7680, 1.442695
      %v7762 = vpow.pop %v7761
      %v7763 = vmul.f32 %v7681, 1.442695
      %v7764 = vpow.pop %v7763
      %v7765 = vmul.f32 %v7682, 1.442695
      %v7766 = vpow.pop %v7765
      %v7767 = vmul.f32 %v7683, 1.442695
      %v7768 = vpow.pop %v7767
      %v7769 = vmul.f32 %v7684, 1.442695
      %v7770 = vpow.pop %v7769
      %v7771 = vmul.f32 %v7685, 1.442695
      %v7772 = vpow.pop %v7771
      %v7773 = vmul.f32 %v7686, 1.442695
      %v7774 = vpow.pop %v7773
      %v7775 = vmul.f32 %v7687, 1.442695
      %v7776 = vpow.pop %v7775
      %v7777 = vmul.f32 %v7688, 1.442695
      %v7778 = vpow.pop %v7777
      %v7779 = vmul.f32 %v7689, 1.442695
      %v7780 = vpow.pop %v7779
      %v7781 = vmul.f32 %v7690, 1.442695
      %v7782 = vpow.pop %v7781
      %v7783 = vmul.f32 %v7691, 1.442695
      %v7784 = vpow.pop %v7783
      %v7785 = vmul.f32 %v7692, 1.442695
      %v7786 = vpow.pop %v7785
      %v7787 = vmul.f32 %v7693, 1.442695
      %v7788 = vpow.pop %v7787
      %v7789 = vmul.f32 %v7694, 1.442695
      %v7790 = vpow.pop %v7789
      %v7791 = vsel %vm7218, %v7698, 0.0
      %v7792 = vadd.f32 %v7696, %v7791
      %7793 = vadd.xlane.f32.xlu0 %v7792
      %v7794 = vpop.xlane.xlu0 %7793
      %v7795 = vsel %vm7218, %v7702, 0.0
      %v7796 = vadd.f32 %v7700, %v7795
      %7797 = vadd.xlane.f32.xlu0 %v7796
      %v7798 = vpop.xlane.xlu0 %7797
      %v7799 = vsel %vm7218, %v7706, 0.0
      %v7800 = vadd.f32 %v7704, %v7799
      %7801 = vadd.xlane.f32.xlu0 %v7800
      %v7802 = vpop.xlane.xlu0 %7801
      %v7803 = vsel %vm7218, %v7710, 0.0
      %v7804 = vadd.f32 %v7708, %v7803
      %7805 = vadd.xlane.f32.xlu0 %v7804
      %v7806 = vpop.xlane.xlu0 %7805
      %v7807 = vsel %vm7218, %v7714, 0.0
      %v7808 = vadd.f32 %v7712, %v7807
      %7809 = vadd.xlane.f32.xlu0 %v7808
      %v7810 = vpop.xlane.xlu0 %7809
      %v7811 = vsel %vm7218, %v7718, 0.0
      %v7812 = vadd.f32 %v7716, %v7811
      %7813 = vadd.xlane.f32.xlu0 %v7812
      %v7814 = vpop.xlane.xlu0 %7813
      %v7815 = vsel %vm7218, %v7722, 0.0
      %v7816 = vadd.f32 %v7720, %v7815
      %7817 = vadd.xlane.f32.xlu0 %v7816
      %v7818 = vpop.xlane.xlu0 %7817
      %v7819 = vsel %vm7218, %v7726, 0.0
      %v7820 = vadd.f32 %v7724, %v7819
      %7821 = vadd.xlane.f32.xlu0 %v7820
      %v7822 = vpop.xlane.xlu0 %7821
      %v7823 = vsel %vm7218, %v7730, 0.0
      %v7824 = vadd.f32 %v7728, %v7823
      %7825 = vadd.xlane.f32.xlu0 %v7824
      %v7826 = vpop.xlane.xlu0 %7825
      %v7827 = vsel %vm7218, %v7734, 0.0
      %v7828 = vadd.f32 %v7732, %v7827
      %7829 = vadd.xlane.f32.xlu0 %v7828
      %v7830 = vpop.xlane.xlu0 %7829
      %v7831 = vsel %vm7218, %v7738, 0.0
      %v7832 = vadd.f32 %v7736, %v7831
      %7833 = vadd.xlane.f32.xlu0 %v7832
      %v7834 = vpop.xlane.xlu0 %7833
      %v7835 = vsel %vm7218, %v7742, 0.0
      %v7836 = vadd.f32 %v7740, %v7835
      %7837 = vadd.xlane.f32.xlu0 %v7836
      %v7838 = vpop.xlane.xlu0 %7837
      %v7839 = vsel %vm7218, %v7746, 0.0
      %v7840 = vadd.f32 %v7744, %v7839
      %7841 = vadd.xlane.f32.xlu0 %v7840
      %v7842 = vpop.xlane.xlu0 %7841
      %v7843 = vsel %vm7218, %v7750, 0.0
      %v7844 = vadd.f32 %v7748, %v7843
      %7845 = vadd.xlane.f32.xlu0 %v7844
      %v7846 = vpop.xlane.xlu0 %7845
      %v7847 = vsel %vm7218, %v7754, 0.0
      %v7848 = vadd.f32 %v7752, %v7847
      %7849 = vadd.xlane.f32.xlu0 %v7848
      %v7850 = vpop.xlane.xlu0 %7849
      %v7851 = vsel %vm7218, %v7758, 0.0
      %v7852 = vadd.f32 %v7756, %v7851
      %7853 = vadd.xlane.f32.xlu0 %v7852
      %v7854 = vpop.xlane.xlu0 %7853
      %v7855 = vsel %vm7218, %v7762, 0.0
      %v7856 = vadd.f32 %v7760, %v7855
      %7857 = vadd.xlane.f32.xlu0 %v7856
      %v7858 = vpop.xlane.xlu0 %7857
      %v7859 = vsel %vm7218, %v7766, 0.0
      %v7860 = vadd.f32 %v7764, %v7859
      %7861 = vadd.xlane.f32.xlu0 %v7860
      %v7862 = vpop.xlane.xlu0 %7861
      %v7863 = vsel %vm7218, %v7770, 0.0
      %v7864 = vadd.f32 %v7768, %v7863
      %7865 = vadd.xlane.f32.xlu0 %v7864
      %v7866 = vpop.xlane.xlu0 %7865
      %v7867 = vsel %vm7218, %v7774, 0.0
      %v7868 = vadd.f32 %v7772, %v7867
      %7869 = vadd.xlane.f32.xlu0 %v7868
      %v7870 = vpop.xlane.xlu0 %7869
      %v7871 = vsel %vm7218, %v7778, 0.0
      %v7872 = vadd.f32 %v7776, %v7871
      %7873 = vadd.xlane.f32.xlu0 %v7872
      %v7874 = vpop.xlane.xlu0 %7873
      %v7875 = vsel %vm7218, %v7782, 0.0
      %v7876 = vadd.f32 %v7780, %v7875
      %7877 = vadd.xlane.f32.xlu0 %v7876
      %v7878 = vpop.xlane.xlu0 %7877
      %v7879 = vsel %vm7218, %v7786, 0.0
      %v7880 = vadd.f32 %v7784, %v7879
      %7881 = vadd.xlane.f32.xlu0 %v7880
      %v7882 = vpop.xlane.xlu0 %7881
      %v7883 = vsel %vm7218, %v7790, 0.0
      %v7884 = vadd.f32 %v7788, %v7883
      %7885 = vadd.xlane.f32.xlu0 %v7884
      %v7886 = vpop.xlane.xlu0 %7885
      %v7887 = vrcp.pop %v7794
      %v7888 = vrcp.pop %v7798
      %v7889 = vrcp.pop %v7802
      %v7890 = vrcp.pop %v7806
      %v7891 = vrcp.pop %v7810
      %v7892 = vrcp.pop %v7814
      %v7893 = vrcp.pop %v7818
      %v7894 = vrcp.pop %v7822
      %v7895 = vrcp.pop %v7826
      %v7896 = vrcp.pop %v7830
      %v7897 = vrcp.pop %v7834
      %v7898 = vrcp.pop %v7838
      %v7899 = vrcp.pop %v7842
      %v7900 = vrcp.pop %v7846
      %v7901 = vrcp.pop %v7850
      %v7902 = vrcp.pop %v7854
      %v7903 = vrcp.pop %v7858
      %v7904 = vrcp.pop %v7862
      %v7905 = vrcp.pop %v7866
      %v7906 = vrcp.pop %v7870
      %v7907 = vrcp.pop %v7874
      %v7908 = vrcp.pop %v7878
      %v7909 = vrcp.pop %v7882
      %v7910 = vrcp.pop %v7886
      %v7911 = vmul.f32 %v7696, %v7887
      %v7912 = vmul.f32 %v7698, %v7887
      %v7913 = vmul.f32 %v7700, %v7888
      %v7914 = vmul.f32 %v7702, %v7888
      %v7915 = vmul.f32 %v7704, %v7889
      %v7916 = vmul.f32 %v7706, %v7889
      %v7917 = vmul.f32 %v7708, %v7890
      %v7918 = vmul.f32 %v7710, %v7890
      %v7919 = vmul.f32 %v7712, %v7891
      %v7920 = vmul.f32 %v7714, %v7891
      %v7921 = vmul.f32 %v7716, %v7892
      %v7922 = vmul.f32 %v7718, %v7892
      %v7923 = vmul.f32 %v7720, %v7893
      %v7924 = vmul.f32 %v7722, %v7893
      %v7925 = vmul.f32 %v7724, %v7894
      %v7926 = vmul.f32 %v7726, %v7894
      %v7927 = vmul.f32 %v7728, %v7895
      %v7928 = vmul.f32 %v7730, %v7895
      %v7929 = vmul.f32 %v7732, %v7896
      %v7930 = vmul.f32 %v7734, %v7896
      %v7931 = vmul.f32 %v7736, %v7897
      %v7932 = vmul.f32 %v7738, %v7897
      %v7933 = vmul.f32 %v7740, %v7898
      %v7934 = vmul.f32 %v7742, %v7898
      %v7935 = vmul.f32 %v7744, %v7899
      %v7936 = vmul.f32 %v7746, %v7899
      %v7937 = vmul.f32 %v7748, %v7900
      %v7938 = vmul.f32 %v7750, %v7900
      %v7939 = vmul.f32 %v7752, %v7901
      %v7940 = vmul.f32 %v7754, %v7901
      %v7941 = vmul.f32 %v7756, %v7902
      %v7942 = vmul.f32 %v7758, %v7902
      %v7943 = vmul.f32 %v7760, %v7903
      %v7944 = vmul.f32 %v7762, %v7903
      %v7945 = vmul.f32 %v7764, %v7904
      %v7946 = vmul.f32 %v7766, %v7904
      %v7947 = vmul.f32 %v7768, %v7905
      %v7948 = vmul.f32 %v7770, %v7905
      %v7949 = vmul.f32 %v7772, %v7906
      %v7950 = vmul.f32 %v7774, %v7906
      %v7951 = vmul.f32 %v7776, %v7907
      %v7952 = vmul.f32 %v7778, %v7907
      %v7953 = vmul.f32 %v7780, %v7908
      %v7954 = vmul.f32 %v7782, %v7908
      %v7955 = vmul.f32 %v7784, %v7909
      %v7956 = vmul.f32 %v7786, %v7909
      %v7957 = vmul.f32 %v7788, %v7910
      %v7958 = vmul.f32 %v7790, %v7910
      %v7959 = vpack.c.bf16 %v7913, %v7911
      %v7960 = vpack.c.bf16 %v7914, %v7912
      %v7961 = vpack.c.bf16 %v7917, %v7915
      %v7962 = vpack.c.bf16 %v7918, %v7916
      %v7963 = vpack.c.bf16 %v7921, %v7919
      %v7964 = vpack.c.bf16 %v7922, %v7920
      %v7965 = vpack.c.bf16 %v7925, %v7923
      %v7966 = vpack.c.bf16 %v7926, %v7924
      %v7967 = vpack.c.bf16 %v7929, %v7927
      %v7968 = vpack.c.bf16 %v7930, %v7928
      %v7969 = vpack.c.bf16 %v7933, %v7931
      %v7970 = vpack.c.bf16 %v7934, %v7932
      %v7971 = vpack.c.bf16 %v7937, %v7935
      %v7972 = vpack.c.bf16 %v7938, %v7936
      %v7973 = vpack.c.bf16 %v7941, %v7939
      %v7974 = vpack.c.bf16 %v7942, %v7940
      %v7975 = vpack.c.bf16 %v7945, %v7943
      %v7976 = vpack.c.bf16 %v7946, %v7944
      %v7977 = vpack.c.bf16 %v7949, %v7947
      %v7978 = vpack.c.bf16 %v7950, %v7948
      %v7979 = vpack.c.bf16 %v7953, %v7951
      %v7980 = vpack.c.bf16 %v7954, %v7952
      %v7981 = vpack.c.bf16 %v7957, %v7955
      %v7982 = vpack.c.bf16 %v7958, %v7956
      %v7984 = vsel %vm7218, %v7960, 0
      %v7987 = vsel %vm7218, %v7962, 0
      %v7990 = vsel %vm7218, %v7964, 0
      %v7993 = vsel %vm7218, %v7966, 0
      %v7996 = vsel %vm7218, %v7968, 0
      %v7999 = vsel %vm7218, %v7970, 0
      %v8002 = vsel %vm7218, %v7972, 0
      %v8005 = vsel %vm7218, %v7974, 0
      %v8008 = vsel %vm7218, %v7976, 0
      %v8011 = vsel %vm7218, %v7978, 0
      %v8014 = vsel %vm7218, %v7980, 0
      %v8017 = vsel %vm7218, %v7982, 0
      %8019 = vmatprep.subr.bf16.mxu0 0
      %8020 = vmatpush1.bf16.msra.mxu0 %v7206
      %8021 = vmatprep.subr.bf16.mxu0 0
      %8022 = vmatpush1.bf16.msra.mxu0 %v7207
      %8023 = vmatprep.subr.bf16.mxu0 0
      %8024 = vmatpush1.bf16.msra.mxu0 %v7208
      %8025 = vmatprep.subr.bf16.mxu0 0
      %8026 = vmatpush1.bf16.msra.mxu0 %v7209
      %8027 = vmatprep.subr.bf16.mxu0 0
      %8028 = vmatpush1.bf16.msra.mxu0 %v7210
      %8029 = vmatprep.subr.bf16.mxu0 0
      %8030 = vmatpush1.bf16.msra.mxu0 %v7211
      %8031 = vmatprep.subr.bf16.mxu0 0
      %8032 = vmatpush1.bf16.msra.mxu0 %v7212
      %8033 = vmatprep.subr.bf16.mxu0 0
      %8034 = vmatpush1.bf16.msra.mxu0 %v7213
      %8035 = vmatprep.subr.bf16.mxu0 0
      %8036 = vmatpush1.bf16.msra.mxu0 %v7214
      %8037 = vmatprep.subr.bf16.mxu0 0
      %8038 = vmatpush1.bf16.msra.mxu0 %v7215
      %8039 = vmatprep.subr.bf16.mxu0 0
      %8040 = vmatpush1.bf16.msra.mxu0 %v7216
      %8041 = vmatprep.subr.bf16.mxu0 0
      %8042 = vmatpush1.bf16.msra.mxu0 %v7217
      %8043 = vmatprep.subr.bf16.mxu0 0
      %8044 = vmatpush1.bf16.msra.mxu0 0
      %8045 = vmatprep.subr.bf16.mxu0 0
      %8046 = vmatpush1.bf16.msra.mxu0 0
      %8047 = vmatprep.subr.bf16.mxu0 0
      %8048 = vmatpush1.bf16.msra.mxu0 0
      %8049 = vmatprep.subr.bf16.mxu0 0
      %8050 = vmatpush1.bf16.msra.mxu0 0
      %8051 = vmatprep.mubr.bf16.mxu0 %v7984
      %8052 = vmatmul.mubr.bf16.gmra.mrb[0].mxu0 %v7959
      %v8053 = vpop.f32.mrb[0].mxu0
      %v8054 = vadd.f32 0.0, %v8053
      %v8055 = vpop.f32.mrb[0].mxu0
      %v8056 = vpop.f32.mrb[0].mxu0
      %v8057 = vadd.f32 0.0, %v8056
      %v8058 = vpop.f32.mrb[0].mxu0
      %8059 = vmatprep.mubr.bf16.mxu0 %v7987
      %8060 = vmatmul.mubr.bf16.gmra.mrb[0].mxu0 %v7961
      %v8061 = vpop.f32.mrb[0].mxu0
      %v8062 = vadd.f32 0.0, %v8061
      %v8063 = vpop.f32.mrb[0].mxu0
      %v8064 = vpop.f32.mrb[0].mxu0
      %v8065 = vadd.f32 0.0, %v8064
      %v8066 = vpop.f32.mrb[0].mxu0
      %8067 = vmatprep.mubr.bf16.mxu0 %v7990
      %8068 = vmatmul.mubr.bf16.gmra.mrb[0].mxu0 %v7963
      %v8069 = vpop.f32.mrb[0].mxu0
      %v8070 = vadd.f32 0.0, %v8069
      %v8071 = vpop.f32.mrb[0].mxu0
      %v8072 = vpop.f32.mrb[0].mxu0
      %v8073 = vadd.f32 0.0, %v8072
      %v8074 = vpop.f32.mrb[0].mxu0
      %8075 = vmatprep.mubr.bf16.mxu0 %v7993
      %8076 = vmatmul.mubr.bf16.gmra.mrb[0].mxu0 %v7965
      %v8077 = vpop.f32.mrb[0].mxu0
      %v8078 = vadd.f32 0.0, %v8077
      %v8079 = vpop.f32.mrb[0].mxu0
      %v8080 = vpop.f32.mrb[0].mxu0
      %v8081 = vadd.f32 0.0, %v8080
      %v8082 = vpop.f32.mrb[0].mxu0
      %8083 = vmatprep.mubr.bf16.mxu0 %v7996
      %8084 = vmatmul.mubr.bf16.gmra.mrb[0].mxu0 %v7967
      %v8085 = vpop.f32.mrb[0].mxu0
      %v8086 = vadd.f32 0.0, %v8085
      %v8087 = vpop.f32.mrb[0].mxu0
      %v8088 = vpop.f32.mrb[0].mxu0
      %v8089 = vadd.f32 0.0, %v8088
      %v8090 = vpop.f32.mrb[0].mxu0
      %8091 = vmatprep.mubr.bf16.mxu0 %v7999
      %8092 = vmatmul.mubr.bf16.gmra.mrb[0].mxu0 %v7969
      %v8093 = vpop.f32.mrb[0].mxu0
      %v8094 = vadd.f32 0.0, %v8093
      %v8095 = vpop.f32.mrb[0].mxu0
      %v8096 = vpop.f32.mrb[0].mxu0
      %v8097 = vadd.f32 0.0, %v8096
      %v8098 = vpop.f32.mrb[0].mxu0
      %8099 = vmatprep.mubr.bf16.mxu0 %v8002
      %8100 = vmatmul.mubr.bf16.gmra.mrb[0].mxu0 %v7971
      %v8101 = vpop.f32.mrb[0].mxu0
      %v8102 = vadd.f32 0.0, %v8101
      %v8103 = vpop.f32.mrb[0].mxu0
      %v8104 = vpop.f32.mrb[0].mxu0
      %v8105 = vadd.f32 0.0, %v8104
      %v8106 = vpop.f32.mrb[0].mxu0
      %8107 = vmatprep.mubr.bf16.mxu0 %v8005
      %8108 = vmatmul.mubr.bf16.gmra.mrb[0].mxu0 %v7973
      %v8109 = vpop.f32.mrb[0].mxu0
      %v8110 = vadd.f32 0.0, %v8109
      %v8111 = vpop.f32.mrb[0].mxu0
      %v8112 = vpop.f32.mrb[0].mxu0
      %v8113 = vadd.f32 0.0, %v8112
      %v8114 = vpop.f32.mrb[0].mxu0
      %8115 = vmatprep.mubr.bf16.mxu0 %v8008
      %8116 = vmatmul.mubr.bf16.gmra.mrb[0].mxu0 %v7975
      %v8117 = vpop.f32.mrb[0].mxu0
      %v8118 = vadd.f32 0.0, %v8117
      %v8119 = vpop.f32.mrb[0].mxu0
      %v8120 = vpop.f32.mrb[0].mxu0
      %v8121 = vadd.f32 0.0, %v8120
      %v8122 = vpop.f32.mrb[0].mxu0
      %8123 = vmatprep.mubr.bf16.mxu0 %v8011
      %8124 = vmatmul.mubr.bf16.gmra.mrb[0].mxu0 %v7977
      %v8125 = vpop.f32.mrb[0].mxu0
      %v8126 = vadd.f32 0.0, %v8125
      %v8127 = vpop.f32.mrb[0].mxu0
      %v8128 = vpop.f32.mrb[0].mxu0
      %v8129 = vadd.f32 0.0, %v8128
      %v8130 = vpop.f32.mrb[0].mxu0
      %8131 = vmatprep.mubr.bf16.mxu0 %v8014
      %8132 = vmatmul.mubr.bf16.gmra.mrb[0].mxu0 %v7979
      %v8133 = vpop.f32.mrb[0].mxu0
      %v8134 = vadd.f32 0.0, %v8133
      %v8135 = vpop.f32.mrb[0].mxu0
      %v8136 = vpop.f32.mrb[0].mxu0
      %v8137 = vadd.f32 0.0, %v8136
      %v8138 = vpop.f32.mrb[0].mxu0
      %8139 = vmatprep.mubr.bf16.mxu0 %v8017
      %8140 = vmatmul.mubr.bf16.gmra.mrb[0].mxu0 %v7981
      %v8141 = vpop.f32.mrb[0].mxu0
      %v8142 = vadd.f32 0.0, %v8141
      %v8143 = vpop.f32.mrb[0].mxu0
      %v8144 = vpop.f32.mrb[0].mxu0
      %v8145 = vadd.f32 0.0, %v8144
      %v8146 = vpop.f32.mrb[0].mxu0
      %8147 = vdwg.mxu0
      %v8148 = vpack.c.bf16 %v8057, %v8054
      %v8149 = vpack.c.bf16 %v8065, %v8062
      %v8150 = vpack.c.bf16 %v8073, %v8070
      %v8151 = vpack.c.bf16 %v8081, %v8078
      %v8152 = vpack.c.bf16 %v8089, %v8086
      %v8153 = vpack.c.bf16 %v8097, %v8094
      %v8154 = vpack.c.bf16 %v8105, %v8102
      %v8155 = vpack.c.bf16 %v8113, %v8110
      %v8156 = vpack.c.bf16 %v8121, %v8118
      %v8157 = vpack.c.bf16 %v8129, %v8126
      %v8158 = vpack.c.bf16 %v8137, %v8134
      %v8159 = vpack.c.bf16 %v8145, %v8142
      %v8160 = vld [vmem:[%s63] sm:$0xf]
      %v8161 = vld [vmem:[%s63 + $0x4] sm:$0xf]
      %v8162 = vld [vmem:[%s63 + $0x8] sm:$0xf]
      %v8163 = vld [vmem:[%s63 + $0xc] sm:$0xf]
      %v8164 = vld [vmem:[%s63 + $0x10] sm:$0xf]
      %v8165 = vld [vmem:[%s63 + $0x14] sm:$0xf]
      %v8166 = vld [vmem:[%s63 + $0x18] sm:$0xf]
      %v8167 = vld [vmem:[%s63 + $0x1c] sm:$0xf]
      %8180 = vrot.lane.b32.xlu0 %v7182, 64
      %v8181 = vpop.permute.xlu0 %8180
      %8182 = vrot.lane.b32.xlu0 %v7183, 64
      %v8183 = vpop.permute.xlu0 %8182
      %8184 = vrot.lane.b32.xlu0 %v7184, 64
      %v8185 = vpop.permute.xlu0 %8184
      %8186 = vrot.lane.b32.xlu0 %v7185, 64
      %v8187 = vpop.permute.xlu0 %8186
      %8188 = vrot.lane.b32.xlu0 %v7186, 64
      %v8189 = vpop.permute.xlu0 %8188
      %8190 = vrot.lane.b32.xlu0 %v7187, 64
      %v8191 = vpop.permute.xlu0 %8190
      %8192 = vrot.lane.b32.xlu0 %v7188, 64
      %v8193 = vpop.permute.xlu0 %8192
      %8194 = vrot.lane.b32.xlu0 %v7189, 64
      %v8195 = vpop.permute.xlu0 %8194
      %8196 = vrot.lane.b32.xlu0 %v7190, 64
      %v8197 = vpop.permute.xlu0 %8196
      %8198 = vrot.lane.b32.xlu0 %v7191, 64
      %v8199 = vpop.permute.xlu0 %8198
      %8200 = vrot.lane.b32.xlu0 %v7192, 64
      %v8201 = vpop.permute.xlu0 %8200
      %8202 = vrot.lane.b32.xlu0 %v7193, 64
      %v8203 = vpop.permute.xlu0 %8202
      %8216 = vrot.lane.b32.xlu0 %v7194, 64
      %v8217 = vpop.permute.xlu0 %8216
      %8218 = vrot.lane.b32.xlu0 %v7195, 64
      %v8219 = vpop.permute.xlu0 %8218
      %8220 = vrot.lane.b32.xlu0 %v7196, 64
      %v8221 = vpop.permute.xlu0 %8220
      %8222 = vrot.lane.b32.xlu0 %v7197, 64
      %v8223 = vpop.permute.xlu0 %8222
      %8224 = vrot.lane.b32.xlu0 %v7198, 64
      %v8225 = vpop.permute.xlu0 %8224
      %8226 = vrot.lane.b32.xlu0 %v7199, 64
      %v8227 = vpop.permute.xlu0 %8226
      %8228 = vrot.lane.b32.xlu0 %v7200, 64
      %v8229 = vpop.permute.xlu0 %8228
      %8230 = vrot.lane.b32.xlu0 %v7201, 64
      %v8231 = vpop.permute.xlu0 %8230
      %8232 = vrot.lane.b32.xlu0 %v7202, 64
      %v8233 = vpop.permute.xlu0 %8232
      %8234 = vrot.lane.b32.xlu0 %v7203, 64
      %v8235 = vpop.permute.xlu0 %8234
      %8236 = vrot.lane.b32.xlu0 %v7204, 64
      %v8237 = vpop.permute.xlu0 %8236
      %8238 = vrot.lane.b32.xlu0 %v7205, 64
      %v8239 = vpop.permute.xlu0 %8238
      %v8241 = vsel %vm7218, %v8181, 0
      %v8244 = vsel %vm7218, %v8183, 0
      %v8247 = vsel %vm7218, %v8185, 0
      %v8250 = vsel %vm7218, %v8187, 0
      %v8253 = vsel %vm7218, %v8189, 0
      %v8256 = vsel %vm7218, %v8191, 0
      %v8259 = vsel %vm7218, %v8193, 0
      %v8262 = vsel %vm7218, %v8195, 0
      %v8265 = vsel %vm7218, %v8197, 0
      %v8268 = vsel %vm7218, %v8199, 0
      %v8271 = vsel %vm7218, %v8201, 0
      %v8274 = vsel %vm7218, %v8203, 0
      %v8277 = vsel %vm7218, %v8217, 0
      %v8280 = vsel %vm7218, %v8219, 0
      %v8283 = vsel %vm7218, %v8221, 0
      %v8286 = vsel %vm7218, %v8223, 0
      %v8289 = vsel %vm7218, %v8225, 0
      %v8292 = vsel %vm7218, %v8227, 0
      %v8295 = vsel %vm7218, %v8229, 0
      %v8298 = vsel %vm7218, %v8231, 0
      %v8301 = vsel %vm7218, %v8233, 0
      %v8304 = vsel %vm7218, %v8235, 0
      %v8307 = vsel %vm7218, %v8237, 0
      %v8310 = vsel %vm7218, %v8239, 0
      %8312 = vmatprep.subr.bf16.mxu0 0
      %8313 = vmatpush1.bf16.xpose.msra.mxu0 %v8277
      %8314 = vmatprep.subr.bf16.mxu0 0
      %8315 = vmatpush1.bf16.xpose.msra.mxu0 %v8280
      %8316 = vmatprep.subr.bf16.mxu0 0
      %8317 = vmatpush1.bf16.xpose.msra.mxu0 %v8283
      %8318 = vmatprep.subr.bf16.mxu0 0
      %8319 = vmatpush1.bf16.xpose.msra.mxu0 %v8286
      %8320 = vmatprep.subr.bf16.mxu0 0
      %8321 = vmatpush1.bf16.xpose.msra.mxu0 %v8289
      %8322 = vmatprep.subr.bf16.mxu0 0
      %8323 = vmatpush1.bf16.xpose.msra.mxu0 %v8292
      %8324 = vmatprep.subr.bf16.mxu0 0
      %8325 = vmatpush1.bf16.xpose.msra.mxu0 %v8295
      %8326 = vmatprep.subr.bf16.mxu0 0
      %8327 = vmatpush1.bf16.xpose.msra.mxu0 %v8298
      %8328 = vmatprep.subr.bf16.mxu0 0
      %8329 = vmatpush1.bf16.xpose.msra.mxu0 %v8301
      %8330 = vmatprep.subr.bf16.mxu0 0
      %8331 = vmatpush1.bf16.xpose.msra.mxu0 %v8304
      %8332 = vmatprep.subr.bf16.mxu0 0
      %8333 = vmatpush1.bf16.xpose.msra.mxu0 %v8307
      %8334 = vmatprep.subr.bf16.mxu0 0
      %8335 = vmatpush1.bf16.xpose.msra.mxu0 %v8310
      %8336 = vmatprep.subr.bf16.mxu0 0
      %8337 = vmatpush1.bf16.xpose.msra.mxu0 0
      %8338 = vmatprep.subr.bf16.mxu0 0
      %8339 = vmatpush1.bf16.xpose.msra.mxu0 0
      %8340 = vmatprep.subr.bf16.mxu0 0
      %8341 = vmatpush1.bf16.xpose.msra.mxu0 0
      %8342 = vmatprep.subr.bf16.mxu0 0
      %8343 = vmatpush1.bf16.xpose.msra.mxu0 0
      %8344 = vmatprep.mubr.bf16.mxu0 0
      %8345 = vmatmul.mubr.bf16.gmra.mrb[0].mxu0 %v8241
      %v8346 = vpop.f32.mrb[0].mxu0
      %v8347 = vadd.f32 0.0, %v8346
      %v8348 = vpop.f32.mrb[0].mxu0
      %v8349 = vadd.f32 0.0, %v8348
      %v8350 = vpop.f32.mrb[0].mxu0
      %v8351 = vadd.f32 0.0, %v8350
      %v8352 = vpop.f32.mrb[0].mxu0
      %v8353 = vadd.f32 0.0, %v8352
      %8354 = vmatprep.mubr.bf16.mxu0 0
      %8355 = vmatmul.mubr.bf16.gmra.mrb[0].mxu0 %v8244
      %v8356 = vpop.f32.mrb[0].mxu0
      %v8357 = vadd.f32 0.0, %v8356
      %v8358 = vpop.f32.mrb[0].mxu0
      %v8359 = vadd.f32 0.0, %v8358
      %v8360 = vpop.f32.mrb[0].mxu0
      %v8361 = vadd.f32 0.0, %v8360
      %v8362 = vpop.f32.mrb[0].mxu0
      %v8363 = vadd.f32 0.0, %v8362
      %8364 = vmatprep.mubr.bf16.mxu0 0
      %8365 = vmatmul.mubr.bf16.gmra.mrb[0].mxu0 %v8247
      %v8366 = vpop.f32.mrb[0].mxu0
      %v8367 = vadd.f32 0.0, %v8366
      %v8368 = vpop.f32.mrb[0].mxu0
      %v8369 = vadd.f32 0.0, %v8368
      %v8370 = vpop.f32.mrb[0].mxu0
      %v8371 = vadd.f32 0.0, %v8370
      %v8372 = vpop.f32.mrb[0].mxu0
      %v8373 = vadd.f32 0.0, %v8372
      %8374 = vmatprep.mubr.bf16.mxu0 0
      %8375 = vmatmul.mubr.bf16.gmra.mrb[0].mxu0 %v8250
      %v8376 = vpop.f32.mrb[0].mxu0
      %v8377 = vadd.f32 0.0, %v8376
      %v8378 = vpop.f32.mrb[0].mxu0
      %v8379 = vadd.f32 0.0, %v8378
      %v8380 = vpop.f32.mrb[0].mxu0
      %v8381 = vadd.f32 0.0, %v8380
      %v8382 = vpop.f32.mrb[0].mxu0
      %v8383 = vadd.f32 0.0, %v8382
      %8384 = vmatprep.mubr.bf16.mxu0 0
      %8385 = vmatmul.mubr.bf16.gmra.mrb[0].mxu0 %v8253
      %v8386 = vpop.f32.mrb[0].mxu0
      %v8387 = vadd.f32 0.0, %v8386
      %v8388 = vpop.f32.mrb[0].mxu0
      %v8389 = vadd.f32 0.0, %v8388
      %v8390 = vpop.f32.mrb[0].mxu0
      %v8391 = vadd.f32 0.0, %v8390
      %v8392 = vpop.f32.mrb[0].mxu0
      %v8393 = vadd.f32 0.0, %v8392
      %8394 = vmatprep.mubr.bf16.mxu0 0
      %8395 = vmatmul.mubr.bf16.gmra.mrb[0].mxu0 %v8256
      %v8396 = vpop.f32.mrb[0].mxu0
      %v8397 = vadd.f32 0.0, %v8396
      %v8398 = vpop.f32.mrb[0].mxu0
      %v8399 = vadd.f32 0.0, %v8398
      %v8400 = vpop.f32.mrb[0].mxu0
      %v8401 = vadd.f32 0.0, %v8400
      %v8402 = vpop.f32.mrb[0].mxu0
      %v8403 = vadd.f32 0.0, %v8402
      %8404 = vmatprep.mubr.bf16.mxu0 0
      %8405 = vmatmul.mubr.bf16.gmra.mrb[0].mxu0 %v8259
      %v8406 = vpop.f32.mrb[0].mxu0
      %v8407 = vadd.f32 0.0, %v8406
      %v8408 = vpop.f32.mrb[0].mxu0
      %v8409 = vadd.f32 0.0, %v8408
      %v8410 = vpop.f32.mrb[0].mxu0
      %v8411 = vadd.f32 0.0, %v8410
      %v8412 = vpop.f32.mrb[0].mxu0
      %v8413 = vadd.f32 0.0, %v8412
      %8414 = vmatprep.mubr.bf16.mxu0 0
      %8415 = vmatmul.mubr.bf16.gmra.mrb[0].mxu0 %v8262
      %v8416 = vpop.f32.mrb[0].mxu0
      %v8417 = vadd.f32 0.0, %v8416
      %v8418 = vpop.f32.mrb[0].mxu0
      %v8419 = vadd.f32 0.0, %v8418
      %v8420 = vpop.f32.mrb[0].mxu0
      %v8421 = vadd.f32 0.0, %v8420
      %v8422 = vpop.f32.mrb[0].mxu0
      %v8423 = vadd.f32 0.0, %v8422
      %8424 = vmatprep.mubr.bf16.mxu0 0
      %8425 = vmatmul.mubr.bf16.gmra.mrb[0].mxu0 %v8265
      %v8426 = vpop.f32.mrb[0].mxu0
      %v8427 = vadd.f32 0.0, %v8426
      %v8428 = vpop.f32.mrb[0].mxu0
      %v8429 = vadd.f32 0.0, %v8428
      %v8430 = vpop.f32.mrb[0].mxu0
      %v8431 = vadd.f32 0.0, %v8430
      %v8432 = vpop.f32.mrb[0].mxu0
      %v8433 = vadd.f32 0.0, %v8432
      %8434 = vmatprep.mubr.bf16.mxu0 0
      %8435 = vmatmul.mubr.bf16.gmra.mrb[0].mxu0 %v8268
      %v8436 = vpop.f32.mrb[0].mxu0
      %v8437 = vadd.f32 0.0, %v8436
      %v8438 = vpop.f32.mrb[0].mxu0
      %v8439 = vadd.f32 0.0, %v8438
      %v8440 = vpop.f32.mrb[0].mxu0
      %v8441 = vadd.f32 0.0, %v8440
      %v8442 = vpop.f32.mrb[0].mxu0
      %v8443 = vadd.f32 0.0, %v8442
      %8444 = vmatprep.mubr.bf16.mxu0 0
      %8445 = vmatmul.mubr.bf16.gmra.mrb[0].mxu0 %v8271
      %v8446 = vpop.f32.mrb[0].mxu0
      %v8447 = vadd.f32 0.0, %v8446
      %v8448 = vpop.f32.mrb[0].mxu0
      %v8449 = vadd.f32 0.0, %v8448
      %v8450 = vpop.f32.mrb[0].mxu0
      %v8451 = vadd.f32 0.0, %v8450
      %v8452 = vpop.f32.mrb[0].mxu0
      %v8453 = vadd.f32 0.0, %v8452
      %8454 = vmatprep.mubr.bf16.mxu0 0
      %8455 = vmatmul.mubr.bf16.gmra.mrb[0].mxu0 %v8274
      %v8456 = vpop.f32.mrb[0].mxu0
      %v8457 = vadd.f32 0.0, %v8456
      %v8458 = vpop.f32.mrb[0].mxu0
      %v8459 = vadd.f32 0.0, %v8458
      %v8460 = vpop.f32.mrb[0].mxu0
      %v8461 = vadd.f32 0.0, %v8460
      %v8462 = vpop.f32.mrb[0].mxu0
      %v8463 = vadd.f32 0.0, %v8462
      %8464 = vdwg.mxu0
      %v8465 = vmul.f32 %v8347, 0.088388346
      %v8466 = vmul.f32 %v8349, 0.088388346
      %v8467 = vmul.f32 %v8351, 0.088388346
      %v8468 = vmul.f32 %v8353, 0.088388346
      %v8469 = vmul.f32 %v8357, 0.088388346
      %v8470 = vmul.f32 %v8359, 0.088388346
      %v8471 = vmul.f32 %v8361, 0.088388346
      %v8472 = vmul.f32 %v8363, 0.088388346
      %v8473 = vmul.f32 %v8367, 0.088388346
      %v8474 = vmul.f32 %v8369, 0.088388346
      %v8475 = vmul.f32 %v8371, 0.088388346
      %v8476 = vmul.f32 %v8373, 0.088388346
      %v8477 = vmul.f32 %v8377, 0.088388346
      %v8478 = vmul.f32 %v8379, 0.088388346
      %v8479 = vmul.f32 %v8381, 0.088388346
      %v8480 = vmul.f32 %v8383, 0.088388346
      %v8481 = vmul.f32 %v8387, 0.088388346
      %v8482 = vmul.f32 %v8389, 0.088388346
      %v8483 = vmul.f32 %v8391, 0.088388346
      %v8484 = vmul.f32 %v8393, 0.088388346
      %v8485 = vmul.f32 %v8397, 0.088388346
      %v8486 = vmul.f32 %v8399, 0.088388346
      %v8487 = vmul.f32 %v8401, 0.088388346
      %v8488 = vmul.f32 %v8403, 0.088388346
      %v8489 = vmul.f32 %v8407, 0.088388346
      %v8490 = vmul.f32 %v8409, 0.088388346
      %v8491 = vmul.f32 %v8411, 0.088388346
      %v8492 = vmul.f32 %v8413, 0.088388346
      %v8493 = vmul.f32 %v8417, 0.088388346
      %v8494 = vmul.f32 %v8419, 0.088388346
      %v8495 = vmul.f32 %v8421, 0.088388346
      %v8496 = vmul.f32 %v8423, 0.088388346
      %v8497 = vmul.f32 %v8427, 0.088388346
      %v8498 = vmul.f32 %v8429, 0.088388346
      %v8499 = vmul.f32 %v8431, 0.088388346
      %v8500 = vmul.f32 %v8433, 0.088388346
      %v8501 = vmul.f32 %v8437, 0.088388346
      %v8502 = vmul.f32 %v8439, 0.088388346
      %v8503 = vmul.f32 %v8441, 0.088388346
      %v8504 = vmul.f32 %v8443, 0.088388346
      %v8505 = vmul.f32 %v8447, 0.088388346
      %v8506 = vmul.f32 %v8449, 0.088388346
      %v8507 = vmul.f32 %v8451, 0.088388346
      %v8508 = vmul.f32 %v8453, 0.088388346
      %v8509 = vmul.f32 %v8457, 0.088388346
      %v8510 = vmul.f32 %v8459, 0.088388346
      %v8511 = vmul.f32 %v8461, 0.088388346
      %v8512 = vmul.f32 %v8463, 0.088388346
      %v8513 = vadd.f32 %v8465, %v7496
      %v8514 = vadd.f32 %v8466, %v7500
      %v8515 = vadd.f32 %v8467, %v7496
      %v8516 = vadd.f32 %v8468, %v7500
      %v8517 = vadd.f32 %v8469, %v7496
      %v8518 = vadd.f32 %v8470, %v7500
      %v8519 = vadd.f32 %v8471, %v7496
      %v8520 = vadd.f32 %v8472, %v7500
      %v8521 = vadd.f32 %v8473, %v7496
      %v8522 = vadd.f32 %v8474, %v7500
      %v8523 = vadd.f32 %v8475, %v7496
      %v8524 = vadd.f32 %v8476, %v7500
      %v8525 = vadd.f32 %v8477, %v7496
      %v8526 = vadd.f32 %v8478, %v7500
      %v8527 = vadd.f32 %v8479, %v7496
      %v8528 = vadd.f32 %v8480, %v7500
      %v8529 = vadd.f32 %v8481, %v7496
      %v8530 = vadd.f32 %v8482, %v7500
      %v8531 = vadd.f32 %v8483, %v7496
      %v8532 = vadd.f32 %v8484, %v7500
      %v8533 = vadd.f32 %v8485, %v7496
      %v8534 = vadd.f32 %v8486, %v7500
      %v8535 = vadd.f32 %v8487, %v7496
      %v8536 = vadd.f32 %v8488, %v7500
      %v8537 = vadd.f32 %v8489, %v7496
      %v8538 = vadd.f32 %v8490, %v7500
      %v8539 = vadd.f32 %v8491, %v7496
      %v8540 = vadd.f32 %v8492, %v7500
      %v8541 = vadd.f32 %v8493, %v7496
      %v8542 = vadd.f32 %v8494, %v7500
      %v8543 = vadd.f32 %v8495, %v7496
      %v8544 = vadd.f32 %v8496, %v7500
      %v8545 = vadd.f32 %v8497, %v7496
      %v8546 = vadd.f32 %v8498, %v7500
      %v8547 = vadd.f32 %v8499, %v7496
      %v8548 = vadd.f32 %v8500, %v7500
      %v8549 = vadd.f32 %v8501, %v7496
      %v8550 = vadd.f32 %v8502, %v7500
      %v8551 = vadd.f32 %v8503, %v7496
      %v8552 = vadd.f32 %v8504, %v7500
      %v8553 = vadd.f32 %v8505, %v7496
      %v8554 = vadd.f32 %v8506, %v7500
      %v8555 = vadd.f32 %v8507, %v7496
      %v8556 = vadd.f32 %v8508, %v7500
      %v8557 = vadd.f32 %v8509, %v7496
      %v8558 = vadd.f32 %v8510, %v7500
      %v8559 = vadd.f32 %v8511, %v7496
      %v8560 = vadd.f32 %v8512, %v7500
      %v8561 = vsel %vm7218, %v8514, -inf
      %v8562 = vmax.f32 %v8513, %v8561
      %8563 = vmax.xlane.f32.xlu0 %v8562
      %v8564 = vpop.xlane.xlu0 %8563
      %v8565 = vsel %vm7218, %v8516, -inf
      %v8566 = vmax.f32 %v8515, %v8565
      %8567 = vmax.xlane.f32.xlu0 %v8566
      %v8568 = vpop.xlane.xlu0 %8567
      %v8569 = vsel %vm7218, %v8518, -inf
      %v8570 = vmax.f32 %v8517, %v8569
      %8571 = vmax.xlane.f32.xlu0 %v8570
      %v8572 = vpop.xlane.xlu0 %8571
      %v8573 = vsel %vm7218, %v8520, -inf
      %v8574 = vmax.f32 %v8519, %v8573
      %8575 = vmax.xlane.f32.xlu0 %v8574
      %v8576 = vpop.xlane.xlu0 %8575
      %v8577 = vsel %vm7218, %v8522, -inf
      %v8578 = vmax.f32 %v8521, %v8577
      %8579 = vmax.xlane.f32.xlu0 %v8578
      %v8580 = vpop.xlane.xlu0 %8579
      %v8581 = vsel %vm7218, %v8524, -inf
      %v8582 = vmax.f32 %v8523, %v8581
      %8583 = vmax.xlane.f32.xlu0 %v8582
      %v8584 = vpop.xlane.xlu0 %8583
      %v8585 = vsel %vm7218, %v8526, -inf
      %v8586 = vmax.f32 %v8525, %v8585
      %8587 = vmax.xlane.f32.xlu0 %v8586
      %v8588 = vpop.xlane.xlu0 %8587
      %v8589 = vsel %vm7218, %v8528, -inf
      %v8590 = vmax.f32 %v8527, %v8589
      %8591 = vmax.xlane.f32.xlu0 %v8590
      %v8592 = vpop.xlane.xlu0 %8591
      %v8593 = vsel %vm7218, %v8530, -inf
      %v8594 = vmax.f32 %v8529, %v8593
      %8595 = vmax.xlane.f32.xlu0 %v8594
      %v8596 = vpop.xlane.xlu0 %8595
      %v8597 = vsel %vm7218, %v8532, -inf
      %v8598 = vmax.f32 %v8531, %v8597
      %8599 = vmax.xlane.f32.xlu0 %v8598
      %v8600 = vpop.xlane.xlu0 %8599
      %v8601 = vsel %vm7218, %v8534, -inf
      %v8602 = vmax.f32 %v8533, %v8601
      %8603 = vmax.xlane.f32.xlu0 %v8602
      %v8604 = vpop.xlane.xlu0 %8603
      %v8605 = vsel %vm7218, %v8536, -inf
      %v8606 = vmax.f32 %v8535, %v8605
      %8607 = vmax.xlane.f32.xlu0 %v8606
      %v8608 = vpop.xlane.xlu0 %8607
      %v8609 = vsel %vm7218, %v8538, -inf
      %v8610 = vmax.f32 %v8537, %v8609
      %8611 = vmax.xlane.f32.xlu0 %v8610
      %v8612 = vpop.xlane.xlu0 %8611
      %v8613 = vsel %vm7218, %v8540, -inf
      %v8614 = vmax.f32 %v8539, %v8613
      %8615 = vmax.xlane.f32.xlu0 %v8614
      %v8616 = vpop.xlane.xlu0 %8615
      %v8617 = vsel %vm7218, %v8542, -inf
      %v8618 = vmax.f32 %v8541, %v8617
      %8619 = vmax.xlane.f32.xlu0 %v8618
      %v8620 = vpop.xlane.xlu0 %8619
      %v8621 = vsel %vm7218, %v8544, -inf
      %v8622 = vmax.f32 %v8543, %v8621
      %8623 = vmax.xlane.f32.xlu0 %v8622
      %v8624 = vpop.xlane.xlu0 %8623
      %v8625 = vsel %vm7218, %v8546, -inf
      %v8626 = vmax.f32 %v8545, %v8625
      %8627 = vmax.xlane.f32.xlu0 %v8626
      %v8628 = vpop.xlane.xlu0 %8627
      %v8629 = vsel %vm7218, %v8548, -inf
      %v8630 = vmax.f32 %v8547, %v8629
      %8631 = vmax.xlane.f32.xlu0 %v8630
      %v8632 = vpop.xlane.xlu0 %8631
      %v8633 = vsel %vm7218, %v8550, -inf
      %v8634 = vmax.f32 %v8549, %v8633
      %8635 = vmax.xlane.f32.xlu0 %v8634
      %v8636 = vpop.xlane.xlu0 %8635
      %v8637 = vsel %vm7218, %v8552, -inf
      %v8638 = vmax.f32 %v8551, %v8637
      %8639 = vmax.xlane.f32.xlu0 %v8638
      %v8640 = vpop.xlane.xlu0 %8639
      %v8641 = vsel %vm7218, %v8554, -inf
      %v8642 = vmax.f32 %v8553, %v8641
      %8643 = vmax.xlane.f32.xlu0 %v8642
      %v8644 = vpop.xlane.xlu0 %8643
      %v8645 = vsel %vm7218, %v8556, -inf
      %v8646 = vmax.f32 %v8555, %v8645
      %8647 = vmax.xlane.f32.xlu0 %v8646
      %v8648 = vpop.xlane.xlu0 %8647
      %v8649 = vsel %vm7218, %v8558, -inf
      %v8650 = vmax.f32 %v8557, %v8649
      %8651 = vmax.xlane.f32.xlu0 %v8650
      %v8652 = vpop.xlane.xlu0 %8651
      %v8653 = vsel %vm7218, %v8560, -inf
      %v8654 = vmax.f32 %v8559, %v8653
      %8655 = vmax.xlane.f32.xlu0 %v8654
      %v8656 = vpop.xlane.xlu0 %8655
      %v8657 = vsub.f32 %v8513, %v8564
      %v8658 = vsub.f32 %v8514, %v8564
      %v8659 = vsub.f32 %v8515, %v8568
      %v8660 = vsub.f32 %v8516, %v8568
      %v8661 = vsub.f32 %v8517, %v8572
      %v8662 = vsub.f32 %v8518, %v8572
      %v8663 = vsub.f32 %v8519, %v8576
      %v8664 = vsub.f32 %v8520, %v8576
      %v8665 = vsub.f32 %v8521, %v8580
      %v8666 = vsub.f32 %v8522, %v8580
      %v8667 = vsub.f32 %v8523, %v8584
      %v8668 = vsub.f32 %v8524, %v8584
      %v8669 = vsub.f32 %v8525, %v8588
      %v8670 = vsub.f32 %v8526, %v8588
      %v8671 = vsub.f32 %v8527, %v8592
      %v8672 = vsub.f32 %v8528, %v8592
      %v8673 = vsub.f32 %v8529, %v8596
      %v8674 = vsub.f32 %v8530, %v8596
      %v8675 = vsub.f32 %v8531, %v8600
      %v8676 = vsub.f32 %v8532, %v8600
      %v8677 = vsub.f32 %v8533, %v8604
      %v8678 = vsub.f32 %v8534, %v8604
      %v8679 = vsub.f32 %v8535, %v8608
      %v8680 = vsub.f32 %v8536, %v8608
      %v8681 = vsub.f32 %v8537, %v8612
      %v8682 = vsub.f32 %v8538, %v8612
      %v8683 = vsub.f32 %v8539, %v8616
      %v8684 = vsub.f32 %v8540, %v8616
      %v8685 = vsub.f32 %v8541, %v8620
      %v8686 = vsub.f32 %v8542, %v8620
      %v8687 = vsub.f32 %v8543, %v8624
      %v8688 = vsub.f32 %v8544, %v8624
      %v8689 = vsub.f32 %v8545, %v8628
      %v8690 = vsub.f32 %v8546, %v8628
      %v8691 = vsub.f32 %v8547, %v8632
      %v8692 = vsub.f32 %v8548, %v8632
      %v8693 = vsub.f32 %v8549, %v8636
      %v8694 = vsub.f32 %v8550, %v8636
      %v8695 = vsub.f32 %v8551, %v8640
      %v8696 = vsub.f32 %v8552, %v8640
      %v8697 = vsub.f32 %v8553, %v8644
      %v8698 = vsub.f32 %v8554, %v8644
      %v8699 = vsub.f32 %v8555, %v8648
      %v8700 = vsub.f32 %v8556, %v8648
      %v8701 = vsub.f32 %v8557, %v8652
      %v8702 = vsub.f32 %v8558, %v8652
      %v8703 = vsub.f32 %v8559, %v8656
      %v8704 = vsub.f32 %v8560, %v8656
      %v8705 = vmul.f32 %v8657, 1.442695
      %v8706 = vpow.pop %v8705
      %v8707 = vmul.f32 %v8658, 1.442695
      %v8708 = vpow.pop %v8707
      %v8709 = vmul.f32 %v8659, 1.442695
      %v8710 = vpow.pop %v8709
      %v8711 = vmul.f32 %v8660, 1.442695
      %v8712 = vpow.pop %v8711
      %v8713 = vmul.f32 %v8661, 1.442695
      %v8714 = vpow.pop %v8713
      %v8715 = vmul.f32 %v8662, 1.442695
      %v8716 = vpow.pop %v8715
      %v8717 = vmul.f32 %v8663, 1.442695
      %v8718 = vpow.pop %v8717
      %v8719 = vmul.f32 %v8664, 1.442695
      %v8720 = vpow.pop %v8719
      %v8721 = vmul.f32 %v8665, 1.442695
      %v8722 = vpow.pop %v8721
      %v8723 = vmul.f32 %v8666, 1.442695
      %v8724 = vpow.pop %v8723
      %v8725 = vmul.f32 %v8667, 1.442695
      %v8726 = vpow.pop %v8725
      %v8727 = vmul.f32 %v8668, 1.442695
      %v8728 = vpow.pop %v8727
      %v8729 = vmul.f32 %v8669, 1.442695
      %v8730 = vpow.pop %v8729
      %v8731 = vmul.f32 %v8670, 1.442695
      %v8732 = vpow.pop %v8731
      %v8733 = vmul.f32 %v8671, 1.442695
      %v8734 = vpow.pop %v8733
      %v8735 = vmul.f32 %v8672, 1.442695
      %v8736 = vpow.pop %v8735
      %v8737 = vmul.f32 %v8673, 1.442695
      %v8738 = vpow.pop %v8737
      %v8739 = vmul.f32 %v8674, 1.442695
      %v8740 = vpow.pop %v8739
      %v8741 = vmul.f32 %v8675, 1.442695
      %v8742 = vpow.pop %v8741
      %v8743 = vmul.f32 %v8676, 1.442695
      %v8744 = vpow.pop %v8743
      %v8745 = vmul.f32 %v8677, 1.442695
      %v8746 = vpow.pop %v8745
      %v8747 = vmul.f32 %v8678, 1.442695
      %v8748 = vpow.pop %v8747
      %v8749 = vmul.f32 %v8679, 1.442695
      %v8750 = vpow.pop %v8749
      %v8751 = vmul.f32 %v8680, 1.442695
      %v8752 = vpow.pop %v8751
      %v8753 = vmul.f32 %v8681, 1.442695
      %v8754 = vpow.pop %v8753
      %v8755 = vmul.f32 %v8682, 1.442695
      %v8756 = vpow.pop %v8755
      %v8757 = vmul.f32 %v8683, 1.442695
      %v8758 = vpow.pop %v8757
      %v8759 = vmul.f32 %v8684, 1.442695
      %v8760 = vpow.pop %v8759
      %v8761 = vmul.f32 %v8685, 1.442695
      %v8762 = vpow.pop %v8761
      %v8763 = vmul.f32 %v8686, 1.442695
      %v8764 = vpow.pop %v8763
      %v8765 = vmul.f32 %v8687, 1.442695
      %v8766 = vpow.pop %v8765
      %v8767 = vmul.f32 %v8688, 1.442695
      %v8768 = vpow.pop %v8767
      %v8769 = vmul.f32 %v8689, 1.442695
      %v8770 = vpow.pop %v8769
      %v8771 = vmul.f32 %v8690, 1.442695
      %v8772 = vpow.pop %v8771
      %v8773 = vmul.f32 %v8691, 1.442695
      %v8774 = vpow.pop %v8773
      %v8775 = vmul.f32 %v8692, 1.442695
      %v8776 = vpow.pop %v8775
      %v8777 = vmul.f32 %v8693, 1.442695
      %v8778 = vpow.pop %v8777
      %v8779 = vmul.f32 %v8694, 1.442695
      %v8780 = vpow.pop %v8779
      %v8781 = vmul.f32 %v8695, 1.442695
      %v8782 = vpow.pop %v8781
      %v8783 = vmul.f32 %v8696, 1.442695
      %v8784 = vpow.pop %v8783
      %v8785 = vmul.f32 %v8697, 1.442695
      %v8786 = vpow.pop %v8785
      %v8787 = vmul.f32 %v8698, 1.442695
      %v8788 = vpow.pop %v8787
      %v8789 = vmul.f32 %v8699, 1.442695
      %v8790 = vpow.pop %v8789
      %v8791 = vmul.f32 %v8700, 1.442695
      %v8792 = vpow.pop %v8791
      %v8793 = vmul.f32 %v8701, 1.442695
      %v8794 = vpow.pop %v8793
      %v8795 = vmul.f32 %v8702, 1.442695
      %v8796 = vpow.pop %v8795
      %v8797 = vmul.f32 %v8703, 1.442695
      %v8798 = vpow.pop %v8797
      %v8799 = vmul.f32 %v8704, 1.442695
      %v8800 = vpow.pop %v8799
      %v8801 = vsel %vm7218, %v8708, 0.0
      %v8802 = vadd.f32 %v8706, %v8801
      %8803 = vadd.xlane.f32.xlu0 %v8802
      %v8804 = vpop.xlane.xlu0 %8803
      %v8805 = vsel %vm7218, %v8712, 0.0
      %v8806 = vadd.f32 %v8710, %v8805
      %8807 = vadd.xlane.f32.xlu0 %v8806
      %v8808 = vpop.xlane.xlu0 %8807
      %v8809 = vsel %vm7218, %v8716, 0.0
      %v8810 = vadd.f32 %v8714, %v8809
      %8811 = vadd.xlane.f32.xlu0 %v8810
      %v8812 = vpop.xlane.xlu0 %8811
      %v8813 = vsel %vm7218, %v8720, 0.0
      %v8814 = vadd.f32 %v8718, %v8813
      %8815 = vadd.xlane.f32.xlu0 %v8814
      %v8816 = vpop.xlane.xlu0 %8815
      %v8817 = vsel %vm7218, %v8724, 0.0
      %v8818 = vadd.f32 %v8722, %v8817
      %8819 = vadd.xlane.f32.xlu0 %v8818
      %v8820 = vpop.xlane.xlu0 %8819
      %v8821 = vsel %vm7218, %v8728, 0.0
      %v8822 = vadd.f32 %v8726, %v8821
      %8823 = vadd.xlane.f32.xlu0 %v8822
      %v8824 = vpop.xlane.xlu0 %8823
      %v8825 = vsel %vm7218, %v8732, 0.0
      %v8826 = vadd.f32 %v8730, %v8825
      %8827 = vadd.xlane.f32.xlu0 %v8826
      %v8828 = vpop.xlane.xlu0 %8827
      %v8829 = vsel %vm7218, %v8736, 0.0
      %v8830 = vadd.f32 %v8734, %v8829
      %8831 = vadd.xlane.f32.xlu0 %v8830
      %v8832 = vpop.xlane.xlu0 %8831
      %v8833 = vsel %vm7218, %v8740, 0.0
      %v8834 = vadd.f32 %v8738, %v8833
      %8835 = vadd.xlane.f32.xlu0 %v8834
      %v8836 = vpop.xlane.xlu0 %8835
      %v8837 = vsel %vm7218, %v8744, 0.0
      %v8838 = vadd.f32 %v8742, %v8837
      %8839 = vadd.xlane.f32.xlu0 %v8838
      %v8840 = vpop.xlane.xlu0 %8839
      %v8841 = vsel %vm7218, %v8748, 0.0
      %v8842 = vadd.f32 %v8746, %v8841
      %8843 = vadd.xlane.f32.xlu0 %v8842
      %v8844 = vpop.xlane.xlu0 %8843
      %v8845 = vsel %vm7218, %v8752, 0.0
      %v8846 = vadd.f32 %v8750, %v8845
      %8847 = vadd.xlane.f32.xlu0 %v8846
      %v8848 = vpop.xlane.xlu0 %8847
      %v8849 = vsel %vm7218, %v8756, 0.0
      %v8850 = vadd.f32 %v8754, %v8849
      %8851 = vadd.xlane.f32.xlu0 %v8850
      %v8852 = vpop.xlane.xlu0 %8851
      %v8853 = vsel %vm7218, %v8760, 0.0
      %v8854 = vadd.f32 %v8758, %v8853
      %8855 = vadd.xlane.f32.xlu0 %v8854
      %v8856 = vpop.xlane.xlu0 %8855
      %v8857 = vsel %vm7218, %v8764, 0.0
      %v8858 = vadd.f32 %v8762, %v8857
      %8859 = vadd.xlane.f32.xlu0 %v8858
      %v8860 = vpop.xlane.xlu0 %8859
      %v8861 = vsel %vm7218, %v8768, 0.0
      %v8862 = vadd.f32 %v8766, %v8861
      %8863 = vadd.xlane.f32.xlu0 %v8862
      %v8864 = vpop.xlane.xlu0 %8863
      %v8865 = vsel %vm7218, %v8772, 0.0
      %v8866 = vadd.f32 %v8770, %v8865
      %8867 = vadd.xlane.f32.xlu0 %v8866
      %v8868 = vpop.xlane.xlu0 %8867
      %v8869 = vsel %vm7218, %v8776, 0.0
      %v8870 = vadd.f32 %v8774, %v8869
      %8871 = vadd.xlane.f32.xlu0 %v8870
      %v8872 = vpop.xlane.xlu0 %8871
      %v8873 = vsel %vm7218, %v8780, 0.0
      %v8874 = vadd.f32 %v8778, %v8873
      %8875 = vadd.xlane.f32.xlu0 %v8874
      %v8876 = vpop.xlane.xlu0 %8875
      %v8877 = vsel %vm7218, %v8784, 0.0
      %v8878 = vadd.f32 %v8782, %v8877
      %8879 = vadd.xlane.f32.xlu0 %v8878
      %v8880 = vpop.xlane.xlu0 %8879
      %v8881 = vsel %vm7218, %v8788, 0.0
      %v8882 = vadd.f32 %v8786, %v8881
      %8883 = vadd.xlane.f32.xlu0 %v8882
      %v8884 = vpop.xlane.xlu0 %8883
      %v8885 = vsel %vm7218, %v8792, 0.0
      %v8886 = vadd.f32 %v8790, %v8885
      %8887 = vadd.xlane.f32.xlu0 %v8886
      %v8888 = vpop.xlane.xlu0 %8887
      %v8889 = vsel %vm7218, %v8796, 0.0
      %v8890 = vadd.f32 %v8794, %v8889
      %8891 = vadd.xlane.f32.xlu0 %v8890
      %v8892 = vpop.xlane.xlu0 %8891
      %v8893 = vsel %vm7218, %v8800, 0.0
      %v8894 = vadd.f32 %v8798, %v8893
      %8895 = vadd.xlane.f32.xlu0 %v8894
      %v8896 = vpop.xlane.xlu0 %8895
      %v8897 = vrcp.pop %v8804
      %v8898 = vrcp.pop %v8808
      %v8899 = vrcp.pop %v8812
      %v8900 = vrcp.pop %v8816
      %v8901 = vrcp.pop %v8820
      %v8902 = vrcp.pop %v8824
      %v8903 = vrcp.pop %v8828
      %v8904 = vrcp.pop %v8832
      %v8905 = vrcp.pop %v8836
      %v8906 = vrcp.pop %v8840
      %v8907 = vrcp.pop %v8844
      %v8908 = vrcp.pop %v8848
      %v8909 = vrcp.pop %v8852
      %v8910 = vrcp.pop %v8856
      %v8911 = vrcp.pop %v8860
      %v8912 = vrcp.pop %v8864
      %v8913 = vrcp.pop %v8868
      %v8914 = vrcp.pop %v8872
      %v8915 = vrcp.pop %v8876
      %v8916 = vrcp.pop %v8880
      %v8917 = vrcp.pop %v8884
      %v8918 = vrcp.pop %v8888
      %v8919 = vrcp.pop %v8892
      %v8920 = vrcp.pop %v8896
      %v8921 = vmul.f32 %v8706, %v8897
      %v8922 = vmul.f32 %v8708, %v8897
      %v8923 = vmul.f32 %v8710, %v8898
      %v8924 = vmul.f32 %v8712, %v8898
      %v8925 = vmul.f32 %v8714, %v8899
      %v8926 = vmul.f32 %v8716, %v8899
      %v8927 = vmul.f32 %v8718, %v8900
      %v8928 = vmul.f32 %v8720, %v8900
      %v8929 = vmul.f32 %v8722, %v8901
      %v8930 = vmul.f32 %v8724, %v8901
      %v8931 = vmul.f32 %v8726, %v8902
      %v8932 = vmul.f32 %v8728, %v8902
      %v8933 = vmul.f32 %v8730, %v8903
      %v8934 = vmul.f32 %v8732, %v8903
      %v8935 = vmul.f32 %v8734, %v8904
      %v8936 = vmul.f32 %v8736, %v8904
      %v8937 = vmul.f32 %v8738, %v8905
      %v8938 = vmul.f32 %v8740, %v8905
      %v8939 = vmul.f32 %v8742, %v8906
      %v8940 = vmul.f32 %v8744, %v8906
      %v8941 = vmul.f32 %v8746, %v8907
      %v8942 = vmul.f32 %v8748, %v8907
      %v8943 = vmul.f32 %v8750, %v8908
      %v8944 = vmul.f32 %v8752, %v8908
      %v8945 = vmul.f32 %v8754, %v8909
      %v8946 = vmul.f32 %v8756, %v8909
      %v8947 = vmul.f32 %v8758, %v8910
      %v8948 = vmul.f32 %v8760, %v8910
      %v8949 = vmul.f32 %v8762, %v8911
      %v8950 = vmul.f32 %v8764, %v8911
      %v8951 = vmul.f32 %v8766, %v8912
      %v8952 = vmul.f32 %v8768, %v8912
      %v8953 = vmul.f32 %v8770, %v8913
      %v8954 = vmul.f32 %v8772, %v8913
      %v8955 = vmul.f32 %v8774, %v8914
      %v8956 = vmul.f32 %v8776, %v8914
      %v8957 = vmul.f32 %v8778, %v8915
      %v8958 = vmul.f32 %v8780, %v8915
      %v8959 = vmul.f32 %v8782, %v8916
      %v8960 = vmul.f32 %v8784, %v8916
      %v8961 = vmul.f32 %v8786, %v8917
      %v8962 = vmul.f32 %v8788, %v8917
      %v8963 = vmul.f32 %v8790, %v8918
      %v8964 = vmul.f32 %v8792, %v8918
      %v8965 = vmul.f32 %v8794, %v8919
      %v8966 = vmul.f32 %v8796, %v8919
      %v8967 = vmul.f32 %v8798, %v8920
      %v8968 = vmul.f32 %v8800, %v8920
      %v8969 = vpack.c.bf16 %v8923, %v8921
      %v8970 = vpack.c.bf16 %v8924, %v8922
      %v8971 = vpack.c.bf16 %v8927, %v8925
      %v8972 = vpack.c.bf16 %v8928, %v8926
      %v8973 = vpack.c.bf16 %v8931, %v8929
      %v8974 = vpack.c.bf16 %v8932, %v8930
      %v8975 = vpack.c.bf16 %v8935, %v8933
      %v8976 = vpack.c.bf16 %v8936, %v8934
      %v8977 = vpack.c.bf16 %v8939, %v8937
      %v8978 = vpack.c.bf16 %v8940, %v8938
      %v8979 = vpack.c.bf16 %v8943, %v8941
      %v8980 = vpack.c.bf16 %v8944, %v8942
      %v8981 = vpack.c.bf16 %v8947, %v8945
      %v8982 = vpack.c.bf16 %v8948, %v8946
      %v8983 = vpack.c.bf16 %v8951, %v8949
      %v8984 = vpack.c.bf16 %v8952, %v8950
      %v8985 = vpack.c.bf16 %v8955, %v8953
      %v8986 = vpack.c.bf16 %v8956, %v8954
      %v8987 = vpack.c.bf16 %v8959, %v8957
      %v8988 = vpack.c.bf16 %v8960, %v8958
      %v8989 = vpack.c.bf16 %v8963, %v8961
      %v8990 = vpack.c.bf16 %v8964, %v8962
      %v8991 = vpack.c.bf16 %v8967, %v8965
      %v8992 = vpack.c.bf16 %v8968, %v8966
      %9005 = vrot.lane.b32.xlu0 %v7206, 64
      %v9006 = vpop.permute.xlu0 %9005
      %9007 = vrot.lane.b32.xlu0 %v7207, 64
      %v9008 = vpop.permute.xlu0 %9007
      %9009 = vrot.lane.b32.xlu0 %v7208, 64
      %v9010 = vpop.permute.xlu0 %9009
      %9011 = vrot.lane.b32.xlu0 %v7209, 64
      %v9012 = vpop.permute.xlu0 %9011
      %9013 = vrot.lane.b32.xlu0 %v7210, 64
      %v9014 = vpop.permute.xlu0 %9013
      %9015 = vrot.lane.b32.xlu0 %v7211, 64
      %v9016 = vpop.permute.xlu0 %9015
      %9017 = vrot.lane.b32.xlu0 %v7212, 64
      %v9018 = vpop.permute.xlu0 %9017
      %9019 = vrot.lane.b32.xlu0 %v7213, 64
      %v9020 = vpop.permute.xlu0 %9019
      %9021 = vrot.lane.b32.xlu0 %v7214, 64
      %v9022 = vpop.permute.xlu0 %9021
      %9023 = vrot.lane.b32.xlu0 %v7215, 64
      %v9024 = vpop.permute.xlu0 %9023
      %9025 = vrot.lane.b32.xlu0 %v7216, 64
      %v9026 = vpop.permute.xlu0 %9025
      %9027 = vrot.lane.b32.xlu0 %v7217, 64
      %v9028 = vpop.permute.xlu0 %9027
      %v9042 = vsel %vm7218, %v8970, 0
      %v9045 = vsel %vm7218, %v8972, 0
      %v9048 = vsel %vm7218, %v8974, 0
      %v9051 = vsel %vm7218, %v8976, 0
      %v9054 = vsel %vm7218, %v8978, 0
      %v9057 = vsel %vm7218, %v8980, 0
      %v9060 = vsel %vm7218, %v8982, 0
      %v9063 = vsel %vm7218, %v8984, 0
      %v9066 = vsel %vm7218, %v8986, 0
      %v9069 = vsel %vm7218, %v8988, 0
      %v9072 = vsel %vm7218, %v8990, 0
      %v9075 = vsel %vm7218, %v8992, 0
      %9077 = vmatprep.subr.bf16.mxu0 0
      %9078 = vmatpush1.bf16.msra.mxu0 %v9006
      %9079 = vmatprep.subr.bf16.mxu0 0
      %9080 = vmatpush1.bf16.msra.mxu0 %v9008
      %9081 = vmatprep.subr.bf16.mxu0 0
      %9082 = vmatpush1.bf16.msra.mxu0 %v9010
      %9083 = vmatprep.subr.bf16.mxu0 0
      %9084 = vmatpush1.bf16.msra.mxu0 %v9012
      %9085 = vmatprep.subr.bf16.mxu0 0
      %9086 = vmatpush1.bf16.msra.mxu0 %v9014
      %9087 = vmatprep.subr.bf16.mxu0 0
      %9088 = vmatpush1.bf16.msra.mxu0 %v9016
      %9089 = vmatprep.subr.bf16.mxu0 0
      %9090 = vmatpush1.bf16.msra.mxu0 %v9018
      %9091 = vmatprep.subr.bf16.mxu0 0
      %9092 = vmatpush1.bf16.msra.mxu0 %v9020
      %9093 = vmatprep.subr.bf16.mxu0 0
      %9094 = vmatpush1.bf16.msra.mxu0 %v9022
      %9095 = vmatprep.subr.bf16.mxu0 0
      %9096 = vmatpush1.bf16.msra.mxu0 %v9024
      %9097 = vmatprep.subr.bf16.mxu0 0
      %9098 = vmatpush1.bf16.msra.mxu0 %v9026
      %9099 = vmatprep.subr.bf16.mxu0 0
      %9100 = vmatpush1.bf16.msra.mxu0 %v9028
      %9101 = vmatprep.subr.bf16.mxu0 0
      %9102 = vmatpush1.bf16.msra.mxu0 0
      %9103 = vmatprep.subr.bf16.mxu0 0
      %9104 = vmatpush1.bf16.msra.mxu0 0
      %9105 = vmatprep.subr.bf16.mxu0 0
      %9106 = vmatpush1.bf16.msra.mxu0 0
      %9107 = vmatprep.subr.bf16.mxu0 0
      %9108 = vmatpush1.bf16.msra.mxu0 0
      %9109 = vmatprep.mubr.bf16.mxu0 %v9042
      %9110 = vmatmul.mubr.bf16.gmra.mrb[0].mxu0 %v8969
      %v9111 = vpop.f32.mrb[0].mxu0
      %v9112 = vadd.f32 0.0, %v9111
      %v9113 = vpop.f32.mrb[0].mxu0
      %v9114 = vpop.f32.mrb[0].mxu0
      %v9115 = vadd.f32 0.0, %v9114
      %v9116 = vpop.f32.mrb[0].mxu0
      %9117 = vmatprep.mubr.bf16.mxu0 %v9045
      %9118 = vmatmul.mubr.bf16.gmra.mrb[0].mxu0 %v8971
      %v9119 = vpop.f32.mrb[0].mxu0
      %v9120 = vadd.f32 0.0, %v9119
      %v9121 = vpop.f32.mrb[0].mxu0
      %v9122 = vpop.f32.mrb[0].mxu0
      %v9123 = vadd.f32 0.0, %v9122
      %v9124 = vpop.f32.mrb[0].mxu0
      %9125 = vmatprep.mubr.bf16.mxu0 %v9048
      %9126 = vmatmul.mubr.bf16.gmra.mrb[0].mxu0 %v8973
      %v9127 = vpop.f32.mrb[0].mxu0
      %v9128 = vadd.f32 0.0, %v9127
      %v9129 = vpop.f32.mrb[0].mxu0
      %v9130 = vpop.f32.mrb[0].mxu0
      %v9131 = vadd.f32 0.0, %v9130
      %v9132 = vpop.f32.mrb[0].mxu0
      %9133 = vmatprep.mubr.bf16.mxu0 %v9051
      %9134 = vmatmul.mubr.bf16.gmra.mrb[0].mxu0 %v8975
      %v9135 = vpop.f32.mrb[0].mxu0
      %v9136 = vadd.f32 0.0, %v9135
      %v9137 = vpop.f32.mrb[0].mxu0
      %v9138 = vpop.f32.mrb[0].mxu0
      %v9139 = vadd.f32 0.0, %v9138
      %v9140 = vpop.f32.mrb[0].mxu0
      %9141 = vmatprep.mubr.bf16.mxu0 %v9054
      %9142 = vmatmul.mubr.bf16.gmra.mrb[0].mxu0 %v8977
      %v9143 = vpop.f32.mrb[0].mxu0
      %v9144 = vadd.f32 0.0, %v9143
      %v9145 = vpop.f32.mrb[0].mxu0
      %v9146 = vpop.f32.mrb[0].mxu0
      %v9147 = vadd.f32 0.0, %v9146
      %v9148 = vpop.f32.mrb[0].mxu0
      %9149 = vmatprep.mubr.bf16.mxu0 %v9057
      %9150 = vmatmul.mubr.bf16.gmra.mrb[0].mxu0 %v8979
      %v9151 = vpop.f32.mrb[0].mxu0
      %v9152 = vadd.f32 0.0, %v9151
      %v9153 = vpop.f32.mrb[0].mxu0
      %v9154 = vpop.f32.mrb[0].mxu0
      %v9155 = vadd.f32 0.0, %v9154
      %v9156 = vpop.f32.mrb[0].mxu0
      %9157 = vmatprep.mubr.bf16.mxu0 %v9060
      %9158 = vmatmul.mubr.bf16.gmra.mrb[0].mxu0 %v8981
      %v9159 = vpop.f32.mrb[0].mxu0
      %v9160 = vadd.f32 0.0, %v9159
      %v9161 = vpop.f32.mrb[0].mxu0
      %v9162 = vpop.f32.mrb[0].mxu0
      %v9163 = vadd.f32 0.0, %v9162
      %v9164 = vpop.f32.mrb[0].mxu0
      %9165 = vmatprep.mubr.bf16.mxu0 %v9063
      %9166 = vmatmul.mubr.bf16.gmra.mrb[0].mxu0 %v8983
      %v9167 = vpop.f32.mrb[0].mxu0
      %v9168 = vadd.f32 0.0, %v9167
      %v9169 = vpop.f32.mrb[0].mxu0
      %v9170 = vpop.f32.mrb[0].mxu0
      %v9171 = vadd.f32 0.0, %v9170
      %v9172 = vpop.f32.mrb[0].mxu0
      %9173 = vmatprep.mubr.bf16.mxu0 %v9066
      %9174 = vmatmul.mubr.bf16.gmra.mrb[0].mxu0 %v8985
      %v9175 = vpop.f32.mrb[0].mxu0
      %v9176 = vadd.f32 0.0, %v9175
      %v9177 = vpop.f32.mrb[0].mxu0
      %v9178 = vpop.f32.mrb[0].mxu0
      %v9179 = vadd.f32 0.0, %v9178
      %v9180 = vpop.f32.mrb[0].mxu0
      %9181 = vmatprep.mubr.bf16.mxu0 %v9069
      %9182 = vmatmul.mubr.bf16.gmra.mrb[0].mxu0 %v8987
      %v9183 = vpop.f32.mrb[0].mxu0
      %v9184 = vadd.f32 0.0, %v9183
      %v9185 = vpop.f32.mrb[0].mxu0
      %v9186 = vpop.f32.mrb[0].mxu0
      %v9187 = vadd.f32 0.0, %v9186
      %v9188 = vpop.f32.mrb[0].mxu0
      %9189 = vmatprep.mubr.bf16.mxu0 %v9072
      %9190 = vmatmul.mubr.bf16.gmra.mrb[0].mxu0 %v8989
      %v9191 = vpop.f32.mrb[0].mxu0
      %v9192 = vadd.f32 0.0, %v9191
      %v9193 = vpop.f32.mrb[0].mxu0
      %v9194 = vpop.f32.mrb[0].mxu0
      %v9195 = vadd.f32 0.0, %v9194
      %v9196 = vpop.f32.mrb[0].mxu0
      %9197 = vmatprep.mubr.bf16.mxu0 %v9075
      %9198 = vmatmul.mubr.bf16.gmra.mrb[0].mxu0 %v8991
      %v9199 = vpop.f32.mrb[0].mxu0
      %v9200 = vadd.f32 0.0, %v9199
      %v9201 = vpop.f32.mrb[0].mxu0
      %v9202 = vpop.f32.mrb[0].mxu0
      %v9203 = vadd.f32 0.0, %v9202
      %v9204 = vpop.f32.mrb[0].mxu0
      %9205 = vdwg.mxu0
      %v9206 = vpack.c.bf16 %v9115, %v9112
      %v9207 = vpack.c.bf16 %v9123, %v9120
      %v9208 = vpack.c.bf16 %v9131, %v9128
      %v9209 = vpack.c.bf16 %v9139, %v9136
      %v9210 = vpack.c.bf16 %v9147, %v9144
      %v9211 = vpack.c.bf16 %v9155, %v9152
      %v9212 = vpack.c.bf16 %v9163, %v9160
      %v9213 = vpack.c.bf16 %v9171, %v9168
      %v9214 = vpack.c.bf16 %v9179, %v9176
      %v9215 = vpack.c.bf16 %v9187, %v9184
      %v9216 = vpack.c.bf16 %v9195, %v9192
      %v9217 = vpack.c.bf16 %v9203, %v9200
      %v9218 = vld [vmem:[%s63 + $0x20] sm:$0xf]
      %v9219 = vld [vmem:[%s63 + $0x24] sm:$0xf]
      %v9220 = vld [vmem:[%s63 + $0x28] sm:$0xf]
      %v9221 = vld [vmem:[%s63 + $0x2c] sm:$0xf]
      %v9222 = vld [vmem:[%s63 + $0x30] sm:$0xf]
      %v9223 = vld [vmem:[%s63 + $0x34] sm:$0xf]
      %v9224 = vld [vmem:[%s63 + $0x38] sm:$0xf]
      %v9225 = vld [vmem:[%s63 + $0x3c] sm:$0xf]
      %v9234 = vunpack.c.l.b16 %v9218
      %v9235 = vunpack.c.l.b16 %v9219
      %v9236 = vunpack.c.l.b16 %v9220
      %v9237 = vunpack.c.l.b16 %v9221
      %v9238 = vunpack.c.l.b16 %v9222
      %v9239 = vunpack.c.l.b16 %v9223
      %v9240 = vunpack.c.l.b16 %v9224
      %v9241 = vunpack.c.l.b16 %v9225
      %v9242 = vpack.c.b16 %v9235, %v9234
      %v9243 = vpack.c.b16 %v9237, %v9236
      %v9244 = vpack.c.b16 %v9239, %v9238
      %v9245 = vpack.c.b16 %v9241, %v9240
      %v9251 = vsel %vm7218, %v9206, 0
      %v9254 = vsel %vm7218, %v9207, 0
      %v9257 = vsel %vm7218, %v9208, 0
      %v9260 = vsel %vm7218, %v9209, 0
      %v9263 = vsel %vm7218, %v9210, 0
      %v9266 = vsel %vm7218, %v9211, 0
      %v9269 = vsel %vm7218, %v9212, 0
      %v9272 = vsel %vm7218, %v9213, 0
      %v9275 = vsel %vm7218, %v9214, 0
      %v9278 = vsel %vm7218, %v9215, 0
      %v9281 = vsel %vm7218, %v9216, 0
      %v9284 = vsel %vm7218, %v9217, 0
      %9286 = vmatprep.subr.bf16.mxu0 0
      %9287 = vmatpush1.bf16.msra.mxu0 %v9242
      %9288 = vmatprep.subr.bf16.mxu0 0
      %9289 = vmatpush1.bf16.msra.mxu0 %v9243
      %9290 = vmatprep.subr.bf16.mxu0 0
      %9291 = vmatpush1.bf16.msra.mxu0 %v9244
      %9292 = vmatprep.subr.bf16.mxu0 0
      %9293 = vmatpush1.bf16.msra.mxu0 %v9245
      %9294 = vmatprep.subr.bf16.mxu0 0
      %9295 = vmatpush1.bf16.msra.mxu0 0
      %9296 = vmatprep.subr.bf16.mxu0 0
      %9297 = vmatpush1.bf16.msra.mxu0 0
      %9298 = vmatprep.subr.bf16.mxu0 0
      %9299 = vmatpush1.bf16.msra.mxu0 0
      %9300 = vmatprep.subr.bf16.mxu0 0
      %9301 = vmatpush1.bf16.msra.mxu0 0
      %9302 = vmatprep.subr.bf16.mxu0 0
      %9303 = vmatpush1.bf16.msra.mxu0 0
      %9304 = vmatprep.subr.bf16.mxu0 0
      %9305 = vmatpush1.bf16.msra.mxu0 0
      %9306 = vmatprep.subr.bf16.mxu0 0
      %9307 = vmatpush1.bf16.msra.mxu0 0
      %9308 = vmatprep.subr.bf16.mxu0 0
      %9309 = vmatpush1.bf16.msra.mxu0 0
      %9310 = vmatprep.subr.bf16.mxu0 0
      %9311 = vmatpush1.bf16.msra.mxu0 0
      %9312 = vmatprep.subr.bf16.mxu0 0
      %9313 = vmatpush1.bf16.msra.mxu0 0
      %9314 = vmatprep.subr.bf16.mxu0 0
      %9315 = vmatpush1.bf16.msra.mxu0 0
      %9316 = vmatprep.subr.bf16.mxu0 0
      %9317 = vmatpush1.bf16.msra.mxu0 0
      %9318 = vmatprep.mubr.bf16.mxu0 0
      %9319 = vmatmul.mubr.bf16.gmra.mrb[0].mxu0 %v9251
      %v9320 = vpop.f32.mrb[0].mxu0
      %v9321 = vadd.f32 0.0, %v9320
      %v9322 = vpop.f32.mrb[0].mxu0
      %v9323 = vpop.f32.mrb[0].mxu0
      %v9324 = vadd.f32 0.0, %v9323
      %v9325 = vpop.f32.mrb[0].mxu0
      %9326 = vmatprep.mubr.bf16.mxu0 0
      %9327 = vmatmul.mubr.bf16.gmra.mrb[0].mxu0 %v9254
      %v9328 = vpop.f32.mrb[0].mxu0
      %v9329 = vadd.f32 0.0, %v9328
      %v9330 = vpop.f32.mrb[0].mxu0
      %v9331 = vpop.f32.mrb[0].mxu0
      %v9332 = vadd.f32 0.0, %v9331
      %v9333 = vpop.f32.mrb[0].mxu0
      %9334 = vmatprep.mubr.bf16.mxu0 0
      %9335 = vmatmul.mubr.bf16.gmra.mrb[0].mxu0 %v9257
      %v9336 = vpop.f32.mrb[0].mxu0
      %v9337 = vadd.f32 0.0, %v9336
      %v9338 = vpop.f32.mrb[0].mxu0
      %v9339 = vpop.f32.mrb[0].mxu0
      %v9340 = vadd.f32 0.0, %v9339
      %v9341 = vpop.f32.mrb[0].mxu0
      %9342 = vmatprep.mubr.bf16.mxu0 0
      %9343 = vmatmul.mubr.bf16.gmra.mrb[0].mxu0 %v9260
      %v9344 = vpop.f32.mrb[0].mxu0
      %v9345 = vadd.f32 0.0, %v9344
      %v9346 = vpop.f32.mrb[0].mxu0
      %v9347 = vpop.f32.mrb[0].mxu0
      %v9348 = vadd.f32 0.0, %v9347
      %v9349 = vpop.f32.mrb[0].mxu0
      %9350 = vmatprep.mubr.bf16.mxu0 0
      %9351 = vmatmul.mubr.bf16.gmra.mrb[0].mxu0 %v9263
      %v9352 = vpop.f32.mrb[0].mxu0
      %v9353 = vadd.f32 0.0, %v9352
      %v9354 = vpop.f32.mrb[0].mxu0
      %v9355 = vpop.f32.mrb[0].mxu0
      %v9356 = vadd.f32 0.0, %v9355
      %v9357 = vpop.f32.mrb[0].mxu0
      %9358 = vmatprep.mubr.bf16.mxu0 0
      %9359 = vmatmul.mubr.bf16.gmra.mrb[0].mxu0 %v9266
      %v9360 = vpop.f32.mrb[0].mxu0
      %v9361 = vadd.f32 0.0, %v9360
      %v9362 = vpop.f32.mrb[0].mxu0
      %v9363 = vpop.f32.mrb[0].mxu0
      %v9364 = vadd.f32 0.0, %v9363
      %v9365 = vpop.f32.mrb[0].mxu0
      %9366 = vmatprep.mubr.bf16.mxu0 0
      %9367 = vmatmul.mubr.bf16.gmra.mrb[0].mxu0 %v9269
      %v9368 = vpop.f32.mrb[0].mxu0
      %v9369 = vadd.f32 0.0, %v9368
      %v9370 = vpop.f32.mrb[0].mxu0
      %v9371 = vpop.f32.mrb[0].mxu0
      %v9372 = vadd.f32 0.0, %v9371
      %v9373 = vpop.f32.mrb[0].mxu0
      %9374 = vmatprep.mubr.bf16.mxu0 0
      %9375 = vmatmul.mubr.bf16.gmra.mrb[0].mxu0 %v9272
      %v9376 = vpop.f32.mrb[0].mxu0
      %v9377 = vadd.f32 0.0, %v9376
      %v9378 = vpop.f32.mrb[0].mxu0
      %v9379 = vpop.f32.mrb[0].mxu0
      %v9380 = vadd.f32 0.0, %v9379
      %v9381 = vpop.f32.mrb[0].mxu0
      %9382 = vmatprep.mubr.bf16.mxu0 0
      %9383 = vmatmul.mubr.bf16.gmra.mrb[0].mxu0 %v9275
      %v9384 = vpop.f32.mrb[0].mxu0
      %v9385 = vadd.f32 0.0, %v9384
      %v9386 = vpop.f32.mrb[0].mxu0
      %v9387 = vpop.f32.mrb[0].mxu0
      %v9388 = vadd.f32 0.0, %v9387
      %v9389 = vpop.f32.mrb[0].mxu0
      %9390 = vmatprep.mubr.bf16.mxu0 0
      %9391 = vmatmul.mubr.bf16.gmra.mrb[0].mxu0 %v9278
      %v9392 = vpop.f32.mrb[0].mxu0
      %v9393 = vadd.f32 0.0, %v9392
      %v9394 = vpop.f32.mrb[0].mxu0
      %v9395 = vpop.f32.mrb[0].mxu0
      %v9396 = vadd.f32 0.0, %v9395
      %v9397 = vpop.f32.mrb[0].mxu0
      %9398 = vmatprep.mubr.bf16.mxu0 0
      %9399 = vmatmul.mubr.bf16.gmra.mrb[0].mxu0 %v9281
      %v9400 = vpop.f32.mrb[0].mxu0
      %v9401 = vadd.f32 0.0, %v9400
      %v9402 = vpop.f32.mrb[0].mxu0
      %v9403 = vpop.f32.mrb[0].mxu0
      %v9404 = vadd.f32 0.0, %v9403
      %v9405 = vpop.f32.mrb[0].mxu0
      %9406 = vmatprep.mubr.bf16.mxu0 0
      %9407 = vmatmul.mubr.bf16.gmra.mrb[0].mxu0 %v9284
      %v9408 = vpop.f32.mrb[0].mxu0
      %v9409 = vadd.f32 0.0, %v9408
      %v9410 = vpop.f32.mrb[0].mxu0
      %v9411 = vpop.f32.mrb[0].mxu0
      %v9412 = vadd.f32 0.0, %v9411
      %v9413 = vpop.f32.mrb[0].mxu0
      %9414 = vdwg.mxu0
      %v9423 = vunpack.c.l.b16 %v8160
      %v9424 = vunpack.c.l.b16 %v8161
      %v9425 = vunpack.c.l.b16 %v8162
      %v9426 = vunpack.c.l.b16 %v8163
      %v9427 = vunpack.c.l.b16 %v8164
      %v9428 = vunpack.c.l.b16 %v8165
      %v9429 = vunpack.c.l.b16 %v8166
      %v9430 = vunpack.c.l.b16 %v8167
      %v9431 = vpack.c.b16 %v9424, %v9423
      %v9432 = vpack.c.b16 %v9426, %v9425
      %v9433 = vpack.c.b16 %v9428, %v9427
      %v9434 = vpack.c.b16 %v9430, %v9429
      %v9440 = vsel %vm7218, %v8148, 0
      %v9443 = vsel %vm7218, %v8149, 0
      %v9446 = vsel %vm7218, %v8150, 0
      %v9449 = vsel %vm7218, %v8151, 0
      %v9452 = vsel %vm7218, %v8152, 0
      %v9455 = vsel %vm7218, %v8153, 0
      %v9458 = vsel %vm7218, %v8154, 0
      %v9461 = vsel %vm7218, %v8155, 0
      %v9464 = vsel %vm7218, %v8156, 0
      %v9467 = vsel %vm7218, %v8157, 0
      %v9470 = vsel %vm7218, %v8158, 0
      %v9473 = vsel %vm7218, %v8159, 0
      %9475 = vmatprep.subr.bf16.mxu0 0
      %9476 = vmatpush1.bf16.msra.mxu0 %v9431
      %9477 = vmatprep.subr.bf16.mxu0 0
      %9478 = vmatpush1.bf16.msra.mxu0 %v9432
      %9479 = vmatprep.subr.bf16.mxu0 0
      %9480 = vmatpush1.bf16.msra.mxu0 %v9433
      %9481 = vmatprep.subr.bf16.mxu0 0
      %9482 = vmatpush1.bf16.msra.mxu0 %v9434
      %9483 = vmatprep.subr.bf16.mxu0 0
      %9484 = vmatpush1.bf16.msra.mxu0 0
      %9485 = vmatprep.subr.bf16.mxu0 0
      %9486 = vmatpush1.bf16.msra.mxu0 0
      %9487 = vmatprep.subr.bf16.mxu0 0
      %9488 = vmatpush1.bf16.msra.mxu0 0
      %9489 = vmatprep.subr.bf16.mxu0 0
      %9490 = vmatpush1.bf16.msra.mxu0 0
      %9491 = vmatprep.subr.bf16.mxu0 0
      %9492 = vmatpush1.bf16.msra.mxu0 0
      %9493 = vmatprep.subr.bf16.mxu0 0
      %9494 = vmatpush1.bf16.msra.mxu0 0
      %9495 = vmatprep.subr.bf16.mxu0 0
      %9496 = vmatpush1.bf16.msra.mxu0 0
      %9497 = vmatprep.subr.bf16.mxu0 0
      %9498 = vmatpush1.bf16.msra.mxu0 0
      %9499 = vmatprep.subr.bf16.mxu0 0
      %9500 = vmatpush1.bf16.msra.mxu0 0
      %9501 = vmatprep.subr.bf16.mxu0 0
      %9502 = vmatpush1.bf16.msra.mxu0 0
      %9503 = vmatprep.subr.bf16.mxu0 0
      %9504 = vmatpush1.bf16.msra.mxu0 0
      %9505 = vmatprep.subr.bf16.mxu0 0
      %9506 = vmatpush1.bf16.msra.mxu0 0
      %9507 = vmatprep.mubr.bf16.mxu0 0
      %9508 = vmatmul.mubr.bf16.gmra.mrb[0].mxu0 %v9440
      %v9509 = vpop.f32.mrb[0].mxu0
      %v9510 = vadd.f32 %v9321, %v9509
      %v9511 = vpop.f32.mrb[0].mxu0
      %v9512 = vpop.f32.mrb[0].mxu0
      %v9513 = vadd.f32 %v9324, %v9512
      %v9514 = vpop.f32.mrb[0].mxu0
      %9515 = vmatprep.mubr.bf16.mxu0 0
      %9516 = vmatmul.mubr.bf16.gmra.mrb[0].mxu0 %v9443
      %v9517 = vpop.f32.mrb[0].mxu0
      %v9518 = vadd.f32 %v9329, %v9517
      %v9519 = vpop.f32.mrb[0].mxu0
      %v9520 = vpop.f32.mrb[0].mxu0
      %v9521 = vadd.f32 %v9332, %v9520
      %v9522 = vpop.f32.mrb[0].mxu0
      %9523 = vmatprep.mubr.bf16.mxu0 0
      %9524 = vmatmul.mubr.bf16.gmra.mrb[0].mxu0 %v9446
      %v9525 = vpop.f32.mrb[0].mxu0
      %v9526 = vadd.f32 %v9337, %v9525
      %v9527 = vpop.f32.mrb[0].mxu0
      %v9528 = vpop.f32.mrb[0].mxu0
      %v9529 = vadd.f32 %v9340, %v9528
      %v9530 = vpop.f32.mrb[0].mxu0
      %9531 = vmatprep.mubr.bf16.mxu0 0
      %9532 = vmatmul.mubr.bf16.gmra.mrb[0].mxu0 %v9449
      %v9533 = vpop.f32.mrb[0].mxu0
      %v9534 = vadd.f32 %v9345, %v9533
      %v9535 = vpop.f32.mrb[0].mxu0
      %v9536 = vpop.f32.mrb[0].mxu0
      %v9537 = vadd.f32 %v9348, %v9536
      %v9538 = vpop.f32.mrb[0].mxu0
      %9539 = vmatprep.mubr.bf16.mxu0 0
      %9540 = vmatmul.mubr.bf16.gmra.mrb[0].mxu0 %v9452
      %v9541 = vpop.f32.mrb[0].mxu0
      %v9542 = vadd.f32 %v9353, %v9541
      %v9543 = vpop.f32.mrb[0].mxu0
      %v9544 = vpop.f32.mrb[0].mxu0
      %v9545 = vadd.f32 %v9356, %v9544
      %v9546 = vpop.f32.mrb[0].mxu0
      %9547 = vmatprep.mubr.bf16.mxu0 0
      %9548 = vmatmul.mubr.bf16.gmra.mrb[0].mxu0 %v9455
      %v9549 = vpop.f32.mrb[0].mxu0
      %v9550 = vadd.f32 %v9361, %v9549
      %v9551 = vpop.f32.mrb[0].mxu0
      %v9552 = vpop.f32.mrb[0].mxu0
      %v9553 = vadd.f32 %v9364, %v9552
      %v9554 = vpop.f32.mrb[0].mxu0
      %9555 = vmatprep.mubr.bf16.mxu0 0
      %9556 = vmatmul.mubr.bf16.gmra.mrb[0].mxu0 %v9458
      %v9557 = vpop.f32.mrb[0].mxu0
      %v9558 = vadd.f32 %v9369, %v9557
      %v9559 = vpop.f32.mrb[0].mxu0
      %v9560 = vpop.f32.mrb[0].mxu0
      %v9561 = vadd.f32 %v9372, %v9560
      %v9562 = vpop.f32.mrb[0].mxu0
      %9563 = vmatprep.mubr.bf16.mxu0 0
      %9564 = vmatmul.mubr.bf16.gmra.mrb[0].mxu0 %v9461
      %v9565 = vpop.f32.mrb[0].mxu0
      %v9566 = vadd.f32 %v9377, %v9565
      %v9567 = vpop.f32.mrb[0].mxu0
      %v9568 = vpop.f32.mrb[0].mxu0
      %v9569 = vadd.f32 %v9380, %v9568
      %v9570 = vpop.f32.mrb[0].mxu0
      %9571 = vmatprep.mubr.bf16.mxu0 0
      %9572 = vmatmul.mubr.bf16.gmra.mrb[0].mxu0 %v9464
      %v9573 = vpop.f32.mrb[0].mxu0
      %v9574 = vadd.f32 %v9385, %v9573
      %v9575 = vpop.f32.mrb[0].mxu0
      %v9576 = vpop.f32.mrb[0].mxu0
      %v9577 = vadd.f32 %v9388, %v9576
      %v9578 = vpop.f32.mrb[0].mxu0
      %9579 = vmatprep.mubr.bf16.mxu0 0
      %9580 = vmatmul.mubr.bf16.gmra.mrb[0].mxu0 %v9467
      %v9581 = vpop.f32.mrb[0].mxu0
      %v9582 = vadd.f32 %v9393, %v9581
      %v9583 = vpop.f32.mrb[0].mxu0
      %v9584 = vpop.f32.mrb[0].mxu0
      %v9585 = vadd.f32 %v9396, %v9584
      %v9586 = vpop.f32.mrb[0].mxu0
      %9587 = vmatprep.mubr.bf16.mxu0 0
      %9588 = vmatmul.mubr.bf16.gmra.mrb[0].mxu0 %v9470
      %v9589 = vpop.f32.mrb[0].mxu0
      %v9590 = vadd.f32 %v9401, %v9589
      %v9591 = vpop.f32.mrb[0].mxu0
      %v9592 = vpop.f32.mrb[0].mxu0
      %v9593 = vadd.f32 %v9404, %v9592
      %v9594 = vpop.f32.mrb[0].mxu0
      %9595 = vmatprep.mubr.bf16.mxu0 0
      %9596 = vmatmul.mubr.bf16.gmra.mrb[0].mxu0 %v9473
      %v9597 = vpop.f32.mrb[0].mxu0
      %v9598 = vadd.f32 %v9409, %v9597
      %v9599 = vpop.f32.mrb[0].mxu0
      %v9600 = vpop.f32.mrb[0].mxu0
      %v9601 = vadd.f32 %v9412, %v9600
      %v9602 = vpop.f32.mrb[0].mxu0
      %9603 = vdwg.mxu0
      %v9604 = vld [vmem:[%s65] sm:$0x1]
      %v9606 = vlaneseq
      %v9607 = vshrl.u32 %v9606, 7
      %v9608 = vsub.s32 0, %v9607
      %v9609 = vrot.slane %v9604, %v9608
      %v9611 = vadd.f32 %v9510, %v9609
      %v9612 = vadd.f32 %v9513, %v9609
      %v9613 = vadd.f32 %v9518, %v9609
      %v9614 = vadd.f32 %v9521, %v9609
      %v9615 = vadd.f32 %v9526, %v9609
      %v9616 = vadd.f32 %v9529, %v9609
      %v9617 = vadd.f32 %v9534, %v9609
      %v9618 = vadd.f32 %v9537, %v9609
      %v9619 = vadd.f32 %v9542, %v9609
      %v9620 = vadd.f32 %v9545, %v9609
      %v9621 = vadd.f32 %v9550, %v9609
      %v9622 = vadd.f32 %v9553, %v9609
      %v9623 = vadd.f32 %v9558, %v9609
      %v9624 = vadd.f32 %v9561, %v9609
      %v9625 = vadd.f32 %v9566, %v9609
      %v9626 = vadd.f32 %v9569, %v9609
      %v9627 = vadd.f32 %v9574, %v9609
      %v9628 = vadd.f32 %v9577, %v9609
      %v9629 = vadd.f32 %v9582, %v9609
      %v9630 = vadd.f32 %v9585, %v9609
      %v9631 = vadd.f32 %v9590, %v9609
      %v9632 = vadd.f32 %v9593, %v9609
      %v9633 = vadd.f32 %v9598, %v9609
      %v9634 = vadd.f32 %v9601, %v9609
      %v9635 = vadd.f32 %v9611, %v6684
      %v9636 = vadd.f32 %v9612, %v6685
      %v9637 = vadd.f32 %v9613, %v6686
      %v9638 = vadd.f32 %v9614, %v6687
      %v9639 = vadd.f32 %v9615, %v6688
      %v9640 = vadd.f32 %v9616, %v6689
      %v9641 = vadd.f32 %v9617, %v6690
      %v9642 = vadd.f32 %v9618, %v6691
      %v9643 = vadd.f32 %v9619, %v6692
      %v9644 = vadd.f32 %v9620, %v6693
      %v9645 = vadd.f32 %v9621, %v6694
      %v9646 = vadd.f32 %v9622, %v6695
      %v9647 = vadd.f32 %v9623, %v6696
      %v9648 = vadd.f32 %v9624, %v6697
      %v9649 = vadd.f32 %v9625, %v6698
      %v9650 = vadd.f32 %v9626, %v6699
      %v9651 = vadd.f32 %v9627, %v6700
      %v9652 = vadd.f32 %v9628, %v6701
      %v9653 = vadd.f32 %v9629, %v6702
      %v9654 = vadd.f32 %v9630, %v6703
      %v9655 = vadd.f32 %v9631, %v6704
      %v9656 = vadd.f32 %v9632, %v6705
      %v9657 = vadd.f32 %v9633, %v6706
      %v9658 = vadd.f32 %v9634, %v6707
      %v9659 = vpack.c.bf16 %v9636, %v9635
      %v9660 = vpack.c.bf16 %v9638, %v9637
      %v9661 = vpack.c.bf16 %v9640, %v9639
      %v9662 = vpack.c.bf16 %v9642, %v9641
      %v9663 = vpack.c.bf16 %v9644, %v9643
      %v9664 = vpack.c.bf16 %v9646, %v9645
      %v9665 = vpack.c.bf16 %v9648, %v9647
      %v9666 = vpack.c.bf16 %v9650, %v9649
      %v9667 = vpack.c.bf16 %v9652, %v9651
      %v9668 = vpack.c.bf16 %v9654, %v9653
      %v9669 = vpack.c.bf16 %v9656, %v9655
      %v9670 = vpack.c.bf16 %v9658, %v9657
      %v9671 = vld [vmem:[%s67] sm:$0xf]
      %v9672 = vld [vmem:[%s67 + $0x4] sm:$0xf]
      %v9673 = vld [vmem:[%s67 + $0x8] sm:$0xf]
      %v9674 = vld [vmem:[%s67 + $0xc] sm:$0xf]
      %v9675 = vld [vmem:[%s67 + $0x10] sm:$0xf]
      %v9676 = vld [vmem:[%s67 + $0x14] sm:$0xf]
      %v9677 = vld [vmem:[%s67 + $0x18] sm:$0xf]
      %v9678 = vld [vmem:[%s67 + $0x1c] sm:$0xf]
      %v9679 = vld [vmem:[%s67 + $0x20] sm:$0xf]
      %v9680 = vld [vmem:[%s67 + $0x24] sm:$0xf]
      %v9681 = vld [vmem:[%s67 + $0x28] sm:$0xf]
      %v9682 = vld [vmem:[%s67 + $0x2c] sm:$0xf]
      %v9683 = vld [vmem:[%s67 + $0x30] sm:$0xf]
      %v9684 = vld [vmem:[%s67 + $0x34] sm:$0xf]
      %v9685 = vld [vmem:[%s67 + $0x38] sm:$0xf]
      %v9686 = vld [vmem:[%s67 + $0x3c] sm:$0xf]
      %v9687 = vld [vmem:[%s69] sm:$0x1]
      %v9689 = vlaneseq
      %v9690 = vshrl.u32 %v9689, 7
      %v9691 = vsub.s32 0, %v9690
      %v9692 = vrot.slane %v9687, %v9691
      %v9710 = vunpack.c.l.b16 %v9671
      %v9711 = vunpack.c.l.b16 %v9672
      %v9712 = vunpack.c.l.b16 %v9673
      %v9713 = vunpack.c.l.b16 %v9674
      %v9714 = vunpack.c.l.b16 %v9675
      %v9715 = vunpack.c.l.b16 %v9676
      %v9716 = vunpack.c.l.b16 %v9677
      %v9717 = vunpack.c.l.b16 %v9678
      %v9718 = vunpack.c.l.b16 %v9679
      %v9719 = vunpack.c.l.b16 %v9680
      %v9720 = vunpack.c.l.b16 %v9681
      %v9721 = vunpack.c.l.b16 %v9682
      %v9722 = vunpack.c.l.b16 %v9683
      %v9723 = vunpack.c.l.b16 %v9684
      %v9724 = vunpack.c.l.b16 %v9685
      %v9725 = vunpack.c.l.b16 %v9686
      %v9726 = vpack.c.b16 %v9711, %v9710
      %v9727 = vpack.c.b16 %v9713, %v9712
      %v9728 = vpack.c.b16 %v9715, %v9714
      %v9729 = vpack.c.b16 %v9717, %v9716
      %v9730 = vpack.c.b16 %v9719, %v9718
      %v9731 = vpack.c.b16 %v9721, %v9720
      %v9732 = vpack.c.b16 %v9723, %v9722
      %v9733 = vpack.c.b16 %v9725, %v9724
      %9742 = vmatprep.subr.bf16.mxu0 0
      %9743 = vmatpush1.bf16.msra.mxu0 %v9726
      %9744 = vmatprep.subr.bf16.mxu0 0
      %9745 = vmatpush1.bf16.msra.mxu0 %v9727
      %9746 = vmatprep.subr.bf16.mxu0 0
      %9747 = vmatpush1.bf16.msra.mxu0 %v9728
      %9748 = vmatprep.subr.bf16.mxu0 0
      %9749 = vmatpush1.bf16.msra.mxu0 %v9729
      %9750 = vmatprep.subr.bf16.mxu0 0
      %9751 = vmatpush1.bf16.msra.mxu0 %v9730
      %9752 = vmatprep.subr.bf16.mxu0 0
      %9753 = vmatpush1.bf16.msra.mxu0 %v9731
      %9754 = vmatprep.subr.bf16.mxu0 0
      %9755 = vmatpush1.bf16.msra.mxu0 %v9732
      %9756 = vmatprep.subr.bf16.mxu0 0
      %9757 = vmatpush1.bf16.msra.mxu0 %v9733
      %9758 = vmatprep.subr.bf16.mxu0 0
      %9759 = vmatpush1.bf16.msra.mxu0 0
      %9760 = vmatprep.subr.bf16.mxu0 0
      %9761 = vmatpush1.bf16.msra.mxu0 0
      %9762 = vmatprep.subr.bf16.mxu0 0
      %9763 = vmatpush1.bf16.msra.mxu0 0
      %9764 = vmatprep.subr.bf16.mxu0 0
      %9765 = vmatpush1.bf16.msra.mxu0 0
      %9766 = vmatprep.subr.bf16.mxu0 0
      %9767 = vmatpush1.bf16.msra.mxu0 0
      %9768 = vmatprep.subr.bf16.mxu0 0
      %9769 = vmatpush1.bf16.msra.mxu0 0
      %9770 = vmatprep.subr.bf16.mxu0 0
      %9771 = vmatpush1.bf16.msra.mxu0 0
      %9772 = vmatprep.subr.bf16.mxu0 0
      %9773 = vmatpush1.bf16.msra.mxu0 0
      %9774 = vmatprep.mubr.bf16.mxu0 0
      %9775 = vmatmul.mubr.bf16.gmra.mrb[0].mxu0 %v9659
      %v9776 = vpop.f32.mrb[0].mxu0
      %v9777 = vadd.f32 %v9692, %v9776
      %v9778 = vpop.f32.mrb[0].mxu0
      %v9779 = vpop.f32.mrb[0].mxu0
      %v9780 = vadd.f32 %v9692, %v9779
      %v9781 = vpop.f32.mrb[0].mxu0
      %9782 = vmatprep.mubr.bf16.mxu0 0
      %9783 = vmatmul.mubr.bf16.gmra.mrb[0].mxu0 %v9660
      %v9784 = vpop.f32.mrb[0].mxu0
      %v9785 = vadd.f32 %v9692, %v9784
      %v9786 = vpop.f32.mrb[0].mxu0
      %v9787 = vpop.f32.mrb[0].mxu0
      %v9788 = vadd.f32 %v9692, %v9787
      %v9789 = vpop.f32.mrb[0].mxu0
      %9790 = vmatprep.mubr.bf16.mxu0 0
      %9791 = vmatmul.mubr.bf16.gmra.mrb[0].mxu0 %v9661
      %v9792 = vpop.f32.mrb[0].mxu0
      %v9793 = vadd.f32 %v9692, %v9792
      %v9794 = vpop.f32.mrb[0].mxu0
      %v9795 = vpop.f32.mrb[0].mxu0
      %v9796 = vadd.f32 %v9692, %v9795
      %v9797 = vpop.f32.mrb[0].mxu0
      %9798 = vmatprep.mubr.bf16.mxu0 0
      %9799 = vmatmul.mubr.bf16.gmra.mrb[0].mxu0 %v9662
      %v9800 = vpop.f32.mrb[0].mxu0
      %v9801 = vadd.f32 %v9692, %v9800
      %v9802 = vpop.f32.mrb[0].mxu0
      %v9803 = vpop.f32.mrb[0].mxu0
      %v9804 = vadd.f32 %v9692, %v9803
      %v9805 = vpop.f32.mrb[0].mxu0
      %9806 = vmatprep.mubr.bf16.mxu0 0
      %9807 = vmatmul.mubr.bf16.gmra.mrb[0].mxu0 %v9663
      %v9808 = vpop.f32.mrb[0].mxu0
      %v9809 = vadd.f32 %v9692, %v9808
      %v9810 = vpop.f32.mrb[0].mxu0
      %v9811 = vpop.f32.mrb[0].mxu0
      %v9812 = vadd.f32 %v9692, %v9811
      %v9813 = vpop.f32.mrb[0].mxu0
      %9814 = vmatprep.mubr.bf16.mxu0 0
      %9815 = vmatmul.mubr.bf16.gmra.mrb[0].mxu0 %v9664
      %v9816 = vpop.f32.mrb[0].mxu0
      %v9817 = vadd.f32 %v9692, %v9816
      %v9818 = vpop.f32.mrb[0].mxu0
      %v9819 = vpop.f32.mrb[0].mxu0
      %v9820 = vadd.f32 %v9692, %v9819
      %v9821 = vpop.f32.mrb[0].mxu0
      %9822 = vmatprep.mubr.bf16.mxu0 0
      %9823 = vmatmul.mubr.bf16.gmra.mrb[0].mxu0 %v9665
      %v9824 = vpop.f32.mrb[0].mxu0
      %v9825 = vadd.f32 %v9692, %v9824
      %v9826 = vpop.f32.mrb[0].mxu0
      %v9827 = vpop.f32.mrb[0].mxu0
      %v9828 = vadd.f32 %v9692, %v9827
      %v9829 = vpop.f32.mrb[0].mxu0
      %9830 = vmatprep.mubr.bf16.mxu0 0
      %9831 = vmatmul.mubr.bf16.gmra.mrb[0].mxu0 %v9666
      %v9832 = vpop.f32.mrb[0].mxu0
      %v9833 = vadd.f32 %v9692, %v9832
      %v9834 = vpop.f32.mrb[0].mxu0
      %v9835 = vpop.f32.mrb[0].mxu0
      %v9836 = vadd.f32 %v9692, %v9835
      %v9837 = vpop.f32.mrb[0].mxu0
      %9838 = vmatprep.mubr.bf16.mxu0 0
      %9839 = vmatmul.mubr.bf16.gmra.mrb[0].mxu0 %v9667
      %v9840 = vpop.f32.mrb[0].mxu0
      %v9841 = vadd.f32 %v9692, %v9840
      %v9842 = vpop.f32.mrb[0].mxu0
      %v9843 = vpop.f32.mrb[0].mxu0
      %v9844 = vadd.f32 %v9692, %v9843
      %v9845 = vpop.f32.mrb[0].mxu0
      %9846 = vmatprep.mubr.bf16.mxu0 0
      %9847 = vmatmul.mubr.bf16.gmra.mrb[0].mxu0 %v9668
      %v9848 = vpop.f32.mrb[0].mxu0
      %v9849 = vadd.f32 %v9692, %v9848
      %v9850 = vpop.f32.mrb[0].mxu0
      %v9851 = vpop.f32.mrb[0].mxu0
      %v9852 = vadd.f32 %v9692, %v9851
      %v9853 = vpop.f32.mrb[0].mxu0
      %9854 = vmatprep.mubr.bf16.mxu0 0
      %9855 = vmatmul.mubr.bf16.gmra.mrb[0].mxu0 %v9669
      %v9856 = vpop.f32.mrb[0].mxu0
      %v9857 = vadd.f32 %v9692, %v9856
      %v9858 = vpop.f32.mrb[0].mxu0
      %v9859 = vpop.f32.mrb[0].mxu0
      %v9860 = vadd.f32 %v9692, %v9859
      %v9861 = vpop.f32.mrb[0].mxu0
      %9862 = vmatprep.mubr.bf16.mxu0 0
      %9863 = vmatmul.mubr.bf16.gmra.mrb[0].mxu0 %v9670
      %v9864 = vpop.f32.mrb[0].mxu0
      %v9865 = vadd.f32 %v9692, %v9864
      %v9866 = vpop.f32.mrb[0].mxu0
      %v9867 = vpop.f32.mrb[0].mxu0
      %v9868 = vadd.f32 %v9692, %v9867
      %v9869 = vpop.f32.mrb[0].mxu0
      %9870 = vdwg.mxu0
      %v9871 = vmul.f32 %v9777, %v1457
      %v9872 = vmul.f32 %v9780, %v1462
      %v9873 = vmul.f32 %v9785, %v1467
      %v9874 = vmul.f32 %v9788, %v1472
      %v9875 = vmul.f32 %v9793, %v1477
      %v9876 = vmul.f32 %v9796, %v1482
      %v9877 = vmul.f32 %v9801, %v1487
      %v9878 = vmul.f32 %v9804, %v1492
      %v9879 = vmul.f32 %v9809, %v1497
      %v9880 = vmul.f32 %v9812, %v1502
      %v9881 = vmul.f32 %v9817, %v1507
      %v9882 = vmul.f32 %v9820, %v1512
      %v9883 = vmul.f32 %v9825, %v1517
      %v9884 = vmul.f32 %v9828, %v1522
      %v9885 = vmul.f32 %v9833, %v1527
      %v9886 = vmul.f32 %v9836, %v1532
      %v9887 = vmul.f32 %v9841, %v1537
      %v9888 = vmul.f32 %v9844, %v1542
      %v9889 = vmul.f32 %v9849, %v1547
      %v9890 = vmul.f32 %v9852, %v1552
      %v9891 = vmul.f32 %v9857, %v1557
      %v9892 = vmul.f32 %v9860, %v1562
      %v9893 = vmul.f32 %v9865, %v1567
      %v9894 = vmul.f32 %v9868, %v1572
      %v9895 = vadd.f32 %v9871, %v9872
      %v9896 = vadd.f32 %v9895, %v9873
      %v9897 = vadd.f32 %v9896, %v9874
      %v9898 = vadd.f32 %v9897, %v9875
      %v9899 = vadd.f32 %v9898, %v9876
      %v9900 = vadd.f32 %v9899, %v9877
      %v9901 = vadd.f32 %v9900, %v9878
      %v9902 = vadd.f32 %v9901, %v9879
      %v9903 = vadd.f32 %v9902, %v9880
      %v9904 = vadd.f32 %v9903, %v9881
      %v9905 = vadd.f32 %v9904, %v9882
      %v9906 = vadd.f32 %v9905, %v9883
      %v9907 = vadd.f32 %v9906, %v9884
      %v9908 = vadd.f32 %v9907, %v9885
      %v9909 = vadd.f32 %v9908, %v9886
      %v9910 = vadd.f32 %v9909, %v9887
      %v9911 = vadd.f32 %v9910, %v9888
      %v9912 = vadd.f32 %v9911, %v9889
      %v9913 = vadd.f32 %v9912, %v9890
      %v9914 = vadd.f32 %v9913, %v9891
      %v9915 = vadd.f32 %v9914, %v9892
      %v9916 = vadd.f32 %v9915, %v9893
      %v9917 = vadd.f32 %v9916, %v9894
      %v9918 = vrot.slane %v9917, 4
      %v9919 = vadd.f32 %v9917, %v9918
      %v9920 = vrot.slane %v9919, 2
      %v9921 = vadd.f32 %v9919, %v9920
      %v9922 = vrot.slane %v9921, 1
      %v9923 = vadd.f32 %v9921, %v9922
      %9925 = vset.pattern.permute.xlu0 0
      %9926 = vperm.xlu0 %9925, %v1427
      %v9927 = vpop.permute.xlu0 %9926
      %v9929 = vlaneseq
      %v9930 = vshrl.u32 %v9929, 7
      %v9931 = vsub.s32 0, %v9930
      %v9932 = vrot.slane %v9927, %v9931
      %v9933 = vmul.f32 %v9923, %v9932
      %v9934 = vld [vmem:[%s1385] sm:$0x1]
      %v9935 = vpack.c.bf16 %v9934, %v9934
      %v9936 = vld [vmem:[%s71] sm:$0xf]
      %v9937 = vld [vmem:[%s71 + $0x4] sm:$0xf]
      %v9938 = vld [vmem:[%s71 + $0x8] sm:$0xf]
      %v9939 = vld [vmem:[%s71 + $0xc] sm:$0xf]
      %v9940 = vld [vmem:[%s71 + $0x10] sm:$0xf]
      %v9941 = vld [vmem:[%s71 + $0x14] sm:$0xf]
      %v9942 = vld [vmem:[%s71 + $0x18] sm:$0xf]
      %v9943 = vld [vmem:[%s71 + $0x1c] sm:$0xf]
      %v9944 = vld [vmem:[%s71 + $0x20] sm:$0xf]
      %v9945 = vld [vmem:[%s71 + $0x24] sm:$0xf]
      %v9946 = vld [vmem:[%s71 + $0x28] sm:$0xf]
      %v9947 = vld [vmem:[%s71 + $0x2c] sm:$0xf]
      %v9948 = vld [vmem:[%s71 + $0x30] sm:$0xf]
      %v9949 = vld [vmem:[%s71 + $0x34] sm:$0xf]
      %v9950 = vld [vmem:[%s71 + $0x38] sm:$0xf]
      %v9951 = vld [vmem:[%s71 + $0x3c] sm:$0xf]
      %v9952 = vld [vmem:[%s73] sm:$0x1]
      %v9969 = vunpack.c.l.b16 %v9936
      %v9970 = vunpack.c.l.b16 %v9937
      %v9971 = vunpack.c.l.b16 %v9938
      %v9972 = vunpack.c.l.b16 %v9939
      %v9973 = vunpack.c.l.b16 %v9940
      %v9974 = vunpack.c.l.b16 %v9941
      %v9975 = vunpack.c.l.b16 %v9942
      %v9976 = vunpack.c.l.b16 %v9943
      %v9977 = vunpack.c.l.b16 %v9944
      %v9978 = vunpack.c.l.b16 %v9945
      %v9979 = vunpack.c.l.b16 %v9946
      %v9980 = vunpack.c.l.b16 %v9947
      %v9981 = vunpack.c.l.b16 %v9948
      %v9982 = vunpack.c.l.b16 %v9949
      %v9983 = vunpack.c.l.b16 %v9950
      %v9984 = vunpack.c.l.b16 %v9951
      %v9985 = vpack.c.b16 %v9970, %v9969
      %v9986 = vpack.c.b16 %v9972, %v9971
      %v9987 = vpack.c.b16 %v9974, %v9973
      %v9988 = vpack.c.b16 %v9976, %v9975
      %v9989 = vpack.c.b16 %v9978, %v9977
      %v9990 = vpack.c.b16 %v9980, %v9979
      %v9991 = vpack.c.b16 %v9982, %v9981
      %v9992 = vpack.c.b16 %v9984, %v9983
      %10001 = vmatprep.subr.bf16.mxu0 0
      %10002 = vmatpush1.bf16.msra.mxu0 %v9985
      %10003 = vmatprep.subr.bf16.mxu0 0
      %10004 = vmatpush1.bf16.msra.mxu0 %v9986
      %10005 = vmatprep.subr.bf16.mxu0 0
      %10006 = vmatpush1.bf16.msra.mxu0 %v9987
      %10007 = vmatprep.subr.bf16.mxu0 0
      %10008 = vmatpush1.bf16.msra.mxu0 %v9988
      %10009 = vmatprep.subr.bf16.mxu0 0
      %10010 = vmatpush1.bf16.msra.mxu0 %v9989
      %10011 = vmatprep.subr.bf16.mxu0 0
      %10012 = vmatpush1.bf16.msra.mxu0 %v9990
      %10013 = vmatprep.subr.bf16.mxu0 0
      %10014 = vmatpush1.bf16.msra.mxu0 %v9991
      %10015 = vmatprep.subr.bf16.mxu0 0
      %10016 = vmatpush1.bf16.msra.mxu0 %v9992
      %10017 = vmatprep.subr.bf16.mxu0 0
      %10018 = vmatpush1.bf16.msra.mxu0 0
      %10019 = vmatprep.subr.bf16.mxu0 0
      %10020 = vmatpush1.bf16.msra.mxu0 0
      %10021 = vmatprep.subr.bf16.mxu0 0
      %10022 = vmatpush1.bf16.msra.mxu0 0
      %10023 = vmatprep.subr.bf16.mxu0 0
      %10024 = vmatpush1.bf16.msra.mxu0 0
      %10025 = vmatprep.subr.bf16.mxu0 0
      %10026 = vmatpush1.bf16.msra.mxu0 0
      %10027 = vmatprep.subr.bf16.mxu0 0
      %10028 = vmatpush1.bf16.msra.mxu0 0
      %10029 = vmatprep.subr.bf16.mxu0 0
      %10030 = vmatpush1.bf16.msra.mxu0 0
      %10031 = vmatprep.subr.bf16.mxu0 0
      %10032 = vmatpush1.bf16.msra.mxu0 0
      %10033 = vmatprep.mubr.bf16.mxu0 0
      %10034 = vmatmul.mubr.bf16.gmra.mrb[0].mxu0 %v9935
      %v10035 = vpop.f32.mrb[0].mxu0
      %v10036 = vadd.f32 %v9952, %v10035
      %v10037 = vpop.f32.mrb[0].mxu0
      %v10038 = vpop.f32.mrb[0].mxu0
      %v10039 = vpop.f32.mrb[0].mxu0
      %10040 = vdwg.mxu0
      %v10041 = vld [vmem:[#allocation4] sm:$0x1]
      %v10042 = vmul.f32 %v10036, %v9933
      %vm10043 = vcmask 1040384
      %v10044 = vsel %vm10043, %v10042, 0.0
      %10045 = vadd.xlane.f32.xlu0 %v10044
      %v10046 = vpop.xlane.xlu0 %10045
      %v10047 = vmul.f32 %v10041, %v10046
      %v10048 = vld [vmem:[#allocation5] sm:$0x1]
      %v10049 = vadd.f32 %v10047, %v10048
      %10051 = vset.pattern.permute.xlu0 0
      %10052 = vperm.xlu0 %10051, %v10049
      %v10053 = vpop.permute.xlu0 %10052
      %v10055 = vlaneseq
      %v10056 = vshrl.u32 %v10055, 7
      %v10057 = vsub.s32 0, %v10056
      %v10058 = vrot.slane %v10053, %v10057
      %10059 = vst [vmem:[%s1398] sm:$0x1] %v10058
      %p10060 = scmp.lt.s32.totalorder %s103, 1
      %s10061 = scalar_select %p10060, %s103, 1
      %s10062 = scalar_lea.vmem %s81, %s10061
      %p10063 = scmp.lt.s32.totalorder %s103, 1
      %s10064 = scalar_select %p10063, %s103, 1
      %s10065 = scalar_lea.vmem %s83, %s10064
      %p10066 = scmp.lt.s32.totalorder %s103, 1
      %s10067 = scalar_select %p10066, %s103, 1
      %s10068 = scalar_lea.vmem %s85, %s10067
      // Predicated region
      $region181: #{discriminator_forward.1} parent=179 // pred_check
        %p10069 = pneg %p1001
      $region182: #{discriminator_forward.1} parent=179 // pred_check_branch
        %10071 = sbr.rel (%p10069) target = $region184
      $region183: #{discriminator_forward.1} parent=179 // pred_region
        _
      $region184: #{discriminator_forward.1} parent=179 // pred_fallthru
        _
      // Predicated region
      $region185: #{discriminator_forward.1} parent=179 // pred_check
        %p10072 = pneg %p1027
      $region186: #{discriminator_forward.1} parent=179 // pred_check_branch
        %10074 = sbr.rel (%p10072) target = $region188
      $region187: #{discriminator_forward.1} parent=179 // pred_region
        _
      $region188: #{discriminator_forward.1} parent=179 // pred_fallthru
        _
      // Predicated region
      $region189: #{discriminator_forward.1} parent=179 // pred_check
        %p10075 = pneg %p1053
      $region190: #{discriminator_forward.1} parent=179 // pred_check_branch
        %10077 = sbr.rel (%p10075) target = $region192
      $region191: #{discriminator_forward.1} parent=179 // pred_region
        _
      $region192: #{discriminator_forward.1} parent=179 // pred_fallthru
        _
    $region180: #{discriminator_forward.1} parent=5 // pred_fallthru
      _
    %p10078 = scmp.le.s32.totalorder 2, %s98
    // Predicated region
    $region193: #{discriminator_forward.1} parent=5 // pred_check
      %p10079 = pneg %p10078
    $region194: #{discriminator_forward.1} parent=5 // pred_check_branch
      %10081 = sbr.rel (%p10079) target = $region196
    $region195: #{discriminator_forward.1} parent=5 // pred_region
      %s10082 = ssub.s32 %s98, 2
      // Predicated region
      $region197: #{discriminator_forward.1} parent=195 // pred_check
        %p10083 = pneg %p1007
      $region198: #{discriminator_forward.1} parent=195 // pred_check_branch
        %10085 = sbr.rel (%p10083) target = $region200
      $region199: #{discriminator_forward.1} parent=195 // pred_region
        %p10086 = scmp.lt.s32.totalorder %s104, 1
        %s10087 = scalar_select %p10086, %s104, 1
        %s10088 = scalar_lea.vmem %s81, %s10087
      $region200: #{discriminator_forward.1} parent=195 // pred_fallthru
        _
      // Predicated region
      $region201: #{discriminator_forward.1} parent=195 // pred_check
        %p10089 = pneg %p1033
      $region202: #{discriminator_forward.1} parent=195 // pred_check_branch
        %10091 = sbr.rel (%p10089) target = $region204
      $region203: #{discriminator_forward.1} parent=195 // pred_region
        %p10092 = scmp.lt.s32.totalorder %s104, 1
        %s10093 = scalar_select %p10092, %s104, 1
        %s10094 = scalar_lea.vmem %s83, %s10093
      $region204: #{discriminator_forward.1} parent=195 // pred_fallthru
        _
      // Predicated region
      $region205: #{discriminator_forward.1} parent=195 // pred_check
        %p10095 = pneg %p1059
      $region206: #{discriminator_forward.1} parent=195 // pred_check_branch
        %10097 = sbr.rel (%p10095) target = $region208
      $region207: #{discriminator_forward.1} parent=195 // pred_region
        %p10098 = scmp.lt.s32.totalorder %s104, 1
        %s10099 = scalar_select %p10098, %s104, 1
        %s10100 = scalar_lea.vmem %s85, %s10099
      $region208: #{discriminator_forward.1} parent=195 // pred_fallthru
        _
    $region196: #{discriminator_forward.1} parent=5 // pred_fallthru
      _
  $region6: #{discriminator_forward.1} parent=0 // loop_footer
    %s102 = sadd.s32 1, %s98
  $region7: #{discriminator_forward.1} parent=0 // loop_footer_branch
    %97 = sbr.rel target = $region3
  $region8: #{discriminator_forward.1} parent=0 // loop_exit
    _

</llo_original>
